<compile_context>
chip_gen: v7x
topology: tpu7x:2x2x1
jax: 0.10.0
libtpu: 0.0.40
codegen_flags: <defaults>
</compile_context>

<pallas_src>
import jax
import jax.numpy as jnp
from jax import lax
from jax.experimental import pallas as pl
from jax.experimental.pallas import tpu as pltpu

NUM_SYMBOLS_PER_CHANNEL = 8
NUM_SYMBOLS = NUM_SYMBOLS_PER_CHANNEL ** 3      # 512
GRAY_SYMBOLS = 256
HIDDEN = 32                                     # model hidden size
HP = 128                                        # lane-padded hidden size
LN_EPS = 1e-5


# --------------------------------------------------------------------------
# Kernel
# --------------------------------------------------------------------------
def coltran_core_kernel(idx_ref, table_ref, w_pix_ref, big_w_ref, small_ref,
                        enc_logits_ref, dec_logits_ref):
  packed = idx_ref[...]                                     # (T, 1) int32
  t = packed.shape[0]

  # packed = gray_idx * 512 + bins  (both precomputed with integer math).
  gray_idx = packed >> 9                                    # 512 == 2**9
  bins = packed & (NUM_SYMBOLS - 1)

  # ---------------- grayscale encoder path (table lookup) ----------------
  # Encoder embedding -> LN -> residual MLP -> parallel_dense folded into one
  # 256-entry table: cols [0, 512) = enc_logits, cols [512, 512+HP) = z.
  iota_g = lax.broadcasted_iota(jnp.int32, (t, GRAY_SYMBOLS), 1)
  oh_gray = (gray_idx == iota_g).astype(jnp.bfloat16)       # (T, 256) one-hot
  enc = jnp.dot(oh_gray, table_ref[...],
                preferred_element_type=jnp.float32)         # (T, 512+HP) f32
  enc_logits_ref[...] = enc[:, :NUM_SYMBOLS].astype(enc_logits_ref.dtype)
  z = enc[:, NUM_SYMBOLS:]                                  # (T, HP), pad lanes = 0

  # ---------------- decoder path ----------------
  iota_s = lax.broadcasted_iota(jnp.int32, (t, NUM_SYMBOLS), 1)
  oh = (bins == iota_s).astype(jnp.bfloat16)                # (T, 512) one-hot
  # pixel_embed_layer (no bias), output lane-padded to HP
  h_dec = jnp.dot(oh, w_pix_ref[...],
                  preferred_element_type=jnp.float32)       # (T, HP)

  # Packed parameters (static Ref slices are cheap).
  out_w = big_w_ref[:, 0:HP]                                # (HP, HP)   bf16
  in_w = big_w_ref[:, HP:2 * HP]                            # (HP, HP)   bf16
  w_fin = big_w_ref[:, 2 * HP:]                             # (HP, 512)  bf16
  b_fin = small_ref[0:1, :]                                 # (1, 512)   f32
  out_b = small_ref[1:2, 0:HP]                              # (1, HP)    f32
  in_b = small_ref[2:3, 0:HP]
  fn_g = small_ref[3:4, 0:HP]
  fn_b = small_ref[4:5, 0:HP]

  # TODO(synk): OuterDecoder / InnerDecoder axial-attention transformers live
  # in `core` (not given in this module); approximated by conditional residual
  # MLP blocks with the same (h_dec, z) / (h_dec, h_upper, z) conditioning.
  u = h_dec + z
  h_upper = u + jax.nn.relu(
      jnp.dot(u.astype(jnp.bfloat16), out_w,
              preferred_element_type=jnp.float32) + out_b)
  v = h_dec + h_upper + z
  h_inner = v + jax.nn.relu(
      jnp.dot(v.astype(jnp.bfloat16), in_w,
              preferred_element_type=jnp.float32) + in_b)

  # final_norm (LayerNorm over the HIDDEN valid lanes; mean/var explicitly
  # masked to the valid lanes) + final_dense.
  lane_mask = (lax.broadcasted_iota(jnp.int32, (1, HP), 1)
               < HIDDEN).astype(jnp.float32)
  mu = jnp.sum(h_inner * lane_mask, axis=-1, keepdims=True) * (1.0 / HIDDEN)
  d = (h_inner - mu) * lane_mask
  var = jnp.sum(d * d, axis=-1, keepdims=True) * (1.0 / HIDDEN)
  act = d * lax.rsqrt(var + LN_EPS) * fn_g + fn_b           # padded lanes -> 0
  dec = jnp.dot(act.astype(jnp.bfloat16), w_fin,
                preferred_element_type=jnp.float32) + b_fin
  dec_logits_ref[...] = dec.astype(dec_logits_ref.dtype)


# --------------------------------------------------------------------------
# Parameters (kept at the module's real HIDDEN=32 shapes)
# --------------------------------------------------------------------------
def init_params(key):
  ks = jax.random.split(key, 8)

  def dense(k, fan_in, fan_out):
    return (jax.random.normal(k, (fan_in, fan_out), jnp.float32)
            / jnp.sqrt(jnp.float32(fan_in)))

  return dict(
      w_gray=dense(ks[0], GRAY_SYMBOLS, HIDDEN),
      enc_gamma=jnp.ones((1, HIDDEN), jnp.float32),
      enc_beta=jnp.zeros((1, HIDDEN), jnp.float32),
      enc_w=dense(ks[1], HIDDEN, HIDDEN),
      enc_bias=jnp.zeros((1, HIDDEN), jnp.float32),
      w_parallel=dense(ks[2], HIDDEN, NUM_SYMBOLS),
      w_pixel=dense(ks[3], NUM_SYMBOLS, HIDDEN),
      out_w=dense(ks[4], HIDDEN, HIDDEN),
      out_b=jnp.zeros((1, HIDDEN), jnp.float32),
      in_w=dense(ks[5], HIDDEN, HIDDEN),
      in_b=jnp.zeros((1, HIDDEN), jnp.float32),
      fn_gamma=jnp.ones((1, HIDDEN), jnp.float32),
      fn_beta=jnp.zeros((1, HIDDEN), jnp.float32),
      w_final=dense(ks[6], HIDDEN, NUM_SYMBOLS),
      b_final=jnp.zeros((1, NUM_SYMBOLS), jnp.float32),
  )


def _prepare_kernel_params(params):
  """Fold the gray-conditioned encoder into a lookup table; pack/pad to bf16."""
  # z(gray) table: embedding row -> LN -> residual MLP  (tiny; plain JAX, f32).
  h = params["w_gray"]                                     # (256, HIDDEN)
  mu = jnp.mean(h, axis=-1, keepdims=True)
  var = jnp.mean(jnp.square(h - mu), axis=-1, keepdims=True)
  z_ln = ((h - mu) * lax.rsqrt(var + LN_EPS)
          * params["enc_gamma"] + params["enc_beta"])
  # TODO(synk): GrayScaleEncoder's axial-attention Encoder stack is not in
  # this module; approximated by one pre-LN residual MLP block.
  z = h + jax.nn.relu(z_ln @ params["enc_w"] + params["enc_bias"])
  enc_logits_table = z @ params["w_parallel"]              # (256, 512)
  z_pad = jnp.pad(z, ((0, 0), (0, HP - HIDDEN)))           # (256, HP)
  table = jnp.concatenate([enc_logits_table, z_pad],
                          axis=1).astype(jnp.bfloat16)     # (256, 512+HP) bf16

  # Lane-pad hidden-sized weights to HP=128 with zeros (numerics preserved),
  # cast to bf16 for the MXU.
  w_pix = jnp.pad(params["w_pixel"],
                  ((0, 0), (0, HP - HIDDEN))).astype(jnp.bfloat16)  # (512, HP)

  def pad_sq(w):
    return jnp.pad(w, ((0, HP - HIDDEN), (0, HP - HIDDEN)))         # (HP, HP)

  out_w = pad_sq(params["out_w"])
  in_w = pad_sq(params["in_w"])
  w_fin = jnp.pad(params["w_final"], ((0, HP - HIDDEN), (0, 0)))    # (HP, 512)
  big_w = jnp.concatenate([out_w, in_w, w_fin],
                          axis=1).astype(jnp.bfloat16)              # (HP, 768)

  def row(v):
    v = v.reshape(-1)
    return jnp.pad(v, (0, NUM_SYMBOLS - v.shape[0]))[None, :]

  # Biases / LN gamma+beta stay f32 (tiny; preserves LN & bias precision).
  small = jnp.concatenate([
      row(params["b_final"]),        # row 0: final bias (512)
      row(params["out_b"]),          # row 1: outer bias (first HIDDEN lanes)
      row(params["in_b"]),           # row 2: inner bias
      row(params["fn_gamma"]),       # row 3: final_norm gamma
      row(params["fn_beta"]),        # row 4: final_norm beta
      jnp.zeros((3, NUM_SYMBOLS), jnp.float32),
  ], axis=0)                                                        # (8, 512)
  return table, w_pix, big_w, small


# --------------------------------------------------------------------------
# Per-generation tile / VMEM policy
# --------------------------------------------------------------------------
def _device_kind():
  try:
    return jax.devices()[0].device_kind.lower()
  except Exception:
    return ""


def _tile_policy(n):
  """v5e/v6e: 1 TC + 128 MiB VMEM -> big tiles, high limit.
  v7x / unknown: 64 MiB VMEM + 2 TCs -> tile <= 1024, 52 MB limit, prefer an
  even grid-step count. Tiles dividing N exactly are preferred (no pad/slice)."""
  kind = _device_kind()
  big_vmem_single_core = ("v5" in kind) or ("v6" in kind)
  if big_vmem_single_core:
    candidates = (2048, 1024, 512, 256, 128)
    vmem_limit = 96 * 1024 * 1024
    prefer_even_steps = False
  else:
    candidates = (1024, 512, 256, 128)
    vmem_limit = 52 * 1024 * 1024
    prefer_even_steps = True

  exact = [t for t in candidates if n >= t and n % t == 0]
  if exact:
    if prefer_even_steps:
      for t in exact:
        if (n // t) % 2 == 0:
          return t, vmem_limit
    return exact[0], vmem_limit
  for t in candidates:                      # no exact divisor: pad N up
    if n >= t:
      return t, vmem_limit
  return candidates[-1], vmem_limit


# --------------------------------------------------------------------------
# Wrapper
# --------------------------------------------------------------------------
def coltran_core_forward(x, params):
  """x: (B, H, W, 3) float32 integer-valued RGB. Returns (dec_logits, aux)."""
  B, H, W, C = x.shape
  assert C == 3
  N = B * H * W
  tile, vmem_limit = _tile_policy(N)
  n_pad = pl.cdiv(N, tile) * tile

  # Exact integer index math in the wrapper (cheap XLA), one packed int32 per
  # pixel: gray_idx = floor(mean(rgb)), bins from convert_bits(8->3) with
  # basis [64, 8, 1].  packed = gray_idx * 512 + bins.
  xi = x.reshape(N, C).astype(jnp.int32)
  gray_idx = (xi[:, 0] + xi[:, 1] + xi[:, 2]) // 3
  bins = (xi[:, 0] // 32) * 64 + (xi[:, 1] // 32) * 8 + (xi[:, 2] // 32)
  packed = (gray_idx * NUM_SYMBOLS + bins).astype(jnp.int32)[:, None]  # (N,1)
  if n_pad != N:
    packed = jnp.pad(packed, ((0, n_pad - N), (0, 0)))

  table, w_pix, big_w, small = _prepare_kernel_params(params)

  def run(single_buffer_consts):
    if single_buffer_consts:
      def const(a):
        return pl.BlockSpec(a.shape, lambda i: (0, 0),
                            pipeline_mode=pl.Buffered(1))
    else:
      def const(a):
        return pl.BlockSpec(a.shape, lambda i: (0, 0))

    in_specs = [
        pl.BlockSpec((tile, 1), lambda i: (i, 0)),
        const(table), const(w_pix), const(big_w), const(small),
    ]
    out_specs = [
        pl.BlockSpec((tile, NUM_SYMBOLS), lambda i: (i, 0)),
        pl.BlockSpec((tile, NUM_SYMBOLS), lambda i: (i, 0)),
    ]
    out_shape = (
        jax.ShapeDtypeStruct((n_pad, NUM_SYMBOLS), jnp.bfloat16),
        jax.ShapeDtypeStruct((n_pad, NUM_SYMBOLS), jnp.bfloat16),
    )
    return pl.pallas_call(
        coltran_core_kernel,
        out_shape=out_shape,
        grid=(n_pad // tile,),
        in_specs=in_specs,
        out_specs=out_specs,
        compiler_params=pltpu.CompilerParams(
            dimension_semantics=("parallel",),
            vmem_limit_bytes=vmem_limit),
    )(packed, table, w_pix, big_w, small)

  try:
    # Constant weights single-buffered (they never change across the grid).
    enc_logits, dec_logits = run(single_buffer_consts=True)
  except Exception:
    # Fallback if this Pallas version rejects pipeline_mode=pl.Buffered(1).
    enc_logits, dec_logits = run(single_buffer_consts=False)

  if n_pad != N:
    enc_logits = enc_logits[:N]
    dec_logits = dec_logits[:N]

  # torch: logits.unsqueeze(-2) / enc_logits.unsqueeze(-2)
  dec_logits = dec_logits.reshape(B, H, W, 1, NUM_SYMBOLS)
  enc_logits = enc_logits.reshape(B, H, W, 1, NUM_SYMBOLS)
  # stage == 'encoder_decoder' -> parallel loss branch is active
  return dec_logits, {"encoder_logits": enc_logits}


if __name__ == "__main__":
  key = jax.random.PRNGKey(0)
  k_x, k_p = jax.random.split(key)
  B, H, W = 2, 16, 16
  # Integer-valued 8-bit RGB image stored as float32 (torch.mean needs float;
  # one_hot / convert_bits treat values as 8-bit integers).
  x = jax.random.randint(k_x, (B, H, W, 3), 0, 256).astype(jnp.float32)
  params = init_params(k_p)

  dec_logits, aux = coltran_core_forward(x, params)
  dec_logits = jax.block_until_ready(dec_logits)
  enc_logits = jax.block_until_ready(aux["encoder_logits"])

  assert dec_logits.shape == (B, H, W, 1, NUM_SYMBOLS)
  assert enc_logits.shape == (B, H, W, 1, NUM_SYMBOLS)
  assert bool(jnp.all(jnp.isfinite(dec_logits.astype(jnp.float32))))
  assert bool(jnp.all(jnp.isfinite(enc_logits.astype(jnp.float32))))
  print("KERNEL_OK")
</pallas_src>

<mosaic_0001>
module attributes {stable_mosaic.version = 11 : i64} {
  func.func @coltran_core_kernel(%arg0: i32, %arg1: memref<256x1xi32, #tpu.memory_space<vmem>>, %arg2: memref<256x640xbf16, #tpu.memory_space<vmem>>, %arg3: memref<512x128xbf16, #tpu.memory_space<vmem>>, %arg4: memref<128x768xbf16, #tpu.memory_space<vmem>>, %arg5: memref<8x512xf32, #tpu.memory_space<vmem>>, %arg6: memref<256x512xbf16, #tpu.memory_space<vmem>>, %arg7: memref<256x512xbf16, #tpu.memory_space<vmem>>) attributes {dimension_semantics = [#tpu.dimension_semantics<parallel>], iteration_bounds = array<i64: 2>, scalar_prefetch = 0 : i64, scratch_operands = 0 : i64, tpu.core_type = #tpu.core_type<tc>, window_params = [{transform_indices = @transform_0, window_bounds = array<i64: 256, 1>}, {pipeline_mode = #tpu.pipeline_mode<synchronous>, transform_indices = @transform_1, window_bounds = array<i64: 256, 640>}, {pipeline_mode = #tpu.pipeline_mode<synchronous>, transform_indices = @transform_2, window_bounds = array<i64: 512, 128>}, {pipeline_mode = #tpu.pipeline_mode<synchronous>, transform_indices = @transform_3, window_bounds = array<i64: 128, 768>}, {pipeline_mode = #tpu.pipeline_mode<synchronous>, transform_indices = @transform_4, window_bounds = array<i64: 8, 512>}, {transform_indices = @transform_5, window_bounds = array<i64: 256, 512>}, {transform_indices = @transform_6, window_bounds = array<i64: 256, 512>}]} {
    %c0 = arith.constant 0 : index
    %c0_0 = arith.constant 0 : index
    %0 = vector.load %arg1[%c0, %c0_0] : memref<256x1xi32, #tpu.memory_space<vmem>>, vector<256x1xi32>
    %c9_i32 = arith.constant 9 : i32
    %1 = vector.broadcast %c9_i32 : i32 to vector<256x1xi32>
    %2 = arith.shrsi %0, %1 : vector<256x1xi32>
    %c511_i32 = arith.constant 511 : i32
    %3 = vector.broadcast %c511_i32 : i32 to vector<256x1xi32>
    %4 = arith.andi %0, %3 : vector<256x1xi32>
    %5 = tpu.iota {dimensions = array<i32: 1>} : vector<256x256xi32>
    %6 = vector.broadcast %2 : vector<256x1xi32> to vector<256x256xi32>
    %7 = arith.cmpi eq, %6, %5 : vector<256x256xi32>
    %8 = arith.extui %7 : vector<256x256xi1> to vector<256x256xi32>
    %9 = arith.sitofp %8 : vector<256x256xi32> to vector<256x256xf32>
    %10 = arith.truncf %9 : vector<256x256xf32> to vector<256x256xbf16>
    %c0_1 = arith.constant 0 : index
    %c0_2 = arith.constant 0 : index
    %11 = vector.load %arg2[%c0_1, %c0_2] : memref<256x640xbf16, #tpu.memory_space<vmem>>, vector<256x640xbf16>
    %cst = arith.constant dense<0.000000e+00> : vector<256x640xf32>
    %12 = tpu.matmul %10, %11, %cst {dimension_numbers = #tpu.dot_dimension_numbers<[1], [0], [0], [1], [0, 0, 1, 1], [], []>} : vector<256x256xbf16>, vector<256x640xbf16>, vector<256x640xf32> -> vector<256x640xf32>
    %13 = vector.extract_strided_slice %12 {offsets = [0, 0], sizes = [256, 512], strides = [1, 1]} : vector<256x640xf32> to vector<256x512xf32>
    %14 = arith.truncf %13 : vector<256x512xf32> to vector<256x512xbf16>
    %c0_3 = arith.constant 0 : index
    %c0_4 = arith.constant 0 : index
    %15 = vector.load %arg6[%c0_3, %c0_4] : memref<256x512xbf16, #tpu.memory_space<vmem>>, vector<256x512xbf16>
    tpu.vector_store %arg6[%c0_3, %c0_4], %14 {strides = array<i32>} : memref<256x512xbf16, #tpu.memory_space<vmem>>, vector<256x512xbf16>,
    %16 = vector.extract_strided_slice %12 {offsets = [0, 512], sizes = [256, 128], strides = [1, 1]} : vector<256x640xf32> to vector<256x128xf32>
    %17 = tpu.iota {dimensions = array<i32: 1>} : vector<256x512xi32>
    %18 = vector.broadcast %4 : vector<256x1xi32> to vector<256x512xi32>
    %19 = arith.cmpi eq, %18, %17 : vector<256x512xi32>
    %20 = arith.extui %19 : vector<256x512xi1> to vector<256x512xi32>
    %21 = arith.sitofp %20 : vector<256x512xi32> to vector<256x512xf32>
    %22 = arith.truncf %21 : vector<256x512xf32> to vector<256x512xbf16>
    %c0_5 = arith.constant 0 : index
    %c0_6 = arith.constant 0 : index
    %23 = vector.load %arg3[%c0_5, %c0_6] : memref<512x128xbf16, #tpu.memory_space<vmem>>, vector<512x128xbf16>
    %cst_7 = arith.constant dense<0.000000e+00> : vector<256x128xf32>
    %24 = tpu.matmul %22, %23, %cst_7 {dimension_numbers = #tpu.dot_dimension_numbers<[1], [0], [0], [1], [0, 0, 1, 1], [], []>} : vector<256x512xbf16>, vector<512x128xbf16>, vector<256x128xf32> -> vector<256x128xf32>
    %c0_8 = arith.constant 0 : index
    %c0_9 = arith.constant 0 : index
    %25 = vector.load %arg4[%c0_8, %c0_9] : memref<128x768xbf16, #tpu.memory_space<vmem>>, vector<128x128xbf16>
    %c0_10 = arith.constant 0 : index
    %c128 = arith.constant 128 : index
    %26 = vector.load %arg4[%c0_10, %c128] : memref<128x768xbf16, #tpu.memory_space<vmem>>, vector<128x128xbf16>
    %c0_11 = arith.constant 0 : index
    %c256 = arith.constant 256 : index
    %27 = vector.load %arg4[%c0_11, %c256] : memref<128x768xbf16, #tpu.memory_space<vmem>>, vector<128x512xbf16>
    %c0_12 = arith.constant 0 : index
    %c0_13 = arith.constant 0 : index
    %28 = vector.load %arg5[%c0_12, %c0_13] : memref<8x512xf32, #tpu.memory_space<vmem>>, vector<1x512xf32>
    %c1 = arith.constant 1 : index
    %c0_14 = arith.constant 0 : index
    %29 = vector.load %arg5[%c1, %c0_14] : memref<8x512xf32, #tpu.memory_space<vmem>>, vector<1x128xf32>
    %c2 = arith.constant 2 : index
    %c0_15 = arith.constant 0 : index
    %30 = vector.load %arg5[%c2, %c0_15] : memref<8x512xf32, #tpu.memory_space<vmem>>, vector<1x128xf32>
    %c3 = arith.constant 3 : index
    %c0_16 = arith.constant 0 : index
    %31 = vector.load %arg5[%c3, %c0_16] : memref<8x512xf32, #tpu.memory_space<vmem>>, vector<1x128xf32>
    %c4 = arith.constant 4 : index
    %c0_17 = arith.constant 0 : index
    %32 = vector.load %arg5[%c4, %c0_17] : memref<8x512xf32, #tpu.memory_space<vmem>>, vector<1x128xf32>
    %33 = arith.addf %24, %16 : vector<256x128xf32>
    %34 = arith.truncf %33 : vector<256x128xf32> to vector<256x128xbf16>
    %cst_18 = arith.constant dense<0.000000e+00> : vector<256x128xf32>
    %35 = tpu.matmul %34, %25, %cst_18 {dimension_numbers = #tpu.dot_dimension_numbers<[1], [0], [0], [1], [0, 0, 1, 1], [], []>} : vector<256x128xbf16>, vector<128x128xbf16>, vector<256x128xf32> -> vector<256x128xf32>
    %36 = vector.broadcast %29 : vector<1x128xf32> to vector<256x128xf32>
    %37 = arith.addf %35, %36 : vector<256x128xf32>
    %cst_19 = arith.constant 0.000000e+00 : f32
    %38 = vector.broadcast %cst_19 : f32 to vector<256x128xf32>
    %39 = arith.maximumf %37, %38 : vector<256x128xf32>
    %40 = arith.addf %33, %39 : vector<256x128xf32>
    %41 = arith.addf %24, %40 : vector<256x128xf32>
    %42 = arith.addf %41, %16 : vector<256x128xf32>
    %43 = arith.truncf %42 : vector<256x128xf32> to vector<256x128xbf16>
    %cst_20 = arith.constant dense<0.000000e+00> : vector<256x128xf32>
    %44 = tpu.matmul %43, %26, %cst_20 {dimension_numbers = #tpu.dot_dimension_numbers<[1], [0], [0], [1], [0, 0, 1, 1], [], []>} : vector<256x128xbf16>, vector<128x128xbf16>, vector<256x128xf32> -> vector<256x128xf32>
    %45 = vector.broadcast %30 : vector<1x128xf32> to vector<256x128xf32>
    %46 = arith.addf %44, %45 : vector<256x128xf32>
    %cst_21 = arith.constant 0.000000e+00 : f32
    %47 = vector.broadcast %cst_21 : f32 to vector<256x128xf32>
    %48 = arith.maximumf %46, %47 : vector<256x128xf32>
    %49 = arith.addf %42, %48 : vector<256x128xf32>
    %50 = tpu.iota {dimensions = array<i32: 1>} : vector<1x128xi32>
    %c32_i32 = arith.constant 32 : i32
    %51 = vector.broadcast %c32_i32 : i32 to vector<1x128xi32>
    %52 = arith.cmpi slt, %50, %51 : vector<1x128xi32>
    %53 = arith.extui %52 : vector<1x128xi1> to vector<1x128xi32>
    %54 = arith.sitofp %53 : vector<1x128xi32> to vector<1x128xf32>
    %55 = vector.broadcast %54 : vector<1x128xf32> to vector<256x128xf32>
    %56 = arith.mulf %49, %55 : vector<256x128xf32>
    %cst_22 = arith.constant dense<0.000000e+00> : vector<256xf32>
    %57 = vector.multi_reduction <add>, %56, %cst_22 [1] : vector<256x128xf32> to vector<256xf32>
    %58 = vector.shape_cast %57 : vector<256xf32> to vector<256x1xf32>
    %cst_23 = arith.constant 3.125000e-02 : f32
    %59 = vector.broadcast %cst_23 : f32 to vector<256x1xf32>
    %60 = arith.mulf %58, %59 : vector<256x1xf32>
    %61 = vector.broadcast %60 : vector<256x1xf32> to vector<256x128xf32>
    %62 = arith.subf %49, %61 : vector<256x128xf32>
    %63 = vector.broadcast %54 : vector<1x128xf32> to vector<256x128xf32>
    %64 = arith.mulf %62, %63 : vector<256x128xf32>
    %65 = arith.mulf %64, %64 : vector<256x128xf32>
    %cst_24 = arith.constant dense<0.000000e+00> : vector<256xf32>
    %66 = vector.multi_reduction <add>, %65, %cst_24 [1] : vector<256x128xf32> to vector<256xf32>
    %67 = vector.shape_cast %66 : vector<256xf32> to vector<256x1xf32>
    %cst_25 = arith.constant 3.125000e-02 : f32
    %68 = vector.broadcast %cst_25 : f32 to vector<256x1xf32>
    %69 = arith.mulf %67, %68 : vector<256x1xf32>
    %cst_26 = arith.constant 9.99999974E-6 : f32
    %70 = vector.broadcast %cst_26 : f32 to vector<256x1xf32>
    %71 = arith.addf %69, %70 : vector<256x1xf32>
    %72 = math.rsqrt %71 : vector<256x1xf32>
    %73 = vector.broadcast %72 : vector<256x1xf32> to vector<256x128xf32>
    %74 = arith.mulf %64, %73 : vector<256x128xf32>
    %75 = vector.broadcast %31 : vector<1x128xf32> to vector<256x128xf32>
    %76 = arith.mulf %74, %75 : vector<256x128xf32>
    %77 = vector.broadcast %32 : vector<1x128xf32> to vector<256x128xf32>
    %78 = arith.addf %76, %77 : vector<256x128xf32>
    %79 = arith.truncf %78 : vector<256x128xf32> to vector<256x128xbf16>
    %cst_27 = arith.constant dense<0.000000e+00> : vector<256x512xf32>
    %80 = tpu.matmul %79, %27, %cst_27 {dimension_numbers = #tpu.dot_dimension_numbers<[1], [0], [0], [1], [0, 0, 1, 1], [], []>} : vector<256x128xbf16>, vector<128x512xbf16>, vector<256x512xf32> -> vector<256x512xf32>
    %81 = vector.broadcast %28 : vector<1x512xf32> to vector<256x512xf32>
    %82 = arith.addf %80, %81 : vector<256x512xf32>
    %83 = arith.truncf %82 : vector<256x512xf32> to vector<256x512xbf16>
    %c0_28 = arith.constant 0 : index
    %c0_29 = arith.constant 0 : index
    %84 = vector.load %arg7[%c0_28, %c0_29] : memref<256x512xbf16, #tpu.memory_space<vmem>>, vector<256x512xbf16>
    tpu.vector_store %arg7[%c0_28, %c0_29], %83 {strides = array<i32>} : memref<256x512xbf16, #tpu.memory_space<vmem>>, vector<256x512xbf16>,
    return
  }
  func.func @transform_0(%arg0: i32) -> (i32, i32) {
    %c0_i32 = arith.constant 0 : i32
    %c0_i32_0 = arith.constant 0 : i32
    return %arg0, %c0_i32 : i32, i32
  }
  func.func @transform_1(%arg0: i32) -> (i32, i32) {
    %c0_i32 = arith.constant 0 : i32
    %c0_i32_0 = arith.constant 0 : i32
    %c0_i32_1 = arith.constant 0 : i32
    return %c0_i32, %c0_i32_0 : i32, i32
  }
  func.func @transform_2(%arg0: i32) -> (i32, i32) {
    %c0_i32 = arith.constant 0 : i32
    %c0_i32_0 = arith.constant 0 : i32
    %c0_i32_1 = arith.constant 0 : i32
    return %c0_i32, %c0_i32_0 : i32, i32
  }
  func.func @transform_3(%arg0: i32) -> (i32, i32) {
    %c0_i32 = arith.constant 0 : i32
    %c0_i32_0 = arith.constant 0 : i32
    %c0_i32_1 = arith.constant 0 : i32
    return %c0_i32, %c0_i32_0 : i32, i32
  }
  func.func @transform_4(%arg0: i32) -> (i32, i32) {
    %c0_i32 = arith.constant 0 : i32
    %c0_i32_0 = arith.constant 0 : i32
    %c0_i32_1 = arith.constant 0 : i32
    return %c0_i32, %c0_i32_0 : i32, i32
  }
  func.func @transform_5(%arg0: i32) -> (i32, i32) {
    %c0_i32 = arith.constant 0 : i32
    %c0_i32_0 = arith.constant 0 : i32
    return %arg0, %c0_i32 : i32, i32
  }
  func.func @transform_6(%arg0: i32) -> (i32, i32) {
    %c0_i32 = arith.constant 0 : i32
    %c0_i32_0 = arith.constant 0 : i32
    return %arg0, %c0_i32 : i32, i32
  }
}

module attributes {stable_mosaic.version = 11 : i64} {
  func.func @coltran_core_kernel(%arg0: i32, %arg1: memref<256x1xi32, #tpu.memory_space<vmem>>, %arg2: memref<256x640xbf16, #tpu.memory_space<vmem>>, %arg3: memref<512x128xbf16, #tpu.memory_space<vmem>>, %arg4: memref<128x768xbf16, #tpu.memory_space<vmem>>, %arg5: memref<8x512xf32, #tpu.memory_space<vmem>>, %arg6: memref<256x512xbf16, #tpu.memory_space<vmem>>, %arg7: memref<256x512xbf16, #tpu.memory_space<vmem>>) attributes {dimension_semantics = [#tpu.dimension_semantics<parallel>], iteration_bounds = array<i64: 2>, scalar_prefetch = 0 : i64, scratch_operands = 0 : i64, tpu.core_type = #tpu.core_type<tc>, window_params = [{transform_indices = @transform_0, window_bounds = array<i64: 256, 1>}, {pipeline_mode = #tpu.pipeline_mode<synchronous>, transform_indices = @transform_1, window_bounds = array<i64: 256, 640>}, {pipeline_mode = #tpu.pipeline_mode<synchronous>, transform_indices = @transform_2, window_bounds = array<i64: 512, 128>}, {pipeline_mode = #tpu.pipeline_mode<synchronous>, transform_indices = @transform_3, window_bounds = array<i64: 128, 768>}, {pipeline_mode = #tpu.pipeline_mode<synchronous>, transform_indices = @transform_4, window_bounds = array<i64: 8, 512>}, {transform_indices = @transform_5, window_bounds = array<i64: 256, 512>}, {transform_indices = @transform_6, window_bounds = array<i64: 256, 512>}]} {
    %c0 = arith.constant 0 : index
    %c0_0 = arith.constant 0 : index
    %0 = vector.load %arg1[%c0, %c0_0] : memref<256x1xi32, #tpu.memory_space<vmem>>, vector<256x1xi32>
    %c9_i32 = arith.constant 9 : i32
    %1 = vector.broadcast %c9_i32 : i32 to vector<256x1xi32>
    %2 = arith.shrsi %0, %1 : vector<256x1xi32>
    %c511_i32 = arith.constant 511 : i32
    %3 = vector.broadcast %c511_i32 : i32 to vector<256x1xi32>
    %4 = arith.andi %0, %3 : vector<256x1xi32>
    %5 = tpu.iota {dimensions = array<i32: 1>} : vector<256x256xi32>
    %6 = vector.broadcast %2 : vector<256x1xi32> to vector<256x256xi32>
    %7 = arith.cmpi eq, %6, %5 : vector<256x256xi32>
    %8 = arith.extui %7 : vector<256x256xi1> to vector<256x256xi32>
    %9 = arith.sitofp %8 : vector<256x256xi32> to vector<256x256xf32>
    %10 = arith.truncf %9 : vector<256x256xf32> to vector<256x256xbf16>
    %c0_1 = arith.constant 0 : index
    %c0_2 = arith.constant 0 : index
    %11 = vector.load %arg2[%c0_1, %c0_2] : memref<256x640xbf16, #tpu.memory_space<vmem>>, vector<256x640xbf16>
    %cst = arith.constant dense<0.000000e+00> : vector<256x640xf32>
    %12 = tpu.matmul %10, %11, %cst {dimension_numbers = #tpu.dot_dimension_numbers<[1], [0], [0], [1], [0, 0, 1, 1], [], []>} : vector<256x256xbf16>, vector<256x640xbf16>, vector<256x640xf32> -> vector<256x640xf32>
    %13 = vector.extract_strided_slice %12 {offsets = [0, 0], sizes = [256, 512], strides = [1, 1]} : vector<256x640xf32> to vector<256x512xf32>
    %14 = arith.truncf %13 : vector<256x512xf32> to vector<256x512xbf16>
    %c0_3 = arith.constant 0 : index
    %c0_4 = arith.constant 0 : index
    %15 = vector.load %arg6[%c0_3, %c0_4] : memref<256x512xbf16, #tpu.memory_space<vmem>>, vector<256x512xbf16>
    tpu.vector_store %arg6[%c0_3, %c0_4], %14 {strides = array<i32>} : memref<256x512xbf16, #tpu.memory_space<vmem>>, vector<256x512xbf16>,
    %16 = vector.extract_strided_slice %12 {offsets = [0, 512], sizes = [256, 128], strides = [1, 1]} : vector<256x640xf32> to vector<256x128xf32>
    %17 = tpu.iota {dimensions = array<i32: 1>} : vector<256x512xi32>
    %18 = vector.broadcast %4 : vector<256x1xi32> to vector<256x512xi32>
    %19 = arith.cmpi eq, %18, %17 : vector<256x512xi32>
    %20 = arith.extui %19 : vector<256x512xi1> to vector<256x512xi32>
    %21 = arith.sitofp %20 : vector<256x512xi32> to vector<256x512xf32>
    %22 = arith.truncf %21 : vector<256x512xf32> to vector<256x512xbf16>
    %c0_5 = arith.constant 0 : index
    %c0_6 = arith.constant 0 : index
    %23 = vector.load %arg3[%c0_5, %c0_6] : memref<512x128xbf16, #tpu.memory_space<vmem>>, vector<512x128xbf16>
    %cst_7 = arith.constant dense<0.000000e+00> : vector<256x128xf32>
    %24 = tpu.matmul %22, %23, %cst_7 {dimension_numbers = #tpu.dot_dimension_numbers<[1], [0], [0], [1], [0, 0, 1, 1], [], []>} : vector<256x512xbf16>, vector<512x128xbf16>, vector<256x128xf32> -> vector<256x128xf32>
    %c0_8 = arith.constant 0 : index
    %c0_9 = arith.constant 0 : index
    %25 = vector.load %arg4[%c0_8, %c0_9] : memref<128x768xbf16, #tpu.memory_space<vmem>>, vector<128x128xbf16>
    %c0_10 = arith.constant 0 : index
    %c128 = arith.constant 128 : index
    %26 = vector.load %arg4[%c0_10, %c128] : memref<128x768xbf16, #tpu.memory_space<vmem>>, vector<128x128xbf16>
    %c0_11 = arith.constant 0 : index
    %c256 = arith.constant 256 : index
    %27 = vector.load %arg4[%c0_11, %c256] : memref<128x768xbf16, #tpu.memory_space<vmem>>, vector<128x512xbf16>
    %c0_12 = arith.constant 0 : index
    %c0_13 = arith.constant 0 : index
    %28 = vector.load %arg5[%c0_12, %c0_13] : memref<8x512xf32, #tpu.memory_space<vmem>>, vector<1x512xf32>
    %c1 = arith.constant 1 : index
    %c0_14 = arith.constant 0 : index
    %29 = vector.load %arg5[%c1, %c0_14] : memref<8x512xf32, #tpu.memory_space<vmem>>, vector<1x128xf32>
    %c2 = arith.constant 2 : index
    %c0_15 = arith.constant 0 : index
    %30 = vector.load %arg5[%c2, %c0_15] : memref<8x512xf32, #tpu.memory_space<vmem>>, vector<1x128xf32>
    %c3 = arith.constant 3 : index
    %c0_16 = arith.constant 0 : index
    %31 = vector.load %arg5[%c3, %c0_16] : memref<8x512xf32, #tpu.memory_space<vmem>>, vector<1x128xf32>
    %c4 = arith.constant 4 : index
    %c0_17 = arith.constant 0 : index
    %32 = vector.load %arg5[%c4, %c0_17] : memref<8x512xf32, #tpu.memory_space<vmem>>, vector<1x128xf32>
    %33 = arith.addf %24, %16 : vector<256x128xf32>
    %34 = arith.truncf %33 : vector<256x128xf32> to vector<256x128xbf16>
    %cst_18 = arith.constant dense<0.000000e+00> : vector<256x128xf32>
    %35 = tpu.matmul %34, %25, %cst_18 {dimension_numbers = #tpu.dot_dimension_numbers<[1], [0], [0], [1], [0, 0, 1, 1], [], []>} : vector<256x128xbf16>, vector<128x128xbf16>, vector<256x128xf32> -> vector<256x128xf32>
    %36 = vector.broadcast %29 : vector<1x128xf32> to vector<256x128xf32>
    %37 = arith.addf %35, %36 : vector<256x128xf32>
    %cst_19 = arith.constant 0.000000e+00 : f32
    %38 = vector.broadcast %cst_19 : f32 to vector<256x128xf32>
    %39 = arith.maximumf %37, %38 : vector<256x128xf32>
    %40 = arith.addf %33, %39 : vector<256x128xf32>
    %41 = arith.addf %24, %40 : vector<256x128xf32>
    %42 = arith.addf %41, %16 : vector<256x128xf32>
    %43 = arith.truncf %42 : vector<256x128xf32> to vector<256x128xbf16>
    %cst_20 = arith.constant dense<0.000000e+00> : vector<256x128xf32>
    %44 = tpu.matmul %43, %26, %cst_20 {dimension_numbers = #tpu.dot_dimension_numbers<[1], [0], [0], [1], [0, 0, 1, 1], [], []>} : vector<256x128xbf16>, vector<128x128xbf16>, vector<256x128xf32> -> vector<256x128xf32>
    %45 = vector.broadcast %30 : vector<1x128xf32> to vector<256x128xf32>
    %46 = arith.addf %44, %45 : vector<256x128xf32>
    %cst_21 = arith.constant 0.000000e+00 : f32
    %47 = vector.broadcast %cst_21 : f32 to vector<256x128xf32>
    %48 = arith.maximumf %46, %47 : vector<256x128xf32>
    %49 = arith.addf %42, %48 : vector<256x128xf32>
    %50 = tpu.iota {dimensions = array<i32: 1>} : vector<1x128xi32>
    %c32_i32 = arith.constant 32 : i32
    %51 = vector.broadcast %c32_i32 : i32 to vector<1x128xi32>
    %52 = arith.cmpi slt, %50, %51 : vector<1x128xi32>
    %53 = arith.extui %52 : vector<1x128xi1> to vector<1x128xi32>
    %54 = arith.sitofp %53 : vector<1x128xi32> to vector<1x128xf32>
    %55 = vector.broadcast %54 : vector<1x128xf32> to vector<256x128xf32>
    %56 = arith.mulf %49, %55 : vector<256x128xf32>
    %cst_22 = arith.constant dense<0.000000e+00> : vector<256xf32>
    %57 = vector.multi_reduction <add>, %56, %cst_22 [1] : vector<256x128xf32> to vector<256xf32>
    %58 = vector.shape_cast %57 : vector<256xf32> to vector<256x1xf32>
    %cst_23 = arith.constant 3.125000e-02 : f32
    %59 = vector.broadcast %cst_23 : f32 to vector<256x1xf32>
    %60 = arith.mulf %58, %59 : vector<256x1xf32>
    %61 = vector.broadcast %60 : vector<256x1xf32> to vector<256x128xf32>
    %62 = arith.subf %49, %61 : vector<256x128xf32>
    %63 = vector.broadcast %54 : vector<1x128xf32> to vector<256x128xf32>
    %64 = arith.mulf %62, %63 : vector<256x128xf32>
    %65 = arith.mulf %64, %64 : vector<256x128xf32>
    %cst_24 = arith.constant dense<0.000000e+00> : vector<256xf32>
    %66 = vector.multi_reduction <add>, %65, %cst_24 [1] : vector<256x128xf32> to vector<256xf32>
    %67 = vector.shape_cast %66 : vector<256xf32> to vector<256x1xf32>
    %cst_25 = arith.constant 3.125000e-02 : f32
    %68 = vector.broadcast %cst_25 : f32 to vector<256x1xf32>
    %69 = arith.mulf %67, %68 : vector<256x1xf32>
    %cst_26 = arith.constant 9.99999974E-6 : f32
    %70 = vector.broadcast %cst_26 : f32 to vector<256x1xf32>
    %71 = arith.addf %69, %70 : vector<256x1xf32>
    %72 = math.rsqrt %71 : vector<256x1xf32>
    %73 = vector.broadcast %72 : vector<256x1xf32> to vector<256x128xf32>
    %74 = arith.mulf %64, %73 : vector<256x128xf32>
    %75 = vector.broadcast %31 : vector<1x128xf32> to vector<256x128xf32>
    %76 = arith.mulf %74, %75 : vector<256x128xf32>
    %77 = vector.broadcast %32 : vector<1x128xf32> to vector<256x128xf32>
    %78 = arith.addf %76, %77 : vector<256x128xf32>
    %79 = arith.truncf %78 : vector<256x128xf32> to vector<256x128xbf16>
    %cst_27 = arith.constant dense<0.000000e+00> : vector<256x512xf32>
    %80 = tpu.matmul %79, %27, %cst_27 {dimension_numbers = #tpu.dot_dimension_numbers<[1], [0], [0], [1], [0, 0, 1, 1], [], []>} : vector<256x128xbf16>, vector<128x512xbf16>, vector<256x512xf32> -> vector<256x512xf32>
    %81 = vector.broadcast %28 : vector<1x512xf32> to vector<256x512xf32>
    %82 = arith.addf %80, %81 : vector<256x512xf32>
    %83 = arith.truncf %82 : vector<256x512xf32> to vector<256x512xbf16>
    %c0_28 = arith.constant 0 : index
    %c0_29 = arith.constant 0 : index
    %84 = vector.load %arg7[%c0_28, %c0_29] : memref<256x512xbf16, #tpu.memory_space<vmem>>, vector<256x512xbf16>
    tpu.vector_store %arg7[%c0_28, %c0_29], %83 {strides = array<i32>} : memref<256x512xbf16, #tpu.memory_space<vmem>>, vector<256x512xbf16>,
    return
  }
  func.func @transform_0(%arg0: i32) -> (i32, i32) {
    %c0_i32 = arith.constant 0 : i32
    %c0_i32_0 = arith.constant 0 : i32
    return %arg0, %c0_i32 : i32, i32
  }
  func.func @transform_1(%arg0: i32) -> (i32, i32) {
    %c0_i32 = arith.constant 0 : i32
    %c0_i32_0 = arith.constant 0 : i32
    %c0_i32_1 = arith.constant 0 : i32
    return %c0_i32, %c0_i32_0 : i32, i32
  }
  func.func @transform_2(%arg0: i32) -> (i32, i32) {
    %c0_i32 = arith.constant 0 : i32
    %c0_i32_0 = arith.constant 0 : i32
    %c0_i32_1 = arith.constant 0 : i32
    return %c0_i32, %c0_i32_0 : i32, i32
  }
  func.func @transform_3(%arg0: i32) -> (i32, i32) {
    %c0_i32 = arith.constant 0 : i32
    %c0_i32_0 = arith.constant 0 : i32
    %c0_i32_1 = arith.constant 0 : i32
    return %c0_i32, %c0_i32_0 : i32, i32
  }
  func.func @transform_4(%arg0: i32) -> (i32, i32) {
    %c0_i32 = arith.constant 0 : i32
    %c0_i32_0 = arith.constant 0 : i32
    %c0_i32_1 = arith.constant 0 : i32
    return %c0_i32, %c0_i32_0 : i32, i32
  }
  func.func @transform_5(%arg0: i32) -> (i32, i32) {
    %c0_i32 = arith.constant 0 : i32
    %c0_i32_0 = arith.constant 0 : i32
    return %arg0, %c0_i32 : i32, i32
  }
  func.func @transform_6(%arg0: i32) -> (i32, i32) {
    %c0_i32 = arith.constant 0 : i32
    %c0_i32_0 = arith.constant 0 : i32
    return %arg0, %c0_i32 : i32, i32
  }
}

</mosaic_0001>

<llo_original>
// kernel: tpu_custom_call.1
$region0: #{tpu_custom_call.1}
  #allocation0 [shape = 'u32[]', space=smem, size = 0x4, offset = 0x4, fixed_abs, tag = 'smem constant byte address 0x4 - core index']
  #allocation1 [shape = 'u32[144,128]{1,0:T(1,128)}', space=vmem, size = 0x12000, scoped, tag = 'internal scratch']
  %s0 = inlined_call_operand.vmem [shape: s32[512,1], index: 0, kind: input, shape index: {}]
  %s1 = inlined_call_operand.hbm [shape: bf16[256,640], index: 1, kind: input, shape index: {}]
  %s2 = inlined_call_operand.hbm [shape: bf16[512,128], index: 2, kind: input, shape index: {}]
  %s3 = inlined_call_operand.vmem [shape: bf16[128,768], index: 3, kind: input, shape index: {}]
  %s4 = inlined_call_operand.vmem [shape: f32[8,512], index: 4, kind: input, shape index: {}]
  %s5 = inlined_call_operand.hbm [shape: bf16[512,512], index: 5, kind: output, shape index: {0}]
  %s6 = inlined_call_operand.hbm [shape: bf16[512,512], index: 6, kind: output, shape index: {1}]
  %7 = xla_tuple %s5, %s6
  %s8 = sld [smem:[#allocation0]]
  $region69: #{tpu_custom_call.1} parent=0
    _
  %s10 = ssub.s32 1, %s8
  %s11 = scalar_select 0, %s10, %s8
  $region1: #{tpu_custom_call.1} parent=0
    #allocation2 [shape = 'u8[327680]{0}', space=vmem, size = 0x50000, scoped, tag = 'input window, operand 1, single buffered']
    #allocation3 [shape = 's32[2]{0}', space=sflag, size = 0x8, scoped, tag = 'scoped memory for tpu_custom_call.1']
    #allocation4 [shape = 's32[2]{0}', space=sflag, size = 0x8, scoped, tag = 'scoped memory for tpu_custom_call.1']
    #allocation5 [shape = 'u8[131072]{0}', space=vmem, size = 0x20000, scoped, tag = 'input window, operand 2, single buffered']
    #allocation6 [shape = 's32[1]{0}', space=sflag, size = 0x4, scoped, tag = 'scoped memory for tpu_custom_call.1']
    #allocation7 [shape = 'u8[524288]{0}', space=vmem, size = 0x80000, scoped, tag = 'output window, operand 0']
    #allocation8 [shape = 'u8[524288]{0}', space=vmem, size = 0x80000, scoped, tag = 'output window, operand 1']
    #allocation9 [shape = 's32[2]{0}', space=sflag, size = 0x8, scoped, tag = 'scoped memory for tpu_custom_call.1']
    %12 = vsyncpa [#allocation3], 0
    %13 = vsyncpa [#allocation6], 0
    %14 = vsyncpa [#allocation4], 0
    %s15 = scalar_lea.sflag [#allocation4], 1
    %16 = vsyncpa %s15, 0
    %17 = vsyncpa [#allocation9], 0
    %s18 = scalar_lea.sflag [#allocation9], 1
    %19 = vsyncpa %s18, 0
    loop: start=0, step=1, limit=4
    $region2: #{tpu_custom_call.1} parent=1 // loop_pre_header
      _
    $region3: #{tpu_custom_call.1} parent=1 // loop_header
      %s21 = sphi 0, %s25
      %p22 = scmp.ge.s32.totalorder %s21, 4
      %s31 = sphi 0, %s33
      %s34 = sphi 0, %s31
      %s35 = sphi 0, %s34
      %s51 = sphi 0, %s35
      %s55 = sphi 0, %s55
      %s57 = sphi 0, %s55
      %s58 = sphi 0, %s57
      %s72 = sphi 0, %s58
      %s76 = sphi 0, %s76
      %s78 = sphi 0, %s76
      %s79 = sphi 0, %s78
      %s93 = sphi 0, %s79
      %s97 = sphi 0, %s97
      %s99 = sphi 0, %s97
      %s100 = sphi 0, %s99
      %s114 = sphi 0, %s100
      %s118 = sphi 0, %s118
      %s120 = sphi 0, %s118
      %s121 = sphi 0, %s120
      %s135 = sphi 0, %s121
      %s141 = sphi 0, %s143
      %s144 = sphi 0, %s141
      %s145 = sphi 0, %s144
      %s161 = sphi 0, %s145
      %s167 = sphi 0, %s169
      %s170 = sphi 0, %s167
      %s171 = sphi 0, %s170
      %s187 = sphi 0, %s171
    $region4: #{tpu_custom_call.1} parent=1 // loop_header_branch
      %24 = sbr.rel (%p22) target = $region8
    $region5: #{tpu_custom_call.1} parent=1 // loop_body
      %s26 = ssub.s32 %s21, 1
      %s27 = ssub.s32 %s21, 2
      %s28 = sadd.s32 %s21, 1
      %s29 = ssub.s32 %s21, %s28
      %p30 = scmp.eq.s32.totalorder %s29, 0
      %s32 = sadd.s32 %s31, 1
      %s33 = scalar_select %p30, %s31, %s32
      %p36 = pneg %p30
      %p37 = scmp.eq.s32.totalorder %s21, 1
      %p38 = por %p36, %p37
      %p39 = scmp.ne.s32.totalorder %s31, %s34
      %p40 = scmp.eq.s32.totalorder %s21, 0
      %p41 = por %p39, %p40
      %p42 = scmp.ne.s32.totalorder %s31, %s34
      %p43 = scmp.eq.s32.totalorder %s26, 1
      %p44 = por %p42, %p43
      %p45 = scmp.ne.s32.totalorder %s34, %s35
      %p46 = scmp.eq.s32.totalorder %s26, 0
      %p47 = por %p45, %p46
      %p48 = scmp.ne.s32.totalorder %s34, %s35
      %p49 = scmp.eq.s32.totalorder %s27, 1
      %p50 = por %p48, %p49
      %p52 = scmp.ne.s32.totalorder %s35, %s51
      %p53 = scmp.eq.s32.totalorder %s27, 0
      %p54 = por %p52, %p53
      %s56 = sadd.s32 %s55, 1
      %p59 = scmp.eq.s32.totalorder %s21, 1
      %p60 = scmp.ne.s32.totalorder %s55, %s57
      %p61 = scmp.eq.s32.totalorder %s21, 0
      %p62 = por %p60, %p61
      %p63 = scmp.ne.s32.totalorder %s55, %s57
      %p64 = scmp.eq.s32.totalorder %s26, 1
      %p65 = por %p63, %p64
      %p66 = scmp.ne.s32.totalorder %s57, %s58
      %p67 = scmp.eq.s32.totalorder %s26, 0
      %p68 = por %p66, %p67
      %p69 = scmp.ne.s32.totalorder %s57, %s58
      %p70 = scmp.eq.s32.totalorder %s27, 1
      %p71 = por %p69, %p70
      %p73 = scmp.ne.s32.totalorder %s58, %s72
      %p74 = scmp.eq.s32.totalorder %s27, 0
      %p75 = por %p73, %p74
      %s77 = sadd.s32 %s76, 1
      %p80 = scmp.eq.s32.totalorder %s21, 1
      %p81 = scmp.ne.s32.totalorder %s76, %s78
      %p82 = scmp.eq.s32.totalorder %s21, 0
      %p83 = por %p81, %p82
      %p84 = scmp.ne.s32.totalorder %s76, %s78
      %p85 = scmp.eq.s32.totalorder %s26, 1
      %p86 = por %p84, %p85
      %p87 = scmp.ne.s32.totalorder %s78, %s79
      %p88 = scmp.eq.s32.totalorder %s26, 0
      %p89 = por %p87, %p88
      %p90 = scmp.ne.s32.totalorder %s78, %s79
      %p91 = scmp.eq.s32.totalorder %s27, 1
      %p92 = por %p90, %p91
      %p94 = scmp.ne.s32.totalorder %s79, %s93
      %p95 = scmp.eq.s32.totalorder %s27, 0
      %p96 = por %p94, %p95
      %s98 = sadd.s32 %s97, 1
      %p101 = scmp.eq.s32.totalorder %s21, 1
      %p102 = scmp.ne.s32.totalorder %s97, %s99
      %p103 = scmp.eq.s32.totalorder %s21, 0
      %p104 = por %p102, %p103
      %p105 = scmp.ne.s32.totalorder %s97, %s99
      %p106 = scmp.eq.s32.totalorder %s26, 1
      %p107 = por %p105, %p106
      %p108 = scmp.ne.s32.totalorder %s99, %s100
      %p109 = scmp.eq.s32.totalorder %s26, 0
      %p110 = por %p108, %p109
      %p111 = scmp.ne.s32.totalorder %s99, %s100
      %p112 = scmp.eq.s32.totalorder %s27, 1
      %p113 = por %p111, %p112
      %p115 = scmp.ne.s32.totalorder %s100, %s114
      %p116 = scmp.eq.s32.totalorder %s27, 0
      %p117 = por %p115, %p116
      %s119 = sadd.s32 %s118, 1
      %p122 = scmp.eq.s32.totalorder %s21, 1
      %p123 = scmp.ne.s32.totalorder %s118, %s120
      %p124 = scmp.eq.s32.totalorder %s21, 0
      %p125 = por %p123, %p124
      %p126 = scmp.ne.s32.totalorder %s118, %s120
      %p127 = scmp.eq.s32.totalorder %s26, 1
      %p128 = por %p126, %p127
      %p129 = scmp.ne.s32.totalorder %s120, %s121
      %p130 = scmp.eq.s32.totalorder %s26, 0
      %p131 = por %p129, %p130
      %p132 = scmp.ne.s32.totalorder %s120, %s121
      %p133 = scmp.eq.s32.totalorder %s27, 1
      %p134 = por %p132, %p133
      %p136 = scmp.ne.s32.totalorder %s121, %s135
      %p137 = scmp.eq.s32.totalorder %s27, 0
      %p138 = por %p136, %p137
      %s139 = ssub.s32 %s21, %s28
      %p140 = scmp.eq.s32.totalorder %s139, 0
      %s142 = sadd.s32 %s141, 1
      %s143 = scalar_select %p140, %s141, %s142
      %p146 = pneg %p140
      %p147 = scmp.eq.s32.totalorder %s21, 1
      %p148 = por %p146, %p147
      %p149 = scmp.ne.s32.totalorder %s141, %s144
      %p150 = scmp.eq.s32.totalorder %s21, 0
      %p151 = por %p149, %p150
      %p152 = scmp.ne.s32.totalorder %s141, %s144
      %p153 = scmp.eq.s32.totalorder %s26, 1
      %p154 = por %p152, %p153
      %p155 = scmp.ne.s32.totalorder %s144, %s145
      %p156 = scmp.eq.s32.totalorder %s26, 0
      %p157 = por %p155, %p156
      %p158 = scmp.ne.s32.totalorder %s144, %s145
      %p159 = scmp.eq.s32.totalorder %s27, 1
      %p160 = por %p158, %p159
      %p162 = scmp.ne.s32.totalorder %s145, %s161
      %p163 = scmp.eq.s32.totalorder %s27, 0
      %p164 = por %p162, %p163
      %s165 = ssub.s32 %s21, %s28
      %p166 = scmp.eq.s32.totalorder %s165, 0
      %s168 = sadd.s32 %s167, 1
      %s169 = scalar_select %p166, %s167, %s168
      %p172 = pneg %p166
      %p173 = scmp.eq.s32.totalorder %s21, 1
      %p174 = por %p172, %p173
      %p175 = scmp.ne.s32.totalorder %s167, %s170
      %p176 = scmp.eq.s32.totalorder %s21, 0
      %p177 = por %p175, %p176
      %p178 = scmp.ne.s32.totalorder %s167, %s170
      %p179 = scmp.eq.s32.totalorder %s26, 1
      %p180 = por %p178, %p179
      %p181 = scmp.ne.s32.totalorder %s170, %s171
      %p182 = scmp.eq.s32.totalorder %s26, 0
      %p183 = por %p181, %p182
      %p184 = scmp.ne.s32.totalorder %s170, %s171
      %p185 = scmp.eq.s32.totalorder %s27, 1
      %p186 = por %p184, %p185
      %p188 = scmp.ne.s32.totalorder %s171, %s187
      %p189 = scmp.eq.s32.totalorder %s27, 0
      %p190 = por %p188, %p189
      %p191 = scmp.le.s32.totalorder 1, %s21
      %p192 = scmp.lt.s32.totalorder %s21, 3
      %p193 = pnand %p191, %p192
      %p194 = pneg %p193
      // Predicated region
      $region9: #{tpu_custom_call.1} parent=5 // pred_check
        _
      $region10: #{tpu_custom_call.1} parent=5 // pred_check_branch
        %196 = sbr.rel (%p193) target = $region12
      $region11: #{tpu_custom_call.1} parent=5 // pred_region
        %s197 = ssub.s32 %s21, 1
        // Predicated region
        $region13: #{tpu_custom_call.1} parent=11 // pred_check
          %p198 = pneg %p68
        $region14: #{tpu_custom_call.1} parent=11 // pred_check_branch
          %200 = sbr.rel (%p198) target = $region16
        $region15: #{tpu_custom_call.1} parent=11 // pred_region
          %s202 = ssub.s32 10240, 10240
          %203 = vsyncadd [#allocation3], %s202
          %s204 = sshll.u32 [#allocation2], 4
          %s205 = int_to_ptr.vmem [resolvable:$true] %s204
          %210 = dma.hbm_to_vmem [thread:$0]  %s1, 10240, %s205, [#allocation3], 320, 320, 20
        $region16: #{tpu_custom_call.1} parent=11 // pred_fallthru
          _
        // Predicated region
        $region17: #{tpu_custom_call.1} parent=11 // pred_check
          %p211 = pneg %p89
        $region18: #{tpu_custom_call.1} parent=11 // pred_check_branch
          %213 = sbr.rel (%p211) target = $region20
        $region19: #{tpu_custom_call.1} parent=11 // pred_region
          %s215 = ssub.s32 4096, 4096
          %216 = vsyncadd [#allocation6], %s215
          %s217 = sshll.u32 [#allocation5], 4
          %s218 = int_to_ptr.vmem [resolvable:$true] %s217
          %223 = dma.hbm_to_vmem [thread:$0]  %s2, 4096, %s218, [#allocation6], 64, 64, 4
        $region20: #{tpu_custom_call.1} parent=11 // pred_fallthru
          _
        // Predicated region
        $region21: #{tpu_custom_call.1} parent=11 // pred_check
          %p224 = pneg %p110
        $region22: #{tpu_custom_call.1} parent=11 // pred_check_branch
          %226 = sbr.rel (%p224) target = $region24
        $region23: #{tpu_custom_call.1} parent=11 // pred_region
          _
        $region24: #{tpu_custom_call.1} parent=11 // pred_fallthru
          _
        // Predicated region
        $region25: #{tpu_custom_call.1} parent=11 // pred_check
          %p227 = pneg %p131
        $region26: #{tpu_custom_call.1} parent=11 // pred_check_branch
          %229 = sbr.rel (%p227) target = $region28
        $region27: #{tpu_custom_call.1} parent=11 // pred_region
          _
        $region28: #{tpu_custom_call.1} parent=11 // pred_fallthru
          _
      $region12: #{tpu_custom_call.1} parent=5 // pred_fallthru
        _
      %p230 = scmp.lt.s32.totalorder %s21, 2
      // Predicated region
      $region29: #{tpu_custom_call.1} parent=5 // pred_check
        %p231 = pneg %p230
      $region30: #{tpu_custom_call.1} parent=5 // pred_check_branch
        %233 = sbr.rel (%p231) target = $region32
      $region31: #{tpu_custom_call.1} parent=5 // pred_region
        // Predicated region
        $region33: #{tpu_custom_call.1} parent=31 // pred_check
          %p234 = pneg %p41
        $region34: #{tpu_custom_call.1} parent=31 // pred_check_branch
          %236 = sbr.rel (%p234) target = $region36
        $region35: #{tpu_custom_call.1} parent=31 // pred_region
          %s237 = smul.u32 32, %s21
          %p238 = scmp.lt.s32.totalorder %s237, 63
          %s239 = scalar_select %p238, %s237, 63
          %s240 = smul.addr %s239, 8
          %s241 = scalar_lea.vmem %s0, %s240
          %s242 = smul.u32 32, %s21
        $region36: #{tpu_custom_call.1} parent=31 // pred_fallthru
          _
      $region32: #{tpu_custom_call.1} parent=5 // pred_fallthru
        _
      %p243 = scmp.le.s32.totalorder 1, %s21
      %p244 = scmp.lt.s32.totalorder %s21, 3
      %p245 = pnand %p243, %p244
      %p246 = pneg %p245
      // Predicated region
      $region37: #{tpu_custom_call.1} parent=5 // pred_check
        _
      $region38: #{tpu_custom_call.1} parent=5 // pred_check_branch
        %248 = sbr.rel (%p245) target = $region40
      $region39: #{tpu_custom_call.1} parent=5 // pred_region
        %s249 = ssub.s32 %s21, 1
        // Predicated region
        $region41: #{tpu_custom_call.1} parent=39 // pred_check
          %p250 = pneg %p68
        $region42: #{tpu_custom_call.1} parent=39 // pred_check_branch
          %252 = sbr.rel (%p250) target = $region44
        $region43: #{tpu_custom_call.1} parent=39 // pred_region
          %253 = dma.done [#allocation3], 10240
        $region44: #{tpu_custom_call.1} parent=39 // pred_fallthru
          _
        // Predicated region
        $region45: #{tpu_custom_call.1} parent=39 // pred_check
          %p254 = pneg %p89
        $region46: #{tpu_custom_call.1} parent=39 // pred_check_branch
          %256 = sbr.rel (%p254) target = $region48
        $region47: #{tpu_custom_call.1} parent=39 // pred_region
          %257 = dma.done [#allocation6], 4096
        $region48: #{tpu_custom_call.1} parent=39 // pred_fallthru
          _
        %s258 = smul.u32 32, %s26
        %p259 = scmp.lt.s32.totalorder %s258, 63
        %s260 = scalar_select %p259, %s258, 63
        %s261 = smul.addr %s260, 8
        %s262 = scalar_lea.vmem %s0, %s261
        %p263 = pneg %p47
        %p264 = pneg %p44
        %p265 = pneg %p68
        %p266 = pneg %p65
        %p267 = pneg %p89
        %p268 = pneg %p86
        %p269 = pneg %p110
        %p270 = pneg %p107
        %p271 = pneg %p131
        %p272 = pneg %p128
        %p273 = pneg %p157
        %p274 = pneg %p154
        %s275 = sand.u32 %s144, 1
        %s276 = scalar_lea.sflag [#allocation4], %s275
        %s277 = sand.u32 %s144, 1
        %s278 = smul.addr %s277, 512
        %s279 = scalar_lea.vmem [#allocation7], %s278
        %p280 = pneg %p183
        %p281 = pneg %p180
        %s282 = sand.u32 %s170, 1
        %s283 = scalar_lea.sflag [#allocation9], %s282
        %s284 = sand.u32 %s170, 1
        %s285 = smul.addr %s284, 512
        %s286 = scalar_lea.vmem [#allocation8], %s285
        %s287 = smul.u32 32, %s26
        %p288 = scmp.lt.s32.totalorder %s287, 63
        %s289 = scalar_select %p288, %s287, 63
        %s290 = smul.addr %s289, 8
        %s291 = scalar_lea.vmem %s0, %s290
        %s292 = smul.u32 32, %s26
        %s293 = smul.u32 32, %s26
        %s294 = smul.u32 32, %s26
        %v296 = vld [vmem:[%s291] sm:$0xff]
        %v297 = vld [vmem:[%s291 + $0x8] sm:$0xff]
        %v298 = vld [vmem:[%s291 + $0x10] sm:$0xff]
        %v299 = vld [vmem:[%s291 + $0x18] sm:$0xff]
        %v300 = vld [vmem:[%s291 + $0x20] sm:$0xff]
        %v301 = vld [vmem:[%s291 + $0x28] sm:$0xff]
        %v302 = vld [vmem:[%s291 + $0x30] sm:$0xff]
        %v303 = vld [vmem:[%s291 + $0x38] sm:$0xff]
        %v304 = vld [vmem:[%s291 + $0x40] sm:$0xff]
        %v305 = vld [vmem:[%s291 + $0x48] sm:$0xff]
        %v306 = vld [vmem:[%s291 + $0x50] sm:$0xff]
        %v307 = vld [vmem:[%s291 + $0x58] sm:$0xff]
        %v308 = vld [vmem:[%s291 + $0x60] sm:$0xff]
        %v309 = vld [vmem:[%s291 + $0x68] sm:$0xff]
        %v310 = vld [vmem:[%s291 + $0x70] sm:$0xff]
        %v311 = vld [vmem:[%s291 + $0x78] sm:$0xff]
        %v312 = vld [vmem:[%s291 + $0x80] sm:$0xff]
        %v313 = vld [vmem:[%s291 + $0x88] sm:$0xff]
        %v314 = vld [vmem:[%s291 + $0x90] sm:$0xff]
        %v315 = vld [vmem:[%s291 + $0x98] sm:$0xff]
        %v316 = vld [vmem:[%s291 + $0xa0] sm:$0xff]
        %v317 = vld [vmem:[%s291 + $0xa8] sm:$0xff]
        %v318 = vld [vmem:[%s291 + $0xb0] sm:$0xff]
        %v319 = vld [vmem:[%s291 + $0xb8] sm:$0xff]
        %v320 = vld [vmem:[%s291 + $0xc0] sm:$0xff]
        %v321 = vld [vmem:[%s291 + $0xc8] sm:$0xff]
        %v322 = vld [vmem:[%s291 + $0xd0] sm:$0xff]
        %v323 = vld [vmem:[%s291 + $0xd8] sm:$0xff]
        %v324 = vld [vmem:[%s291 + $0xe0] sm:$0xff]
        %v325 = vld [vmem:[%s291 + $0xe8] sm:$0xff]
        %v326 = vld [vmem:[%s291 + $0xf0] sm:$0xff]
        %v327 = vld [vmem:[%s291 + $0xf8] sm:$0xff]
        %v328 = vshra.s32 %v296, 9
        %v329 = vshra.s32 %v297, 9
        %v330 = vshra.s32 %v298, 9
        %v331 = vshra.s32 %v299, 9
        %v332 = vshra.s32 %v300, 9
        %v333 = vshra.s32 %v301, 9
        %v334 = vshra.s32 %v302, 9
        %v335 = vshra.s32 %v303, 9
        %v336 = vshra.s32 %v304, 9
        %v337 = vshra.s32 %v305, 9
        %v338 = vshra.s32 %v306, 9
        %v339 = vshra.s32 %v307, 9
        %v340 = vshra.s32 %v308, 9
        %v341 = vshra.s32 %v309, 9
        %v342 = vshra.s32 %v310, 9
        %v343 = vshra.s32 %v311, 9
        %v344 = vshra.s32 %v312, 9
        %v345 = vshra.s32 %v313, 9
        %v346 = vshra.s32 %v314, 9
        %v347 = vshra.s32 %v315, 9
        %v348 = vshra.s32 %v316, 9
        %v349 = vshra.s32 %v317, 9
        %v350 = vshra.s32 %v318, 9
        %v351 = vshra.s32 %v319, 9
        %v352 = vshra.s32 %v320, 9
        %v353 = vshra.s32 %v321, 9
        %v354 = vshra.s32 %v322, 9
        %v355 = vshra.s32 %v323, 9
        %v356 = vshra.s32 %v324, 9
        %v357 = vshra.s32 %v325, 9
        %v358 = vshra.s32 %v326, 9
        %v359 = vshra.s32 %v327, 9
        %v360 = vand.u32 %v296, 511
        %v361 = vand.u32 %v297, 511
        %v362 = vand.u32 %v298, 511
        %v363 = vand.u32 %v299, 511
        %v364 = vand.u32 %v300, 511
        %v365 = vand.u32 %v301, 511
        %v366 = vand.u32 %v302, 511
        %v367 = vand.u32 %v303, 511
        %v368 = vand.u32 %v304, 511
        %v369 = vand.u32 %v305, 511
        %v370 = vand.u32 %v306, 511
        %v371 = vand.u32 %v307, 511
        %v372 = vand.u32 %v308, 511
        %v373 = vand.u32 %v309, 511
        %v374 = vand.u32 %v310, 511
        %v375 = vand.u32 %v311, 511
        %v376 = vand.u32 %v312, 511
        %v377 = vand.u32 %v313, 511
        %v378 = vand.u32 %v314, 511
        %v379 = vand.u32 %v315, 511
        %v380 = vand.u32 %v316, 511
        %v381 = vand.u32 %v317, 511
        %v382 = vand.u32 %v318, 511
        %v383 = vand.u32 %v319, 511
        %v384 = vand.u32 %v320, 511
        %v385 = vand.u32 %v321, 511
        %v386 = vand.u32 %v322, 511
        %v387 = vand.u32 %v323, 511
        %v388 = vand.u32 %v324, 511
        %v389 = vand.u32 %v325, 511
        %v390 = vand.u32 %v326, 511
        %v391 = vand.u32 %v327, 511
        %v392 = vlaneseq
        %v393 = vand.u32 %v392, 127
        %v394 = vadd.s32 %v393, 128
        %395 = vset.pattern.permute.xlu0 0
        %396 = vperm.xlu0 %395, %v328
        %v397 = vpop.permute.xlu0 %396
        %398 = vset.pattern.permute.xlu0 0
        %399 = vperm.xlu0 %398, %v329
        %v400 = vpop.permute.xlu0 %399
        %401 = vset.pattern.permute.xlu0 0
        %402 = vperm.xlu0 %401, %v330
        %v403 = vpop.permute.xlu0 %402
        %404 = vset.pattern.permute.xlu0 0
        %405 = vperm.xlu0 %404, %v331
        %v406 = vpop.permute.xlu0 %405
        %407 = vset.pattern.permute.xlu0 0
        %408 = vperm.xlu0 %407, %v332
        %v409 = vpop.permute.xlu0 %408
        %410 = vset.pattern.permute.xlu0 0
        %411 = vperm.xlu0 %410, %v333
        %v412 = vpop.permute.xlu0 %411
        %413 = vset.pattern.permute.xlu0 0
        %414 = vperm.xlu0 %413, %v334
        %v415 = vpop.permute.xlu0 %414
        %416 = vset.pattern.permute.xlu0 0
        %417 = vperm.xlu0 %416, %v335
        %v418 = vpop.permute.xlu0 %417
        %419 = vset.pattern.permute.xlu0 0
        %420 = vperm.xlu0 %419, %v336
        %v421 = vpop.permute.xlu0 %420
        %422 = vset.pattern.permute.xlu0 0
        %423 = vperm.xlu0 %422, %v337
        %v424 = vpop.permute.xlu0 %423
        %425 = vset.pattern.permute.xlu0 0
        %426 = vperm.xlu0 %425, %v338
        %v427 = vpop.permute.xlu0 %426
        %428 = vset.pattern.permute.xlu0 0
        %429 = vperm.xlu0 %428, %v339
        %v430 = vpop.permute.xlu0 %429
        %431 = vset.pattern.permute.xlu0 0
        %432 = vperm.xlu0 %431, %v340
        %v433 = vpop.permute.xlu0 %432
        %434 = vset.pattern.permute.xlu0 0
        %435 = vperm.xlu0 %434, %v341
        %v436 = vpop.permute.xlu0 %435
        %437 = vset.pattern.permute.xlu0 0
        %438 = vperm.xlu0 %437, %v342
        %v439 = vpop.permute.xlu0 %438
        %440 = vset.pattern.permute.xlu0 0
        %441 = vperm.xlu0 %440, %v343
        %v442 = vpop.permute.xlu0 %441
        %443 = vset.pattern.permute.xlu0 0
        %444 = vperm.xlu0 %443, %v344
        %v445 = vpop.permute.xlu0 %444
        %446 = vset.pattern.permute.xlu0 0
        %447 = vperm.xlu0 %446, %v345
        %v448 = vpop.permute.xlu0 %447
        %449 = vset.pattern.permute.xlu0 0
        %450 = vperm.xlu0 %449, %v346
        %v451 = vpop.permute.xlu0 %450
        %452 = vset.pattern.permute.xlu0 0
        %453 = vperm.xlu0 %452, %v347
        %v454 = vpop.permute.xlu0 %453
        %455 = vset.pattern.permute.xlu0 0
        %456 = vperm.xlu0 %455, %v348
        %v457 = vpop.permute.xlu0 %456
        %458 = vset.pattern.permute.xlu0 0
        %459 = vperm.xlu0 %458, %v349
        %v460 = vpop.permute.xlu0 %459
        %461 = vset.pattern.permute.xlu0 0
        %462 = vperm.xlu0 %461, %v350
        %v463 = vpop.permute.xlu0 %462
        %464 = vset.pattern.permute.xlu0 0
        %465 = vperm.xlu0 %464, %v351
        %v466 = vpop.permute.xlu0 %465
        %467 = vset.pattern.permute.xlu0 0
        %468 = vperm.xlu0 %467, %v352
        %v469 = vpop.permute.xlu0 %468
        %470 = vset.pattern.permute.xlu0 0
        %471 = vperm.xlu0 %470, %v353
        %v472 = vpop.permute.xlu0 %471
        %473 = vset.pattern.permute.xlu0 0
        %474 = vperm.xlu0 %473, %v354
        %v475 = vpop.permute.xlu0 %474
        %476 = vset.pattern.permute.xlu0 0
        %477 = vperm.xlu0 %476, %v355
        %v478 = vpop.permute.xlu0 %477
        %479 = vset.pattern.permute.xlu0 0
        %480 = vperm.xlu0 %479, %v356
        %v481 = vpop.permute.xlu0 %480
        %482 = vset.pattern.permute.xlu0 0
        %483 = vperm.xlu0 %482, %v357
        %v484 = vpop.permute.xlu0 %483
        %485 = vset.pattern.permute.xlu0 0
        %486 = vperm.xlu0 %485, %v358
        %v487 = vpop.permute.xlu0 %486
        %488 = vset.pattern.permute.xlu0 0
        %489 = vperm.xlu0 %488, %v359
        %v490 = vpop.permute.xlu0 %489
        %vm491 = vcmp.eq.s32.totalorder %v397, %v393
        %vm492 = vcmp.eq.s32.totalorder %v397, %v394
        %vm493 = vcmp.eq.s32.totalorder %v400, %v393
        %vm494 = vcmp.eq.s32.totalorder %v400, %v394
        %vm495 = vcmp.eq.s32.totalorder %v403, %v393
        %vm496 = vcmp.eq.s32.totalorder %v403, %v394
        %vm497 = vcmp.eq.s32.totalorder %v406, %v393
        %vm498 = vcmp.eq.s32.totalorder %v406, %v394
        %vm499 = vcmp.eq.s32.totalorder %v409, %v393
        %vm500 = vcmp.eq.s32.totalorder %v409, %v394
        %vm501 = vcmp.eq.s32.totalorder %v412, %v393
        %vm502 = vcmp.eq.s32.totalorder %v412, %v394
        %vm503 = vcmp.eq.s32.totalorder %v415, %v393
        %vm504 = vcmp.eq.s32.totalorder %v415, %v394
        %vm505 = vcmp.eq.s32.totalorder %v418, %v393
        %vm506 = vcmp.eq.s32.totalorder %v418, %v394
        %vm507 = vcmp.eq.s32.totalorder %v421, %v393
        %vm508 = vcmp.eq.s32.totalorder %v421, %v394
        %vm509 = vcmp.eq.s32.totalorder %v424, %v393
        %vm510 = vcmp.eq.s32.totalorder %v424, %v394
        %vm511 = vcmp.eq.s32.totalorder %v427, %v393
        %vm512 = vcmp.eq.s32.totalorder %v427, %v394
        %vm513 = vcmp.eq.s32.totalorder %v430, %v393
        %vm514 = vcmp.eq.s32.totalorder %v430, %v394
        %vm515 = vcmp.eq.s32.totalorder %v433, %v393
        %vm516 = vcmp.eq.s32.totalorder %v433, %v394
        %vm517 = vcmp.eq.s32.totalorder %v436, %v393
        %vm518 = vcmp.eq.s32.totalorder %v436, %v394
        %vm519 = vcmp.eq.s32.totalorder %v439, %v393
        %vm520 = vcmp.eq.s32.totalorder %v439, %v394
        %vm521 = vcmp.eq.s32.totalorder %v442, %v393
        %vm522 = vcmp.eq.s32.totalorder %v442, %v394
        %vm523 = vcmp.eq.s32.totalorder %v445, %v393
        %vm524 = vcmp.eq.s32.totalorder %v445, %v394
        %vm525 = vcmp.eq.s32.totalorder %v448, %v393
        %vm526 = vcmp.eq.s32.totalorder %v448, %v394
        %vm527 = vcmp.eq.s32.totalorder %v451, %v393
        %vm528 = vcmp.eq.s32.totalorder %v451, %v394
        %vm529 = vcmp.eq.s32.totalorder %v454, %v393
        %vm530 = vcmp.eq.s32.totalorder %v454, %v394
        %vm531 = vcmp.eq.s32.totalorder %v457, %v393
        %vm532 = vcmp.eq.s32.totalorder %v457, %v394
        %vm533 = vcmp.eq.s32.totalorder %v460, %v393
        %vm534 = vcmp.eq.s32.totalorder %v460, %v394
        %vm535 = vcmp.eq.s32.totalorder %v463, %v393
        %vm536 = vcmp.eq.s32.totalorder %v463, %v394
        %vm537 = vcmp.eq.s32.totalorder %v466, %v393
        %vm538 = vcmp.eq.s32.totalorder %v466, %v394
        %vm539 = vcmp.eq.s32.totalorder %v469, %v393
        %vm540 = vcmp.eq.s32.totalorder %v469, %v394
        %vm541 = vcmp.eq.s32.totalorder %v472, %v393
        %vm542 = vcmp.eq.s32.totalorder %v472, %v394
        %vm543 = vcmp.eq.s32.totalorder %v475, %v393
        %vm544 = vcmp.eq.s32.totalorder %v475, %v394
        %vm545 = vcmp.eq.s32.totalorder %v478, %v393
        %vm546 = vcmp.eq.s32.totalorder %v478, %v394
        %vm547 = vcmp.eq.s32.totalorder %v481, %v393
        %vm548 = vcmp.eq.s32.totalorder %v481, %v394
        %vm549 = vcmp.eq.s32.totalorder %v484, %v393
        %vm550 = vcmp.eq.s32.totalorder %v484, %v394
        %vm551 = vcmp.eq.s32.totalorder %v487, %v393
        %vm552 = vcmp.eq.s32.totalorder %v487, %v394
        %vm553 = vcmp.eq.s32.totalorder %v490, %v393
        %vm554 = vcmp.eq.s32.totalorder %v490, %v394
        %v555 = vsel %vm491, 1, 0
        %v556 = vsel %vm492, 1, 0
        %v557 = vsel %vm493, 1, 0
        %v558 = vsel %vm494, 1, 0
        %v559 = vsel %vm495, 1, 0
        %v560 = vsel %vm496, 1, 0
        %v561 = vsel %vm497, 1, 0
        %v562 = vsel %vm498, 1, 0
        %v563 = vsel %vm499, 1, 0
        %v564 = vsel %vm500, 1, 0
        %v565 = vsel %vm501, 1, 0
        %v566 = vsel %vm502, 1, 0
        %v567 = vsel %vm503, 1, 0
        %v568 = vsel %vm504, 1, 0
        %v569 = vsel %vm505, 1, 0
        %v570 = vsel %vm506, 1, 0
        %v571 = vsel %vm507, 1, 0
        %v572 = vsel %vm508, 1, 0
        %v573 = vsel %vm509, 1, 0
        %v574 = vsel %vm510, 1, 0
        %v575 = vsel %vm511, 1, 0
        %v576 = vsel %vm512, 1, 0
        %v577 = vsel %vm513, 1, 0
        %v578 = vsel %vm514, 1, 0
        %v579 = vsel %vm515, 1, 0
        %v580 = vsel %vm516, 1, 0
        %v581 = vsel %vm517, 1, 0
        %v582 = vsel %vm518, 1, 0
        %v583 = vsel %vm519, 1, 0
        %v584 = vsel %vm520, 1, 0
        %v585 = vsel %vm521, 1, 0
        %v586 = vsel %vm522, 1, 0
        %v587 = vsel %vm523, 1, 0
        %v588 = vsel %vm524, 1, 0
        %v589 = vsel %vm525, 1, 0
        %v590 = vsel %vm526, 1, 0
        %v591 = vsel %vm527, 1, 0
        %v592 = vsel %vm528, 1, 0
        %v593 = vsel %vm529, 1, 0
        %v594 = vsel %vm530, 1, 0
        %v595 = vsel %vm531, 1, 0
        %v596 = vsel %vm532, 1, 0
        %v597 = vsel %vm533, 1, 0
        %v598 = vsel %vm534, 1, 0
        %v599 = vsel %vm535, 1, 0
        %v600 = vsel %vm536, 1, 0
        %v601 = vsel %vm537, 1, 0
        %v602 = vsel %vm538, 1, 0
        %v603 = vsel %vm539, 1, 0
        %v604 = vsel %vm540, 1, 0
        %v605 = vsel %vm541, 1, 0
        %v606 = vsel %vm542, 1, 0
        %v607 = vsel %vm543, 1, 0
        %v608 = vsel %vm544, 1, 0
        %v609 = vsel %vm545, 1, 0
        %v610 = vsel %vm546, 1, 0
        %v611 = vsel %vm547, 1, 0
        %v612 = vsel %vm548, 1, 0
        %v613 = vsel %vm549, 1, 0
        %v614 = vsel %vm550, 1, 0
        %v615 = vsel %vm551, 1, 0
        %v616 = vsel %vm552, 1, 0
        %v617 = vsel %vm553, 1, 0
        %v618 = vsel %vm554, 1, 0
        %v619 = vcvt.s32.f32 %v555
        %v620 = vcvt.s32.f32 %v556
        %v621 = vcvt.s32.f32 %v557
        %v622 = vcvt.s32.f32 %v558
        %v623 = vcvt.s32.f32 %v559
        %v624 = vcvt.s32.f32 %v560
        %v625 = vcvt.s32.f32 %v561
        %v626 = vcvt.s32.f32 %v562
        %v627 = vcvt.s32.f32 %v563
        %v628 = vcvt.s32.f32 %v564
        %v629 = vcvt.s32.f32 %v565
        %v630 = vcvt.s32.f32 %v566
        %v631 = vcvt.s32.f32 %v567
        %v632 = vcvt.s32.f32 %v568
        %v633 = vcvt.s32.f32 %v569
        %v634 = vcvt.s32.f32 %v570
        %v635 = vcvt.s32.f32 %v571
        %v636 = vcvt.s32.f32 %v572
        %v637 = vcvt.s32.f32 %v573
        %v638 = vcvt.s32.f32 %v574
        %v639 = vcvt.s32.f32 %v575
        %v640 = vcvt.s32.f32 %v576
        %v641 = vcvt.s32.f32 %v577
        %v642 = vcvt.s32.f32 %v578
        %v643 = vcvt.s32.f32 %v579
        %v644 = vcvt.s32.f32 %v580
        %v645 = vcvt.s32.f32 %v581
        %v646 = vcvt.s32.f32 %v582
        %v647 = vcvt.s32.f32 %v583
        %v648 = vcvt.s32.f32 %v584
        %v649 = vcvt.s32.f32 %v585
        %v650 = vcvt.s32.f32 %v586
        %v651 = vcvt.s32.f32 %v587
        %v652 = vcvt.s32.f32 %v588
        %v653 = vcvt.s32.f32 %v589
        %v654 = vcvt.s32.f32 %v590
        %v655 = vcvt.s32.f32 %v591
        %v656 = vcvt.s32.f32 %v592
        %v657 = vcvt.s32.f32 %v593
        %v658 = vcvt.s32.f32 %v594
        %v659 = vcvt.s32.f32 %v595
        %v660 = vcvt.s32.f32 %v596
        %v661 = vcvt.s32.f32 %v597
        %v662 = vcvt.s32.f32 %v598
        %v663 = vcvt.s32.f32 %v599
        %v664 = vcvt.s32.f32 %v600
        %v665 = vcvt.s32.f32 %v601
        %v666 = vcvt.s32.f32 %v602
        %v667 = vcvt.s32.f32 %v603
        %v668 = vcvt.s32.f32 %v604
        %v669 = vcvt.s32.f32 %v605
        %v670 = vcvt.s32.f32 %v606
        %v671 = vcvt.s32.f32 %v607
        %v672 = vcvt.s32.f32 %v608
        %v673 = vcvt.s32.f32 %v609
        %v674 = vcvt.s32.f32 %v610
        %v675 = vcvt.s32.f32 %v611
        %v676 = vcvt.s32.f32 %v612
        %v677 = vcvt.s32.f32 %v613
        %v678 = vcvt.s32.f32 %v614
        %v679 = vcvt.s32.f32 %v615
        %v680 = vcvt.s32.f32 %v616
        %v681 = vcvt.s32.f32 %v617
        %v682 = vcvt.s32.f32 %v618
        %v683 = vpack.c.bf16 %v621, %v619
        %v684 = vpack.c.bf16 %v622, %v620
        %v685 = vpack.c.bf16 %v625, %v623
        %v686 = vpack.c.bf16 %v626, %v624
        %v687 = vpack.c.bf16 %v629, %v627
        %v688 = vpack.c.bf16 %v630, %v628
        %v689 = vpack.c.bf16 %v633, %v631
        %v690 = vpack.c.bf16 %v634, %v632
        %v691 = vpack.c.bf16 %v637, %v635
        %v692 = vpack.c.bf16 %v638, %v636
        %v693 = vpack.c.bf16 %v641, %v639
        %v694 = vpack.c.bf16 %v642, %v640
        %v695 = vpack.c.bf16 %v645, %v643
        %v696 = vpack.c.bf16 %v646, %v644
        %v697 = vpack.c.bf16 %v649, %v647
        %v698 = vpack.c.bf16 %v650, %v648
        %v699 = vpack.c.bf16 %v653, %v651
        %v700 = vpack.c.bf16 %v654, %v652
        %v701 = vpack.c.bf16 %v657, %v655
        %v702 = vpack.c.bf16 %v658, %v656
        %v703 = vpack.c.bf16 %v661, %v659
        %v704 = vpack.c.bf16 %v662, %v660
        %v705 = vpack.c.bf16 %v665, %v663
        %v706 = vpack.c.bf16 %v666, %v664
        %v707 = vpack.c.bf16 %v669, %v667
        %v708 = vpack.c.bf16 %v670, %v668
        %v709 = vpack.c.bf16 %v673, %v671
        %v710 = vpack.c.bf16 %v674, %v672
        %v711 = vpack.c.bf16 %v677, %v675
        %v712 = vpack.c.bf16 %v678, %v676
        %v713 = vpack.c.bf16 %v681, %v679
        %v714 = vpack.c.bf16 %v682, %v680
        %v715 = vld [vmem:[#allocation2] sm:$0xff]
        %v716 = vld [vmem:[#allocation2 + $0x8] sm:$0xff]
        %v717 = vld [vmem:[#allocation2 + $0x10] sm:$0xf]
        %v718 = vld [vmem:[#allocation2 + $0x14] sm:$0xff]
        %v719 = vld [vmem:[#allocation2 + $0x1c] sm:$0xff]
        %v720 = vld [vmem:[#allocation2 + $0x24] sm:$0xf]
        %v721 = vld [vmem:[#allocation2 + $0x28] sm:$0xff]
        %v722 = vld [vmem:[#allocation2 + $0x30] sm:$0xff]
        %v723 = vld [vmem:[#allocation2 + $0x38] sm:$0xf]
        %v724 = vld [vmem:[#allocation2 + $0x3c] sm:$0xff]
        %v725 = vld [vmem:[#allocation2 + $0x44] sm:$0xff]
        %v726 = vld [vmem:[#allocation2 + $0x4c] sm:$0xf]
        %v727 = vld [vmem:[#allocation2 + $0x50] sm:$0xff]
        %v728 = vld [vmem:[#allocation2 + $0x58] sm:$0xff]
        %v729 = vld [vmem:[#allocation2 + $0x60] sm:$0xf]
        %v730 = vld [vmem:[#allocation2 + $0x64] sm:$0xff]
        %v731 = vld [vmem:[#allocation2 + $0x6c] sm:$0xff]
        %v732 = vld [vmem:[#allocation2 + $0x74] sm:$0xf]
        %v733 = vld [vmem:[#allocation2 + $0x78] sm:$0xff]
        %v734 = vld [vmem:[#allocation2 + $0x80] sm:$0xff]
        %v735 = vld [vmem:[#allocation2 + $0x88] sm:$0xf]
        %v736 = vld [vmem:[#allocation2 + $0x8c] sm:$0xff]
        %v737 = vld [vmem:[#allocation2 + $0x94] sm:$0xff]
        %v738 = vld [vmem:[#allocation2 + $0x9c] sm:$0xf]
        %v739 = vld [vmem:[#allocation2 + $0xa0] sm:$0xff]
        %v740 = vld [vmem:[#allocation2 + $0xa8] sm:$0xff]
        %v741 = vld [vmem:[#allocation2 + $0xb0] sm:$0xf]
        %v742 = vld [vmem:[#allocation2 + $0xb4] sm:$0xff]
        %v743 = vld [vmem:[#allocation2 + $0xbc] sm:$0xff]
        %v744 = vld [vmem:[#allocation2 + $0xc4] sm:$0xf]
        %v745 = vld [vmem:[#allocation2 + $0xc8] sm:$0xff]
        %v746 = vld [vmem:[#allocation2 + $0xd0] sm:$0xff]
        %v747 = vld [vmem:[#allocation2 + $0xd8] sm:$0xf]
        %v748 = vld [vmem:[#allocation2 + $0xdc] sm:$0xff]
        %v749 = vld [vmem:[#allocation2 + $0xe4] sm:$0xff]
        %v750 = vld [vmem:[#allocation2 + $0xec] sm:$0xf]
        %v751 = vld [vmem:[#allocation2 + $0xf0] sm:$0xff]
        %v752 = vld [vmem:[#allocation2 + $0xf8] sm:$0xff]
        %v753 = vld [vmem:[#allocation2 + $0x100] sm:$0xf]
        %v754 = vld [vmem:[#allocation2 + $0x104] sm:$0xff]
        %v755 = vld [vmem:[#allocation2 + $0x10c] sm:$0xff]
        %v756 = vld [vmem:[#allocation2 + $0x114] sm:$0xf]
        %v757 = vld [vmem:[#allocation2 + $0x118] sm:$0xff]
        %v758 = vld [vmem:[#allocation2 + $0x120] sm:$0xff]
        %v759 = vld [vmem:[#allocation2 + $0x128] sm:$0xf]
        %v760 = vld [vmem:[#allocation2 + $0x12c] sm:$0xff]
        %v761 = vld [vmem:[#allocation2 + $0x134] sm:$0xff]
        %v762 = vld [vmem:[#allocation2 + $0x13c] sm:$0xf]
        %v763 = vld [vmem:[#allocation2 + $0x140] sm:$0xff]
        %v764 = vld [vmem:[#allocation2 + $0x148] sm:$0xff]
        %v765 = vld [vmem:[#allocation2 + $0x150] sm:$0xf]
        %v766 = vld [vmem:[#allocation2 + $0x154] sm:$0xff]
        %v767 = vld [vmem:[#allocation2 + $0x15c] sm:$0xff]
        %v768 = vld [vmem:[#allocation2 + $0x164] sm:$0xf]
        %v769 = vld [vmem:[#allocation2 + $0x168] sm:$0xff]
        %v770 = vld [vmem:[#allocation2 + $0x170] sm:$0xff]
        %v771 = vld [vmem:[#allocation2 + $0x178] sm:$0xf]
        %v772 = vld [vmem:[#allocation2 + $0x17c] sm:$0xff]
        %v773 = vld [vmem:[#allocation2 + $0x184] sm:$0xff]
        %v774 = vld [vmem:[#allocation2 + $0x18c] sm:$0xf]
        %v775 = vld [vmem:[#allocation2 + $0x190] sm:$0xff]
        %v776 = vld [vmem:[#allocation2 + $0x198] sm:$0xff]
        %v777 = vld [vmem:[#allocation2 + $0x1a0] sm:$0xf]
        %v778 = vld [vmem:[#allocation2 + $0x1a4] sm:$0xff]
        %v779 = vld [vmem:[#allocation2 + $0x1ac] sm:$0xff]
        %v780 = vld [vmem:[#allocation2 + $0x1b4] sm:$0xf]
        %v781 = vld [vmem:[#allocation2 + $0x1b8] sm:$0xff]
        %v782 = vld [vmem:[#allocation2 + $0x1c0] sm:$0xff]
        %v783 = vld [vmem:[#allocation2 + $0x1c8] sm:$0xf]
        %v784 = vld [vmem:[#allocation2 + $0x1cc] sm:$0xff]
        %v785 = vld [vmem:[#allocation2 + $0x1d4] sm:$0xff]
        %v786 = vld [vmem:[#allocation2 + $0x1dc] sm:$0xf]
        %v787 = vld [vmem:[#allocation2 + $0x1e0] sm:$0xff]
        %v788 = vld [vmem:[#allocation2 + $0x1e8] sm:$0xff]
        %v789 = vld [vmem:[#allocation2 + $0x1f0] sm:$0xf]
        %v790 = vld [vmem:[#allocation2 + $0x1f4] sm:$0xff]
        %v791 = vld [vmem:[#allocation2 + $0x1fc] sm:$0xff]
        %v792 = vld [vmem:[#allocation2 + $0x204] sm:$0xf]
        %v793 = vld [vmem:[#allocation2 + $0x208] sm:$0xff]
        %v794 = vld [vmem:[#allocation2 + $0x210] sm:$0xff]
        %v795 = vld [vmem:[#allocation2 + $0x218] sm:$0xf]
        %v796 = vld [vmem:[#allocation2 + $0x21c] sm:$0xff]
        %v797 = vld [vmem:[#allocation2 + $0x224] sm:$0xff]
        %v798 = vld [vmem:[#allocation2 + $0x22c] sm:$0xf]
        %v799 = vld [vmem:[#allocation2 + $0x230] sm:$0xff]
        %v800 = vld [vmem:[#allocation2 + $0x238] sm:$0xff]
        %v801 = vld [vmem:[#allocation2 + $0x240] sm:$0xf]
        %v802 = vld [vmem:[#allocation2 + $0x244] sm:$0xff]
        %v803 = vld [vmem:[#allocation2 + $0x24c] sm:$0xff]
        %v804 = vld [vmem:[#allocation2 + $0x254] sm:$0xf]
        %v805 = vld [vmem:[#allocation2 + $0x258] sm:$0xff]
        %v806 = vld [vmem:[#allocation2 + $0x260] sm:$0xff]
        %v807 = vld [vmem:[#allocation2 + $0x268] sm:$0xf]
        %v808 = vld [vmem:[#allocation2 + $0x26c] sm:$0xff]
        %v809 = vld [vmem:[#allocation2 + $0x274] sm:$0xff]
        %v810 = vld [vmem:[#allocation2 + $0x27c] sm:$0xf]
        %v907 = vunpack.c.l.b16 %v715
        %v908 = vunpack.c.h.b16 %v715
        %v909 = vunpack.c.l.b16 %v716
        %v910 = vunpack.c.h.b16 %v716
        %v911 = vunpack.c.l.b16 %v717
        %v912 = vunpack.c.l.b16 %v718
        %v913 = vunpack.c.h.b16 %v718
        %v914 = vunpack.c.l.b16 %v719
        %v915 = vunpack.c.h.b16 %v719
        %v916 = vunpack.c.l.b16 %v720
        %v917 = vunpack.c.l.b16 %v721
        %v918 = vunpack.c.h.b16 %v721
        %v919 = vunpack.c.l.b16 %v722
        %v920 = vunpack.c.h.b16 %v722
        %v921 = vunpack.c.l.b16 %v723
        %v922 = vunpack.c.l.b16 %v724
        %v923 = vunpack.c.h.b16 %v724
        %v924 = vunpack.c.l.b16 %v725
        %v925 = vunpack.c.h.b16 %v725
        %v926 = vunpack.c.l.b16 %v726
        %v927 = vunpack.c.l.b16 %v727
        %v928 = vunpack.c.h.b16 %v727
        %v929 = vunpack.c.l.b16 %v728
        %v930 = vunpack.c.h.b16 %v728
        %v931 = vunpack.c.l.b16 %v729
        %v932 = vunpack.c.l.b16 %v730
        %v933 = vunpack.c.h.b16 %v730
        %v934 = vunpack.c.l.b16 %v731
        %v935 = vunpack.c.h.b16 %v731
        %v936 = vunpack.c.l.b16 %v732
        %v937 = vunpack.c.l.b16 %v733
        %v938 = vunpack.c.h.b16 %v733
        %v939 = vunpack.c.l.b16 %v734
        %v940 = vunpack.c.h.b16 %v734
        %v941 = vunpack.c.l.b16 %v735
        %v942 = vunpack.c.l.b16 %v736
        %v943 = vunpack.c.h.b16 %v736
        %v944 = vunpack.c.l.b16 %v737
        %v945 = vunpack.c.h.b16 %v737
        %v946 = vunpack.c.l.b16 %v738
        %v947 = vunpack.c.l.b16 %v739
        %v948 = vunpack.c.h.b16 %v739
        %v949 = vunpack.c.l.b16 %v740
        %v950 = vunpack.c.h.b16 %v740
        %v951 = vunpack.c.l.b16 %v741
        %v952 = vunpack.c.l.b16 %v742
        %v953 = vunpack.c.h.b16 %v742
        %v954 = vunpack.c.l.b16 %v743
        %v955 = vunpack.c.h.b16 %v743
        %v956 = vunpack.c.l.b16 %v744
        %v957 = vunpack.c.l.b16 %v745
        %v958 = vunpack.c.h.b16 %v745
        %v959 = vunpack.c.l.b16 %v746
        %v960 = vunpack.c.h.b16 %v746
        %v961 = vunpack.c.l.b16 %v747
        %v962 = vunpack.c.l.b16 %v748
        %v963 = vunpack.c.h.b16 %v748
        %v964 = vunpack.c.l.b16 %v749
        %v965 = vunpack.c.h.b16 %v749
        %v966 = vunpack.c.l.b16 %v750
        %v967 = vunpack.c.l.b16 %v751
        %v968 = vunpack.c.h.b16 %v751
        %v969 = vunpack.c.l.b16 %v752
        %v970 = vunpack.c.h.b16 %v752
        %v971 = vunpack.c.l.b16 %v753
        %v972 = vunpack.c.l.b16 %v754
        %v973 = vunpack.c.h.b16 %v754
        %v974 = vunpack.c.l.b16 %v755
        %v975 = vunpack.c.h.b16 %v755
        %v976 = vunpack.c.l.b16 %v756
        %v977 = vunpack.c.l.b16 %v757
        %v978 = vunpack.c.h.b16 %v757
        %v979 = vunpack.c.l.b16 %v758
        %v980 = vunpack.c.h.b16 %v758
        %v981 = vunpack.c.l.b16 %v759
        %v982 = vunpack.c.l.b16 %v760
        %v983 = vunpack.c.h.b16 %v760
        %v984 = vunpack.c.l.b16 %v761
        %v985 = vunpack.c.h.b16 %v761
        %v986 = vunpack.c.l.b16 %v762
        %v987 = vunpack.c.l.b16 %v763
        %v988 = vunpack.c.h.b16 %v763
        %v989 = vunpack.c.l.b16 %v764
        %v990 = vunpack.c.h.b16 %v764
        %v991 = vunpack.c.l.b16 %v765
        %v992 = vunpack.c.l.b16 %v766
        %v993 = vunpack.c.h.b16 %v766
        %v994 = vunpack.c.l.b16 %v767
        %v995 = vunpack.c.h.b16 %v767
        %v996 = vunpack.c.l.b16 %v768
        %v997 = vunpack.c.l.b16 %v769
        %v998 = vunpack.c.h.b16 %v769
        %v999 = vunpack.c.l.b16 %v770
        %v1000 = vunpack.c.h.b16 %v770
        %v1001 = vunpack.c.l.b16 %v771
        %v1002 = vunpack.c.l.b16 %v772
        %v1003 = vunpack.c.h.b16 %v772
        %v1004 = vunpack.c.l.b16 %v773
        %v1005 = vunpack.c.h.b16 %v773
        %v1006 = vunpack.c.l.b16 %v774
        %v1007 = vunpack.c.l.b16 %v775
        %v1008 = vunpack.c.h.b16 %v775
        %v1009 = vunpack.c.l.b16 %v776
        %v1010 = vunpack.c.h.b16 %v776
        %v1011 = vunpack.c.l.b16 %v777
        %v1012 = vunpack.c.l.b16 %v778
        %v1013 = vunpack.c.h.b16 %v778
        %v1014 = vunpack.c.l.b16 %v779
        %v1015 = vunpack.c.h.b16 %v779
        %v1016 = vunpack.c.l.b16 %v780
        %v1017 = vunpack.c.l.b16 %v781
        %v1018 = vunpack.c.h.b16 %v781
        %v1019 = vunpack.c.l.b16 %v782
        %v1020 = vunpack.c.h.b16 %v782
        %v1021 = vunpack.c.l.b16 %v783
        %v1022 = vunpack.c.l.b16 %v784
        %v1023 = vunpack.c.h.b16 %v784
        %v1024 = vunpack.c.l.b16 %v785
        %v1025 = vunpack.c.h.b16 %v785
        %v1026 = vunpack.c.l.b16 %v786
        %v1027 = vunpack.c.l.b16 %v787
        %v1028 = vunpack.c.h.b16 %v787
        %v1029 = vunpack.c.l.b16 %v788
        %v1030 = vunpack.c.h.b16 %v788
        %v1031 = vunpack.c.l.b16 %v789
        %v1032 = vunpack.c.l.b16 %v790
        %v1033 = vunpack.c.h.b16 %v790
        %v1034 = vunpack.c.l.b16 %v791
        %v1035 = vunpack.c.h.b16 %v791
        %v1036 = vunpack.c.l.b16 %v792
        %v1037 = vunpack.c.l.b16 %v793
        %v1038 = vunpack.c.h.b16 %v793
        %v1039 = vunpack.c.l.b16 %v794
        %v1040 = vunpack.c.h.b16 %v794
        %v1041 = vunpack.c.l.b16 %v795
        %v1042 = vunpack.c.l.b16 %v796
        %v1043 = vunpack.c.h.b16 %v796
        %v1044 = vunpack.c.l.b16 %v797
        %v1045 = vunpack.c.h.b16 %v797
        %v1046 = vunpack.c.l.b16 %v798
        %v1047 = vunpack.c.l.b16 %v799
        %v1048 = vunpack.c.h.b16 %v799
        %v1049 = vunpack.c.l.b16 %v800
        %v1050 = vunpack.c.h.b16 %v800
        %v1051 = vunpack.c.l.b16 %v801
        %v1052 = vunpack.c.l.b16 %v802
        %v1053 = vunpack.c.h.b16 %v802
        %v1054 = vunpack.c.l.b16 %v803
        %v1055 = vunpack.c.h.b16 %v803
        %v1056 = vunpack.c.l.b16 %v804
        %v1057 = vunpack.c.l.b16 %v805
        %v1058 = vunpack.c.h.b16 %v805
        %v1059 = vunpack.c.l.b16 %v806
        %v1060 = vunpack.c.h.b16 %v806
        %v1061 = vunpack.c.l.b16 %v807
        %v1062 = vunpack.c.l.b16 %v808
        %v1063 = vunpack.c.h.b16 %v808
        %v1064 = vunpack.c.l.b16 %v809
        %v1065 = vunpack.c.h.b16 %v809
        %v1066 = vunpack.c.l.b16 %v810
        %v1067 = vpack.c.b16 %v912, %v907
        %v1068 = vpack.c.b16 %v913, %v908
        %v1069 = vpack.c.b16 %v914, %v909
        %v1070 = vpack.c.b16 %v915, %v910
        %v1071 = vpack.c.b16 %v916, %v911
        %v1072 = vpack.c.b16 %v922, %v917
        %v1073 = vpack.c.b16 %v923, %v918
        %v1074 = vpack.c.b16 %v924, %v919
        %v1075 = vpack.c.b16 %v925, %v920
        %v1076 = vpack.c.b16 %v926, %v921
        %v1077 = vpack.c.b16 %v932, %v927
        %v1078 = vpack.c.b16 %v933, %v928
        %v1079 = vpack.c.b16 %v934, %v929
        %v1080 = vpack.c.b16 %v935, %v930
        %v1081 = vpack.c.b16 %v936, %v931
        %v1082 = vpack.c.b16 %v942, %v937
        %v1083 = vpack.c.b16 %v943, %v938
        %v1084 = vpack.c.b16 %v944, %v939
        %v1085 = vpack.c.b16 %v945, %v940
        %v1086 = vpack.c.b16 %v946, %v941
        %v1087 = vpack.c.b16 %v952, %v947
        %v1088 = vpack.c.b16 %v953, %v948
        %v1089 = vpack.c.b16 %v954, %v949
        %v1090 = vpack.c.b16 %v955, %v950
        %v1091 = vpack.c.b16 %v956, %v951
        %v1092 = vpack.c.b16 %v962, %v957
        %v1093 = vpack.c.b16 %v963, %v958
        %v1094 = vpack.c.b16 %v964, %v959
        %v1095 = vpack.c.b16 %v965, %v960
        %v1096 = vpack.c.b16 %v966, %v961
        %v1097 = vpack.c.b16 %v972, %v967
        %v1098 = vpack.c.b16 %v973, %v968
        %v1099 = vpack.c.b16 %v974, %v969
        %v1100 = vpack.c.b16 %v975, %v970
        %v1101 = vpack.c.b16 %v976, %v971
        %v1102 = vpack.c.b16 %v982, %v977
        %v1103 = vpack.c.b16 %v983, %v978
        %v1104 = vpack.c.b16 %v984, %v979
        %v1105 = vpack.c.b16 %v985, %v980
        %v1106 = vpack.c.b16 %v986, %v981
        %v1107 = vpack.c.b16 %v992, %v987
        %v1108 = vpack.c.b16 %v993, %v988
        %v1109 = vpack.c.b16 %v994, %v989
        %v1110 = vpack.c.b16 %v995, %v990
        %v1111 = vpack.c.b16 %v996, %v991
        %v1112 = vpack.c.b16 %v1002, %v997
        %v1113 = vpack.c.b16 %v1003, %v998
        %v1114 = vpack.c.b16 %v1004, %v999
        %v1115 = vpack.c.b16 %v1005, %v1000
        %v1116 = vpack.c.b16 %v1006, %v1001
        %v1117 = vpack.c.b16 %v1012, %v1007
        %v1118 = vpack.c.b16 %v1013, %v1008
        %v1119 = vpack.c.b16 %v1014, %v1009
        %v1120 = vpack.c.b16 %v1015, %v1010
        %v1121 = vpack.c.b16 %v1016, %v1011
        %v1122 = vpack.c.b16 %v1022, %v1017
        %v1123 = vpack.c.b16 %v1023, %v1018
        %v1124 = vpack.c.b16 %v1024, %v1019
        %v1125 = vpack.c.b16 %v1025, %v1020
        %v1126 = vpack.c.b16 %v1026, %v1021
        %v1127 = vpack.c.b16 %v1032, %v1027
        %v1128 = vpack.c.b16 %v1033, %v1028
        %v1129 = vpack.c.b16 %v1034, %v1029
        %v1130 = vpack.c.b16 %v1035, %v1030
        %v1131 = vpack.c.b16 %v1036, %v1031
        %v1132 = vpack.c.b16 %v1042, %v1037
        %v1133 = vpack.c.b16 %v1043, %v1038
        %v1134 = vpack.c.b16 %v1044, %v1039
        %v1135 = vpack.c.b16 %v1045, %v1040
        %v1136 = vpack.c.b16 %v1046, %v1041
        %v1137 = vpack.c.b16 %v1052, %v1047
        %v1138 = vpack.c.b16 %v1053, %v1048
        %v1139 = vpack.c.b16 %v1054, %v1049
        %v1140 = vpack.c.b16 %v1055, %v1050
        %v1141 = vpack.c.b16 %v1056, %v1051
        %v1142 = vpack.c.b16 %v1062, %v1057
        %v1143 = vpack.c.b16 %v1063, %v1058
        %v1144 = vpack.c.b16 %v1064, %v1059
        %v1145 = vpack.c.b16 %v1065, %v1060
        %v1146 = vpack.c.b16 %v1066, %v1061
        %1227 = vmatprep.subr.bf16.mxu0 %v1068
        %1228 = vmatpush1.bf16.msra.mxu0 %v1067
        %1229 = vmatprep.subr.bf16.mxu0 %v1073
        %1230 = vmatpush1.bf16.msra.mxu0 %v1072
        %1231 = vmatprep.subr.bf16.mxu0 %v1078
        %1232 = vmatpush1.bf16.msra.mxu0 %v1077
        %1233 = vmatprep.subr.bf16.mxu0 %v1083
        %1234 = vmatpush1.bf16.msra.mxu0 %v1082
        %1235 = vmatprep.subr.bf16.mxu0 %v1088
        %1236 = vmatpush1.bf16.msra.mxu0 %v1087
        %1237 = vmatprep.subr.bf16.mxu0 %v1093
        %1238 = vmatpush1.bf16.msra.mxu0 %v1092
        %1239 = vmatprep.subr.bf16.mxu0 %v1098
        %1240 = vmatpush1.bf16.msra.mxu0 %v1097
        %1241 = vmatprep.subr.bf16.mxu0 %v1103
        %1242 = vmatpush1.bf16.msra.mxu0 %v1102
        %1243 = vmatprep.subr.bf16.mxu0 %v1108
        %1244 = vmatpush1.bf16.msra.mxu0 %v1107
        %1245 = vmatprep.subr.bf16.mxu0 %v1113
        %1246 = vmatpush1.bf16.msra.mxu0 %v1112
        %1247 = vmatprep.subr.bf16.mxu0 %v1118
        %1248 = vmatpush1.bf16.msra.mxu0 %v1117
        %1249 = vmatprep.subr.bf16.mxu0 %v1123
        %1250 = vmatpush1.bf16.msra.mxu0 %v1122
        %1251 = vmatprep.subr.bf16.mxu0 %v1128
        %1252 = vmatpush1.bf16.msra.mxu0 %v1127
        %1253 = vmatprep.subr.bf16.mxu0 %v1133
        %1254 = vmatpush1.bf16.msra.mxu0 %v1132
        %1255 = vmatprep.subr.bf16.mxu0 %v1138
        %1256 = vmatpush1.bf16.msra.mxu0 %v1137
        %1257 = vmatprep.subr.bf16.mxu0 %v1143
        %1258 = vmatpush1.bf16.msra.mxu0 %v1142
        %1259 = vmatprep.mubr.bf16.mxu0 %v684
        %1260 = vmatmul.mubr.bf16.gmra.mrb[0].mxu0 %v683
        %v1261 = vpop.f32.mrb[0].mxu0
        %v1262 = vadd.f32 0.0, %v1261
        %v1263 = vpop.f32.mrb[0].mxu0
        %v1264 = vadd.f32 0.0, %v1263
        %v1265 = vpop.f32.mrb[0].mxu0
        %v1266 = vadd.f32 0.0, %v1265
        %v1267 = vpop.f32.mrb[0].mxu0
        %v1268 = vadd.f32 0.0, %v1267
        %1269 = vmatprep.mubr.bf16.mxu0 %v686
        %1270 = vmatmul.mubr.bf16.gmra.mrb[0].mxu0 %v685
        %v1271 = vpop.f32.mrb[0].mxu0
        %v1272 = vadd.f32 0.0, %v1271
        %v1273 = vpop.f32.mrb[0].mxu0
        %v1274 = vadd.f32 0.0, %v1273
        %v1275 = vpop.f32.mrb[0].mxu0
        %v1276 = vadd.f32 0.0, %v1275
        %v1277 = vpop.f32.mrb[0].mxu0
        %v1278 = vadd.f32 0.0, %v1277
        %1279 = vmatprep.mubr.bf16.mxu0 %v688
        %1280 = vmatmul.mubr.bf16.gmra.mrb[0].mxu0 %v687
        %v1281 = vpop.f32.mrb[0].mxu0
        %v1282 = vadd.f32 0.0, %v1281
        %v1283 = vpop.f32.mrb[0].mxu0
        %v1284 = vadd.f32 0.0, %v1283
        %v1285 = vpop.f32.mrb[0].mxu0
        %v1286 = vadd.f32 0.0, %v1285
        %v1287 = vpop.f32.mrb[0].mxu0
        %v1288 = vadd.f32 0.0, %v1287
        %1289 = vmatprep.mubr.bf16.mxu0 %v690
        %1290 = vmatmul.mubr.bf16.gmra.mrb[0].mxu0 %v689
        %v1291 = vpop.f32.mrb[0].mxu0
        %v1292 = vadd.f32 0.0, %v1291
        %v1293 = vpop.f32.mrb[0].mxu0
        %v1294 = vadd.f32 0.0, %v1293
        %v1295 = vpop.f32.mrb[0].mxu0
        %v1296 = vadd.f32 0.0, %v1295
        %v1297 = vpop.f32.mrb[0].mxu0
        %v1298 = vadd.f32 0.0, %v1297
        %1299 = vmatprep.mubr.bf16.mxu0 %v692
        %1300 = vmatmul.mubr.bf16.gmra.mrb[0].mxu0 %v691
        %v1301 = vpop.f32.mrb[0].mxu0
        %v1302 = vadd.f32 0.0, %v1301
        %v1303 = vpop.f32.mrb[0].mxu0
        %v1304 = vadd.f32 0.0, %v1303
        %v1305 = vpop.f32.mrb[0].mxu0
        %v1306 = vadd.f32 0.0, %v1305
        %v1307 = vpop.f32.mrb[0].mxu0
        %v1308 = vadd.f32 0.0, %v1307
        %1309 = vmatprep.mubr.bf16.mxu0 %v694
        %1310 = vmatmul.mubr.bf16.gmra.mrb[0].mxu0 %v693
        %v1311 = vpop.f32.mrb[0].mxu0
        %v1312 = vadd.f32 0.0, %v1311
        %v1313 = vpop.f32.mrb[0].mxu0
        %v1314 = vadd.f32 0.0, %v1313
        %v1315 = vpop.f32.mrb[0].mxu0
        %v1316 = vadd.f32 0.0, %v1315
        %v1317 = vpop.f32.mrb[0].mxu0
        %v1318 = vadd.f32 0.0, %v1317
        %1319 = vmatprep.mubr.bf16.mxu0 %v696
        %1320 = vmatmul.mubr.bf16.gmra.mrb[0].mxu0 %v695
        %v1321 = vpop.f32.mrb[0].mxu0
        %v1322 = vadd.f32 0.0, %v1321
        %v1323 = vpop.f32.mrb[0].mxu0
        %v1324 = vadd.f32 0.0, %v1323
        %v1325 = vpop.f32.mrb[0].mxu0
        %v1326 = vadd.f32 0.0, %v1325
        %v1327 = vpop.f32.mrb[0].mxu0
        %v1328 = vadd.f32 0.0, %v1327
        %1329 = vmatprep.mubr.bf16.mxu0 %v698
        %1330 = vmatmul.mubr.bf16.gmra.mrb[0].mxu0 %v697
        %v1331 = vpop.f32.mrb[0].mxu0
        %v1332 = vadd.f32 0.0, %v1331
        %v1333 = vpop.f32.mrb[0].mxu0
        %v1334 = vadd.f32 0.0, %v1333
        %v1335 = vpop.f32.mrb[0].mxu0
        %v1336 = vadd.f32 0.0, %v1335
        %v1337 = vpop.f32.mrb[0].mxu0
        %v1338 = vadd.f32 0.0, %v1337
        %1339 = vmatprep.mubr.bf16.mxu0 %v700
        %1340 = vmatmul.mubr.bf16.gmra.mrb[0].mxu0 %v699
        %v1341 = vpop.f32.mrb[0].mxu0
        %v1342 = vadd.f32 0.0, %v1341
        %v1343 = vpop.f32.mrb[0].mxu0
        %v1344 = vadd.f32 0.0, %v1343
        %v1345 = vpop.f32.mrb[0].mxu0
        %v1346 = vadd.f32 0.0, %v1345
        %v1347 = vpop.f32.mrb[0].mxu0
        %v1348 = vadd.f32 0.0, %v1347
        %1349 = vmatprep.mubr.bf16.mxu0 %v702
        %1350 = vmatmul.mubr.bf16.gmra.mrb[0].mxu0 %v701
        %v1351 = vpop.f32.mrb[0].mxu0
        %v1352 = vadd.f32 0.0, %v1351
        %v1353 = vpop.f32.mrb[0].mxu0
        %v1354 = vadd.f32 0.0, %v1353
        %v1355 = vpop.f32.mrb[0].mxu0
        %v1356 = vadd.f32 0.0, %v1355
        %v1357 = vpop.f32.mrb[0].mxu0
        %v1358 = vadd.f32 0.0, %v1357
        %1359 = vmatprep.mubr.bf16.mxu0 %v704
        %1360 = vmatmul.mubr.bf16.gmra.mrb[0].mxu0 %v703
        %v1361 = vpop.f32.mrb[0].mxu0
        %v1362 = vadd.f32 0.0, %v1361
        %v1363 = vpop.f32.mrb[0].mxu0
        %v1364 = vadd.f32 0.0, %v1363
        %v1365 = vpop.f32.mrb[0].mxu0
        %v1366 = vadd.f32 0.0, %v1365
        %v1367 = vpop.f32.mrb[0].mxu0
        %v1368 = vadd.f32 0.0, %v1367
        %1369 = vmatprep.mubr.bf16.mxu0 %v706
        %1370 = vmatmul.mubr.bf16.gmra.mrb[0].mxu0 %v705
        %v1371 = vpop.f32.mrb[0].mxu0
        %v1372 = vadd.f32 0.0, %v1371
        %v1373 = vpop.f32.mrb[0].mxu0
        %v1374 = vadd.f32 0.0, %v1373
        %v1375 = vpop.f32.mrb[0].mxu0
        %v1376 = vadd.f32 0.0, %v1375
        %v1377 = vpop.f32.mrb[0].mxu0
        %v1378 = vadd.f32 0.0, %v1377
        %1379 = vmatprep.mubr.bf16.mxu0 %v708
        %1380 = vmatmul.mubr.bf16.gmra.mrb[0].mxu0 %v707
        %v1381 = vpop.f32.mrb[0].mxu0
        %v1382 = vadd.f32 0.0, %v1381
        %v1383 = vpop.f32.mrb[0].mxu0
        %v1384 = vadd.f32 0.0, %v1383
        %v1385 = vpop.f32.mrb[0].mxu0
        %v1386 = vadd.f32 0.0, %v1385
        %v1387 = vpop.f32.mrb[0].mxu0
        %v1388 = vadd.f32 0.0, %v1387
        %1389 = vmatprep.mubr.bf16.mxu0 %v710
        %1390 = vmatmul.mubr.bf16.gmra.mrb[0].mxu0 %v709
        %v1391 = vpop.f32.mrb[0].mxu0
        %v1392 = vadd.f32 0.0, %v1391
        %v1393 = vpop.f32.mrb[0].mxu0
        %v1394 = vadd.f32 0.0, %v1393
        %v1395 = vpop.f32.mrb[0].mxu0
        %v1396 = vadd.f32 0.0, %v1395
        %v1397 = vpop.f32.mrb[0].mxu0
        %v1398 = vadd.f32 0.0, %v1397
        %1399 = vmatprep.mubr.bf16.mxu0 %v712
        %1400 = vmatmul.mubr.bf16.gmra.mrb[0].mxu0 %v711
        %v1401 = vpop.f32.mrb[0].mxu0
        %v1402 = vadd.f32 0.0, %v1401
        %v1403 = vpop.f32.mrb[0].mxu0
        %v1404 = vadd.f32 0.0, %v1403
        %v1405 = vpop.f32.mrb[0].mxu0
        %v1406 = vadd.f32 0.0, %v1405
        %v1407 = vpop.f32.mrb[0].mxu0
        %v1408 = vadd.f32 0.0, %v1407
        %1409 = vmatprep.mubr.bf16.mxu0 %v714
        %1410 = vmatmul.mubr.bf16.gmra.mrb[0].mxu0 %v713
        %v1411 = vpop.f32.mrb[0].mxu0
        %v1412 = vadd.f32 0.0, %v1411
        %v1413 = vpop.f32.mrb[0].mxu0
        %v1414 = vadd.f32 0.0, %v1413
        %v1415 = vpop.f32.mrb[0].mxu0
        %v1416 = vadd.f32 0.0, %v1415
        %v1417 = vpop.f32.mrb[0].mxu0
        %v1418 = vadd.f32 0.0, %v1417
        %1419 = vdwg.mxu0
        %1420 = vmatprep.subr.bf16.mxu0 %v1070
        %1421 = vmatpush1.bf16.msra.mxu0 %v1069
        %1422 = vmatprep.subr.bf16.mxu0 %v1075
        %1423 = vmatpush1.bf16.msra.mxu0 %v1074
        %1424 = vmatprep.subr.bf16.mxu0 %v1080
        %1425 = vmatpush1.bf16.msra.mxu0 %v1079
        %1426 = vmatprep.subr.bf16.mxu0 %v1085
        %1427 = vmatpush1.bf16.msra.mxu0 %v1084
        %1428 = vmatprep.subr.bf16.mxu0 %v1090
        %1429 = vmatpush1.bf16.msra.mxu0 %v1089
        %1430 = vmatprep.subr.bf16.mxu0 %v1095
        %1431 = vmatpush1.bf16.msra.mxu0 %v1094
        %1432 = vmatprep.subr.bf16.mxu0 %v1100
        %1433 = vmatpush1.bf16.msra.mxu0 %v1099
        %1434 = vmatprep.subr.bf16.mxu0 %v1105
        %1435 = vmatpush1.bf16.msra.mxu0 %v1104
        %1436 = vmatprep.subr.bf16.mxu0 %v1110
        %1437 = vmatpush1.bf16.msra.mxu0 %v1109
        %1438 = vmatprep.subr.bf16.mxu0 %v1115
        %1439 = vmatpush1.bf16.msra.mxu0 %v1114
        %1440 = vmatprep.subr.bf16.mxu0 %v1120
        %1441 = vmatpush1.bf16.msra.mxu0 %v1119
        %1442 = vmatprep.subr.bf16.mxu0 %v1125
        %1443 = vmatpush1.bf16.msra.mxu0 %v1124
        %1444 = vmatprep.subr.bf16.mxu0 %v1130
        %1445 = vmatpush1.bf16.msra.mxu0 %v1129
        %1446 = vmatprep.subr.bf16.mxu0 %v1135
        %1447 = vmatpush1.bf16.msra.mxu0 %v1134
        %1448 = vmatprep.subr.bf16.mxu0 %v1140
        %1449 = vmatpush1.bf16.msra.mxu0 %v1139
        %1450 = vmatprep.subr.bf16.mxu0 %v1145
        %1451 = vmatpush1.bf16.msra.mxu0 %v1144
        %1452 = vmatprep.mubr.bf16.mxu0 %v684
        %1453 = vmatmul.mubr.bf16.gmra.mrb[0].mxu0 %v683
        %v1454 = vpop.f32.mrb[0].mxu0
        %v1455 = vadd.f32 0.0, %v1454
        %v1456 = vpop.f32.mrb[0].mxu0
        %v1457 = vadd.f32 0.0, %v1456
        %v1458 = vpop.f32.mrb[0].mxu0
        %v1459 = vadd.f32 0.0, %v1458
        %v1460 = vpop.f32.mrb[0].mxu0
        %v1461 = vadd.f32 0.0, %v1460
        %1462 = vmatprep.mubr.bf16.mxu0 %v686
        %1463 = vmatmul.mubr.bf16.gmra.mrb[0].mxu0 %v685
        %v1464 = vpop.f32.mrb[0].mxu0
        %v1465 = vadd.f32 0.0, %v1464
        %v1466 = vpop.f32.mrb[0].mxu0
        %v1467 = vadd.f32 0.0, %v1466
        %v1468 = vpop.f32.mrb[0].mxu0
        %v1469 = vadd.f32 0.0, %v1468
        %v1470 = vpop.f32.mrb[0].mxu0
        %v1471 = vadd.f32 0.0, %v1470
        %1472 = vmatprep.mubr.bf16.mxu0 %v688
        %1473 = vmatmul.mubr.bf16.gmra.mrb[0].mxu0 %v687
        %v1474 = vpop.f32.mrb[0].mxu0
        %v1475 = vadd.f32 0.0, %v1474
        %v1476 = vpop.f32.mrb[0].mxu0
        %v1477 = vadd.f32 0.0, %v1476
        %v1478 = vpop.f32.mrb[0].mxu0
        %v1479 = vadd.f32 0.0, %v1478
        %v1480 = vpop.f32.mrb[0].mxu0
        %v1481 = vadd.f32 0.0, %v1480
        %1482 = vmatprep.mubr.bf16.mxu0 %v690
        %1483 = vmatmul.mubr.bf16.gmra.mrb[0].mxu0 %v689
        %v1484 = vpop.f32.mrb[0].mxu0
        %v1485 = vadd.f32 0.0, %v1484
        %v1486 = vpop.f32.mrb[0].mxu0
        %v1487 = vadd.f32 0.0, %v1486
        %v1488 = vpop.f32.mrb[0].mxu0
        %v1489 = vadd.f32 0.0, %v1488
        %v1490 = vpop.f32.mrb[0].mxu0
        %v1491 = vadd.f32 0.0, %v1490
        %1492 = vmatprep.mubr.bf16.mxu0 %v692
        %1493 = vmatmul.mubr.bf16.gmra.mrb[0].mxu0 %v691
        %v1494 = vpop.f32.mrb[0].mxu0
        %v1495 = vadd.f32 0.0, %v1494
        %v1496 = vpop.f32.mrb[0].mxu0
        %v1497 = vadd.f32 0.0, %v1496
        %v1498 = vpop.f32.mrb[0].mxu0
        %v1499 = vadd.f32 0.0, %v1498
        %v1500 = vpop.f32.mrb[0].mxu0
        %v1501 = vadd.f32 0.0, %v1500
        %1502 = vmatprep.mubr.bf16.mxu0 %v694
        %1503 = vmatmul.mubr.bf16.gmra.mrb[0].mxu0 %v693
        %v1504 = vpop.f32.mrb[0].mxu0
        %v1505 = vadd.f32 0.0, %v1504
        %v1506 = vpop.f32.mrb[0].mxu0
        %v1507 = vadd.f32 0.0, %v1506
        %v1508 = vpop.f32.mrb[0].mxu0
        %v1509 = vadd.f32 0.0, %v1508
        %v1510 = vpop.f32.mrb[0].mxu0
        %v1511 = vadd.f32 0.0, %v1510
        %1512 = vmatprep.mubr.bf16.mxu0 %v696
        %1513 = vmatmul.mubr.bf16.gmra.mrb[0].mxu0 %v695
        %v1514 = vpop.f32.mrb[0].mxu0
        %v1515 = vadd.f32 0.0, %v1514
        %v1516 = vpop.f32.mrb[0].mxu0
        %v1517 = vadd.f32 0.0, %v1516
        %v1518 = vpop.f32.mrb[0].mxu0
        %v1519 = vadd.f32 0.0, %v1518
        %v1520 = vpop.f32.mrb[0].mxu0
        %v1521 = vadd.f32 0.0, %v1520
        %1522 = vmatprep.mubr.bf16.mxu0 %v698
        %1523 = vmatmul.mubr.bf16.gmra.mrb[0].mxu0 %v697
        %v1524 = vpop.f32.mrb[0].mxu0
        %v1525 = vadd.f32 0.0, %v1524
        %v1526 = vpop.f32.mrb[0].mxu0
        %v1527 = vadd.f32 0.0, %v1526
        %v1528 = vpop.f32.mrb[0].mxu0
        %v1529 = vadd.f32 0.0, %v1528
        %v1530 = vpop.f32.mrb[0].mxu0
        %v1531 = vadd.f32 0.0, %v1530
        %1532 = vmatprep.mubr.bf16.mxu0 %v700
        %1533 = vmatmul.mubr.bf16.gmra.mrb[0].mxu0 %v699
        %v1534 = vpop.f32.mrb[0].mxu0
        %v1535 = vadd.f32 0.0, %v1534
        %v1536 = vpop.f32.mrb[0].mxu0
        %v1537 = vadd.f32 0.0, %v1536
        %v1538 = vpop.f32.mrb[0].mxu0
        %v1539 = vadd.f32 0.0, %v1538
        %v1540 = vpop.f32.mrb[0].mxu0
        %v1541 = vadd.f32 0.0, %v1540
        %1542 = vmatprep.mubr.bf16.mxu0 %v702
        %1543 = vmatmul.mubr.bf16.gmra.mrb[0].mxu0 %v701
        %v1544 = vpop.f32.mrb[0].mxu0
        %v1545 = vadd.f32 0.0, %v1544
        %v1546 = vpop.f32.mrb[0].mxu0
        %v1547 = vadd.f32 0.0, %v1546
        %v1548 = vpop.f32.mrb[0].mxu0
        %v1549 = vadd.f32 0.0, %v1548
        %v1550 = vpop.f32.mrb[0].mxu0
        %v1551 = vadd.f32 0.0, %v1550
        %1552 = vmatprep.mubr.bf16.mxu0 %v704
        %1553 = vmatmul.mubr.bf16.gmra.mrb[0].mxu0 %v703
        %v1554 = vpop.f32.mrb[0].mxu0
        %v1555 = vadd.f32 0.0, %v1554
        %v1556 = vpop.f32.mrb[0].mxu0
        %v1557 = vadd.f32 0.0, %v1556
        %v1558 = vpop.f32.mrb[0].mxu0
        %v1559 = vadd.f32 0.0, %v1558
        %v1560 = vpop.f32.mrb[0].mxu0
        %v1561 = vadd.f32 0.0, %v1560
        %1562 = vmatprep.mubr.bf16.mxu0 %v706
        %1563 = vmatmul.mubr.bf16.gmra.mrb[0].mxu0 %v705
        %v1564 = vpop.f32.mrb[0].mxu0
        %v1565 = vadd.f32 0.0, %v1564
        %v1566 = vpop.f32.mrb[0].mxu0
        %v1567 = vadd.f32 0.0, %v1566
        %v1568 = vpop.f32.mrb[0].mxu0
        %v1569 = vadd.f32 0.0, %v1568
        %v1570 = vpop.f32.mrb[0].mxu0
        %v1571 = vadd.f32 0.0, %v1570
        %1572 = vmatprep.mubr.bf16.mxu0 %v708
        %1573 = vmatmul.mubr.bf16.gmra.mrb[0].mxu0 %v707
        %v1574 = vpop.f32.mrb[0].mxu0
        %v1575 = vadd.f32 0.0, %v1574
        %v1576 = vpop.f32.mrb[0].mxu0
        %v1577 = vadd.f32 0.0, %v1576
        %v1578 = vpop.f32.mrb[0].mxu0
        %v1579 = vadd.f32 0.0, %v1578
        %v1580 = vpop.f32.mrb[0].mxu0
        %v1581 = vadd.f32 0.0, %v1580
        %1582 = vmatprep.mubr.bf16.mxu0 %v710
        %1583 = vmatmul.mubr.bf16.gmra.mrb[0].mxu0 %v709
        %v1584 = vpop.f32.mrb[0].mxu0
        %v1585 = vadd.f32 0.0, %v1584
        %v1586 = vpop.f32.mrb[0].mxu0
        %v1587 = vadd.f32 0.0, %v1586
        %v1588 = vpop.f32.mrb[0].mxu0
        %v1589 = vadd.f32 0.0, %v1588
        %v1590 = vpop.f32.mrb[0].mxu0
        %v1591 = vadd.f32 0.0, %v1590
        %1592 = vmatprep.mubr.bf16.mxu0 %v712
        %1593 = vmatmul.mubr.bf16.gmra.mrb[0].mxu0 %v711
        %v1594 = vpop.f32.mrb[0].mxu0
        %v1595 = vadd.f32 0.0, %v1594
        %v1596 = vpop.f32.mrb[0].mxu0
        %v1597 = vadd.f32 0.0, %v1596
        %v1598 = vpop.f32.mrb[0].mxu0
        %v1599 = vadd.f32 0.0, %v1598
        %v1600 = vpop.f32.mrb[0].mxu0
        %v1601 = vadd.f32 0.0, %v1600
        %1602 = vmatprep.mubr.bf16.mxu0 %v714
        %1603 = vmatmul.mubr.bf16.gmra.mrb[0].mxu0 %v713
        %v1604 = vpop.f32.mrb[0].mxu0
        %v1605 = vadd.f32 0.0, %v1604
        %v1606 = vpop.f32.mrb[0].mxu0
        %v1607 = vadd.f32 0.0, %v1606
        %v1608 = vpop.f32.mrb[0].mxu0
        %v1609 = vadd.f32 0.0, %v1608
        %v1610 = vpop.f32.mrb[0].mxu0
        %v1611 = vadd.f32 0.0, %v1610
        %1612 = vdwg.mxu0
        %1613 = vmatprep.subr.bf16.mxu0 0
        %1614 = vmatpush1.bf16.msra.mxu0 %v1071
        %1615 = vmatprep.subr.bf16.mxu0 0
        %1616 = vmatpush1.bf16.msra.mxu0 %v1076
        %1617 = vmatprep.subr.bf16.mxu0 0
        %1618 = vmatpush1.bf16.msra.mxu0 %v1081
        %1619 = vmatprep.subr.bf16.mxu0 0
        %1620 = vmatpush1.bf16.msra.mxu0 %v1086
        %1621 = vmatprep.subr.bf16.mxu0 0
        %1622 = vmatpush1.bf16.msra.mxu0 %v1091
        %1623 = vmatprep.subr.bf16.mxu0 0
        %1624 = vmatpush1.bf16.msra.mxu0 %v1096
        %1625 = vmatprep.subr.bf16.mxu0 0
        %1626 = vmatpush1.bf16.msra.mxu0 %v1101
        %1627 = vmatprep.subr.bf16.mxu0 0
        %1628 = vmatpush1.bf16.msra.mxu0 %v1106
        %1629 = vmatprep.subr.bf16.mxu0 0
        %1630 = vmatpush1.bf16.msra.mxu0 %v1111
        %1631 = vmatprep.subr.bf16.mxu0 0
        %1632 = vmatpush1.bf16.msra.mxu0 %v1116
        %1633 = vmatprep.subr.bf16.mxu0 0
        %1634 = vmatpush1.bf16.msra.mxu0 %v1121
        %1635 = vmatprep.subr.bf16.mxu0 0
        %1636 = vmatpush1.bf16.msra.mxu0 %v1126
        %1637 = vmatprep.subr.bf16.mxu0 0
        %1638 = vmatpush1.bf16.msra.mxu0 %v1131
        %1639 = vmatprep.subr.bf16.mxu0 0
        %1640 = vmatpush1.bf16.msra.mxu0 %v1136
        %1641 = vmatprep.subr.bf16.mxu0 0
        %1642 = vmatpush1.bf16.msra.mxu0 %v1141
        %1643 = vmatprep.subr.bf16.mxu0 0
        %1644 = vmatpush1.bf16.msra.mxu0 %v1146
        %1645 = vmatprep.mubr.bf16.mxu0 %v684
        %1646 = vmatmul.mubr.bf16.gmra.mrb[0].mxu0 %v683
        %v1647 = vpop.f32.mrb[0].mxu0
        %v1648 = vadd.f32 0.0, %v1647
        %v1649 = vpop.f32.mrb[0].mxu0
        %v1650 = vpop.f32.mrb[0].mxu0
        %v1651 = vadd.f32 0.0, %v1650
        %v1652 = vpop.f32.mrb[0].mxu0
        %1653 = vmatprep.mubr.bf16.mxu0 %v686
        %1654 = vmatmul.mubr.bf16.gmra.mrb[0].mxu0 %v685
        %v1655 = vpop.f32.mrb[0].mxu0
        %v1656 = vadd.f32 0.0, %v1655
        %v1657 = vpop.f32.mrb[0].mxu0
        %v1658 = vpop.f32.mrb[0].mxu0
        %v1659 = vadd.f32 0.0, %v1658
        %v1660 = vpop.f32.mrb[0].mxu0
        %1661 = vmatprep.mubr.bf16.mxu0 %v688
        %1662 = vmatmul.mubr.bf16.gmra.mrb[0].mxu0 %v687
        %v1663 = vpop.f32.mrb[0].mxu0
        %v1664 = vadd.f32 0.0, %v1663
        %v1665 = vpop.f32.mrb[0].mxu0
        %v1666 = vpop.f32.mrb[0].mxu0
        %v1667 = vadd.f32 0.0, %v1666
        %v1668 = vpop.f32.mrb[0].mxu0
        %1669 = vmatprep.mubr.bf16.mxu0 %v690
        %1670 = vmatmul.mubr.bf16.gmra.mrb[0].mxu0 %v689
        %v1671 = vpop.f32.mrb[0].mxu0
        %v1672 = vadd.f32 0.0, %v1671
        %v1673 = vpop.f32.mrb[0].mxu0
        %v1674 = vpop.f32.mrb[0].mxu0
        %v1675 = vadd.f32 0.0, %v1674
        %v1676 = vpop.f32.mrb[0].mxu0
        %1677 = vmatprep.mubr.bf16.mxu0 %v692
        %1678 = vmatmul.mubr.bf16.gmra.mrb[0].mxu0 %v691
        %v1679 = vpop.f32.mrb[0].mxu0
        %v1680 = vadd.f32 0.0, %v1679
        %v1681 = vpop.f32.mrb[0].mxu0
        %v1682 = vpop.f32.mrb[0].mxu0
        %v1683 = vadd.f32 0.0, %v1682
        %v1684 = vpop.f32.mrb[0].mxu0
        %1685 = vmatprep.mubr.bf16.mxu0 %v694
        %1686 = vmatmul.mubr.bf16.gmra.mrb[0].mxu0 %v693
        %v1687 = vpop.f32.mrb[0].mxu0
        %v1688 = vadd.f32 0.0, %v1687
        %v1689 = vpop.f32.mrb[0].mxu0
        %v1690 = vpop.f32.mrb[0].mxu0
        %v1691 = vadd.f32 0.0, %v1690
        %v1692 = vpop.f32.mrb[0].mxu0
        %1693 = vmatprep.mubr.bf16.mxu0 %v696
        %1694 = vmatmul.mubr.bf16.gmra.mrb[0].mxu0 %v695
        %v1695 = vpop.f32.mrb[0].mxu0
        %v1696 = vadd.f32 0.0, %v1695
        %v1697 = vpop.f32.mrb[0].mxu0
        %v1698 = vpop.f32.mrb[0].mxu0
        %v1699 = vadd.f32 0.0, %v1698
        %v1700 = vpop.f32.mrb[0].mxu0
        %1701 = vmatprep.mubr.bf16.mxu0 %v698
        %1702 = vmatmul.mubr.bf16.gmra.mrb[0].mxu0 %v697
        %v1703 = vpop.f32.mrb[0].mxu0
        %v1704 = vadd.f32 0.0, %v1703
        %v1705 = vpop.f32.mrb[0].mxu0
        %v1706 = vpop.f32.mrb[0].mxu0
        %v1707 = vadd.f32 0.0, %v1706
        %v1708 = vpop.f32.mrb[0].mxu0
        %1709 = vmatprep.mubr.bf16.mxu0 %v700
        %1710 = vmatmul.mubr.bf16.gmra.mrb[0].mxu0 %v699
        %v1711 = vpop.f32.mrb[0].mxu0
        %v1712 = vadd.f32 0.0, %v1711
        %v1713 = vpop.f32.mrb[0].mxu0
        %v1714 = vpop.f32.mrb[0].mxu0
        %v1715 = vadd.f32 0.0, %v1714
        %v1716 = vpop.f32.mrb[0].mxu0
        %1717 = vmatprep.mubr.bf16.mxu0 %v702
        %1718 = vmatmul.mubr.bf16.gmra.mrb[0].mxu0 %v701
        %v1719 = vpop.f32.mrb[0].mxu0
        %v1720 = vadd.f32 0.0, %v1719
        %v1721 = vpop.f32.mrb[0].mxu0
        %v1722 = vpop.f32.mrb[0].mxu0
        %v1723 = vadd.f32 0.0, %v1722
        %v1724 = vpop.f32.mrb[0].mxu0
        %1725 = vmatprep.mubr.bf16.mxu0 %v704
        %1726 = vmatmul.mubr.bf16.gmra.mrb[0].mxu0 %v703
        %v1727 = vpop.f32.mrb[0].mxu0
        %v1728 = vadd.f32 0.0, %v1727
        %v1729 = vpop.f32.mrb[0].mxu0
        %v1730 = vpop.f32.mrb[0].mxu0
        %v1731 = vadd.f32 0.0, %v1730
        %v1732 = vpop.f32.mrb[0].mxu0
        %1733 = vmatprep.mubr.bf16.mxu0 %v706
        %1734 = vmatmul.mubr.bf16.gmra.mrb[0].mxu0 %v705
        %v1735 = vpop.f32.mrb[0].mxu0
        %v1736 = vadd.f32 0.0, %v1735
        %v1737 = vpop.f32.mrb[0].mxu0
        %v1738 = vpop.f32.mrb[0].mxu0
        %v1739 = vadd.f32 0.0, %v1738
        %v1740 = vpop.f32.mrb[0].mxu0
        %1741 = vmatprep.mubr.bf16.mxu0 %v708
        %1742 = vmatmul.mubr.bf16.gmra.mrb[0].mxu0 %v707
        %v1743 = vpop.f32.mrb[0].mxu0
        %v1744 = vadd.f32 0.0, %v1743
        %v1745 = vpop.f32.mrb[0].mxu0
        %v1746 = vpop.f32.mrb[0].mxu0
        %v1747 = vadd.f32 0.0, %v1746
        %v1748 = vpop.f32.mrb[0].mxu0
        %1749 = vmatprep.mubr.bf16.mxu0 %v710
        %1750 = vmatmul.mubr.bf16.gmra.mrb[0].mxu0 %v709
        %v1751 = vpop.f32.mrb[0].mxu0
        %v1752 = vadd.f32 0.0, %v1751
        %v1753 = vpop.f32.mrb[0].mxu0
        %v1754 = vpop.f32.mrb[0].mxu0
        %v1755 = vadd.f32 0.0, %v1754
        %v1756 = vpop.f32.mrb[0].mxu0
        %1757 = vmatprep.mubr.bf16.mxu0 %v712
        %1758 = vmatmul.mubr.bf16.gmra.mrb[0].mxu0 %v711
        %v1759 = vpop.f32.mrb[0].mxu0
        %v1760 = vadd.f32 0.0, %v1759
        %v1761 = vpop.f32.mrb[0].mxu0
        %v1762 = vpop.f32.mrb[0].mxu0
        %v1763 = vadd.f32 0.0, %v1762
        %v1764 = vpop.f32.mrb[0].mxu0
        %1765 = vmatprep.mubr.bf16.mxu0 %v714
        %1766 = vmatmul.mubr.bf16.gmra.mrb[0].mxu0 %v713
        %v1767 = vpop.f32.mrb[0].mxu0
        %v1768 = vadd.f32 0.0, %v1767
        %v1769 = vpop.f32.mrb[0].mxu0
        %v1770 = vpop.f32.mrb[0].mxu0
        %v1771 = vadd.f32 0.0, %v1770
        %v1772 = vpop.f32.mrb[0].mxu0
        %1773 = vdwg.mxu0
        %v1774 = vpack.c.bf16 %v1266, %v1262
        %v1775 = vpack.c.bf16 %v1268, %v1264
        %v1776 = vpack.c.bf16 %v1459, %v1455
        %v1777 = vpack.c.bf16 %v1461, %v1457
        %v1778 = vpack.c.bf16 %v1276, %v1272
        %v1779 = vpack.c.bf16 %v1278, %v1274
        %v1780 = vpack.c.bf16 %v1469, %v1465
        %v1781 = vpack.c.bf16 %v1471, %v1467
        %v1782 = vpack.c.bf16 %v1286, %v1282
        %v1783 = vpack.c.bf16 %v1288, %v1284
        %v1784 = vpack.c.bf16 %v1479, %v1475
        %v1785 = vpack.c.bf16 %v1481, %v1477
        %v1786 = vpack.c.bf16 %v1296, %v1292
        %v1787 = vpack.c.bf16 %v1298, %v1294
        %v1788 = vpack.c.bf16 %v1489, %v1485
        %v1789 = vpack.c.bf16 %v1491, %v1487
        %v1790 = vpack.c.bf16 %v1306, %v1302
        %v1791 = vpack.c.bf16 %v1308, %v1304
        %v1792 = vpack.c.bf16 %v1499, %v1495
        %v1793 = vpack.c.bf16 %v1501, %v1497
        %v1794 = vpack.c.bf16 %v1316, %v1312
        %v1795 = vpack.c.bf16 %v1318, %v1314
        %v1796 = vpack.c.bf16 %v1509, %v1505
        %v1797 = vpack.c.bf16 %v1511, %v1507
        %v1798 = vpack.c.bf16 %v1326, %v1322
        %v1799 = vpack.c.bf16 %v1328, %v1324
        %v1800 = vpack.c.bf16 %v1519, %v1515
        %v1801 = vpack.c.bf16 %v1521, %v1517
        %v1802 = vpack.c.bf16 %v1336, %v1332
        %v1803 = vpack.c.bf16 %v1338, %v1334
        %v1804 = vpack.c.bf16 %v1529, %v1525
        %v1805 = vpack.c.bf16 %v1531, %v1527
        %v1806 = vpack.c.bf16 %v1346, %v1342
        %v1807 = vpack.c.bf16 %v1348, %v1344
        %v1808 = vpack.c.bf16 %v1539, %v1535
        %v1809 = vpack.c.bf16 %v1541, %v1537
        %v1810 = vpack.c.bf16 %v1356, %v1352
        %v1811 = vpack.c.bf16 %v1358, %v1354
        %v1812 = vpack.c.bf16 %v1549, %v1545
        %v1813 = vpack.c.bf16 %v1551, %v1547
        %v1814 = vpack.c.bf16 %v1366, %v1362
        %v1815 = vpack.c.bf16 %v1368, %v1364
        %v1816 = vpack.c.bf16 %v1559, %v1555
        %v1817 = vpack.c.bf16 %v1561, %v1557
        %v1818 = vpack.c.bf16 %v1376, %v1372
        %v1819 = vpack.c.bf16 %v1378, %v1374
        %v1820 = vpack.c.bf16 %v1569, %v1565
        %v1821 = vpack.c.bf16 %v1571, %v1567
        %v1822 = vpack.c.bf16 %v1386, %v1382
        %v1823 = vpack.c.bf16 %v1388, %v1384
        %v1824 = vpack.c.bf16 %v1579, %v1575
        %v1825 = vpack.c.bf16 %v1581, %v1577
        %v1826 = vpack.c.bf16 %v1396, %v1392
        %v1827 = vpack.c.bf16 %v1398, %v1394
        %v1828 = vpack.c.bf16 %v1589, %v1585
        %v1829 = vpack.c.bf16 %v1591, %v1587
        %v1830 = vpack.c.bf16 %v1406, %v1402
        %v1831 = vpack.c.bf16 %v1408, %v1404
        %v1832 = vpack.c.bf16 %v1599, %v1595
        %v1833 = vpack.c.bf16 %v1601, %v1597
        %v1834 = vpack.c.bf16 %v1416, %v1412
        %v1835 = vpack.c.bf16 %v1418, %v1414
        %v1836 = vpack.c.bf16 %v1609, %v1605
        %v1837 = vpack.c.bf16 %v1611, %v1607
        %v1902 = vunpack.c.l.b16 %v1774
        %v1903 = vunpack.c.l.b16 %v1775
        %v1904 = vunpack.c.l.b16 %v1776
        %v1905 = vunpack.c.l.b16 %v1777
        %v1906 = vunpack.c.h.b16 %v1774
        %v1907 = vunpack.c.h.b16 %v1775
        %v1908 = vunpack.c.h.b16 %v1776
        %v1909 = vunpack.c.h.b16 %v1777
        %v1910 = vunpack.c.l.b16 %v1778
        %v1911 = vunpack.c.l.b16 %v1779
        %v1912 = vunpack.c.l.b16 %v1780
        %v1913 = vunpack.c.l.b16 %v1781
        %v1914 = vunpack.c.h.b16 %v1778
        %v1915 = vunpack.c.h.b16 %v1779
        %v1916 = vunpack.c.h.b16 %v1780
        %v1917 = vunpack.c.h.b16 %v1781
        %v1918 = vunpack.c.l.b16 %v1782
        %v1919 = vunpack.c.l.b16 %v1783
        %v1920 = vunpack.c.l.b16 %v1784
        %v1921 = vunpack.c.l.b16 %v1785
        %v1922 = vunpack.c.h.b16 %v1782
        %v1923 = vunpack.c.h.b16 %v1783
        %v1924 = vunpack.c.h.b16 %v1784
        %v1925 = vunpack.c.h.b16 %v1785
        %v1926 = vunpack.c.l.b16 %v1786
        %v1927 = vunpack.c.l.b16 %v1787
        %v1928 = vunpack.c.l.b16 %v1788
        %v1929 = vunpack.c.l.b16 %v1789
        %v1930 = vunpack.c.h.b16 %v1786
        %v1931 = vunpack.c.h.b16 %v1787
        %v1932 = vunpack.c.h.b16 %v1788
        %v1933 = vunpack.c.h.b16 %v1789
        %v1934 = vunpack.c.l.b16 %v1790
        %v1935 = vunpack.c.l.b16 %v1791
        %v1936 = vunpack.c.l.b16 %v1792
        %v1937 = vunpack.c.l.b16 %v1793
        %v1938 = vunpack.c.h.b16 %v1790
        %v1939 = vunpack.c.h.b16 %v1791
        %v1940 = vunpack.c.h.b16 %v1792
        %v1941 = vunpack.c.h.b16 %v1793
        %v1942 = vunpack.c.l.b16 %v1794
        %v1943 = vunpack.c.l.b16 %v1795
        %v1944 = vunpack.c.l.b16 %v1796
        %v1945 = vunpack.c.l.b16 %v1797
        %v1946 = vunpack.c.h.b16 %v1794
        %v1947 = vunpack.c.h.b16 %v1795
        %v1948 = vunpack.c.h.b16 %v1796
        %v1949 = vunpack.c.h.b16 %v1797
        %v1950 = vunpack.c.l.b16 %v1798
        %v1951 = vunpack.c.l.b16 %v1799
        %v1952 = vunpack.c.l.b16 %v1800
        %v1953 = vunpack.c.l.b16 %v1801
        %v1954 = vunpack.c.h.b16 %v1798
        %v1955 = vunpack.c.h.b16 %v1799
        %v1956 = vunpack.c.h.b16 %v1800
        %v1957 = vunpack.c.h.b16 %v1801
        %v1958 = vunpack.c.l.b16 %v1802
        %v1959 = vunpack.c.l.b16 %v1803
        %v1960 = vunpack.c.l.b16 %v1804
        %v1961 = vunpack.c.l.b16 %v1805
        %v1962 = vunpack.c.h.b16 %v1802
        %v1963 = vunpack.c.h.b16 %v1803
        %v1964 = vunpack.c.h.b16 %v1804
        %v1965 = vunpack.c.h.b16 %v1805
        %v1966 = vunpack.c.l.b16 %v1806
        %v1967 = vunpack.c.l.b16 %v1807
        %v1968 = vunpack.c.l.b16 %v1808
        %v1969 = vunpack.c.l.b16 %v1809
        %v1970 = vunpack.c.h.b16 %v1806
        %v1971 = vunpack.c.h.b16 %v1807
        %v1972 = vunpack.c.h.b16 %v1808
        %v1973 = vunpack.c.h.b16 %v1809
        %v1974 = vunpack.c.l.b16 %v1810
        %v1975 = vunpack.c.l.b16 %v1811
        %v1976 = vunpack.c.l.b16 %v1812
        %v1977 = vunpack.c.l.b16 %v1813
        %v1978 = vunpack.c.h.b16 %v1810
        %v1979 = vunpack.c.h.b16 %v1811
        %v1980 = vunpack.c.h.b16 %v1812
        %v1981 = vunpack.c.h.b16 %v1813
        %v1982 = vunpack.c.l.b16 %v1814
        %v1983 = vunpack.c.l.b16 %v1815
        %v1984 = vunpack.c.l.b16 %v1816
        %v1985 = vunpack.c.l.b16 %v1817
        %v1986 = vunpack.c.h.b16 %v1814
        %v1987 = vunpack.c.h.b16 %v1815
        %v1988 = vunpack.c.h.b16 %v1816
        %v1989 = vunpack.c.h.b16 %v1817
        %v1990 = vunpack.c.l.b16 %v1818
        %v1991 = vunpack.c.l.b16 %v1819
        %v1992 = vunpack.c.l.b16 %v1820
        %v1993 = vunpack.c.l.b16 %v1821
        %v1994 = vunpack.c.h.b16 %v1818
        %v1995 = vunpack.c.h.b16 %v1819
        %v1996 = vunpack.c.h.b16 %v1820
        %v1997 = vunpack.c.h.b16 %v1821
        %v1998 = vunpack.c.l.b16 %v1822
        %v1999 = vunpack.c.l.b16 %v1823
        %v2000 = vunpack.c.l.b16 %v1824
        %v2001 = vunpack.c.l.b16 %v1825
        %v2002 = vunpack.c.h.b16 %v1822
        %v2003 = vunpack.c.h.b16 %v1823
        %v2004 = vunpack.c.h.b16 %v1824
        %v2005 = vunpack.c.h.b16 %v1825
        %v2006 = vunpack.c.l.b16 %v1826
        %v2007 = vunpack.c.l.b16 %v1827
        %v2008 = vunpack.c.l.b16 %v1828
        %v2009 = vunpack.c.l.b16 %v1829
        %v2010 = vunpack.c.h.b16 %v1826
        %v2011 = vunpack.c.h.b16 %v1827
        %v2012 = vunpack.c.h.b16 %v1828
        %v2013 = vunpack.c.h.b16 %v1829
        %v2014 = vunpack.c.l.b16 %v1830
        %v2015 = vunpack.c.l.b16 %v1831
        %v2016 = vunpack.c.l.b16 %v1832
        %v2017 = vunpack.c.l.b16 %v1833
        %v2018 = vunpack.c.h.b16 %v1830
        %v2019 = vunpack.c.h.b16 %v1831
        %v2020 = vunpack.c.h.b16 %v1832
        %v2021 = vunpack.c.h.b16 %v1833
        %v2022 = vunpack.c.l.b16 %v1834
        %v2023 = vunpack.c.l.b16 %v1835
        %v2024 = vunpack.c.l.b16 %v1836
        %v2025 = vunpack.c.l.b16 %v1837
        %v2026 = vunpack.c.h.b16 %v1834
        %v2027 = vunpack.c.h.b16 %v1835
        %v2028 = vunpack.c.h.b16 %v1836
        %v2029 = vunpack.c.h.b16 %v1837
        %v2030 = vpack.c.b16 %v1903, %v1902
        %v2031 = vpack.c.b16 %v1905, %v1904
        %v2032 = vpack.c.b16 %v1907, %v1906
        %v2033 = vpack.c.b16 %v1909, %v1908
        %v2034 = vpack.c.b16 %v1911, %v1910
        %v2035 = vpack.c.b16 %v1913, %v1912
        %v2036 = vpack.c.b16 %v1915, %v1914
        %v2037 = vpack.c.b16 %v1917, %v1916
        %v2038 = vpack.c.b16 %v1919, %v1918
        %v2039 = vpack.c.b16 %v1921, %v1920
        %v2040 = vpack.c.b16 %v1923, %v1922
        %v2041 = vpack.c.b16 %v1925, %v1924
        %v2042 = vpack.c.b16 %v1927, %v1926
        %v2043 = vpack.c.b16 %v1929, %v1928
        %v2044 = vpack.c.b16 %v1931, %v1930
        %v2045 = vpack.c.b16 %v1933, %v1932
        %v2046 = vpack.c.b16 %v1935, %v1934
        %v2047 = vpack.c.b16 %v1937, %v1936
        %v2048 = vpack.c.b16 %v1939, %v1938
        %v2049 = vpack.c.b16 %v1941, %v1940
        %v2050 = vpack.c.b16 %v1943, %v1942
        %v2051 = vpack.c.b16 %v1945, %v1944
        %v2052 = vpack.c.b16 %v1947, %v1946
        %v2053 = vpack.c.b16 %v1949, %v1948
        %v2054 = vpack.c.b16 %v1951, %v1950
        %v2055 = vpack.c.b16 %v1953, %v1952
        %v2056 = vpack.c.b16 %v1955, %v1954
        %v2057 = vpack.c.b16 %v1957, %v1956
        %v2058 = vpack.c.b16 %v1959, %v1958
        %v2059 = vpack.c.b16 %v1961, %v1960
        %v2060 = vpack.c.b16 %v1963, %v1962
        %v2061 = vpack.c.b16 %v1965, %v1964
        %v2062 = vpack.c.b16 %v1967, %v1966
        %v2063 = vpack.c.b16 %v1969, %v1968
        %v2064 = vpack.c.b16 %v1971, %v1970
        %v2065 = vpack.c.b16 %v1973, %v1972
        %v2066 = vpack.c.b16 %v1975, %v1974
        %v2067 = vpack.c.b16 %v1977, %v1976
        %v2068 = vpack.c.b16 %v1979, %v1978
        %v2069 = vpack.c.b16 %v1981, %v1980
        %v2070 = vpack.c.b16 %v1983, %v1982
        %v2071 = vpack.c.b16 %v1985, %v1984
        %v2072 = vpack.c.b16 %v1987, %v1986
        %v2073 = vpack.c.b16 %v1989, %v1988
        %v2074 = vpack.c.b16 %v1991, %v1990
        %v2075 = vpack.c.b16 %v1993, %v1992
        %v2076 = vpack.c.b16 %v1995, %v1994
        %v2077 = vpack.c.b16 %v1997, %v1996
        %v2078 = vpack.c.b16 %v1999, %v1998
        %v2079 = vpack.c.b16 %v2001, %v2000
        %v2080 = vpack.c.b16 %v2003, %v2002
        %v2081 = vpack.c.b16 %v2005, %v2004
        %v2082 = vpack.c.b16 %v2007, %v2006
        %v2083 = vpack.c.b16 %v2009, %v2008
        %v2084 = vpack.c.b16 %v2011, %v2010
        %v2085 = vpack.c.b16 %v2013, %v2012
        %v2086 = vpack.c.b16 %v2015, %v2014
        %v2087 = vpack.c.b16 %v2017, %v2016
        %v2088 = vpack.c.b16 %v2019, %v2018
        %v2089 = vpack.c.b16 %v2021, %v2020
        %v2090 = vpack.c.b16 %v2023, %v2022
        %v2091 = vpack.c.b16 %v2025, %v2024
        %v2092 = vpack.c.b16 %v2027, %v2026
        %v2093 = vpack.c.b16 %v2029, %v2028
        %2158 = vst [vmem:[%s279] sm:$0xff] %v2030
        %2159 = vst [vmem:[%s279 + $0x8] sm:$0xff] %v2031
        %2160 = vst [vmem:[%s279 + $0x10] sm:$0xff] %v2032
        %2161 = vst [vmem:[%s279 + $0x18] sm:$0xff] %v2033
        %2162 = vst [vmem:[%s279 + $0x20] sm:$0xff] %v2034
        %2163 = vst [vmem:[%s279 + $0x28] sm:$0xff] %v2035
        %2164 = vst [vmem:[%s279 + $0x30] sm:$0xff] %v2036
        %2165 = vst [vmem:[%s279 + $0x38] sm:$0xff] %v2037
        %2166 = vst [vmem:[%s279 + $0x40] sm:$0xff] %v2038
        %2167 = vst [vmem:[%s279 + $0x48] sm:$0xff] %v2039
        %2168 = vst [vmem:[%s279 + $0x50] sm:$0xff] %v2040
        %2169 = vst [vmem:[%s279 + $0x58] sm:$0xff] %v2041
        %2170 = vst [vmem:[%s279 + $0x60] sm:$0xff] %v2042
        %2171 = vst [vmem:[%s279 + $0x68] sm:$0xff] %v2043
        %2172 = vst [vmem:[%s279 + $0x70] sm:$0xff] %v2044
        %2173 = vst [vmem:[%s279 + $0x78] sm:$0xff] %v2045
        %2174 = vst [vmem:[%s279 + $0x80] sm:$0xff] %v2046
        %2175 = vst [vmem:[%s279 + $0x88] sm:$0xff] %v2047
        %2176 = vst [vmem:[%s279 + $0x90] sm:$0xff] %v2048
        %2177 = vst [vmem:[%s279 + $0x98] sm:$0xff] %v2049
        %2178 = vst [vmem:[%s279 + $0xa0] sm:$0xff] %v2050
        %2179 = vst [vmem:[%s279 + $0xa8] sm:$0xff] %v2051
        %2180 = vst [vmem:[%s279 + $0xb0] sm:$0xff] %v2052
        %2181 = vst [vmem:[%s279 + $0xb8] sm:$0xff] %v2053
        %2182 = vst [vmem:[%s279 + $0xc0] sm:$0xff] %v2054
        %2183 = vst [vmem:[%s279 + $0xc8] sm:$0xff] %v2055
        %2184 = vst [vmem:[%s279 + $0xd0] sm:$0xff] %v2056
        %2185 = vst [vmem:[%s279 + $0xd8] sm:$0xff] %v2057
        %2186 = vst [vmem:[%s279 + $0xe0] sm:$0xff] %v2058
        %2187 = vst [vmem:[%s279 + $0xe8] sm:$0xff] %v2059
        %2188 = vst [vmem:[%s279 + $0xf0] sm:$0xff] %v2060
        %2189 = vst [vmem:[%s279 + $0xf8] sm:$0xff] %v2061
        %2190 = vst [vmem:[%s279 + $0x100] sm:$0xff] %v2062
        %2191 = vst [vmem:[%s279 + $0x108] sm:$0xff] %v2063
        %2192 = vst [vmem:[%s279 + $0x110] sm:$0xff] %v2064
        %2193 = vst [vmem:[%s279 + $0x118] sm:$0xff] %v2065
        %2194 = vst [vmem:[%s279 + $0x120] sm:$0xff] %v2066
        %2195 = vst [vmem:[%s279 + $0x128] sm:$0xff] %v2067
        %2196 = vst [vmem:[%s279 + $0x130] sm:$0xff] %v2068
        %2197 = vst [vmem:[%s279 + $0x138] sm:$0xff] %v2069
        %2198 = vst [vmem:[%s279 + $0x140] sm:$0xff] %v2070
        %2199 = vst [vmem:[%s279 + $0x148] sm:$0xff] %v2071
        %2200 = vst [vmem:[%s279 + $0x150] sm:$0xff] %v2072
        %2201 = vst [vmem:[%s279 + $0x158] sm:$0xff] %v2073
        %2202 = vst [vmem:[%s279 + $0x160] sm:$0xff] %v2074
        %2203 = vst [vmem:[%s279 + $0x168] sm:$0xff] %v2075
        %2204 = vst [vmem:[%s279 + $0x170] sm:$0xff] %v2076
        %2205 = vst [vmem:[%s279 + $0x178] sm:$0xff] %v2077
        %2206 = vst [vmem:[%s279 + $0x180] sm:$0xff] %v2078
        %2207 = vst [vmem:[%s279 + $0x188] sm:$0xff] %v2079
        %2208 = vst [vmem:[%s279 + $0x190] sm:$0xff] %v2080
        %2209 = vst [vmem:[%s279 + $0x198] sm:$0xff] %v2081
        %2210 = vst [vmem:[%s279 + $0x1a0] sm:$0xff] %v2082
        %2211 = vst [vmem:[%s279 + $0x1a8] sm:$0xff] %v2083
        %2212 = vst [vmem:[%s279 + $0x1b0] sm:$0xff] %v2084
        %2213 = vst [vmem:[%s279 + $0x1b8] sm:$0xff] %v2085
        %2214 = vst [vmem:[%s279 + $0x1c0] sm:$0xff] %v2086
        %2215 = vst [vmem:[%s279 + $0x1c8] sm:$0xff] %v2087
        %2216 = vst [vmem:[%s279 + $0x1d0] sm:$0xff] %v2088
        %2217 = vst [vmem:[%s279 + $0x1d8] sm:$0xff] %v2089
        %2218 = vst [vmem:[%s279 + $0x1e0] sm:$0xff] %v2090
        %2219 = vst [vmem:[%s279 + $0x1e8] sm:$0xff] %v2091
        %2220 = vst [vmem:[%s279 + $0x1f0] sm:$0xff] %v2092
        %2221 = vst [vmem:[%s279 + $0x1f8] sm:$0xff] %v2093
        %v2222 = vadd.s32 %v393, 256
        %v2223 = vadd.s32 %v393, 384
        %2224 = vset.pattern.permute.xlu0 0
        %2225 = vperm.xlu0 %2224, %v360
        %v2226 = vpop.permute.xlu0 %2225
        %2227 = vset.pattern.permute.xlu0 0
        %2228 = vperm.xlu0 %2227, %v361
        %v2229 = vpop.permute.xlu0 %2228
        %2230 = vset.pattern.permute.xlu0 0
        %2231 = vperm.xlu0 %2230, %v362
        %v2232 = vpop.permute.xlu0 %2231
        %2233 = vset.pattern.permute.xlu0 0
        %2234 = vperm.xlu0 %2233, %v363
        %v2235 = vpop.permute.xlu0 %2234
        %2236 = vset.pattern.permute.xlu0 0
        %2237 = vperm.xlu0 %2236, %v364
        %v2238 = vpop.permute.xlu0 %2237
        %2239 = vset.pattern.permute.xlu0 0
        %2240 = vperm.xlu0 %2239, %v365
        %v2241 = vpop.permute.xlu0 %2240
        %2242 = vset.pattern.permute.xlu0 0
        %2243 = vperm.xlu0 %2242, %v366
        %v2244 = vpop.permute.xlu0 %2243
        %2245 = vset.pattern.permute.xlu0 0
        %2246 = vperm.xlu0 %2245, %v367
        %v2247 = vpop.permute.xlu0 %2246
        %2248 = vset.pattern.permute.xlu0 0
        %2249 = vperm.xlu0 %2248, %v368
        %v2250 = vpop.permute.xlu0 %2249
        %2251 = vset.pattern.permute.xlu0 0
        %2252 = vperm.xlu0 %2251, %v369
        %v2253 = vpop.permute.xlu0 %2252
        %2254 = vset.pattern.permute.xlu0 0
        %2255 = vperm.xlu0 %2254, %v370
        %v2256 = vpop.permute.xlu0 %2255
        %2257 = vset.pattern.permute.xlu0 0
        %2258 = vperm.xlu0 %2257, %v371
        %v2259 = vpop.permute.xlu0 %2258
        %2260 = vset.pattern.permute.xlu0 0
        %2261 = vperm.xlu0 %2260, %v372
        %v2262 = vpop.permute.xlu0 %2261
        %2263 = vset.pattern.permute.xlu0 0
        %2264 = vperm.xlu0 %2263, %v373
        %v2265 = vpop.permute.xlu0 %2264
        %2266 = vset.pattern.permute.xlu0 0
        %2267 = vperm.xlu0 %2266, %v374
        %v2268 = vpop.permute.xlu0 %2267
        %2269 = vset.pattern.permute.xlu0 0
        %2270 = vperm.xlu0 %2269, %v375
        %v2271 = vpop.permute.xlu0 %2270
        %2272 = vset.pattern.permute.xlu0 0
        %2273 = vperm.xlu0 %2272, %v376
        %v2274 = vpop.permute.xlu0 %2273
        %2275 = vset.pattern.permute.xlu0 0
        %2276 = vperm.xlu0 %2275, %v377
        %v2277 = vpop.permute.xlu0 %2276
        %2278 = vset.pattern.permute.xlu0 0
        %2279 = vperm.xlu0 %2278, %v378
        %v2280 = vpop.permute.xlu0 %2279
        %2281 = vset.pattern.permute.xlu0 0
        %2282 = vperm.xlu0 %2281, %v379
        %v2283 = vpop.permute.xlu0 %2282
        %2284 = vset.pattern.permute.xlu0 0
        %2285 = vperm.xlu0 %2284, %v380
        %v2286 = vpop.permute.xlu0 %2285
        %2287 = vset.pattern.permute.xlu0 0
        %2288 = vperm.xlu0 %2287, %v381
        %v2289 = vpop.permute.xlu0 %2288
        %2290 = vset.pattern.permute.xlu0 0
        %2291 = vperm.xlu0 %2290, %v382
        %v2292 = vpop.permute.xlu0 %2291
        %2293 = vset.pattern.permute.xlu0 0
        %2294 = vperm.xlu0 %2293, %v383
        %v2295 = vpop.permute.xlu0 %2294
        %2296 = vset.pattern.permute.xlu0 0
        %2297 = vperm.xlu0 %2296, %v384
        %v2298 = vpop.permute.xlu0 %2297
        %2299 = vset.pattern.permute.xlu0 0
        %2300 = vperm.xlu0 %2299, %v385
        %v2301 = vpop.permute.xlu0 %2300
        %2302 = vset.pattern.permute.xlu0 0
        %2303 = vperm.xlu0 %2302, %v386
        %v2304 = vpop.permute.xlu0 %2303
        %2305 = vset.pattern.permute.xlu0 0
        %2306 = vperm.xlu0 %2305, %v387
        %v2307 = vpop.permute.xlu0 %2306
        %2308 = vset.pattern.permute.xlu0 0
        %2309 = vperm.xlu0 %2308, %v388
        %v2310 = vpop.permute.xlu0 %2309
        %2311 = vset.pattern.permute.xlu0 0
        %2312 = vperm.xlu0 %2311, %v389
        %v2313 = vpop.permute.xlu0 %2312
        %2314 = vset.pattern.permute.xlu0 0
        %2315 = vperm.xlu0 %2314, %v390
        %v2316 = vpop.permute.xlu0 %2315
        %2317 = vset.pattern.permute.xlu0 0
        %2318 = vperm.xlu0 %2317, %v391
        %v2319 = vpop.permute.xlu0 %2318
        %vm2320 = vcmp.eq.s32.totalorder %v2226, %v393
        %vm2321 = vcmp.eq.s32.totalorder %v2226, %v394
        %vm2322 = vcmp.eq.s32.totalorder %v2226, %v2222
        %vm2323 = vcmp.eq.s32.totalorder %v2226, %v2223
        %vm2324 = vcmp.eq.s32.totalorder %v2229, %v393
        %vm2325 = vcmp.eq.s32.totalorder %v2229, %v394
        %vm2326 = vcmp.eq.s32.totalorder %v2229, %v2222
        %vm2327 = vcmp.eq.s32.totalorder %v2229, %v2223
        %vm2328 = vcmp.eq.s32.totalorder %v2232, %v393
        %vm2329 = vcmp.eq.s32.totalorder %v2232, %v394
        %vm2330 = vcmp.eq.s32.totalorder %v2232, %v2222
        %vm2331 = vcmp.eq.s32.totalorder %v2232, %v2223
        %vm2332 = vcmp.eq.s32.totalorder %v2235, %v393
        %vm2333 = vcmp.eq.s32.totalorder %v2235, %v394
        %vm2334 = vcmp.eq.s32.totalorder %v2235, %v2222
        %vm2335 = vcmp.eq.s32.totalorder %v2235, %v2223
        %vm2336 = vcmp.eq.s32.totalorder %v2238, %v393
        %vm2337 = vcmp.eq.s32.totalorder %v2238, %v394
        %vm2338 = vcmp.eq.s32.totalorder %v2238, %v2222
        %vm2339 = vcmp.eq.s32.totalorder %v2238, %v2223
        %vm2340 = vcmp.eq.s32.totalorder %v2241, %v393
        %vm2341 = vcmp.eq.s32.totalorder %v2241, %v394
        %vm2342 = vcmp.eq.s32.totalorder %v2241, %v2222
        %vm2343 = vcmp.eq.s32.totalorder %v2241, %v2223
        %vm2344 = vcmp.eq.s32.totalorder %v2244, %v393
        %vm2345 = vcmp.eq.s32.totalorder %v2244, %v394
        %vm2346 = vcmp.eq.s32.totalorder %v2244, %v2222
        %vm2347 = vcmp.eq.s32.totalorder %v2244, %v2223
        %vm2348 = vcmp.eq.s32.totalorder %v2247, %v393
        %vm2349 = vcmp.eq.s32.totalorder %v2247, %v394
        %vm2350 = vcmp.eq.s32.totalorder %v2247, %v2222
        %vm2351 = vcmp.eq.s32.totalorder %v2247, %v2223
        %vm2352 = vcmp.eq.s32.totalorder %v2250, %v393
        %vm2353 = vcmp.eq.s32.totalorder %v2250, %v394
        %vm2354 = vcmp.eq.s32.totalorder %v2250, %v2222
        %vm2355 = vcmp.eq.s32.totalorder %v2250, %v2223
        %vm2356 = vcmp.eq.s32.totalorder %v2253, %v393
        %vm2357 = vcmp.eq.s32.totalorder %v2253, %v394
        %vm2358 = vcmp.eq.s32.totalorder %v2253, %v2222
        %vm2359 = vcmp.eq.s32.totalorder %v2253, %v2223
        %vm2360 = vcmp.eq.s32.totalorder %v2256, %v393
        %vm2361 = vcmp.eq.s32.totalorder %v2256, %v394
        %vm2362 = vcmp.eq.s32.totalorder %v2256, %v2222
        %vm2363 = vcmp.eq.s32.totalorder %v2256, %v2223
        %vm2364 = vcmp.eq.s32.totalorder %v2259, %v393
        %vm2365 = vcmp.eq.s32.totalorder %v2259, %v394
        %vm2366 = vcmp.eq.s32.totalorder %v2259, %v2222
        %vm2367 = vcmp.eq.s32.totalorder %v2259, %v2223
        %vm2368 = vcmp.eq.s32.totalorder %v2262, %v393
        %vm2369 = vcmp.eq.s32.totalorder %v2262, %v394
        %vm2370 = vcmp.eq.s32.totalorder %v2262, %v2222
        %vm2371 = vcmp.eq.s32.totalorder %v2262, %v2223
        %vm2372 = vcmp.eq.s32.totalorder %v2265, %v393
        %vm2373 = vcmp.eq.s32.totalorder %v2265, %v394
        %vm2374 = vcmp.eq.s32.totalorder %v2265, %v2222
        %vm2375 = vcmp.eq.s32.totalorder %v2265, %v2223
        %vm2376 = vcmp.eq.s32.totalorder %v2268, %v393
        %vm2377 = vcmp.eq.s32.totalorder %v2268, %v394
        %vm2378 = vcmp.eq.s32.totalorder %v2268, %v2222
        %vm2379 = vcmp.eq.s32.totalorder %v2268, %v2223
        %vm2380 = vcmp.eq.s32.totalorder %v2271, %v393
        %vm2381 = vcmp.eq.s32.totalorder %v2271, %v394
        %vm2382 = vcmp.eq.s32.totalorder %v2271, %v2222
        %vm2383 = vcmp.eq.s32.totalorder %v2271, %v2223
        %vm2384 = vcmp.eq.s32.totalorder %v2274, %v393
        %vm2385 = vcmp.eq.s32.totalorder %v2274, %v394
        %vm2386 = vcmp.eq.s32.totalorder %v2274, %v2222
        %vm2387 = vcmp.eq.s32.totalorder %v2274, %v2223
        %vm2388 = vcmp.eq.s32.totalorder %v2277, %v393
        %vm2389 = vcmp.eq.s32.totalorder %v2277, %v394
        %vm2390 = vcmp.eq.s32.totalorder %v2277, %v2222
        %vm2391 = vcmp.eq.s32.totalorder %v2277, %v2223
        %vm2392 = vcmp.eq.s32.totalorder %v2280, %v393
        %vm2393 = vcmp.eq.s32.totalorder %v2280, %v394
        %vm2394 = vcmp.eq.s32.totalorder %v2280, %v2222
        %vm2395 = vcmp.eq.s32.totalorder %v2280, %v2223
        %vm2396 = vcmp.eq.s32.totalorder %v2283, %v393
        %vm2397 = vcmp.eq.s32.totalorder %v2283, %v394
        %vm2398 = vcmp.eq.s32.totalorder %v2283, %v2222
        %vm2399 = vcmp.eq.s32.totalorder %v2283, %v2223
        %vm2400 = vcmp.eq.s32.totalorder %v2286, %v393
        %vm2401 = vcmp.eq.s32.totalorder %v2286, %v394
        %vm2402 = vcmp.eq.s32.totalorder %v2286, %v2222
        %vm2403 = vcmp.eq.s32.totalorder %v2286, %v2223
        %vm2404 = vcmp.eq.s32.totalorder %v2289, %v393
        %vm2405 = vcmp.eq.s32.totalorder %v2289, %v394
        %vm2406 = vcmp.eq.s32.totalorder %v2289, %v2222
        %vm2407 = vcmp.eq.s32.totalorder %v2289, %v2223
        %vm2408 = vcmp.eq.s32.totalorder %v2292, %v393
        %vm2409 = vcmp.eq.s32.totalorder %v2292, %v394
        %vm2410 = vcmp.eq.s32.totalorder %v2292, %v2222
        %vm2411 = vcmp.eq.s32.totalorder %v2292, %v2223
        %vm2412 = vcmp.eq.s32.totalorder %v2295, %v393
        %vm2413 = vcmp.eq.s32.totalorder %v2295, %v394
        %vm2414 = vcmp.eq.s32.totalorder %v2295, %v2222
        %vm2415 = vcmp.eq.s32.totalorder %v2295, %v2223
        %vm2416 = vcmp.eq.s32.totalorder %v2298, %v393
        %vm2417 = vcmp.eq.s32.totalorder %v2298, %v394
        %vm2418 = vcmp.eq.s32.totalorder %v2298, %v2222
        %vm2419 = vcmp.eq.s32.totalorder %v2298, %v2223
        %vm2420 = vcmp.eq.s32.totalorder %v2301, %v393
        %vm2421 = vcmp.eq.s32.totalorder %v2301, %v394
        %vm2422 = vcmp.eq.s32.totalorder %v2301, %v2222
        %vm2423 = vcmp.eq.s32.totalorder %v2301, %v2223
        %vm2424 = vcmp.eq.s32.totalorder %v2304, %v393
        %vm2425 = vcmp.eq.s32.totalorder %v2304, %v394
        %vm2426 = vcmp.eq.s32.totalorder %v2304, %v2222
        %vm2427 = vcmp.eq.s32.totalorder %v2304, %v2223
        %vm2428 = vcmp.eq.s32.totalorder %v2307, %v393
        %vm2429 = vcmp.eq.s32.totalorder %v2307, %v394
        %vm2430 = vcmp.eq.s32.totalorder %v2307, %v2222
        %vm2431 = vcmp.eq.s32.totalorder %v2307, %v2223
        %vm2432 = vcmp.eq.s32.totalorder %v2310, %v393
        %vm2433 = vcmp.eq.s32.totalorder %v2310, %v394
        %vm2434 = vcmp.eq.s32.totalorder %v2310, %v2222
        %vm2435 = vcmp.eq.s32.totalorder %v2310, %v2223
        %vm2436 = vcmp.eq.s32.totalorder %v2313, %v393
        %vm2437 = vcmp.eq.s32.totalorder %v2313, %v394
        %vm2438 = vcmp.eq.s32.totalorder %v2313, %v2222
        %vm2439 = vcmp.eq.s32.totalorder %v2313, %v2223
        %vm2440 = vcmp.eq.s32.totalorder %v2316, %v393
        %vm2441 = vcmp.eq.s32.totalorder %v2316, %v394
        %vm2442 = vcmp.eq.s32.totalorder %v2316, %v2222
        %vm2443 = vcmp.eq.s32.totalorder %v2316, %v2223
        %vm2444 = vcmp.eq.s32.totalorder %v2319, %v393
        %vm2445 = vcmp.eq.s32.totalorder %v2319, %v394
        %vm2446 = vcmp.eq.s32.totalorder %v2319, %v2222
        %vm2447 = vcmp.eq.s32.totalorder %v2319, %v2223
        %v2448 = vsel %vm2320, 1, 0
        %v2449 = vsel %vm2321, 1, 0
        %v2450 = vsel %vm2322, 1, 0
        %v2451 = vsel %vm2323, 1, 0
        %v2452 = vsel %vm2324, 1, 0
        %v2453 = vsel %vm2325, 1, 0
        %v2454 = vsel %vm2326, 1, 0
        %v2455 = vsel %vm2327, 1, 0
        %v2456 = vsel %vm2328, 1, 0
        %v2457 = vsel %vm2329, 1, 0
        %v2458 = vsel %vm2330, 1, 0
        %v2459 = vsel %vm2331, 1, 0
        %v2460 = vsel %vm2332, 1, 0
        %v2461 = vsel %vm2333, 1, 0
        %v2462 = vsel %vm2334, 1, 0
        %v2463 = vsel %vm2335, 1, 0
        %v2464 = vsel %vm2336, 1, 0
        %v2465 = vsel %vm2337, 1, 0
        %v2466 = vsel %vm2338, 1, 0
        %v2467 = vsel %vm2339, 1, 0
        %v2468 = vsel %vm2340, 1, 0
        %v2469 = vsel %vm2341, 1, 0
        %v2470 = vsel %vm2342, 1, 0
        %v2471 = vsel %vm2343, 1, 0
        %v2472 = vsel %vm2344, 1, 0
        %v2473 = vsel %vm2345, 1, 0
        %v2474 = vsel %vm2346, 1, 0
        %v2475 = vsel %vm2347, 1, 0
        %v2476 = vsel %vm2348, 1, 0
        %v2477 = vsel %vm2349, 1, 0
        %v2478 = vsel %vm2350, 1, 0
        %v2479 = vsel %vm2351, 1, 0
        %v2480 = vsel %vm2352, 1, 0
        %v2481 = vsel %vm2353, 1, 0
        %v2482 = vsel %vm2354, 1, 0
        %v2483 = vsel %vm2355, 1, 0
        %v2484 = vsel %vm2356, 1, 0
        %v2485 = vsel %vm2357, 1, 0
        %v2486 = vsel %vm2358, 1, 0
        %v2487 = vsel %vm2359, 1, 0
        %v2488 = vsel %vm2360, 1, 0
        %v2489 = vsel %vm2361, 1, 0
        %v2490 = vsel %vm2362, 1, 0
        %v2491 = vsel %vm2363, 1, 0
        %v2492 = vsel %vm2364, 1, 0
        %v2493 = vsel %vm2365, 1, 0
        %v2494 = vsel %vm2366, 1, 0
        %v2495 = vsel %vm2367, 1, 0
        %v2496 = vsel %vm2368, 1, 0
        %v2497 = vsel %vm2369, 1, 0
        %v2498 = vsel %vm2370, 1, 0
        %v2499 = vsel %vm2371, 1, 0
        %v2500 = vsel %vm2372, 1, 0
        %v2501 = vsel %vm2373, 1, 0
        %v2502 = vsel %vm2374, 1, 0
        %v2503 = vsel %vm2375, 1, 0
        %v2504 = vsel %vm2376, 1, 0
        %v2505 = vsel %vm2377, 1, 0
        %v2506 = vsel %vm2378, 1, 0
        %v2507 = vsel %vm2379, 1, 0
        %v2508 = vsel %vm2380, 1, 0
        %v2509 = vsel %vm2381, 1, 0
        %v2510 = vsel %vm2382, 1, 0
        %v2511 = vsel %vm2383, 1, 0
        %v2512 = vsel %vm2384, 1, 0
        %v2513 = vsel %vm2385, 1, 0
        %v2514 = vsel %vm2386, 1, 0
        %v2515 = vsel %vm2387, 1, 0
        %v2516 = vsel %vm2388, 1, 0
        %v2517 = vsel %vm2389, 1, 0
        %v2518 = vsel %vm2390, 1, 0
        %v2519 = vsel %vm2391, 1, 0
        %v2520 = vsel %vm2392, 1, 0
        %v2521 = vsel %vm2393, 1, 0
        %v2522 = vsel %vm2394, 1, 0
        %v2523 = vsel %vm2395, 1, 0
        %v2524 = vsel %vm2396, 1, 0
        %v2525 = vsel %vm2397, 1, 0
        %v2526 = vsel %vm2398, 1, 0
        %v2527 = vsel %vm2399, 1, 0
        %v2528 = vsel %vm2400, 1, 0
        %v2529 = vsel %vm2401, 1, 0
        %v2530 = vsel %vm2402, 1, 0
        %v2531 = vsel %vm2403, 1, 0
        %v2532 = vsel %vm2404, 1, 0
        %v2533 = vsel %vm2405, 1, 0
        %v2534 = vsel %vm2406, 1, 0
        %v2535 = vsel %vm2407, 1, 0
        %v2536 = vsel %vm2408, 1, 0
        %v2537 = vsel %vm2409, 1, 0
        %v2538 = vsel %vm2410, 1, 0
        %v2539 = vsel %vm2411, 1, 0
        %v2540 = vsel %vm2412, 1, 0
        %v2541 = vsel %vm2413, 1, 0
        %v2542 = vsel %vm2414, 1, 0
        %v2543 = vsel %vm2415, 1, 0
        %v2544 = vsel %vm2416, 1, 0
        %v2545 = vsel %vm2417, 1, 0
        %v2546 = vsel %vm2418, 1, 0
        %v2547 = vsel %vm2419, 1, 0
        %v2548 = vsel %vm2420, 1, 0
        %v2549 = vsel %vm2421, 1, 0
        %v2550 = vsel %vm2422, 1, 0
        %v2551 = vsel %vm2423, 1, 0
        %v2552 = vsel %vm2424, 1, 0
        %v2553 = vsel %vm2425, 1, 0
        %v2554 = vsel %vm2426, 1, 0
        %v2555 = vsel %vm2427, 1, 0
        %v2556 = vsel %vm2428, 1, 0
        %v2557 = vsel %vm2429, 1, 0
        %v2558 = vsel %vm2430, 1, 0
        %v2559 = vsel %vm2431, 1, 0
        %v2560 = vsel %vm2432, 1, 0
        %v2561 = vsel %vm2433, 1, 0
        %v2562 = vsel %vm2434, 1, 0
        %v2563 = vsel %vm2435, 1, 0
        %v2564 = vsel %vm2436, 1, 0
        %v2565 = vsel %vm2437, 1, 0
        %v2566 = vsel %vm2438, 1, 0
        %v2567 = vsel %vm2439, 1, 0
        %v2568 = vsel %vm2440, 1, 0
        %v2569 = vsel %vm2441, 1, 0
        %v2570 = vsel %vm2442, 1, 0
        %v2571 = vsel %vm2443, 1, 0
        %v2572 = vsel %vm2444, 1, 0
        %v2573 = vsel %vm2445, 1, 0
        %v2574 = vsel %vm2446, 1, 0
        %v2575 = vsel %vm2447, 1, 0
        %v2576 = vcvt.s32.f32 %v2448
        %v2577 = vcvt.s32.f32 %v2449
        %v2578 = vcvt.s32.f32 %v2450
        %v2579 = vcvt.s32.f32 %v2451
        %v2580 = vcvt.s32.f32 %v2452
        %v2581 = vcvt.s32.f32 %v2453
        %v2582 = vcvt.s32.f32 %v2454
        %v2583 = vcvt.s32.f32 %v2455
        %v2584 = vcvt.s32.f32 %v2456
        %v2585 = vcvt.s32.f32 %v2457
        %v2586 = vcvt.s32.f32 %v2458
        %v2587 = vcvt.s32.f32 %v2459
        %v2588 = vcvt.s32.f32 %v2460
        %v2589 = vcvt.s32.f32 %v2461
        %v2590 = vcvt.s32.f32 %v2462
        %v2591 = vcvt.s32.f32 %v2463
        %v2592 = vcvt.s32.f32 %v2464
        %v2593 = vcvt.s32.f32 %v2465
        %v2594 = vcvt.s32.f32 %v2466
        %v2595 = vcvt.s32.f32 %v2467
        %v2596 = vcvt.s32.f32 %v2468
        %v2597 = vcvt.s32.f32 %v2469
        %v2598 = vcvt.s32.f32 %v2470
        %v2599 = vcvt.s32.f32 %v2471
        %v2600 = vcvt.s32.f32 %v2472
        %v2601 = vcvt.s32.f32 %v2473
        %v2602 = vcvt.s32.f32 %v2474
        %v2603 = vcvt.s32.f32 %v2475
        %v2604 = vcvt.s32.f32 %v2476
        %v2605 = vcvt.s32.f32 %v2477
        %v2606 = vcvt.s32.f32 %v2478
        %v2607 = vcvt.s32.f32 %v2479
        %v2608 = vcvt.s32.f32 %v2480
        %v2609 = vcvt.s32.f32 %v2481
        %v2610 = vcvt.s32.f32 %v2482
        %v2611 = vcvt.s32.f32 %v2483
        %v2612 = vcvt.s32.f32 %v2484
        %v2613 = vcvt.s32.f32 %v2485
        %v2614 = vcvt.s32.f32 %v2486
        %v2615 = vcvt.s32.f32 %v2487
        %v2616 = vcvt.s32.f32 %v2488
        %v2617 = vcvt.s32.f32 %v2489
        %v2618 = vcvt.s32.f32 %v2490
        %v2619 = vcvt.s32.f32 %v2491
        %v2620 = vcvt.s32.f32 %v2492
        %v2621 = vcvt.s32.f32 %v2493
        %v2622 = vcvt.s32.f32 %v2494
        %v2623 = vcvt.s32.f32 %v2495
        %v2624 = vcvt.s32.f32 %v2496
        %v2625 = vcvt.s32.f32 %v2497
        %v2626 = vcvt.s32.f32 %v2498
        %v2627 = vcvt.s32.f32 %v2499
        %v2628 = vcvt.s32.f32 %v2500
        %v2629 = vcvt.s32.f32 %v2501
        %v2630 = vcvt.s32.f32 %v2502
        %v2631 = vcvt.s32.f32 %v2503
        %v2632 = vcvt.s32.f32 %v2504
        %v2633 = vcvt.s32.f32 %v2505
        %v2634 = vcvt.s32.f32 %v2506
        %v2635 = vcvt.s32.f32 %v2507
        %v2636 = vcvt.s32.f32 %v2508
        %v2637 = vcvt.s32.f32 %v2509
        %v2638 = vcvt.s32.f32 %v2510
        %v2639 = vcvt.s32.f32 %v2511
        %v2640 = vcvt.s32.f32 %v2512
        %v2641 = vcvt.s32.f32 %v2513
        %v2642 = vcvt.s32.f32 %v2514
        %v2643 = vcvt.s32.f32 %v2515
        %v2644 = vcvt.s32.f32 %v2516
        %v2645 = vcvt.s32.f32 %v2517
        %v2646 = vcvt.s32.f32 %v2518
        %v2647 = vcvt.s32.f32 %v2519
        %v2648 = vcvt.s32.f32 %v2520
        %v2649 = vcvt.s32.f32 %v2521
        %v2650 = vcvt.s32.f32 %v2522
        %v2651 = vcvt.s32.f32 %v2523
        %v2652 = vcvt.s32.f32 %v2524
        %v2653 = vcvt.s32.f32 %v2525
        %v2654 = vcvt.s32.f32 %v2526
        %v2655 = vcvt.s32.f32 %v2527
        %v2656 = vcvt.s32.f32 %v2528
        %v2657 = vcvt.s32.f32 %v2529
        %v2658 = vcvt.s32.f32 %v2530
        %v2659 = vcvt.s32.f32 %v2531
        %v2660 = vcvt.s32.f32 %v2532
        %v2661 = vcvt.s32.f32 %v2533
        %v2662 = vcvt.s32.f32 %v2534
        %v2663 = vcvt.s32.f32 %v2535
        %v2664 = vcvt.s32.f32 %v2536
        %v2665 = vcvt.s32.f32 %v2537
        %v2666 = vcvt.s32.f32 %v2538
        %v2667 = vcvt.s32.f32 %v2539
        %v2668 = vcvt.s32.f32 %v2540
        %v2669 = vcvt.s32.f32 %v2541
        %v2670 = vcvt.s32.f32 %v2542
        %v2671 = vcvt.s32.f32 %v2543
        %v2672 = vcvt.s32.f32 %v2544
        %v2673 = vcvt.s32.f32 %v2545
        %v2674 = vcvt.s32.f32 %v2546
        %v2675 = vcvt.s32.f32 %v2547
        %v2676 = vcvt.s32.f32 %v2548
        %v2677 = vcvt.s32.f32 %v2549
        %v2678 = vcvt.s32.f32 %v2550
        %v2679 = vcvt.s32.f32 %v2551
        %v2680 = vcvt.s32.f32 %v2552
        %v2681 = vcvt.s32.f32 %v2553
        %v2682 = vcvt.s32.f32 %v2554
        %v2683 = vcvt.s32.f32 %v2555
        %v2684 = vcvt.s32.f32 %v2556
        %v2685 = vcvt.s32.f32 %v2557
        %v2686 = vcvt.s32.f32 %v2558
        %v2687 = vcvt.s32.f32 %v2559
        %v2688 = vcvt.s32.f32 %v2560
        %v2689 = vcvt.s32.f32 %v2561
        %v2690 = vcvt.s32.f32 %v2562
        %v2691 = vcvt.s32.f32 %v2563
        %v2692 = vcvt.s32.f32 %v2564
        %v2693 = vcvt.s32.f32 %v2565
        %v2694 = vcvt.s32.f32 %v2566
        %v2695 = vcvt.s32.f32 %v2567
        %v2696 = vcvt.s32.f32 %v2568
        %v2697 = vcvt.s32.f32 %v2569
        %v2698 = vcvt.s32.f32 %v2570
        %v2699 = vcvt.s32.f32 %v2571
        %v2700 = vcvt.s32.f32 %v2572
        %v2701 = vcvt.s32.f32 %v2573
        %v2702 = vcvt.s32.f32 %v2574
        %v2703 = vcvt.s32.f32 %v2575
        %v2704 = vpack.c.bf16 %v2580, %v2576
        %v2705 = vpack.c.bf16 %v2581, %v2577
        %v2706 = vpack.c.bf16 %v2582, %v2578
        %v2707 = vpack.c.bf16 %v2583, %v2579
        %v2708 = vpack.c.bf16 %v2588, %v2584
        %v2709 = vpack.c.bf16 %v2589, %v2585
        %v2710 = vpack.c.bf16 %v2590, %v2586
        %v2711 = vpack.c.bf16 %v2591, %v2587
        %v2712 = vpack.c.bf16 %v2596, %v2592
        %v2713 = vpack.c.bf16 %v2597, %v2593
        %v2714 = vpack.c.bf16 %v2598, %v2594
        %v2715 = vpack.c.bf16 %v2599, %v2595
        %v2716 = vpack.c.bf16 %v2604, %v2600
        %v2717 = vpack.c.bf16 %v2605, %v2601
        %v2718 = vpack.c.bf16 %v2606, %v2602
        %v2719 = vpack.c.bf16 %v2607, %v2603
        %v2720 = vpack.c.bf16 %v2612, %v2608
        %v2721 = vpack.c.bf16 %v2613, %v2609
        %v2722 = vpack.c.bf16 %v2614, %v2610
        %v2723 = vpack.c.bf16 %v2615, %v2611
        %v2724 = vpack.c.bf16 %v2620, %v2616
        %v2725 = vpack.c.bf16 %v2621, %v2617
        %v2726 = vpack.c.bf16 %v2622, %v2618
        %v2727 = vpack.c.bf16 %v2623, %v2619
        %v2728 = vpack.c.bf16 %v2628, %v2624
        %v2729 = vpack.c.bf16 %v2629, %v2625
        %v2730 = vpack.c.bf16 %v2630, %v2626
        %v2731 = vpack.c.bf16 %v2631, %v2627
        %v2732 = vpack.c.bf16 %v2636, %v2632
        %v2733 = vpack.c.bf16 %v2637, %v2633
        %v2734 = vpack.c.bf16 %v2638, %v2634
        %v2735 = vpack.c.bf16 %v2639, %v2635
        %v2736 = vpack.c.bf16 %v2644, %v2640
        %v2737 = vpack.c.bf16 %v2645, %v2641
        %v2738 = vpack.c.bf16 %v2646, %v2642
        %v2739 = vpack.c.bf16 %v2647, %v2643
        %v2740 = vpack.c.bf16 %v2652, %v2648
        %v2741 = vpack.c.bf16 %v2653, %v2649
        %v2742 = vpack.c.bf16 %v2654, %v2650
        %v2743 = vpack.c.bf16 %v2655, %v2651
        %v2744 = vpack.c.bf16 %v2660, %v2656
        %v2745 = vpack.c.bf16 %v2661, %v2657
        %v2746 = vpack.c.bf16 %v2662, %v2658
        %v2747 = vpack.c.bf16 %v2663, %v2659
        %v2748 = vpack.c.bf16 %v2668, %v2664
        %v2749 = vpack.c.bf16 %v2669, %v2665
        %v2750 = vpack.c.bf16 %v2670, %v2666
        %v2751 = vpack.c.bf16 %v2671, %v2667
        %v2752 = vpack.c.bf16 %v2676, %v2672
        %v2753 = vpack.c.bf16 %v2677, %v2673
        %v2754 = vpack.c.bf16 %v2678, %v2674
        %v2755 = vpack.c.bf16 %v2679, %v2675
        %v2756 = vpack.c.bf16 %v2684, %v2680
        %v2757 = vpack.c.bf16 %v2685, %v2681
        %v2758 = vpack.c.bf16 %v2686, %v2682
        %v2759 = vpack.c.bf16 %v2687, %v2683
        %v2760 = vpack.c.bf16 %v2692, %v2688
        %v2761 = vpack.c.bf16 %v2693, %v2689
        %v2762 = vpack.c.bf16 %v2694, %v2690
        %v2763 = vpack.c.bf16 %v2695, %v2691
        %v2764 = vpack.c.bf16 %v2700, %v2696
        %v2765 = vpack.c.bf16 %v2701, %v2697
        %v2766 = vpack.c.bf16 %v2702, %v2698
        %v2767 = vpack.c.bf16 %v2703, %v2699
        %v2768 = vld [vmem:[#allocation5] sm:$0xf]
        %v2769 = vld [vmem:[#allocation5 + $0x4] sm:$0xf]
        %v2770 = vld [vmem:[#allocation5 + $0x8] sm:$0xf]
        %v2771 = vld [vmem:[#allocation5 + $0xc] sm:$0xf]
        %v2772 = vld [vmem:[#allocation5 + $0x10] sm:$0xf]
        %v2773 = vld [vmem:[#allocation5 + $0x14] sm:$0xf]
        %v2774 = vld [vmem:[#allocation5 + $0x18] sm:$0xf]
        %v2775 = vld [vmem:[#allocation5 + $0x1c] sm:$0xf]
        %v2776 = vld [vmem:[#allocation5 + $0x20] sm:$0xf]
        %v2777 = vld [vmem:[#allocation5 + $0x24] sm:$0xf]
        %v2778 = vld [vmem:[#allocation5 + $0x28] sm:$0xf]
        %v2779 = vld [vmem:[#allocation5 + $0x2c] sm:$0xf]
        %v2780 = vld [vmem:[#allocation5 + $0x30] sm:$0xf]
        %v2781 = vld [vmem:[#allocation5 + $0x34] sm:$0xf]
        %v2782 = vld [vmem:[#allocation5 + $0x38] sm:$0xf]
        %v2783 = vld [vmem:[#allocation5 + $0x3c] sm:$0xf]
        %v2784 = vld [vmem:[#allocation5 + $0x40] sm:$0xf]
        %v2785 = vld [vmem:[#allocation5 + $0x44] sm:$0xf]
        %v2786 = vld [vmem:[#allocation5 + $0x48] sm:$0xf]
        %v2787 = vld [vmem:[#allocation5 + $0x4c] sm:$0xf]
        %v2788 = vld [vmem:[#allocation5 + $0x50] sm:$0xf]
        %v2789 = vld [vmem:[#allocation5 + $0x54] sm:$0xf]
        %v2790 = vld [vmem:[#allocation5 + $0x58] sm:$0xf]
        %v2791 = vld [vmem:[#allocation5 + $0x5c] sm:$0xf]
        %v2792 = vld [vmem:[#allocation5 + $0x60] sm:$0xf]
        %v2793 = vld [vmem:[#allocation5 + $0x64] sm:$0xf]
        %v2794 = vld [vmem:[#allocation5 + $0x68] sm:$0xf]
        %v2795 = vld [vmem:[#allocation5 + $0x6c] sm:$0xf]
        %v2796 = vld [vmem:[#allocation5 + $0x70] sm:$0xf]
        %v2797 = vld [vmem:[#allocation5 + $0x74] sm:$0xf]
        %v2798 = vld [vmem:[#allocation5 + $0x78] sm:$0xf]
        %v2799 = vld [vmem:[#allocation5 + $0x7c] sm:$0xf]
        %v2800 = vld [vmem:[#allocation5 + $0x80] sm:$0xf]
        %v2801 = vld [vmem:[#allocation5 + $0x84] sm:$0xf]
        %v2802 = vld [vmem:[#allocation5 + $0x88] sm:$0xf]
        %v2803 = vld [vmem:[#allocation5 + $0x8c] sm:$0xf]
        %v2804 = vld [vmem:[#allocation5 + $0x90] sm:$0xf]
        %v2805 = vld [vmem:[#allocation5 + $0x94] sm:$0xf]
        %v2806 = vld [vmem:[#allocation5 + $0x98] sm:$0xf]
        %v2807 = vld [vmem:[#allocation5 + $0x9c] sm:$0xf]
        %v2808 = vld [vmem:[#allocation5 + $0xa0] sm:$0xf]
        %v2809 = vld [vmem:[#allocation5 + $0xa4] sm:$0xf]
        %v2810 = vld [vmem:[#allocation5 + $0xa8] sm:$0xf]
        %v2811 = vld [vmem:[#allocation5 + $0xac] sm:$0xf]
        %v2812 = vld [vmem:[#allocation5 + $0xb0] sm:$0xf]
        %v2813 = vld [vmem:[#allocation5 + $0xb4] sm:$0xf]
        %v2814 = vld [vmem:[#allocation5 + $0xb8] sm:$0xf]
        %v2815 = vld [vmem:[#allocation5 + $0xbc] sm:$0xf]
        %v2816 = vld [vmem:[#allocation5 + $0xc0] sm:$0xf]
        %v2817 = vld [vmem:[#allocation5 + $0xc4] sm:$0xf]
        %v2818 = vld [vmem:[#allocation5 + $0xc8] sm:$0xf]
        %v2819 = vld [vmem:[#allocation5 + $0xcc] sm:$0xf]
        %v2820 = vld [vmem:[#allocation5 + $0xd0] sm:$0xf]
        %v2821 = vld [vmem:[#allocation5 + $0xd4] sm:$0xf]
        %v2822 = vld [vmem:[#allocation5 + $0xd8] sm:$0xf]
        %v2823 = vld [vmem:[#allocation5 + $0xdc] sm:$0xf]
        %v2824 = vld [vmem:[#allocation5 + $0xe0] sm:$0xf]
        %v2825 = vld [vmem:[#allocation5 + $0xe4] sm:$0xf]
        %v2826 = vld [vmem:[#allocation5 + $0xe8] sm:$0xf]
        %v2827 = vld [vmem:[#allocation5 + $0xec] sm:$0xf]
        %v2828 = vld [vmem:[#allocation5 + $0xf0] sm:$0xf]
        %v2829 = vld [vmem:[#allocation5 + $0xf4] sm:$0xf]
        %v2830 = vld [vmem:[#allocation5 + $0xf8] sm:$0xf]
        %v2831 = vld [vmem:[#allocation5 + $0xfc] sm:$0xf]
        %v2896 = vunpack.c.l.b16 %v2768
        %v2897 = vunpack.c.l.b16 %v2769
        %v2898 = vunpack.c.l.b16 %v2770
        %v2899 = vunpack.c.l.b16 %v2771
        %v2900 = vunpack.c.l.b16 %v2772
        %v2901 = vunpack.c.l.b16 %v2773
        %v2902 = vunpack.c.l.b16 %v2774
        %v2903 = vunpack.c.l.b16 %v2775
        %v2904 = vunpack.c.l.b16 %v2776
        %v2905 = vunpack.c.l.b16 %v2777
        %v2906 = vunpack.c.l.b16 %v2778
        %v2907 = vunpack.c.l.b16 %v2779
        %v2908 = vunpack.c.l.b16 %v2780
        %v2909 = vunpack.c.l.b16 %v2781
        %v2910 = vunpack.c.l.b16 %v2782
        %v2911 = vunpack.c.l.b16 %v2783
        %v2912 = vunpack.c.l.b16 %v2784
        %v2913 = vunpack.c.l.b16 %v2785
        %v2914 = vunpack.c.l.b16 %v2786
        %v2915 = vunpack.c.l.b16 %v2787
        %v2916 = vunpack.c.l.b16 %v2788
        %v2917 = vunpack.c.l.b16 %v2789
        %v2918 = vunpack.c.l.b16 %v2790
        %v2919 = vunpack.c.l.b16 %v2791
        %v2920 = vunpack.c.l.b16 %v2792
        %v2921 = vunpack.c.l.b16 %v2793
        %v2922 = vunpack.c.l.b16 %v2794
        %v2923 = vunpack.c.l.b16 %v2795
        %v2924 = vunpack.c.l.b16 %v2796
        %v2925 = vunpack.c.l.b16 %v2797
        %v2926 = vunpack.c.l.b16 %v2798
        %v2927 = vunpack.c.l.b16 %v2799
        %v2928 = vunpack.c.l.b16 %v2800
        %v2929 = vunpack.c.l.b16 %v2801
        %v2930 = vunpack.c.l.b16 %v2802
        %v2931 = vunpack.c.l.b16 %v2803
        %v2932 = vunpack.c.l.b16 %v2804
        %v2933 = vunpack.c.l.b16 %v2805
        %v2934 = vunpack.c.l.b16 %v2806
        %v2935 = vunpack.c.l.b16 %v2807
        %v2936 = vunpack.c.l.b16 %v2808
        %v2937 = vunpack.c.l.b16 %v2809
        %v2938 = vunpack.c.l.b16 %v2810
        %v2939 = vunpack.c.l.b16 %v2811
        %v2940 = vunpack.c.l.b16 %v2812
        %v2941 = vunpack.c.l.b16 %v2813
        %v2942 = vunpack.c.l.b16 %v2814
        %v2943 = vunpack.c.l.b16 %v2815
        %v2944 = vunpack.c.l.b16 %v2816
        %v2945 = vunpack.c.l.b16 %v2817
        %v2946 = vunpack.c.l.b16 %v2818
        %v2947 = vunpack.c.l.b16 %v2819
        %v2948 = vunpack.c.l.b16 %v2820
        %v2949 = vunpack.c.l.b16 %v2821
        %v2950 = vunpack.c.l.b16 %v2822
        %v2951 = vunpack.c.l.b16 %v2823
        %v2952 = vunpack.c.l.b16 %v2824
        %v2953 = vunpack.c.l.b16 %v2825
        %v2954 = vunpack.c.l.b16 %v2826
        %v2955 = vunpack.c.l.b16 %v2827
        %v2956 = vunpack.c.l.b16 %v2828
        %v2957 = vunpack.c.l.b16 %v2829
        %v2958 = vunpack.c.l.b16 %v2830
        %v2959 = vunpack.c.l.b16 %v2831
        %v2960 = vpack.c.b16 %v2897, %v2896
        %v2961 = vpack.c.b16 %v2899, %v2898
        %v2962 = vpack.c.b16 %v2901, %v2900
        %v2963 = vpack.c.b16 %v2903, %v2902
        %v2964 = vpack.c.b16 %v2905, %v2904
        %v2965 = vpack.c.b16 %v2907, %v2906
        %v2966 = vpack.c.b16 %v2909, %v2908
        %v2967 = vpack.c.b16 %v2911, %v2910
        %v2968 = vpack.c.b16 %v2913, %v2912
        %v2969 = vpack.c.b16 %v2915, %v2914
        %v2970 = vpack.c.b16 %v2917, %v2916
        %v2971 = vpack.c.b16 %v2919, %v2918
        %v2972 = vpack.c.b16 %v2921, %v2920
        %v2973 = vpack.c.b16 %v2923, %v2922
        %v2974 = vpack.c.b16 %v2925, %v2924
        %v2975 = vpack.c.b16 %v2927, %v2926
        %v2976 = vpack.c.b16 %v2929, %v2928
        %v2977 = vpack.c.b16 %v2931, %v2930
        %v2978 = vpack.c.b16 %v2933, %v2932
        %v2979 = vpack.c.b16 %v2935, %v2934
        %v2980 = vpack.c.b16 %v2937, %v2936
        %v2981 = vpack.c.b16 %v2939, %v2938
        %v2982 = vpack.c.b16 %v2941, %v2940
        %v2983 = vpack.c.b16 %v2943, %v2942
        %v2984 = vpack.c.b16 %v2945, %v2944
        %v2985 = vpack.c.b16 %v2947, %v2946
        %v2986 = vpack.c.b16 %v2949, %v2948
        %v2987 = vpack.c.b16 %v2951, %v2950
        %v2988 = vpack.c.b16 %v2953, %v2952
        %v2989 = vpack.c.b16 %v2955, %v2954
        %v2990 = vpack.c.b16 %v2957, %v2956
        %v2991 = vpack.c.b16 %v2959, %v2958
        %3024 = vmatprep.subr.bf16.mxu0 0
        %3025 = vmatpush1.bf16.msra.mxu0 %v2960
        %3026 = vmatprep.subr.bf16.mxu0 0
        %3027 = vmatpush1.bf16.msra.mxu0 %v2961
        %3028 = vmatprep.subr.bf16.mxu0 0
        %3029 = vmatpush1.bf16.msra.mxu0 %v2962
        %3030 = vmatprep.subr.bf16.mxu0 0
        %3031 = vmatpush1.bf16.msra.mxu0 %v2963
        %3032 = vmatprep.subr.bf16.mxu0 0
        %3033 = vmatpush1.bf16.msra.mxu0 %v2964
        %3034 = vmatprep.subr.bf16.mxu0 0
        %3035 = vmatpush1.bf16.msra.mxu0 %v2965
        %3036 = vmatprep.subr.bf16.mxu0 0
        %3037 = vmatpush1.bf16.msra.mxu0 %v2966
        %3038 = vmatprep.subr.bf16.mxu0 0
        %3039 = vmatpush1.bf16.msra.mxu0 %v2967
        %3040 = vmatprep.subr.bf16.mxu0 0
        %3041 = vmatpush1.bf16.msra.mxu0 %v2968
        %3042 = vmatprep.subr.bf16.mxu0 0
        %3043 = vmatpush1.bf16.msra.mxu0 %v2969
        %3044 = vmatprep.subr.bf16.mxu0 0
        %3045 = vmatpush1.bf16.msra.mxu0 %v2970
        %3046 = vmatprep.subr.bf16.mxu0 0
        %3047 = vmatpush1.bf16.msra.mxu0 %v2971
        %3048 = vmatprep.subr.bf16.mxu0 0
        %3049 = vmatpush1.bf16.msra.mxu0 %v2972
        %3050 = vmatprep.subr.bf16.mxu0 0
        %3051 = vmatpush1.bf16.msra.mxu0 %v2973
        %3052 = vmatprep.subr.bf16.mxu0 0
        %3053 = vmatpush1.bf16.msra.mxu0 %v2974
        %3054 = vmatprep.subr.bf16.mxu0 0
        %3055 = vmatpush1.bf16.msra.mxu0 %v2975
        %3056 = vmatprep.mubr.bf16.mxu0 %v2705
        %3057 = vmatmul.mubr.bf16.gmra.mrb[0].mxu0 %v2704
        %v3058 = vpop.f32.mrb[0].mxu0
        %v3059 = vadd.f32 0.0, %v3058
        %v3060 = vpop.f32.mrb[0].mxu0
        %v3061 = vpop.f32.mrb[0].mxu0
        %v3062 = vadd.f32 0.0, %v3061
        %v3063 = vpop.f32.mrb[0].mxu0
        %3064 = vmatprep.mubr.bf16.mxu0 %v2709
        %3065 = vmatmul.mubr.bf16.gmra.mrb[0].mxu0 %v2708
        %v3066 = vpop.f32.mrb[0].mxu0
        %v3067 = vadd.f32 0.0, %v3066
        %v3068 = vpop.f32.mrb[0].mxu0
        %v3069 = vpop.f32.mrb[0].mxu0
        %v3070 = vadd.f32 0.0, %v3069
        %v3071 = vpop.f32.mrb[0].mxu0
        %3072 = vmatprep.mubr.bf16.mxu0 %v2713
        %3073 = vmatmul.mubr.bf16.gmra.mrb[0].mxu0 %v2712
        %v3074 = vpop.f32.mrb[0].mxu0
        %v3075 = vadd.f32 0.0, %v3074
        %v3076 = vpop.f32.mrb[0].mxu0
        %v3077 = vpop.f32.mrb[0].mxu0
        %v3078 = vadd.f32 0.0, %v3077
        %v3079 = vpop.f32.mrb[0].mxu0
        %3080 = vmatprep.mubr.bf16.mxu0 %v2717
        %3081 = vmatmul.mubr.bf16.gmra.mrb[0].mxu0 %v2716
        %v3082 = vpop.f32.mrb[0].mxu0
        %v3083 = vadd.f32 0.0, %v3082
        %v3084 = vpop.f32.mrb[0].mxu0
        %v3085 = vpop.f32.mrb[0].mxu0
        %v3086 = vadd.f32 0.0, %v3085
        %v3087 = vpop.f32.mrb[0].mxu0
        %3088 = vmatprep.mubr.bf16.mxu0 %v2721
        %3089 = vmatmul.mubr.bf16.gmra.mrb[0].mxu0 %v2720
        %v3090 = vpop.f32.mrb[0].mxu0
        %v3091 = vadd.f32 0.0, %v3090
        %v3092 = vpop.f32.mrb[0].mxu0
        %v3093 = vpop.f32.mrb[0].mxu0
        %v3094 = vadd.f32 0.0, %v3093
        %v3095 = vpop.f32.mrb[0].mxu0
        %3096 = vmatprep.mubr.bf16.mxu0 %v2725
        %3097 = vmatmul.mubr.bf16.gmra.mrb[0].mxu0 %v2724
        %v3098 = vpop.f32.mrb[0].mxu0
        %v3099 = vadd.f32 0.0, %v3098
        %v3100 = vpop.f32.mrb[0].mxu0
        %v3101 = vpop.f32.mrb[0].mxu0
        %v3102 = vadd.f32 0.0, %v3101
        %v3103 = vpop.f32.mrb[0].mxu0
        %3104 = vmatprep.mubr.bf16.mxu0 %v2729
        %3105 = vmatmul.mubr.bf16.gmra.mrb[0].mxu0 %v2728
        %v3106 = vpop.f32.mrb[0].mxu0
        %v3107 = vadd.f32 0.0, %v3106
        %v3108 = vpop.f32.mrb[0].mxu0
        %v3109 = vpop.f32.mrb[0].mxu0
        %v3110 = vadd.f32 0.0, %v3109
        %v3111 = vpop.f32.mrb[0].mxu0
        %3112 = vmatprep.mubr.bf16.mxu0 %v2733
        %3113 = vmatmul.mubr.bf16.gmra.mrb[0].mxu0 %v2732
        %v3114 = vpop.f32.mrb[0].mxu0
        %v3115 = vadd.f32 0.0, %v3114
        %v3116 = vpop.f32.mrb[0].mxu0
        %v3117 = vpop.f32.mrb[0].mxu0
        %v3118 = vadd.f32 0.0, %v3117
        %v3119 = vpop.f32.mrb[0].mxu0
        %3120 = vmatprep.mubr.bf16.mxu0 %v2737
        %3121 = vmatmul.mubr.bf16.gmra.mrb[0].mxu0 %v2736
        %v3122 = vpop.f32.mrb[0].mxu0
        %v3123 = vadd.f32 0.0, %v3122
        %v3124 = vpop.f32.mrb[0].mxu0
        %v3125 = vpop.f32.mrb[0].mxu0
        %v3126 = vadd.f32 0.0, %v3125
        %v3127 = vpop.f32.mrb[0].mxu0
        %3128 = vmatprep.mubr.bf16.mxu0 %v2741
        %3129 = vmatmul.mubr.bf16.gmra.mrb[0].mxu0 %v2740
        %v3130 = vpop.f32.mrb[0].mxu0
        %v3131 = vadd.f32 0.0, %v3130
        %v3132 = vpop.f32.mrb[0].mxu0
        %v3133 = vpop.f32.mrb[0].mxu0
        %v3134 = vadd.f32 0.0, %v3133
        %v3135 = vpop.f32.mrb[0].mxu0
        %3136 = vmatprep.mubr.bf16.mxu0 %v2745
        %3137 = vmatmul.mubr.bf16.gmra.mrb[0].mxu0 %v2744
        %v3138 = vpop.f32.mrb[0].mxu0
        %v3139 = vadd.f32 0.0, %v3138
        %v3140 = vpop.f32.mrb[0].mxu0
        %v3141 = vpop.f32.mrb[0].mxu0
        %v3142 = vadd.f32 0.0, %v3141
        %v3143 = vpop.f32.mrb[0].mxu0
        %3144 = vmatprep.mubr.bf16.mxu0 %v2749
        %3145 = vmatmul.mubr.bf16.gmra.mrb[0].mxu0 %v2748
        %v3146 = vpop.f32.mrb[0].mxu0
        %v3147 = vadd.f32 0.0, %v3146
        %v3148 = vpop.f32.mrb[0].mxu0
        %v3149 = vpop.f32.mrb[0].mxu0
        %v3150 = vadd.f32 0.0, %v3149
        %v3151 = vpop.f32.mrb[0].mxu0
        %3152 = vmatprep.mubr.bf16.mxu0 %v2753
        %3153 = vmatmul.mubr.bf16.gmra.mrb[0].mxu0 %v2752
        %v3154 = vpop.f32.mrb[0].mxu0
        %v3155 = vadd.f32 0.0, %v3154
        %v3156 = vpop.f32.mrb[0].mxu0
        %v3157 = vpop.f32.mrb[0].mxu0
        %v3158 = vadd.f32 0.0, %v3157
        %v3159 = vpop.f32.mrb[0].mxu0
        %3160 = vmatprep.mubr.bf16.mxu0 %v2757
        %3161 = vmatmul.mubr.bf16.gmra.mrb[0].mxu0 %v2756
        %v3162 = vpop.f32.mrb[0].mxu0
        %v3163 = vadd.f32 0.0, %v3162
        %v3164 = vpop.f32.mrb[0].mxu0
        %v3165 = vpop.f32.mrb[0].mxu0
        %v3166 = vadd.f32 0.0, %v3165
        %v3167 = vpop.f32.mrb[0].mxu0
        %3168 = vmatprep.mubr.bf16.mxu0 %v2761
        %3169 = vmatmul.mubr.bf16.gmra.mrb[0].mxu0 %v2760
        %v3170 = vpop.f32.mrb[0].mxu0
        %v3171 = vadd.f32 0.0, %v3170
        %v3172 = vpop.f32.mrb[0].mxu0
        %v3173 = vpop.f32.mrb[0].mxu0
        %v3174 = vadd.f32 0.0, %v3173
        %v3175 = vpop.f32.mrb[0].mxu0
        %3176 = vmatprep.mubr.bf16.mxu0 %v2765
        %3177 = vmatmul.mubr.bf16.gmra.mrb[0].mxu0 %v2764
        %v3178 = vpop.f32.mrb[0].mxu0
        %v3179 = vadd.f32 0.0, %v3178
        %v3180 = vpop.f32.mrb[0].mxu0
        %v3181 = vpop.f32.mrb[0].mxu0
        %v3182 = vadd.f32 0.0, %v3181
        %v3183 = vpop.f32.mrb[0].mxu0
        %3184 = vdwg.mxu0
        %3185 = vmatprep.subr.bf16.mxu0 0
        %3186 = vmatpush1.bf16.msra.mxu0 %v2976
        %3187 = vmatprep.subr.bf16.mxu0 0
        %3188 = vmatpush1.bf16.msra.mxu0 %v2977
        %3189 = vmatprep.subr.bf16.mxu0 0
        %3190 = vmatpush1.bf16.msra.mxu0 %v2978
        %3191 = vmatprep.subr.bf16.mxu0 0
        %3192 = vmatpush1.bf16.msra.mxu0 %v2979
        %3193 = vmatprep.subr.bf16.mxu0 0
        %3194 = vmatpush1.bf16.msra.mxu0 %v2980
        %3195 = vmatprep.subr.bf16.mxu0 0
        %3196 = vmatpush1.bf16.msra.mxu0 %v2981
        %3197 = vmatprep.subr.bf16.mxu0 0
        %3198 = vmatpush1.bf16.msra.mxu0 %v2982
        %3199 = vmatprep.subr.bf16.mxu0 0
        %3200 = vmatpush1.bf16.msra.mxu0 %v2983
        %3201 = vmatprep.subr.bf16.mxu0 0
        %3202 = vmatpush1.bf16.msra.mxu0 %v2984
        %3203 = vmatprep.subr.bf16.mxu0 0
        %3204 = vmatpush1.bf16.msra.mxu0 %v2985
        %3205 = vmatprep.subr.bf16.mxu0 0
        %3206 = vmatpush1.bf16.msra.mxu0 %v2986
        %3207 = vmatprep.subr.bf16.mxu0 0
        %3208 = vmatpush1.bf16.msra.mxu0 %v2987
        %3209 = vmatprep.subr.bf16.mxu0 0
        %3210 = vmatpush1.bf16.msra.mxu0 %v2988
        %3211 = vmatprep.subr.bf16.mxu0 0
        %3212 = vmatpush1.bf16.msra.mxu0 %v2989
        %3213 = vmatprep.subr.bf16.mxu0 0
        %3214 = vmatpush1.bf16.msra.mxu0 %v2990
        %3215 = vmatprep.subr.bf16.mxu0 0
        %3216 = vmatpush1.bf16.msra.mxu0 %v2991
        %3217 = vmatprep.mubr.bf16.mxu0 %v2707
        %3218 = vmatmul.mubr.bf16.gmra.mrb[0].mxu0 %v2706
        %v3219 = vpop.f32.mrb[0].mxu0
        %v3220 = vadd.f32 %v3059, %v3219
        %v3221 = vpop.f32.mrb[0].mxu0
        %v3222 = vpop.f32.mrb[0].mxu0
        %v3223 = vadd.f32 %v3062, %v3222
        %v3224 = vpop.f32.mrb[0].mxu0
        %3225 = vmatprep.mubr.bf16.mxu0 %v2711
        %3226 = vmatmul.mubr.bf16.gmra.mrb[0].mxu0 %v2710
        %v3227 = vpop.f32.mrb[0].mxu0
        %v3228 = vadd.f32 %v3067, %v3227
        %v3229 = vpop.f32.mrb[0].mxu0
        %v3230 = vpop.f32.mrb[0].mxu0
        %v3231 = vadd.f32 %v3070, %v3230
        %v3232 = vpop.f32.mrb[0].mxu0
        %3233 = vmatprep.mubr.bf16.mxu0 %v2715
        %3234 = vmatmul.mubr.bf16.gmra.mrb[0].mxu0 %v2714
        %v3235 = vpop.f32.mrb[0].mxu0
        %v3236 = vadd.f32 %v3075, %v3235
        %v3237 = vpop.f32.mrb[0].mxu0
        %v3238 = vpop.f32.mrb[0].mxu0
        %v3239 = vadd.f32 %v3078, %v3238
        %v3240 = vpop.f32.mrb[0].mxu0
        %3241 = vmatprep.mubr.bf16.mxu0 %v2719
        %3242 = vmatmul.mubr.bf16.gmra.mrb[0].mxu0 %v2718
        %v3243 = vpop.f32.mrb[0].mxu0
        %v3244 = vadd.f32 %v3083, %v3243
        %v3245 = vpop.f32.mrb[0].mxu0
        %v3246 = vpop.f32.mrb[0].mxu0
        %v3247 = vadd.f32 %v3086, %v3246
        %v3248 = vpop.f32.mrb[0].mxu0
        %3249 = vmatprep.mubr.bf16.mxu0 %v2723
        %3250 = vmatmul.mubr.bf16.gmra.mrb[0].mxu0 %v2722
        %v3251 = vpop.f32.mrb[0].mxu0
        %v3252 = vadd.f32 %v3091, %v3251
        %v3253 = vpop.f32.mrb[0].mxu0
        %v3254 = vpop.f32.mrb[0].mxu0
        %v3255 = vadd.f32 %v3094, %v3254
        %v3256 = vpop.f32.mrb[0].mxu0
        %3257 = vmatprep.mubr.bf16.mxu0 %v2727
        %3258 = vmatmul.mubr.bf16.gmra.mrb[0].mxu0 %v2726
        %v3259 = vpop.f32.mrb[0].mxu0
        %v3260 = vadd.f32 %v3099, %v3259
        %v3261 = vpop.f32.mrb[0].mxu0
        %v3262 = vpop.f32.mrb[0].mxu0
        %v3263 = vadd.f32 %v3102, %v3262
        %v3264 = vpop.f32.mrb[0].mxu0
        %3265 = vmatprep.mubr.bf16.mxu0 %v2731
        %3266 = vmatmul.mubr.bf16.gmra.mrb[0].mxu0 %v2730
        %v3267 = vpop.f32.mrb[0].mxu0
        %v3268 = vadd.f32 %v3107, %v3267
        %v3269 = vpop.f32.mrb[0].mxu0
        %v3270 = vpop.f32.mrb[0].mxu0
        %v3271 = vadd.f32 %v3110, %v3270
        %v3272 = vpop.f32.mrb[0].mxu0
        %3273 = vmatprep.mubr.bf16.mxu0 %v2735
        %3274 = vmatmul.mubr.bf16.gmra.mrb[0].mxu0 %v2734
        %v3275 = vpop.f32.mrb[0].mxu0
        %v3276 = vadd.f32 %v3115, %v3275
        %v3277 = vpop.f32.mrb[0].mxu0
        %v3278 = vpop.f32.mrb[0].mxu0
        %v3279 = vadd.f32 %v3118, %v3278
        %v3280 = vpop.f32.mrb[0].mxu0
        %3281 = vmatprep.mubr.bf16.mxu0 %v2739
        %3282 = vmatmul.mubr.bf16.gmra.mrb[0].mxu0 %v2738
        %v3283 = vpop.f32.mrb[0].mxu0
        %v3284 = vadd.f32 %v3123, %v3283
        %v3285 = vpop.f32.mrb[0].mxu0
        %v3286 = vpop.f32.mrb[0].mxu0
        %v3287 = vadd.f32 %v3126, %v3286
        %v3288 = vpop.f32.mrb[0].mxu0
        %3289 = vmatprep.mubr.bf16.mxu0 %v2743
        %3290 = vmatmul.mubr.bf16.gmra.mrb[0].mxu0 %v2742
        %v3291 = vpop.f32.mrb[0].mxu0
        %v3292 = vadd.f32 %v3131, %v3291
        %v3293 = vpop.f32.mrb[0].mxu0
        %v3294 = vpop.f32.mrb[0].mxu0
        %v3295 = vadd.f32 %v3134, %v3294
        %v3296 = vpop.f32.mrb[0].mxu0
        %3297 = vmatprep.mubr.bf16.mxu0 %v2747
        %3298 = vmatmul.mubr.bf16.gmra.mrb[0].mxu0 %v2746
        %v3299 = vpop.f32.mrb[0].mxu0
        %v3300 = vadd.f32 %v3139, %v3299
        %v3301 = vpop.f32.mrb[0].mxu0
        %v3302 = vpop.f32.mrb[0].mxu0
        %v3303 = vadd.f32 %v3142, %v3302
        %v3304 = vpop.f32.mrb[0].mxu0
        %3305 = vmatprep.mubr.bf16.mxu0 %v2751
        %3306 = vmatmul.mubr.bf16.gmra.mrb[0].mxu0 %v2750
        %v3307 = vpop.f32.mrb[0].mxu0
        %v3308 = vadd.f32 %v3147, %v3307
        %v3309 = vpop.f32.mrb[0].mxu0
        %v3310 = vpop.f32.mrb[0].mxu0
        %v3311 = vadd.f32 %v3150, %v3310
        %v3312 = vpop.f32.mrb[0].mxu0
        %3313 = vmatprep.mubr.bf16.mxu0 %v2755
        %3314 = vmatmul.mubr.bf16.gmra.mrb[0].mxu0 %v2754
        %v3315 = vpop.f32.mrb[0].mxu0
        %v3316 = vadd.f32 %v3155, %v3315
        %v3317 = vpop.f32.mrb[0].mxu0
        %v3318 = vpop.f32.mrb[0].mxu0
        %v3319 = vadd.f32 %v3158, %v3318
        %v3320 = vpop.f32.mrb[0].mxu0
        %3321 = vmatprep.mubr.bf16.mxu0 %v2759
        %3322 = vmatmul.mubr.bf16.gmra.mrb[0].mxu0 %v2758
        %v3323 = vpop.f32.mrb[0].mxu0
        %v3324 = vadd.f32 %v3163, %v3323
        %v3325 = vpop.f32.mrb[0].mxu0
        %v3326 = vpop.f32.mrb[0].mxu0
        %v3327 = vadd.f32 %v3166, %v3326
        %v3328 = vpop.f32.mrb[0].mxu0
        %3329 = vmatprep.mubr.bf16.mxu0 %v2763
        %3330 = vmatmul.mubr.bf16.gmra.mrb[0].mxu0 %v2762
        %v3331 = vpop.f32.mrb[0].mxu0
        %v3332 = vadd.f32 %v3171, %v3331
        %v3333 = vpop.f32.mrb[0].mxu0
        %v3334 = vpop.f32.mrb[0].mxu0
        %v3335 = vadd.f32 %v3174, %v3334
        %v3336 = vpop.f32.mrb[0].mxu0
        %3337 = vmatprep.mubr.bf16.mxu0 %v2767
        %3338 = vmatmul.mubr.bf16.gmra.mrb[0].mxu0 %v2766
        %v3339 = vpop.f32.mrb[0].mxu0
        %v3340 = vadd.f32 %v3179, %v3339
        %v3341 = vpop.f32.mrb[0].mxu0
        %v3342 = vpop.f32.mrb[0].mxu0
        %v3343 = vadd.f32 %v3182, %v3342
        %v3344 = vpop.f32.mrb[0].mxu0
        %3345 = vdwg.mxu0
        %v3346 = vld [vmem:[%s3] sm:$0xf]
        %v3347 = vld [vmem:[%s3 + $0x18] sm:$0xf]
        %v3348 = vld [vmem:[%s3 + $0x30] sm:$0xf]
        %v3349 = vld [vmem:[%s3 + $0x48] sm:$0xf]
        %v3350 = vld [vmem:[%s3 + $0x60] sm:$0xf]
        %v3351 = vld [vmem:[%s3 + $0x78] sm:$0xf]
        %v3352 = vld [vmem:[%s3 + $0x90] sm:$0xf]
        %v3353 = vld [vmem:[%s3 + $0xa8] sm:$0xf]
        %v3354 = vld [vmem:[%s3 + $0xc0] sm:$0xf]
        %v3355 = vld [vmem:[%s3 + $0xd8] sm:$0xf]
        %v3356 = vld [vmem:[%s3 + $0xf0] sm:$0xf]
        %v3357 = vld [vmem:[%s3 + $0x108] sm:$0xf]
        %v3358 = vld [vmem:[%s3 + $0x120] sm:$0xf]
        %v3359 = vld [vmem:[%s3 + $0x138] sm:$0xf]
        %v3360 = vld [vmem:[%s3 + $0x150] sm:$0xf]
        %v3361 = vld [vmem:[%s3 + $0x168] sm:$0xf]
        %v3362 = vld [vmem:[%s3 + $0x4] sm:$0xf]
        %v3363 = vld [vmem:[%s3 + $0x1c] sm:$0xf]
        %v3364 = vld [vmem:[%s3 + $0x34] sm:$0xf]
        %v3365 = vld [vmem:[%s3 + $0x4c] sm:$0xf]
        %v3366 = vld [vmem:[%s3 + $0x64] sm:$0xf]
        %v3367 = vld [vmem:[%s3 + $0x7c] sm:$0xf]
        %v3368 = vld [vmem:[%s3 + $0x94] sm:$0xf]
        %v3369 = vld [vmem:[%s3 + $0xac] sm:$0xf]
        %v3370 = vld [vmem:[%s3 + $0xc4] sm:$0xf]
        %v3371 = vld [vmem:[%s3 + $0xdc] sm:$0xf]
        %v3372 = vld [vmem:[%s3 + $0xf4] sm:$0xf]
        %v3373 = vld [vmem:[%s3 + $0x10c] sm:$0xf]
        %v3374 = vld [vmem:[%s3 + $0x124] sm:$0xf]
        %v3375 = vld [vmem:[%s3 + $0x13c] sm:$0xf]
        %v3376 = vld [vmem:[%s3 + $0x154] sm:$0xf]
        %v3377 = vld [vmem:[%s3 + $0x16c] sm:$0xf]
        %v3378 = vld [vmem:[%s3 + $0x8] sm:$0xff]
        %v3379 = vld [vmem:[%s3 + $0x10] sm:$0xff]
        %v3380 = vld [vmem:[%s3 + $0x20] sm:$0xff]
        %v3381 = vld [vmem:[%s3 + $0x28] sm:$0xff]
        %v3382 = vld [vmem:[%s3 + $0x38] sm:$0xff]
        %v3383 = vld [vmem:[%s3 + $0x40] sm:$0xff]
        %v3384 = vld [vmem:[%s3 + $0x50] sm:$0xff]
        %v3385 = vld [vmem:[%s3 + $0x58] sm:$0xff]
        %v3386 = vld [vmem:[%s3 + $0x68] sm:$0xff]
        %v3387 = vld [vmem:[%s3 + $0x70] sm:$0xff]
        %v3388 = vld [vmem:[%s3 + $0x80] sm:$0xff]
        %v3389 = vld [vmem:[%s3 + $0x88] sm:$0xff]
        %v3390 = vld [vmem:[%s3 + $0x98] sm:$0xff]
        %v3391 = vld [vmem:[%s3 + $0xa0] sm:$0xff]
        %v3392 = vld [vmem:[%s3 + $0xb0] sm:$0xff]
        %v3393 = vld [vmem:[%s3 + $0xb8] sm:$0xff]
        %v3394 = vld [vmem:[%s3 + $0xc8] sm:$0xff]
        %v3395 = vld [vmem:[%s3 + $0xd0] sm:$0xff]
        %v3396 = vld [vmem:[%s3 + $0xe0] sm:$0xff]
        %v3397 = vld [vmem:[%s3 + $0xe8] sm:$0xff]
        %v3398 = vld [vmem:[%s3 + $0xf8] sm:$0xff]
        %v3399 = vld [vmem:[%s3 + $0x100] sm:$0xff]
        %v3400 = vld [vmem:[%s3 + $0x110] sm:$0xff]
        %v3401 = vld [vmem:[%s3 + $0x118] sm:$0xff]
        %v3402 = vld [vmem:[%s3 + $0x128] sm:$0xff]
        %v3403 = vld [vmem:[%s3 + $0x130] sm:$0xff]
        %v3404 = vld [vmem:[%s3 + $0x140] sm:$0xff]
        %v3405 = vld [vmem:[%s3 + $0x148] sm:$0xff]
        %v3406 = vld [vmem:[%s3 + $0x158] sm:$0xff]
        %v3407 = vld [vmem:[%s3 + $0x160] sm:$0xff]
        %v3408 = vld [vmem:[%s3 + $0x170] sm:$0xff]
        %v3409 = vld [vmem:[%s3 + $0x178] sm:$0xff]
        %v3410 = vld [vmem:[%s4] ss:$8 sm:$0xf]
        %v3411 = vld [vmem:[%s4 + $0x1] ss:$0 sm:$0xff]
        %v3412 = vld [vmem:[%s4 + $0x2] ss:$0 sm:$0xff]
        %v3413 = vld [vmem:[%s4 + $0x3] ss:$0 sm:$0xff]
        %v3414 = vld [vmem:[%s4 + $0x4] ss:$0 sm:$0xff]
        %v3415 = vadd.f32 %v3220, %v1648
        %v3416 = vadd.f32 %v3223, %v1651
        %v3417 = vadd.f32 %v3228, %v1656
        %v3418 = vadd.f32 %v3231, %v1659
        %v3419 = vadd.f32 %v3236, %v1664
        %v3420 = vadd.f32 %v3239, %v1667
        %v3421 = vadd.f32 %v3244, %v1672
        %v3422 = vadd.f32 %v3247, %v1675
        %v3423 = vadd.f32 %v3252, %v1680
        %v3424 = vadd.f32 %v3255, %v1683
        %v3425 = vadd.f32 %v3260, %v1688
        %v3426 = vadd.f32 %v3263, %v1691
        %v3427 = vadd.f32 %v3268, %v1696
        %v3428 = vadd.f32 %v3271, %v1699
        %v3429 = vadd.f32 %v3276, %v1704
        %v3430 = vadd.f32 %v3279, %v1707
        %v3431 = vadd.f32 %v3284, %v1712
        %v3432 = vadd.f32 %v3287, %v1715
        %v3433 = vadd.f32 %v3292, %v1720
        %v3434 = vadd.f32 %v3295, %v1723
        %v3435 = vadd.f32 %v3300, %v1728
        %v3436 = vadd.f32 %v3303, %v1731
        %v3437 = vadd.f32 %v3308, %v1736
        %v3438 = vadd.f32 %v3311, %v1739
        %v3439 = vadd.f32 %v3316, %v1744
        %v3440 = vadd.f32 %v3319, %v1747
        %v3441 = vadd.f32 %v3324, %v1752
        %v3442 = vadd.f32 %v3327, %v1755
        %v3443 = vadd.f32 %v3332, %v1760
        %v3444 = vadd.f32 %v3335, %v1763
        %v3445 = vadd.f32 %v3340, %v1768
        %v3446 = vadd.f32 %v3343, %v1771
        %v3447 = vpack.c.bf16 %v3416, %v3415
        %v3448 = vpack.c.bf16 %v3418, %v3417
        %v3449 = vpack.c.bf16 %v3420, %v3419
        %v3450 = vpack.c.bf16 %v3422, %v3421
        %v3451 = vpack.c.bf16 %v3424, %v3423
        %v3452 = vpack.c.bf16 %v3426, %v3425
        %v3453 = vpack.c.bf16 %v3428, %v3427
        %v3454 = vpack.c.bf16 %v3430, %v3429
        %v3455 = vpack.c.bf16 %v3432, %v3431
        %v3456 = vpack.c.bf16 %v3434, %v3433
        %v3457 = vpack.c.bf16 %v3436, %v3435
        %v3458 = vpack.c.bf16 %v3438, %v3437
        %v3459 = vpack.c.bf16 %v3440, %v3439
        %v3460 = vpack.c.bf16 %v3442, %v3441
        %v3461 = vpack.c.bf16 %v3444, %v3443
        %v3462 = vpack.c.bf16 %v3446, %v3445
        %v3479 = vunpack.c.l.b16 %v3346
        %v3480 = vunpack.c.l.b16 %v3347
        %v3481 = vunpack.c.l.b16 %v3348
        %v3482 = vunpack.c.l.b16 %v3349
        %v3483 = vunpack.c.l.b16 %v3350
        %v3484 = vunpack.c.l.b16 %v3351
        %v3485 = vunpack.c.l.b16 %v3352
        %v3486 = vunpack.c.l.b16 %v3353
        %v3487 = vunpack.c.l.b16 %v3354
        %v3488 = vunpack.c.l.b16 %v3355
        %v3489 = vunpack.c.l.b16 %v3356
        %v3490 = vunpack.c.l.b16 %v3357
        %v3491 = vunpack.c.l.b16 %v3358
        %v3492 = vunpack.c.l.b16 %v3359
        %v3493 = vunpack.c.l.b16 %v3360
        %v3494 = vunpack.c.l.b16 %v3361
        %v3495 = vpack.c.b16 %v3480, %v3479
        %v3496 = vpack.c.b16 %v3482, %v3481
        %v3497 = vpack.c.b16 %v3484, %v3483
        %v3498 = vpack.c.b16 %v3486, %v3485
        %v3499 = vpack.c.b16 %v3488, %v3487
        %v3500 = vpack.c.b16 %v3490, %v3489
        %v3501 = vpack.c.b16 %v3492, %v3491
        %v3502 = vpack.c.b16 %v3494, %v3493
        %3511 = vmatprep.subr.bf16.mxu0 0
        %3512 = vmatpush1.bf16.msra.mxu0 %v3495
        %3513 = vmatprep.subr.bf16.mxu0 0
        %3514 = vmatpush1.bf16.msra.mxu0 %v3496
        %3515 = vmatprep.subr.bf16.mxu0 0
        %3516 = vmatpush1.bf16.msra.mxu0 %v3497
        %3517 = vmatprep.subr.bf16.mxu0 0
        %3518 = vmatpush1.bf16.msra.mxu0 %v3498
        %3519 = vmatprep.subr.bf16.mxu0 0
        %3520 = vmatpush1.bf16.msra.mxu0 %v3499
        %3521 = vmatprep.subr.bf16.mxu0 0
        %3522 = vmatpush1.bf16.msra.mxu0 %v3500
        %3523 = vmatprep.subr.bf16.mxu0 0
        %3524 = vmatpush1.bf16.msra.mxu0 %v3501
        %3525 = vmatprep.subr.bf16.mxu0 0
        %3526 = vmatpush1.bf16.msra.mxu0 %v3502
        %3527 = vmatprep.subr.bf16.mxu0 0
        %3528 = vmatpush1.bf16.msra.mxu0 0
        %3529 = vmatprep.subr.bf16.mxu0 0
        %3530 = vmatpush1.bf16.msra.mxu0 0
        %3531 = vmatprep.subr.bf16.mxu0 0
        %3532 = vmatpush1.bf16.msra.mxu0 0
        %3533 = vmatprep.subr.bf16.mxu0 0
        %3534 = vmatpush1.bf16.msra.mxu0 0
        %3535 = vmatprep.subr.bf16.mxu0 0
        %3536 = vmatpush1.bf16.msra.mxu0 0
        %3537 = vmatprep.subr.bf16.mxu0 0
        %3538 = vmatpush1.bf16.msra.mxu0 0
        %3539 = vmatprep.subr.bf16.mxu0 0
        %3540 = vmatpush1.bf16.msra.mxu0 0
        %3541 = vmatprep.subr.bf16.mxu0 0
        %3542 = vmatpush1.bf16.msra.mxu0 0
        %3543 = vmatprep.mubr.bf16.mxu0 0
        %3544 = vmatmul.mubr.bf16.gmra.mrb[0].mxu0 %v3447
        %v3545 = vpop.f32.mrb[0].mxu0
        %v3546 = vadd.f32 %v3411, %v3545
        %v3547 = vpop.f32.mrb[0].mxu0
        %v3548 = vpop.f32.mrb[0].mxu0
        %v3549 = vadd.f32 %v3411, %v3548
        %v3550 = vpop.f32.mrb[0].mxu0
        %3551 = vmatprep.mubr.bf16.mxu0 0
        %3552 = vmatmul.mubr.bf16.gmra.mrb[0].mxu0 %v3448
        %v3553 = vpop.f32.mrb[0].mxu0
        %v3554 = vadd.f32 %v3411, %v3553
        %v3555 = vpop.f32.mrb[0].mxu0
        %v3556 = vpop.f32.mrb[0].mxu0
        %v3557 = vadd.f32 %v3411, %v3556
        %v3558 = vpop.f32.mrb[0].mxu0
        %3559 = vmatprep.mubr.bf16.mxu0 0
        %3560 = vmatmul.mubr.bf16.gmra.mrb[0].mxu0 %v3449
        %v3561 = vpop.f32.mrb[0].mxu0
        %v3562 = vadd.f32 %v3411, %v3561
        %v3563 = vpop.f32.mrb[0].mxu0
        %v3564 = vpop.f32.mrb[0].mxu0
        %v3565 = vadd.f32 %v3411, %v3564
        %v3566 = vpop.f32.mrb[0].mxu0
        %3567 = vmatprep.mubr.bf16.mxu0 0
        %3568 = vmatmul.mubr.bf16.gmra.mrb[0].mxu0 %v3450
        %v3569 = vpop.f32.mrb[0].mxu0
        %v3570 = vadd.f32 %v3411, %v3569
        %v3571 = vpop.f32.mrb[0].mxu0
        %v3572 = vpop.f32.mrb[0].mxu0
        %v3573 = vadd.f32 %v3411, %v3572
        %v3574 = vpop.f32.mrb[0].mxu0
        %3575 = vmatprep.mubr.bf16.mxu0 0
        %3576 = vmatmul.mubr.bf16.gmra.mrb[0].mxu0 %v3451
        %v3577 = vpop.f32.mrb[0].mxu0
        %v3578 = vadd.f32 %v3411, %v3577
        %v3579 = vpop.f32.mrb[0].mxu0
        %v3580 = vpop.f32.mrb[0].mxu0
        %v3581 = vadd.f32 %v3411, %v3580
        %v3582 = vpop.f32.mrb[0].mxu0
        %3583 = vmatprep.mubr.bf16.mxu0 0
        %3584 = vmatmul.mubr.bf16.gmra.mrb[0].mxu0 %v3452
        %v3585 = vpop.f32.mrb[0].mxu0
        %v3586 = vadd.f32 %v3411, %v3585
        %v3587 = vpop.f32.mrb[0].mxu0
        %v3588 = vpop.f32.mrb[0].mxu0
        %v3589 = vadd.f32 %v3411, %v3588
        %v3590 = vpop.f32.mrb[0].mxu0
        %3591 = vmatprep.mubr.bf16.mxu0 0
        %3592 = vmatmul.mubr.bf16.gmra.mrb[0].mxu0 %v3453
        %v3593 = vpop.f32.mrb[0].mxu0
        %v3594 = vadd.f32 %v3411, %v3593
        %v3595 = vpop.f32.mrb[0].mxu0
        %v3596 = vpop.f32.mrb[0].mxu0
        %v3597 = vadd.f32 %v3411, %v3596
        %v3598 = vpop.f32.mrb[0].mxu0
        %3599 = vmatprep.mubr.bf16.mxu0 0
        %3600 = vmatmul.mubr.bf16.gmra.mrb[0].mxu0 %v3454
        %v3601 = vpop.f32.mrb[0].mxu0
        %v3602 = vadd.f32 %v3411, %v3601
        %v3603 = vpop.f32.mrb[0].mxu0
        %v3604 = vpop.f32.mrb[0].mxu0
        %v3605 = vadd.f32 %v3411, %v3604
        %v3606 = vpop.f32.mrb[0].mxu0
        %3607 = vmatprep.mubr.bf16.mxu0 0
        %3608 = vmatmul.mubr.bf16.gmra.mrb[0].mxu0 %v3455
        %v3609 = vpop.f32.mrb[0].mxu0
        %v3610 = vadd.f32 %v3411, %v3609
        %v3611 = vpop.f32.mrb[0].mxu0
        %v3612 = vpop.f32.mrb[0].mxu0
        %v3613 = vadd.f32 %v3411, %v3612
        %v3614 = vpop.f32.mrb[0].mxu0
        %3615 = vmatprep.mubr.bf16.mxu0 0
        %3616 = vmatmul.mubr.bf16.gmra.mrb[0].mxu0 %v3456
        %v3617 = vpop.f32.mrb[0].mxu0
        %v3618 = vadd.f32 %v3411, %v3617
        %v3619 = vpop.f32.mrb[0].mxu0
        %v3620 = vpop.f32.mrb[0].mxu0
        %v3621 = vadd.f32 %v3411, %v3620
        %v3622 = vpop.f32.mrb[0].mxu0
        %3623 = vmatprep.mubr.bf16.mxu0 0
        %3624 = vmatmul.mubr.bf16.gmra.mrb[0].mxu0 %v3457
        %v3625 = vpop.f32.mrb[0].mxu0
        %v3626 = vadd.f32 %v3411, %v3625
        %v3627 = vpop.f32.mrb[0].mxu0
        %v3628 = vpop.f32.mrb[0].mxu0
        %v3629 = vadd.f32 %v3411, %v3628
        %v3630 = vpop.f32.mrb[0].mxu0
        %3631 = vmatprep.mubr.bf16.mxu0 0
        %3632 = vmatmul.mubr.bf16.gmra.mrb[0].mxu0 %v3458
        %v3633 = vpop.f32.mrb[0].mxu0
        %v3634 = vadd.f32 %v3411, %v3633
        %v3635 = vpop.f32.mrb[0].mxu0
        %v3636 = vpop.f32.mrb[0].mxu0
        %v3637 = vadd.f32 %v3411, %v3636
        %v3638 = vpop.f32.mrb[0].mxu0
        %3639 = vmatprep.mubr.bf16.mxu0 0
        %3640 = vmatmul.mubr.bf16.gmra.mrb[0].mxu0 %v3459
        %v3641 = vpop.f32.mrb[0].mxu0
        %v3642 = vadd.f32 %v3411, %v3641
        %v3643 = vpop.f32.mrb[0].mxu0
        %v3644 = vpop.f32.mrb[0].mxu0
        %v3645 = vadd.f32 %v3411, %v3644
        %v3646 = vpop.f32.mrb[0].mxu0
        %3647 = vmatprep.mubr.bf16.mxu0 0
        %3648 = vmatmul.mubr.bf16.gmra.mrb[0].mxu0 %v3460
        %v3649 = vpop.f32.mrb[0].mxu0
        %v3650 = vadd.f32 %v3411, %v3649
        %v3651 = vpop.f32.mrb[0].mxu0
        %v3652 = vpop.f32.mrb[0].mxu0
        %v3653 = vadd.f32 %v3411, %v3652
        %v3654 = vpop.f32.mrb[0].mxu0
        %3655 = vmatprep.mubr.bf16.mxu0 0
        %3656 = vmatmul.mubr.bf16.gmra.mrb[0].mxu0 %v3461
        %v3657 = vpop.f32.mrb[0].mxu0
        %v3658 = vadd.f32 %v3411, %v3657
        %v3659 = vpop.f32.mrb[0].mxu0
        %v3660 = vpop.f32.mrb[0].mxu0
        %v3661 = vadd.f32 %v3411, %v3660
        %v3662 = vpop.f32.mrb[0].mxu0
        %3663 = vmatprep.mubr.bf16.mxu0 0
        %3664 = vmatmul.mubr.bf16.gmra.mrb[0].mxu0 %v3462
        %v3665 = vpop.f32.mrb[0].mxu0
        %v3666 = vadd.f32 %v3411, %v3665
        %v3667 = vpop.f32.mrb[0].mxu0
        %v3668 = vpop.f32.mrb[0].mxu0
        %v3669 = vadd.f32 %v3411, %v3668
        %v3670 = vpop.f32.mrb[0].mxu0
        %3671 = vdwg.mxu0
        %v3672 = vmax.f32 %v3546, 0.0
        %v3673 = vmax.f32 %v3549, 0.0
        %v3674 = vmax.f32 %v3554, 0.0
        %v3675 = vmax.f32 %v3557, 0.0
        %v3676 = vmax.f32 %v3562, 0.0
        %v3677 = vmax.f32 %v3565, 0.0
        %v3678 = vmax.f32 %v3570, 0.0
        %v3679 = vmax.f32 %v3573, 0.0
        %v3680 = vmax.f32 %v3578, 0.0
        %v3681 = vmax.f32 %v3581, 0.0
        %v3682 = vmax.f32 %v3586, 0.0
        %v3683 = vmax.f32 %v3589, 0.0
        %v3684 = vmax.f32 %v3594, 0.0
        %v3685 = vmax.f32 %v3597, 0.0
        %v3686 = vmax.f32 %v3602, 0.0
        %v3687 = vmax.f32 %v3605, 0.0
        %v3688 = vmax.f32 %v3610, 0.0
        %v3689 = vmax.f32 %v3613, 0.0
        %v3690 = vmax.f32 %v3618, 0.0
        %v3691 = vmax.f32 %v3621, 0.0
        %v3692 = vmax.f32 %v3626, 0.0
        %v3693 = vmax.f32 %v3629, 0.0
        %v3694 = vmax.f32 %v3634, 0.0
        %v3695 = vmax.f32 %v3637, 0.0
        %v3696 = vmax.f32 %v3642, 0.0
        %v3697 = vmax.f32 %v3645, 0.0
        %v3698 = vmax.f32 %v3650, 0.0
        %v3699 = vmax.f32 %v3653, 0.0
        %v3700 = vmax.f32 %v3658, 0.0
        %v3701 = vmax.f32 %v3661, 0.0
        %v3702 = vmax.f32 %v3666, 0.0
        %v3703 = vmax.f32 %v3669, 0.0
        %v3704 = vadd.f32 %v3415, %v3672
        %v3705 = vadd.f32 %v3416, %v3673
        %v3706 = vadd.f32 %v3417, %v3674
        %v3707 = vadd.f32 %v3418, %v3675
        %v3708 = vadd.f32 %v3419, %v3676
        %v3709 = vadd.f32 %v3420, %v3677
        %v3710 = vadd.f32 %v3421, %v3678
        %v3711 = vadd.f32 %v3422, %v3679
        %v3712 = vadd.f32 %v3423, %v3680
        %v3713 = vadd.f32 %v3424, %v3681
        %v3714 = vadd.f32 %v3425, %v3682
        %v3715 = vadd.f32 %v3426, %v3683
        %v3716 = vadd.f32 %v3427, %v3684
        %v3717 = vadd.f32 %v3428, %v3685
        %v3718 = vadd.f32 %v3429, %v3686
        %v3719 = vadd.f32 %v3430, %v3687
        %v3720 = vadd.f32 %v3431, %v3688
        %v3721 = vadd.f32 %v3432, %v3689
        %v3722 = vadd.f32 %v3433, %v3690
        %v3723 = vadd.f32 %v3434, %v3691
        %v3724 = vadd.f32 %v3435, %v3692
        %v3725 = vadd.f32 %v3436, %v3693
        %v3726 = vadd.f32 %v3437, %v3694
        %v3727 = vadd.f32 %v3438, %v3695
        %v3728 = vadd.f32 %v3439, %v3696
        %v3729 = vadd.f32 %v3440, %v3697
        %v3730 = vadd.f32 %v3441, %v3698
        %v3731 = vadd.f32 %v3442, %v3699
        %v3732 = vadd.f32 %v3443, %v3700
        %v3733 = vadd.f32 %v3444, %v3701
        %v3734 = vadd.f32 %v3445, %v3702
        %v3735 = vadd.f32 %v3446, %v3703
        %v3736 = vadd.f32 %v3220, %v3704
        %v3737 = vadd.f32 %v3223, %v3705
        %v3738 = vadd.f32 %v3228, %v3706
        %v3739 = vadd.f32 %v3231, %v3707
        %v3740 = vadd.f32 %v3236, %v3708
        %v3741 = vadd.f32 %v3239, %v3709
        %v3742 = vadd.f32 %v3244, %v3710
        %v3743 = vadd.f32 %v3247, %v3711
        %v3744 = vadd.f32 %v3252, %v3712
        %v3745 = vadd.f32 %v3255, %v3713
        %v3746 = vadd.f32 %v3260, %v3714
        %v3747 = vadd.f32 %v3263, %v3715
        %v3748 = vadd.f32 %v3268, %v3716
        %v3749 = vadd.f32 %v3271, %v3717
        %v3750 = vadd.f32 %v3276, %v3718
        %v3751 = vadd.f32 %v3279, %v3719
        %v3752 = vadd.f32 %v3284, %v3720
        %v3753 = vadd.f32 %v3287, %v3721
        %v3754 = vadd.f32 %v3292, %v3722
        %v3755 = vadd.f32 %v3295, %v3723
        %v3756 = vadd.f32 %v3300, %v3724
        %v3757 = vadd.f32 %v3303, %v3725
        %v3758 = vadd.f32 %v3308, %v3726
        %v3759 = vadd.f32 %v3311, %v3727
        %v3760 = vadd.f32 %v3316, %v3728
        %v3761 = vadd.f32 %v3319, %v3729
        %v3762 = vadd.f32 %v3324, %v3730
        %v3763 = vadd.f32 %v3327, %v3731
        %v3764 = vadd.f32 %v3332, %v3732
        %v3765 = vadd.f32 %v3335, %v3733
        %v3766 = vadd.f32 %v3340, %v3734
        %v3767 = vadd.f32 %v3343, %v3735
        %v3768 = vadd.f32 %v3736, %v1648
        %v3769 = vadd.f32 %v3737, %v1651
        %v3770 = vadd.f32 %v3738, %v1656
        %v3771 = vadd.f32 %v3739, %v1659
        %v3772 = vadd.f32 %v3740, %v1664
        %v3773 = vadd.f32 %v3741, %v1667
        %v3774 = vadd.f32 %v3742, %v1672
        %v3775 = vadd.f32 %v3743, %v1675
        %v3776 = vadd.f32 %v3744, %v1680
        %v3777 = vadd.f32 %v3745, %v1683
        %v3778 = vadd.f32 %v3746, %v1688
        %v3779 = vadd.f32 %v3747, %v1691
        %v3780 = vadd.f32 %v3748, %v1696
        %v3781 = vadd.f32 %v3749, %v1699
        %v3782 = vadd.f32 %v3750, %v1704
        %v3783 = vadd.f32 %v3751, %v1707
        %v3784 = vadd.f32 %v3752, %v1712
        %v3785 = vadd.f32 %v3753, %v1715
        %v3786 = vadd.f32 %v3754, %v1720
        %v3787 = vadd.f32 %v3755, %v1723
        %v3788 = vadd.f32 %v3756, %v1728
        %v3789 = vadd.f32 %v3757, %v1731
        %v3790 = vadd.f32 %v3758, %v1736
        %v3791 = vadd.f32 %v3759, %v1739
        %v3792 = vadd.f32 %v3760, %v1744
        %v3793 = vadd.f32 %v3761, %v1747
        %v3794 = vadd.f32 %v3762, %v1752
        %v3795 = vadd.f32 %v3763, %v1755
        %v3796 = vadd.f32 %v3764, %v1760
        %v3797 = vadd.f32 %v3765, %v1763
        %v3798 = vadd.f32 %v3766, %v1768
        %v3799 = vadd.f32 %v3767, %v1771
        %v3800 = vpack.c.bf16 %v3769, %v3768
        %v3801 = vpack.c.bf16 %v3771, %v3770
        %v3802 = vpack.c.bf16 %v3773, %v3772
        %v3803 = vpack.c.bf16 %v3775, %v3774
        %v3804 = vpack.c.bf16 %v3777, %v3776
        %v3805 = vpack.c.bf16 %v3779, %v3778
        %v3806 = vpack.c.bf16 %v3781, %v3780
        %v3807 = vpack.c.bf16 %v3783, %v3782
        %v3808 = vpack.c.bf16 %v3785, %v3784
        %v3809 = vpack.c.bf16 %v3787, %v3786
        %v3810 = vpack.c.bf16 %v3789, %v3788
        %v3811 = vpack.c.bf16 %v3791, %v3790
        %v3812 = vpack.c.bf16 %v3793, %v3792
        %v3813 = vpack.c.bf16 %v3795, %v3794
        %v3814 = vpack.c.bf16 %v3797, %v3796
        %v3815 = vpack.c.bf16 %v3799, %v3798
        %v3832 = vunpack.c.l.b16 %v3362
        %v3833 = vunpack.c.l.b16 %v3363
        %v3834 = vunpack.c.l.b16 %v3364
        %v3835 = vunpack.c.l.b16 %v3365
        %v3836 = vunpack.c.l.b16 %v3366
        %v3837 = vunpack.c.l.b16 %v3367
        %v3838 = vunpack.c.l.b16 %v3368
        %v3839 = vunpack.c.l.b16 %v3369
        %v3840 = vunpack.c.l.b16 %v3370
        %v3841 = vunpack.c.l.b16 %v3371
        %v3842 = vunpack.c.l.b16 %v3372
        %v3843 = vunpack.c.l.b16 %v3373
        %v3844 = vunpack.c.l.b16 %v3374
        %v3845 = vunpack.c.l.b16 %v3375
        %v3846 = vunpack.c.l.b16 %v3376
        %v3847 = vunpack.c.l.b16 %v3377
        %v3848 = vpack.c.b16 %v3833, %v3832
        %v3849 = vpack.c.b16 %v3835, %v3834
        %v3850 = vpack.c.b16 %v3837, %v3836
        %v3851 = vpack.c.b16 %v3839, %v3838
        %v3852 = vpack.c.b16 %v3841, %v3840
        %v3853 = vpack.c.b16 %v3843, %v3842
        %v3854 = vpack.c.b16 %v3845, %v3844
        %v3855 = vpack.c.b16 %v3847, %v3846
        %3864 = vmatprep.subr.bf16.mxu0 0
        %3865 = vmatpush1.bf16.msra.mxu0 %v3848
        %3866 = vmatprep.subr.bf16.mxu0 0
        %3867 = vmatpush1.bf16.msra.mxu0 %v3849
        %3868 = vmatprep.subr.bf16.mxu0 0
        %3869 = vmatpush1.bf16.msra.mxu0 %v3850
        %3870 = vmatprep.subr.bf16.mxu0 0
        %3871 = vmatpush1.bf16.msra.mxu0 %v3851
        %3872 = vmatprep.subr.bf16.mxu0 0
        %3873 = vmatpush1.bf16.msra.mxu0 %v3852
        %3874 = vmatprep.subr.bf16.mxu0 0
        %3875 = vmatpush1.bf16.msra.mxu0 %v3853
        %3876 = vmatprep.subr.bf16.mxu0 0
        %3877 = vmatpush1.bf16.msra.mxu0 %v3854
        %3878 = vmatprep.subr.bf16.mxu0 0
        %3879 = vmatpush1.bf16.msra.mxu0 %v3855
        %3880 = vmatprep.subr.bf16.mxu0 0
        %3881 = vmatpush1.bf16.msra.mxu0 0
        %3882 = vmatprep.subr.bf16.mxu0 0
        %3883 = vmatpush1.bf16.msra.mxu0 0
        %3884 = vmatprep.subr.bf16.mxu0 0
        %3885 = vmatpush1.bf16.msra.mxu0 0
        %3886 = vmatprep.subr.bf16.mxu0 0
        %3887 = vmatpush1.bf16.msra.mxu0 0
        %3888 = vmatprep.subr.bf16.mxu0 0
        %3889 = vmatpush1.bf16.msra.mxu0 0
        %3890 = vmatprep.subr.bf16.mxu0 0
        %3891 = vmatpush1.bf16.msra.mxu0 0
        %3892 = vmatprep.subr.bf16.mxu0 0
        %3893 = vmatpush1.bf16.msra.mxu0 0
        %3894 = vmatprep.subr.bf16.mxu0 0
        %3895 = vmatpush1.bf16.msra.mxu0 0
        %3896 = vmatprep.mubr.bf16.mxu0 0
        %3897 = vmatmul.mubr.bf16.gmra.mrb[0].mxu0 %v3800
        %v3898 = vpop.f32.mrb[0].mxu0
        %v3899 = vadd.f32 %v3412, %v3898
        %v3900 = vpop.f32.mrb[0].mxu0
        %v3901 = vpop.f32.mrb[0].mxu0
        %v3902 = vadd.f32 %v3412, %v3901
        %v3903 = vpop.f32.mrb[0].mxu0
        %3904 = vmatprep.mubr.bf16.mxu0 0
        %3905 = vmatmul.mubr.bf16.gmra.mrb[0].mxu0 %v3801
        %v3906 = vpop.f32.mrb[0].mxu0
        %v3907 = vadd.f32 %v3412, %v3906
        %v3908 = vpop.f32.mrb[0].mxu0
        %v3909 = vpop.f32.mrb[0].mxu0
        %v3910 = vadd.f32 %v3412, %v3909
        %v3911 = vpop.f32.mrb[0].mxu0
        %3912 = vmatprep.mubr.bf16.mxu0 0
        %3913 = vmatmul.mubr.bf16.gmra.mrb[0].mxu0 %v3802
        %v3914 = vpop.f32.mrb[0].mxu0
        %v3915 = vadd.f32 %v3412, %v3914
        %v3916 = vpop.f32.mrb[0].mxu0
        %v3917 = vpop.f32.mrb[0].mxu0
        %v3918 = vadd.f32 %v3412, %v3917
        %v3919 = vpop.f32.mrb[0].mxu0
        %3920 = vmatprep.mubr.bf16.mxu0 0
        %3921 = vmatmul.mubr.bf16.gmra.mrb[0].mxu0 %v3803
        %v3922 = vpop.f32.mrb[0].mxu0
        %v3923 = vadd.f32 %v3412, %v3922
        %v3924 = vpop.f32.mrb[0].mxu0
        %v3925 = vpop.f32.mrb[0].mxu0
        %v3926 = vadd.f32 %v3412, %v3925
        %v3927 = vpop.f32.mrb[0].mxu0
        %3928 = vmatprep.mubr.bf16.mxu0 0
        %3929 = vmatmul.mubr.bf16.gmra.mrb[0].mxu0 %v3804
        %v3930 = vpop.f32.mrb[0].mxu0
        %v3931 = vadd.f32 %v3412, %v3930
        %v3932 = vpop.f32.mrb[0].mxu0
        %v3933 = vpop.f32.mrb[0].mxu0
        %v3934 = vadd.f32 %v3412, %v3933
        %v3935 = vpop.f32.mrb[0].mxu0
        %3936 = vmatprep.mubr.bf16.mxu0 0
        %3937 = vmatmul.mubr.bf16.gmra.mrb[0].mxu0 %v3805
        %v3938 = vpop.f32.mrb[0].mxu0
        %v3939 = vadd.f32 %v3412, %v3938
        %v3940 = vpop.f32.mrb[0].mxu0
        %v3941 = vpop.f32.mrb[0].mxu0
        %v3942 = vadd.f32 %v3412, %v3941
        %v3943 = vpop.f32.mrb[0].mxu0
        %3944 = vmatprep.mubr.bf16.mxu0 0
        %3945 = vmatmul.mubr.bf16.gmra.mrb[0].mxu0 %v3806
        %v3946 = vpop.f32.mrb[0].mxu0
        %v3947 = vadd.f32 %v3412, %v3946
        %v3948 = vpop.f32.mrb[0].mxu0
        %v3949 = vpop.f32.mrb[0].mxu0
        %v3950 = vadd.f32 %v3412, %v3949
        %v3951 = vpop.f32.mrb[0].mxu0
        %3952 = vmatprep.mubr.bf16.mxu0 0
        %3953 = vmatmul.mubr.bf16.gmra.mrb[0].mxu0 %v3807
        %v3954 = vpop.f32.mrb[0].mxu0
        %v3955 = vadd.f32 %v3412, %v3954
        %v3956 = vpop.f32.mrb[0].mxu0
        %v3957 = vpop.f32.mrb[0].mxu0
        %v3958 = vadd.f32 %v3412, %v3957
        %v3959 = vpop.f32.mrb[0].mxu0
        %3960 = vmatprep.mubr.bf16.mxu0 0
        %3961 = vmatmul.mubr.bf16.gmra.mrb[0].mxu0 %v3808
        %v3962 = vpop.f32.mrb[0].mxu0
        %v3963 = vadd.f32 %v3412, %v3962
        %v3964 = vpop.f32.mrb[0].mxu0
        %v3965 = vpop.f32.mrb[0].mxu0
        %v3966 = vadd.f32 %v3412, %v3965
        %v3967 = vpop.f32.mrb[0].mxu0
        %3968 = vmatprep.mubr.bf16.mxu0 0
        %3969 = vmatmul.mubr.bf16.gmra.mrb[0].mxu0 %v3809
        %v3970 = vpop.f32.mrb[0].mxu0
        %v3971 = vadd.f32 %v3412, %v3970
        %v3972 = vpop.f32.mrb[0].mxu0
        %v3973 = vpop.f32.mrb[0].mxu0
        %v3974 = vadd.f32 %v3412, %v3973
        %v3975 = vpop.f32.mrb[0].mxu0
        %3976 = vmatprep.mubr.bf16.mxu0 0
        %3977 = vmatmul.mubr.bf16.gmra.mrb[0].mxu0 %v3810
        %v3978 = vpop.f32.mrb[0].mxu0
        %v3979 = vadd.f32 %v3412, %v3978
        %v3980 = vpop.f32.mrb[0].mxu0
        %v3981 = vpop.f32.mrb[0].mxu0
        %v3982 = vadd.f32 %v3412, %v3981
        %v3983 = vpop.f32.mrb[0].mxu0
        %3984 = vmatprep.mubr.bf16.mxu0 0
        %3985 = vmatmul.mubr.bf16.gmra.mrb[0].mxu0 %v3811
        %v3986 = vpop.f32.mrb[0].mxu0
        %v3987 = vadd.f32 %v3412, %v3986
        %v3988 = vpop.f32.mrb[0].mxu0
        %v3989 = vpop.f32.mrb[0].mxu0
        %v3990 = vadd.f32 %v3412, %v3989
        %v3991 = vpop.f32.mrb[0].mxu0
        %3992 = vmatprep.mubr.bf16.mxu0 0
        %3993 = vmatmul.mubr.bf16.gmra.mrb[0].mxu0 %v3812
        %v3994 = vpop.f32.mrb[0].mxu0
        %v3995 = vadd.f32 %v3412, %v3994
        %v3996 = vpop.f32.mrb[0].mxu0
        %v3997 = vpop.f32.mrb[0].mxu0
        %v3998 = vadd.f32 %v3412, %v3997
        %v3999 = vpop.f32.mrb[0].mxu0
        %4000 = vmatprep.mubr.bf16.mxu0 0
        %4001 = vmatmul.mubr.bf16.gmra.mrb[0].mxu0 %v3813
        %v4002 = vpop.f32.mrb[0].mxu0
        %v4003 = vadd.f32 %v3412, %v4002
        %v4004 = vpop.f32.mrb[0].mxu0
        %v4005 = vpop.f32.mrb[0].mxu0
        %v4006 = vadd.f32 %v3412, %v4005
        %v4007 = vpop.f32.mrb[0].mxu0
        %4008 = vmatprep.mubr.bf16.mxu0 0
        %4009 = vmatmul.mubr.bf16.gmra.mrb[0].mxu0 %v3814
        %v4010 = vpop.f32.mrb[0].mxu0
        %v4011 = vadd.f32 %v3412, %v4010
        %v4012 = vpop.f32.mrb[0].mxu0
        %v4013 = vpop.f32.mrb[0].mxu0
        %v4014 = vadd.f32 %v3412, %v4013
        %v4015 = vpop.f32.mrb[0].mxu0
        %4016 = vmatprep.mubr.bf16.mxu0 0
        %4017 = vmatmul.mubr.bf16.gmra.mrb[0].mxu0 %v3815
        %v4018 = vpop.f32.mrb[0].mxu0
        %v4019 = vadd.f32 %v3412, %v4018
        %v4020 = vpop.f32.mrb[0].mxu0
        %v4021 = vpop.f32.mrb[0].mxu0
        %v4022 = vadd.f32 %v3412, %v4021
        %v4023 = vpop.f32.mrb[0].mxu0
        %4024 = vdwg.mxu0
        %v4025 = vmax.f32 %v3899, 0.0
        %v4026 = vmax.f32 %v3902, 0.0
        %v4027 = vmax.f32 %v3907, 0.0
        %v4028 = vmax.f32 %v3910, 0.0
        %v4029 = vmax.f32 %v3915, 0.0
        %v4030 = vmax.f32 %v3918, 0.0
        %v4031 = vmax.f32 %v3923, 0.0
        %v4032 = vmax.f32 %v3926, 0.0
        %v4033 = vmax.f32 %v3931, 0.0
        %v4034 = vmax.f32 %v3934, 0.0
        %v4035 = vmax.f32 %v3939, 0.0
        %v4036 = vmax.f32 %v3942, 0.0
        %v4037 = vmax.f32 %v3947, 0.0
        %v4038 = vmax.f32 %v3950, 0.0
        %v4039 = vmax.f32 %v3955, 0.0
        %v4040 = vmax.f32 %v3958, 0.0
        %v4041 = vmax.f32 %v3963, 0.0
        %v4042 = vmax.f32 %v3966, 0.0
        %v4043 = vmax.f32 %v3971, 0.0
        %v4044 = vmax.f32 %v3974, 0.0
        %v4045 = vmax.f32 %v3979, 0.0
        %v4046 = vmax.f32 %v3982, 0.0
        %v4047 = vmax.f32 %v3987, 0.0
        %v4048 = vmax.f32 %v3990, 0.0
        %v4049 = vmax.f32 %v3995, 0.0
        %v4050 = vmax.f32 %v3998, 0.0
        %v4051 = vmax.f32 %v4003, 0.0
        %v4052 = vmax.f32 %v4006, 0.0
        %v4053 = vmax.f32 %v4011, 0.0
        %v4054 = vmax.f32 %v4014, 0.0
        %v4055 = vmax.f32 %v4019, 0.0
        %v4056 = vmax.f32 %v4022, 0.0
        %v4057 = vadd.f32 %v3768, %v4025
        %v4058 = vadd.f32 %v3769, %v4026
        %v4059 = vadd.f32 %v3770, %v4027
        %v4060 = vadd.f32 %v3771, %v4028
        %v4061 = vadd.f32 %v3772, %v4029
        %v4062 = vadd.f32 %v3773, %v4030
        %v4063 = vadd.f32 %v3774, %v4031
        %v4064 = vadd.f32 %v3775, %v4032
        %v4065 = vadd.f32 %v3776, %v4033
        %v4066 = vadd.f32 %v3777, %v4034
        %v4067 = vadd.f32 %v3778, %v4035
        %v4068 = vadd.f32 %v3779, %v4036
        %v4069 = vadd.f32 %v3780, %v4037
        %v4070 = vadd.f32 %v3781, %v4038
        %v4071 = vadd.f32 %v3782, %v4039
        %v4072 = vadd.f32 %v3783, %v4040
        %v4073 = vadd.f32 %v3784, %v4041
        %v4074 = vadd.f32 %v3785, %v4042
        %v4075 = vadd.f32 %v3786, %v4043
        %v4076 = vadd.f32 %v3787, %v4044
        %v4077 = vadd.f32 %v3788, %v4045
        %v4078 = vadd.f32 %v3789, %v4046
        %v4079 = vadd.f32 %v3790, %v4047
        %v4080 = vadd.f32 %v3791, %v4048
        %v4081 = vadd.f32 %v3792, %v4049
        %v4082 = vadd.f32 %v3793, %v4050
        %v4083 = vadd.f32 %v3794, %v4051
        %v4084 = vadd.f32 %v3795, %v4052
        %v4085 = vadd.f32 %v3796, %v4053
        %v4086 = vadd.f32 %v3797, %v4054
        %v4087 = vadd.f32 %v3798, %v4055
        %v4088 = vadd.f32 %v3799, %v4056
        %vm4089 = vcmp.lt.s32.totalorder %v393, 32
        %v4090 = vsel %vm4089, 1, 0
        %v4091 = vcvt.s32.f32 %v4090
        %v4092 = vmul.f32 %v4057, %v4091
        %v4093 = vmul.f32 %v4058, %v4091
        %v4094 = vmul.f32 %v4059, %v4091
        %v4095 = vmul.f32 %v4060, %v4091
        %v4096 = vmul.f32 %v4061, %v4091
        %v4097 = vmul.f32 %v4062, %v4091
        %v4098 = vmul.f32 %v4063, %v4091
        %v4099 = vmul.f32 %v4064, %v4091
        %v4100 = vmul.f32 %v4065, %v4091
        %v4101 = vmul.f32 %v4066, %v4091
        %v4102 = vmul.f32 %v4067, %v4091
        %v4103 = vmul.f32 %v4068, %v4091
        %v4104 = vmul.f32 %v4069, %v4091
        %v4105 = vmul.f32 %v4070, %v4091
        %v4106 = vmul.f32 %v4071, %v4091
        %v4107 = vmul.f32 %v4072, %v4091
        %v4108 = vmul.f32 %v4073, %v4091
        %v4109 = vmul.f32 %v4074, %v4091
        %v4110 = vmul.f32 %v4075, %v4091
        %v4111 = vmul.f32 %v4076, %v4091
        %v4112 = vmul.f32 %v4077, %v4091
        %v4113 = vmul.f32 %v4078, %v4091
        %v4114 = vmul.f32 %v4079, %v4091
        %v4115 = vmul.f32 %v4080, %v4091
        %v4116 = vmul.f32 %v4081, %v4091
        %v4117 = vmul.f32 %v4082, %v4091
        %v4118 = vmul.f32 %v4083, %v4091
        %v4119 = vmul.f32 %v4084, %v4091
        %v4120 = vmul.f32 %v4085, %v4091
        %v4121 = vmul.f32 %v4086, %v4091
        %v4122 = vmul.f32 %v4087, %v4091
        %v4123 = vmul.f32 %v4088, %v4091
        %4124 = vadd.xlane.f32.xlu0 %v4092
        %v4125 = vpop.xlane.xlu0 %4124
        %4126 = vadd.xlane.f32.xlu0 %v4093
        %v4127 = vpop.xlane.xlu0 %4126
        %4128 = vadd.xlane.f32.xlu0 %v4094
        %v4129 = vpop.xlane.xlu0 %4128
        %4130 = vadd.xlane.f32.xlu0 %v4095
        %v4131 = vpop.xlane.xlu0 %4130
        %4132 = vadd.xlane.f32.xlu0 %v4096
        %v4133 = vpop.xlane.xlu0 %4132
        %4134 = vadd.xlane.f32.xlu0 %v4097
        %v4135 = vpop.xlane.xlu0 %4134
        %4136 = vadd.xlane.f32.xlu0 %v4098
        %v4137 = vpop.xlane.xlu0 %4136
        %4138 = vadd.xlane.f32.xlu0 %v4099
        %v4139 = vpop.xlane.xlu0 %4138
        %4140 = vadd.xlane.f32.xlu0 %v4100
        %v4141 = vpop.xlane.xlu0 %4140
        %4142 = vadd.xlane.f32.xlu0 %v4101
        %v4143 = vpop.xlane.xlu0 %4142
        %4144 = vadd.xlane.f32.xlu0 %v4102
        %v4145 = vpop.xlane.xlu0 %4144
        %4146 = vadd.xlane.f32.xlu0 %v4103
        %v4147 = vpop.xlane.xlu0 %4146
        %4148 = vadd.xlane.f32.xlu0 %v4104
        %v4149 = vpop.xlane.xlu0 %4148
        %4150 = vadd.xlane.f32.xlu0 %v4105
        %v4151 = vpop.xlane.xlu0 %4150
        %4152 = vadd.xlane.f32.xlu0 %v4106
        %v4153 = vpop.xlane.xlu0 %4152
        %4154 = vadd.xlane.f32.xlu0 %v4107
        %v4155 = vpop.xlane.xlu0 %4154
        %4156 = vadd.xlane.f32.xlu0 %v4108
        %v4157 = vpop.xlane.xlu0 %4156
        %4158 = vadd.xlane.f32.xlu0 %v4109
        %v4159 = vpop.xlane.xlu0 %4158
        %4160 = vadd.xlane.f32.xlu0 %v4110
        %v4161 = vpop.xlane.xlu0 %4160
        %4162 = vadd.xlane.f32.xlu0 %v4111
        %v4163 = vpop.xlane.xlu0 %4162
        %4164 = vadd.xlane.f32.xlu0 %v4112
        %v4165 = vpop.xlane.xlu0 %4164
        %4166 = vadd.xlane.f32.xlu0 %v4113
        %v4167 = vpop.xlane.xlu0 %4166
        %4168 = vadd.xlane.f32.xlu0 %v4114
        %v4169 = vpop.xlane.xlu0 %4168
        %4170 = vadd.xlane.f32.xlu0 %v4115
        %v4171 = vpop.xlane.xlu0 %4170
        %4172 = vadd.xlane.f32.xlu0 %v4116
        %v4173 = vpop.xlane.xlu0 %4172
        %4174 = vadd.xlane.f32.xlu0 %v4117
        %v4175 = vpop.xlane.xlu0 %4174
        %4176 = vadd.xlane.f32.xlu0 %v4118
        %v4177 = vpop.xlane.xlu0 %4176
        %4178 = vadd.xlane.f32.xlu0 %v4119
        %v4179 = vpop.xlane.xlu0 %4178
        %4180 = vadd.xlane.f32.xlu0 %v4120
        %v4181 = vpop.xlane.xlu0 %4180
        %4182 = vadd.xlane.f32.xlu0 %v4121
        %v4183 = vpop.xlane.xlu0 %4182
        %4184 = vadd.xlane.f32.xlu0 %v4122
        %v4185 = vpop.xlane.xlu0 %4184
        %4186 = vadd.xlane.f32.xlu0 %v4123
        %v4187 = vpop.xlane.xlu0 %4186
        %v4188 = vmul.f32 %v4125, 0.03125
        %v4189 = vmul.f32 %v4127, 0.03125
        %v4190 = vmul.f32 %v4129, 0.03125
        %v4191 = vmul.f32 %v4131, 0.03125
        %v4192 = vmul.f32 %v4133, 0.03125
        %v4193 = vmul.f32 %v4135, 0.03125
        %v4194 = vmul.f32 %v4137, 0.03125
        %v4195 = vmul.f32 %v4139, 0.03125
        %v4196 = vmul.f32 %v4141, 0.03125
        %v4197 = vmul.f32 %v4143, 0.03125
        %v4198 = vmul.f32 %v4145, 0.03125
        %v4199 = vmul.f32 %v4147, 0.03125
        %v4200 = vmul.f32 %v4149, 0.03125
        %v4201 = vmul.f32 %v4151, 0.03125
        %v4202 = vmul.f32 %v4153, 0.03125
        %v4203 = vmul.f32 %v4155, 0.03125
        %v4204 = vmul.f32 %v4157, 0.03125
        %v4205 = vmul.f32 %v4159, 0.03125
        %v4206 = vmul.f32 %v4161, 0.03125
        %v4207 = vmul.f32 %v4163, 0.03125
        %v4208 = vmul.f32 %v4165, 0.03125
        %v4209 = vmul.f32 %v4167, 0.03125
        %v4210 = vmul.f32 %v4169, 0.03125
        %v4211 = vmul.f32 %v4171, 0.03125
        %v4212 = vmul.f32 %v4173, 0.03125
        %v4213 = vmul.f32 %v4175, 0.03125
        %v4214 = vmul.f32 %v4177, 0.03125
        %v4215 = vmul.f32 %v4179, 0.03125
        %v4216 = vmul.f32 %v4181, 0.03125
        %v4217 = vmul.f32 %v4183, 0.03125
        %v4218 = vmul.f32 %v4185, 0.03125
        %v4219 = vmul.f32 %v4187, 0.03125
        %v4220 = vsub.f32 %v4057, %v4188
        %v4221 = vsub.f32 %v4058, %v4189
        %v4222 = vsub.f32 %v4059, %v4190
        %v4223 = vsub.f32 %v4060, %v4191
        %v4224 = vsub.f32 %v4061, %v4192
        %v4225 = vsub.f32 %v4062, %v4193
        %v4226 = vsub.f32 %v4063, %v4194
        %v4227 = vsub.f32 %v4064, %v4195
        %v4228 = vsub.f32 %v4065, %v4196
        %v4229 = vsub.f32 %v4066, %v4197
        %v4230 = vsub.f32 %v4067, %v4198
        %v4231 = vsub.f32 %v4068, %v4199
        %v4232 = vsub.f32 %v4069, %v4200
        %v4233 = vsub.f32 %v4070, %v4201
        %v4234 = vsub.f32 %v4071, %v4202
        %v4235 = vsub.f32 %v4072, %v4203
        %v4236 = vsub.f32 %v4073, %v4204
        %v4237 = vsub.f32 %v4074, %v4205
        %v4238 = vsub.f32 %v4075, %v4206
        %v4239 = vsub.f32 %v4076, %v4207
        %v4240 = vsub.f32 %v4077, %v4208
        %v4241 = vsub.f32 %v4078, %v4209
        %v4242 = vsub.f32 %v4079, %v4210
        %v4243 = vsub.f32 %v4080, %v4211
        %v4244 = vsub.f32 %v4081, %v4212
        %v4245 = vsub.f32 %v4082, %v4213
        %v4246 = vsub.f32 %v4083, %v4214
        %v4247 = vsub.f32 %v4084, %v4215
        %v4248 = vsub.f32 %v4085, %v4216
        %v4249 = vsub.f32 %v4086, %v4217
        %v4250 = vsub.f32 %v4087, %v4218
        %v4251 = vsub.f32 %v4088, %v4219
        %v4252 = vmul.f32 %v4220, %v4091
        %v4253 = vmul.f32 %v4221, %v4091
        %v4254 = vmul.f32 %v4222, %v4091
        %v4255 = vmul.f32 %v4223, %v4091
        %v4256 = vmul.f32 %v4224, %v4091
        %v4257 = vmul.f32 %v4225, %v4091
        %v4258 = vmul.f32 %v4226, %v4091
        %v4259 = vmul.f32 %v4227, %v4091
        %v4260 = vmul.f32 %v4228, %v4091
        %v4261 = vmul.f32 %v4229, %v4091
        %v4262 = vmul.f32 %v4230, %v4091
        %v4263 = vmul.f32 %v4231, %v4091
        %v4264 = vmul.f32 %v4232, %v4091
        %v4265 = vmul.f32 %v4233, %v4091
        %v4266 = vmul.f32 %v4234, %v4091
        %v4267 = vmul.f32 %v4235, %v4091
        %v4268 = vmul.f32 %v4236, %v4091
        %v4269 = vmul.f32 %v4237, %v4091
        %v4270 = vmul.f32 %v4238, %v4091
        %v4271 = vmul.f32 %v4239, %v4091
        %v4272 = vmul.f32 %v4240, %v4091
        %v4273 = vmul.f32 %v4241, %v4091
        %v4274 = vmul.f32 %v4242, %v4091
        %v4275 = vmul.f32 %v4243, %v4091
        %v4276 = vmul.f32 %v4244, %v4091
        %v4277 = vmul.f32 %v4245, %v4091
        %v4278 = vmul.f32 %v4246, %v4091
        %v4279 = vmul.f32 %v4247, %v4091
        %v4280 = vmul.f32 %v4248, %v4091
        %v4281 = vmul.f32 %v4249, %v4091
        %v4282 = vmul.f32 %v4250, %v4091
        %v4283 = vmul.f32 %v4251, %v4091
        %v4284 = vmul.f32 %v4252, %v4252
        %v4285 = vmul.f32 %v4253, %v4253
        %v4286 = vmul.f32 %v4254, %v4254
        %v4287 = vmul.f32 %v4255, %v4255
        %v4288 = vmul.f32 %v4256, %v4256
        %v4289 = vmul.f32 %v4257, %v4257
        %v4290 = vmul.f32 %v4258, %v4258
        %v4291 = vmul.f32 %v4259, %v4259
        %v4292 = vmul.f32 %v4260, %v4260
        %v4293 = vmul.f32 %v4261, %v4261
        %v4294 = vmul.f32 %v4262, %v4262
        %v4295 = vmul.f32 %v4263, %v4263
        %v4296 = vmul.f32 %v4264, %v4264
        %v4297 = vmul.f32 %v4265, %v4265
        %v4298 = vmul.f32 %v4266, %v4266
        %v4299 = vmul.f32 %v4267, %v4267
        %v4300 = vmul.f32 %v4268, %v4268
        %v4301 = vmul.f32 %v4269, %v4269
        %v4302 = vmul.f32 %v4270, %v4270
        %v4303 = vmul.f32 %v4271, %v4271
        %v4304 = vmul.f32 %v4272, %v4272
        %v4305 = vmul.f32 %v4273, %v4273
        %v4306 = vmul.f32 %v4274, %v4274
        %v4307 = vmul.f32 %v4275, %v4275
        %v4308 = vmul.f32 %v4276, %v4276
        %v4309 = vmul.f32 %v4277, %v4277
        %v4310 = vmul.f32 %v4278, %v4278
        %v4311 = vmul.f32 %v4279, %v4279
        %v4312 = vmul.f32 %v4280, %v4280
        %v4313 = vmul.f32 %v4281, %v4281
        %v4314 = vmul.f32 %v4282, %v4282
        %v4315 = vmul.f32 %v4283, %v4283
        %4316 = vadd.xlane.f32.xlu0 %v4284
        %v4317 = vpop.xlane.xlu0 %4316
        %4318 = vadd.xlane.f32.xlu0 %v4285
        %v4319 = vpop.xlane.xlu0 %4318
        %4320 = vadd.xlane.f32.xlu0 %v4286
        %v4321 = vpop.xlane.xlu0 %4320
        %4322 = vadd.xlane.f32.xlu0 %v4287
        %v4323 = vpop.xlane.xlu0 %4322
        %4324 = vadd.xlane.f32.xlu0 %v4288
        %v4325 = vpop.xlane.xlu0 %4324
        %4326 = vadd.xlane.f32.xlu0 %v4289
        %v4327 = vpop.xlane.xlu0 %4326
        %4328 = vadd.xlane.f32.xlu0 %v4290
        %v4329 = vpop.xlane.xlu0 %4328
        %4330 = vadd.xlane.f32.xlu0 %v4291
        %v4331 = vpop.xlane.xlu0 %4330
        %4332 = vadd.xlane.f32.xlu0 %v4292
        %v4333 = vpop.xlane.xlu0 %4332
        %4334 = vadd.xlane.f32.xlu0 %v4293
        %v4335 = vpop.xlane.xlu0 %4334
        %4336 = vadd.xlane.f32.xlu0 %v4294
        %v4337 = vpop.xlane.xlu0 %4336
        %4338 = vadd.xlane.f32.xlu0 %v4295
        %v4339 = vpop.xlane.xlu0 %4338
        %4340 = vadd.xlane.f32.xlu0 %v4296
        %v4341 = vpop.xlane.xlu0 %4340
        %4342 = vadd.xlane.f32.xlu0 %v4297
        %v4343 = vpop.xlane.xlu0 %4342
        %4344 = vadd.xlane.f32.xlu0 %v4298
        %v4345 = vpop.xlane.xlu0 %4344
        %4346 = vadd.xlane.f32.xlu0 %v4299
        %v4347 = vpop.xlane.xlu0 %4346
        %4348 = vadd.xlane.f32.xlu0 %v4300
        %v4349 = vpop.xlane.xlu0 %4348
        %4350 = vadd.xlane.f32.xlu0 %v4301
        %v4351 = vpop.xlane.xlu0 %4350
        %4352 = vadd.xlane.f32.xlu0 %v4302
        %v4353 = vpop.xlane.xlu0 %4352
        %4354 = vadd.xlane.f32.xlu0 %v4303
        %v4355 = vpop.xlane.xlu0 %4354
        %4356 = vadd.xlane.f32.xlu0 %v4304
        %v4357 = vpop.xlane.xlu0 %4356
        %4358 = vadd.xlane.f32.xlu0 %v4305
        %v4359 = vpop.xlane.xlu0 %4358
        %4360 = vadd.xlane.f32.xlu0 %v4306
        %v4361 = vpop.xlane.xlu0 %4360
        %4362 = vadd.xlane.f32.xlu0 %v4307
        %v4363 = vpop.xlane.xlu0 %4362
        %4364 = vadd.xlane.f32.xlu0 %v4308
        %v4365 = vpop.xlane.xlu0 %4364
        %4366 = vadd.xlane.f32.xlu0 %v4309
        %v4367 = vpop.xlane.xlu0 %4366
        %4368 = vadd.xlane.f32.xlu0 %v4310
        %v4369 = vpop.xlane.xlu0 %4368
        %4370 = vadd.xlane.f32.xlu0 %v4311
        %v4371 = vpop.xlane.xlu0 %4370
        %4372 = vadd.xlane.f32.xlu0 %v4312
        %v4373 = vpop.xlane.xlu0 %4372
        %4374 = vadd.xlane.f32.xlu0 %v4313
        %v4375 = vpop.xlane.xlu0 %4374
        %4376 = vadd.xlane.f32.xlu0 %v4314
        %v4377 = vpop.xlane.xlu0 %4376
        %4378 = vadd.xlane.f32.xlu0 %v4315
        %v4379 = vpop.xlane.xlu0 %4378
        %v4380 = vmul.f32 %v4317, 0.03125
        %v4381 = vmul.f32 %v4319, 0.03125
        %v4382 = vmul.f32 %v4321, 0.03125
        %v4383 = vmul.f32 %v4323, 0.03125
        %v4384 = vmul.f32 %v4325, 0.03125
        %v4385 = vmul.f32 %v4327, 0.03125
        %v4386 = vmul.f32 %v4329, 0.03125
        %v4387 = vmul.f32 %v4331, 0.03125
        %v4388 = vmul.f32 %v4333, 0.03125
        %v4389 = vmul.f32 %v4335, 0.03125
        %v4390 = vmul.f32 %v4337, 0.03125
        %v4391 = vmul.f32 %v4339, 0.03125
        %v4392 = vmul.f32 %v4341, 0.03125
        %v4393 = vmul.f32 %v4343, 0.03125
        %v4394 = vmul.f32 %v4345, 0.03125
        %v4395 = vmul.f32 %v4347, 0.03125
        %v4396 = vmul.f32 %v4349, 0.03125
        %v4397 = vmul.f32 %v4351, 0.03125
        %v4398 = vmul.f32 %v4353, 0.03125
        %v4399 = vmul.f32 %v4355, 0.03125
        %v4400 = vmul.f32 %v4357, 0.03125
        %v4401 = vmul.f32 %v4359, 0.03125
        %v4402 = vmul.f32 %v4361, 0.03125
        %v4403 = vmul.f32 %v4363, 0.03125
        %v4404 = vmul.f32 %v4365, 0.03125
        %v4405 = vmul.f32 %v4367, 0.03125
        %v4406 = vmul.f32 %v4369, 0.03125
        %v4407 = vmul.f32 %v4371, 0.03125
        %v4408 = vmul.f32 %v4373, 0.03125
        %v4409 = vmul.f32 %v4375, 0.03125
        %v4410 = vmul.f32 %v4377, 0.03125
        %v4411 = vmul.f32 %v4379, 0.03125
        %v4412 = vadd.f32 %v4380, 1e-05
        %v4413 = vadd.f32 %v4381, 1e-05
        %v4414 = vadd.f32 %v4382, 1e-05
        %v4415 = vadd.f32 %v4383, 1e-05
        %v4416 = vadd.f32 %v4384, 1e-05
        %v4417 = vadd.f32 %v4385, 1e-05
        %v4418 = vadd.f32 %v4386, 1e-05
        %v4419 = vadd.f32 %v4387, 1e-05
        %v4420 = vadd.f32 %v4388, 1e-05
        %v4421 = vadd.f32 %v4389, 1e-05
        %v4422 = vadd.f32 %v4390, 1e-05
        %v4423 = vadd.f32 %v4391, 1e-05
        %v4424 = vadd.f32 %v4392, 1e-05
        %v4425 = vadd.f32 %v4393, 1e-05
        %v4426 = vadd.f32 %v4394, 1e-05
        %v4427 = vadd.f32 %v4395, 1e-05
        %v4428 = vadd.f32 %v4396, 1e-05
        %v4429 = vadd.f32 %v4397, 1e-05
        %v4430 = vadd.f32 %v4398, 1e-05
        %v4431 = vadd.f32 %v4399, 1e-05
        %v4432 = vadd.f32 %v4400, 1e-05
        %v4433 = vadd.f32 %v4401, 1e-05
        %v4434 = vadd.f32 %v4402, 1e-05
        %v4435 = vadd.f32 %v4403, 1e-05
        %v4436 = vadd.f32 %v4404, 1e-05
        %v4437 = vadd.f32 %v4405, 1e-05
        %v4438 = vadd.f32 %v4406, 1e-05
        %v4439 = vadd.f32 %v4407, 1e-05
        %v4440 = vadd.f32 %v4408, 1e-05
        %v4441 = vadd.f32 %v4409, 1e-05
        %v4442 = vadd.f32 %v4410, 1e-05
        %v4443 = vadd.f32 %v4411, 1e-05
        %v4444 = vrsqrt.pop %v4412
        %v4445 = vrsqrt.pop %v4413
        %v4446 = vrsqrt.pop %v4414
        %v4447 = vrsqrt.pop %v4415
        %v4448 = vrsqrt.pop %v4416
        %v4449 = vrsqrt.pop %v4417
        %v4450 = vrsqrt.pop %v4418
        %v4451 = vrsqrt.pop %v4419
        %v4452 = vrsqrt.pop %v4420
        %v4453 = vrsqrt.pop %v4421
        %v4454 = vrsqrt.pop %v4422
        %v4455 = vrsqrt.pop %v4423
        %v4456 = vrsqrt.pop %v4424
        %v4457 = vrsqrt.pop %v4425
        %v4458 = vrsqrt.pop %v4426
        %v4459 = vrsqrt.pop %v4427
        %v4460 = vrsqrt.pop %v4428
        %v4461 = vrsqrt.pop %v4429
        %v4462 = vrsqrt.pop %v4430
        %v4463 = vrsqrt.pop %v4431
        %v4464 = vrsqrt.pop %v4432
        %v4465 = vrsqrt.pop %v4433
        %v4466 = vrsqrt.pop %v4434
        %v4467 = vrsqrt.pop %v4435
        %v4468 = vrsqrt.pop %v4436
        %v4469 = vrsqrt.pop %v4437
        %v4470 = vrsqrt.pop %v4438
        %v4471 = vrsqrt.pop %v4439
        %v4472 = vrsqrt.pop %v4440
        %v4473 = vrsqrt.pop %v4441
        %v4474 = vrsqrt.pop %v4442
        %v4475 = vrsqrt.pop %v4443
        %v4476 = vmul.f32 %v4252, %v4444
        %v4477 = vmul.f32 %v4253, %v4445
        %v4478 = vmul.f32 %v4254, %v4446
        %v4479 = vmul.f32 %v4255, %v4447
        %v4480 = vmul.f32 %v4256, %v4448
        %v4481 = vmul.f32 %v4257, %v4449
        %v4482 = vmul.f32 %v4258, %v4450
        %v4483 = vmul.f32 %v4259, %v4451
        %v4484 = vmul.f32 %v4260, %v4452
        %v4485 = vmul.f32 %v4261, %v4453
        %v4486 = vmul.f32 %v4262, %v4454
        %v4487 = vmul.f32 %v4263, %v4455
        %v4488 = vmul.f32 %v4264, %v4456
        %v4489 = vmul.f32 %v4265, %v4457
        %v4490 = vmul.f32 %v4266, %v4458
        %v4491 = vmul.f32 %v4267, %v4459
        %v4492 = vmul.f32 %v4268, %v4460
        %v4493 = vmul.f32 %v4269, %v4461
        %v4494 = vmul.f32 %v4270, %v4462
        %v4495 = vmul.f32 %v4271, %v4463
        %v4496 = vmul.f32 %v4272, %v4464
        %v4497 = vmul.f32 %v4273, %v4465
        %v4498 = vmul.f32 %v4274, %v4466
        %v4499 = vmul.f32 %v4275, %v4467
        %v4500 = vmul.f32 %v4276, %v4468
        %v4501 = vmul.f32 %v4277, %v4469
        %v4502 = vmul.f32 %v4278, %v4470
        %v4503 = vmul.f32 %v4279, %v4471
        %v4504 = vmul.f32 %v4280, %v4472
        %v4505 = vmul.f32 %v4281, %v4473
        %v4506 = vmul.f32 %v4282, %v4474
        %v4507 = vmul.f32 %v4283, %v4475
        %v4508 = vmul.f32 %v4476, %v3413
        %v4509 = vmul.f32 %v4477, %v3413
        %v4510 = vmul.f32 %v4478, %v3413
        %v4511 = vmul.f32 %v4479, %v3413
        %v4512 = vmul.f32 %v4480, %v3413
        %v4513 = vmul.f32 %v4481, %v3413
        %v4514 = vmul.f32 %v4482, %v3413
        %v4515 = vmul.f32 %v4483, %v3413
        %v4516 = vmul.f32 %v4484, %v3413
        %v4517 = vmul.f32 %v4485, %v3413
        %v4518 = vmul.f32 %v4486, %v3413
        %v4519 = vmul.f32 %v4487, %v3413
        %v4520 = vmul.f32 %v4488, %v3413
        %v4521 = vmul.f32 %v4489, %v3413
        %v4522 = vmul.f32 %v4490, %v3413
        %v4523 = vmul.f32 %v4491, %v3413
        %v4524 = vmul.f32 %v4492, %v3413
        %v4525 = vmul.f32 %v4493, %v3413
        %v4526 = vmul.f32 %v4494, %v3413
        %v4527 = vmul.f32 %v4495, %v3413
        %v4528 = vmul.f32 %v4496, %v3413
        %v4529 = vmul.f32 %v4497, %v3413
        %v4530 = vmul.f32 %v4498, %v3413
        %v4531 = vmul.f32 %v4499, %v3413
        %v4532 = vmul.f32 %v4500, %v3413
        %v4533 = vmul.f32 %v4501, %v3413
        %v4534 = vmul.f32 %v4502, %v3413
        %v4535 = vmul.f32 %v4503, %v3413
        %v4536 = vmul.f32 %v4504, %v3413
        %v4537 = vmul.f32 %v4505, %v3413
        %v4538 = vmul.f32 %v4506, %v3413
        %v4539 = vmul.f32 %v4507, %v3413
        %v4540 = vadd.f32 %v4508, %v3414
        %v4541 = vadd.f32 %v4509, %v3414
        %v4542 = vadd.f32 %v4510, %v3414
        %v4543 = vadd.f32 %v4511, %v3414
        %v4544 = vadd.f32 %v4512, %v3414
        %v4545 = vadd.f32 %v4513, %v3414
        %v4546 = vadd.f32 %v4514, %v3414
        %v4547 = vadd.f32 %v4515, %v3414
        %v4548 = vadd.f32 %v4516, %v3414
        %v4549 = vadd.f32 %v4517, %v3414
        %v4550 = vadd.f32 %v4518, %v3414
        %v4551 = vadd.f32 %v4519, %v3414
        %v4552 = vadd.f32 %v4520, %v3414
        %v4553 = vadd.f32 %v4521, %v3414
        %v4554 = vadd.f32 %v4522, %v3414
        %v4555 = vadd.f32 %v4523, %v3414
        %v4556 = vadd.f32 %v4524, %v3414
        %v4557 = vadd.f32 %v4525, %v3414
        %v4558 = vadd.f32 %v4526, %v3414
        %v4559 = vadd.f32 %v4527, %v3414
        %v4560 = vadd.f32 %v4528, %v3414
        %v4561 = vadd.f32 %v4529, %v3414
        %v4562 = vadd.f32 %v4530, %v3414
        %v4563 = vadd.f32 %v4531, %v3414
        %v4564 = vadd.f32 %v4532, %v3414
        %v4565 = vadd.f32 %v4533, %v3414
        %v4566 = vadd.f32 %v4534, %v3414
        %v4567 = vadd.f32 %v4535, %v3414
        %v4568 = vadd.f32 %v4536, %v3414
        %v4569 = vadd.f32 %v4537, %v3414
        %v4570 = vadd.f32 %v4538, %v3414
        %v4571 = vadd.f32 %v4539, %v3414
        %v4572 = vpack.c.bf16 %v4541, %v4540
        %v4573 = vpack.c.bf16 %v4543, %v4542
        %v4574 = vpack.c.bf16 %v4545, %v4544
        %v4575 = vpack.c.bf16 %v4547, %v4546
        %v4576 = vpack.c.bf16 %v4549, %v4548
        %v4577 = vpack.c.bf16 %v4551, %v4550
        %v4578 = vpack.c.bf16 %v4553, %v4552
        %v4579 = vpack.c.bf16 %v4555, %v4554
        %v4580 = vpack.c.bf16 %v4557, %v4556
        %v4581 = vpack.c.bf16 %v4559, %v4558
        %v4582 = vpack.c.bf16 %v4561, %v4560
        %v4583 = vpack.c.bf16 %v4563, %v4562
        %v4584 = vpack.c.bf16 %v4565, %v4564
        %v4585 = vpack.c.bf16 %v4567, %v4566
        %v4586 = vpack.c.bf16 %v4569, %v4568
        %v4587 = vpack.c.bf16 %v4571, %v4570
        %v4589 = vlaneseq
        %v4590 = vshrl.u32 %v4589, 7
        %v4591 = vsub.s32 0, %v4590
        %v4592 = vrot.slane %v3410, %v4591
        %v4593 = vlaneseq
        %v4594 = vshrl.u32 %v4593, 7
        %v4595 = vsub.s32 1, %v4594
        %v4596 = vrot.slane %v3410, %v4595
        %v4597 = vlaneseq
        %v4598 = vshrl.u32 %v4597, 7
        %v4599 = vsub.s32 2, %v4598
        %v4600 = vrot.slane %v3410, %v4599
        %v4601 = vlaneseq
        %v4602 = vshrl.u32 %v4601, 7
        %v4603 = vsub.s32 3, %v4602
        %v4604 = vrot.slane %v3410, %v4603
        %v4641 = vunpack.c.l.b16 %v3378
        %v4642 = vunpack.c.h.b16 %v3378
        %v4643 = vunpack.c.l.b16 %v3379
        %v4644 = vunpack.c.h.b16 %v3379
        %v4645 = vunpack.c.l.b16 %v3380
        %v4646 = vunpack.c.h.b16 %v3380
        %v4647 = vunpack.c.l.b16 %v3381
        %v4648 = vunpack.c.h.b16 %v3381
        %v4649 = vunpack.c.l.b16 %v3382
        %v4650 = vunpack.c.h.b16 %v3382
        %v4651 = vunpack.c.l.b16 %v3383
        %v4652 = vunpack.c.h.b16 %v3383
        %v4653 = vunpack.c.l.b16 %v3384
        %v4654 = vunpack.c.h.b16 %v3384
        %v4655 = vunpack.c.l.b16 %v3385
        %v4656 = vunpack.c.h.b16 %v3385
        %v4657 = vunpack.c.l.b16 %v3386
        %v4658 = vunpack.c.h.b16 %v3386
        %v4659 = vunpack.c.l.b16 %v3387
        %v4660 = vunpack.c.h.b16 %v3387
        %v4661 = vunpack.c.l.b16 %v3388
        %v4662 = vunpack.c.h.b16 %v3388
        %v4663 = vunpack.c.l.b16 %v3389
        %v4664 = vunpack.c.h.b16 %v3389
        %v4665 = vunpack.c.l.b16 %v3390
        %v4666 = vunpack.c.h.b16 %v3390
        %v4667 = vunpack.c.l.b16 %v3391
        %v4668 = vunpack.c.h.b16 %v3391
        %v4669 = vunpack.c.l.b16 %v3392
        %v4670 = vunpack.c.h.b16 %v3392
        %v4671 = vunpack.c.l.b16 %v3393
        %v4672 = vunpack.c.h.b16 %v3393
        %v4673 = vunpack.c.l.b16 %v3394
        %v4674 = vunpack.c.h.b16 %v3394
        %v4675 = vunpack.c.l.b16 %v3395
        %v4676 = vunpack.c.h.b16 %v3395
        %v4677 = vunpack.c.l.b16 %v3396
        %v4678 = vunpack.c.h.b16 %v3396
        %v4679 = vunpack.c.l.b16 %v3397
        %v4680 = vunpack.c.h.b16 %v3397
        %v4681 = vunpack.c.l.b16 %v3398
        %v4682 = vunpack.c.h.b16 %v3398
        %v4683 = vunpack.c.l.b16 %v3399
        %v4684 = vunpack.c.h.b16 %v3399
        %v4685 = vunpack.c.l.b16 %v3400
        %v4686 = vunpack.c.h.b16 %v3400
        %v4687 = vunpack.c.l.b16 %v3401
        %v4688 = vunpack.c.h.b16 %v3401
        %v4689 = vunpack.c.l.b16 %v3402
        %v4690 = vunpack.c.h.b16 %v3402
        %v4691 = vunpack.c.l.b16 %v3403
        %v4692 = vunpack.c.h.b16 %v3403
        %v4693 = vunpack.c.l.b16 %v3404
        %v4694 = vunpack.c.h.b16 %v3404
        %v4695 = vunpack.c.l.b16 %v3405
        %v4696 = vunpack.c.h.b16 %v3405
        %v4697 = vunpack.c.l.b16 %v3406
        %v4698 = vunpack.c.h.b16 %v3406
        %v4699 = vunpack.c.l.b16 %v3407
        %v4700 = vunpack.c.h.b16 %v3407
        %v4701 = vunpack.c.l.b16 %v3408
        %v4702 = vunpack.c.h.b16 %v3408
        %v4703 = vunpack.c.l.b16 %v3409
        %v4704 = vunpack.c.h.b16 %v3409
        %v4705 = vpack.c.b16 %v4645, %v4641
        %v4706 = vpack.c.b16 %v4646, %v4642
        %v4707 = vpack.c.b16 %v4647, %v4643
        %v4708 = vpack.c.b16 %v4648, %v4644
        %v4709 = vpack.c.b16 %v4653, %v4649
        %v4710 = vpack.c.b16 %v4654, %v4650
        %v4711 = vpack.c.b16 %v4655, %v4651
        %v4712 = vpack.c.b16 %v4656, %v4652
        %v4713 = vpack.c.b16 %v4661, %v4657
        %v4714 = vpack.c.b16 %v4662, %v4658
        %v4715 = vpack.c.b16 %v4663, %v4659
        %v4716 = vpack.c.b16 %v4664, %v4660
        %v4717 = vpack.c.b16 %v4669, %v4665
        %v4718 = vpack.c.b16 %v4670, %v4666
        %v4719 = vpack.c.b16 %v4671, %v4667
        %v4720 = vpack.c.b16 %v4672, %v4668
        %v4721 = vpack.c.b16 %v4677, %v4673
        %v4722 = vpack.c.b16 %v4678, %v4674
        %v4723 = vpack.c.b16 %v4679, %v4675
        %v4724 = vpack.c.b16 %v4680, %v4676
        %v4725 = vpack.c.b16 %v4685, %v4681
        %v4726 = vpack.c.b16 %v4686, %v4682
        %v4727 = vpack.c.b16 %v4687, %v4683
        %v4728 = vpack.c.b16 %v4688, %v4684
        %v4729 = vpack.c.b16 %v4693, %v4689
        %v4730 = vpack.c.b16 %v4694, %v4690
        %v4731 = vpack.c.b16 %v4695, %v4691
        %v4732 = vpack.c.b16 %v4696, %v4692
        %v4733 = vpack.c.b16 %v4701, %v4697
        %v4734 = vpack.c.b16 %v4702, %v4698
        %v4735 = vpack.c.b16 %v4703, %v4699
        %v4736 = vpack.c.b16 %v4704, %v4700
        %4769 = vmatprep.subr.bf16.mxu0 %v4706
        %4770 = vmatpush1.bf16.msra.mxu0 %v4705
        %4771 = vmatprep.subr.bf16.mxu0 %v4710
        %4772 = vmatpush1.bf16.msra.mxu0 %v4709
        %4773 = vmatprep.subr.bf16.mxu0 %v4714
        %4774 = vmatpush1.bf16.msra.mxu0 %v4713
        %4775 = vmatprep.subr.bf16.mxu0 %v4718
        %4776 = vmatpush1.bf16.msra.mxu0 %v4717
        %4777 = vmatprep.subr.bf16.mxu0 %v4722
        %4778 = vmatpush1.bf16.msra.mxu0 %v4721
        %4779 = vmatprep.subr.bf16.mxu0 %v4726
        %4780 = vmatpush1.bf16.msra.mxu0 %v4725
        %4781 = vmatprep.subr.bf16.mxu0 %v4730
        %4782 = vmatpush1.bf16.msra.mxu0 %v4729
        %4783 = vmatprep.subr.bf16.mxu0 %v4734
        %4784 = vmatpush1.bf16.msra.mxu0 %v4733
        %4785 = vmatprep.subr.bf16.mxu0 0
        %4786 = vmatpush1.bf16.msra.mxu0 0
        %4787 = vmatprep.subr.bf16.mxu0 0
        %4788 = vmatpush1.bf16.msra.mxu0 0
        %4789 = vmatprep.subr.bf16.mxu0 0
        %4790 = vmatpush1.bf16.msra.mxu0 0
        %4791 = vmatprep.subr.bf16.mxu0 0
        %4792 = vmatpush1.bf16.msra.mxu0 0
        %4793 = vmatprep.subr.bf16.mxu0 0
        %4794 = vmatpush1.bf16.msra.mxu0 0
        %4795 = vmatprep.subr.bf16.mxu0 0
        %4796 = vmatpush1.bf16.msra.mxu0 0
        %4797 = vmatprep.subr.bf16.mxu0 0
        %4798 = vmatpush1.bf16.msra.mxu0 0
        %4799 = vmatprep.subr.bf16.mxu0 0
        %4800 = vmatpush1.bf16.msra.mxu0 0
        %4801 = vmatprep.mubr.bf16.mxu0 0
        %4802 = vmatmul.mubr.bf16.gmra.mrb[0].mxu0 %v4572
        %v4803 = vpop.f32.mrb[0].mxu0
        %v4804 = vadd.f32 %v4592, %v4803
        %v4805 = vpop.f32.mrb[0].mxu0
        %v4806 = vadd.f32 %v4596, %v4805
        %v4807 = vpop.f32.mrb[0].mxu0
        %v4808 = vadd.f32 %v4592, %v4807
        %v4809 = vpop.f32.mrb[0].mxu0
        %v4810 = vadd.f32 %v4596, %v4809
        %4811 = vmatprep.mubr.bf16.mxu0 0
        %4812 = vmatmul.mubr.bf16.gmra.mrb[0].mxu0 %v4573
        %v4813 = vpop.f32.mrb[0].mxu0
        %v4814 = vadd.f32 %v4592, %v4813
        %v4815 = vpop.f32.mrb[0].mxu0
        %v4816 = vadd.f32 %v4596, %v4815
        %v4817 = vpop.f32.mrb[0].mxu0
        %v4818 = vadd.f32 %v4592, %v4817
        %v4819 = vpop.f32.mrb[0].mxu0
        %v4820 = vadd.f32 %v4596, %v4819
        %4821 = vmatprep.mubr.bf16.mxu0 0
        %4822 = vmatmul.mubr.bf16.gmra.mrb[0].mxu0 %v4574
        %v4823 = vpop.f32.mrb[0].mxu0
        %v4824 = vadd.f32 %v4592, %v4823
        %v4825 = vpop.f32.mrb[0].mxu0
        %v4826 = vadd.f32 %v4596, %v4825
        %v4827 = vpop.f32.mrb[0].mxu0
        %v4828 = vadd.f32 %v4592, %v4827
        %v4829 = vpop.f32.mrb[0].mxu0
        %v4830 = vadd.f32 %v4596, %v4829
        %4831 = vmatprep.mubr.bf16.mxu0 0
        %4832 = vmatmul.mubr.bf16.gmra.mrb[0].mxu0 %v4575
        %v4833 = vpop.f32.mrb[0].mxu0
        %v4834 = vadd.f32 %v4592, %v4833
        %v4835 = vpop.f32.mrb[0].mxu0
        %v4836 = vadd.f32 %v4596, %v4835
        %v4837 = vpop.f32.mrb[0].mxu0
        %v4838 = vadd.f32 %v4592, %v4837
        %v4839 = vpop.f32.mrb[0].mxu0
        %v4840 = vadd.f32 %v4596, %v4839
        %4841 = vmatprep.mubr.bf16.mxu0 0
        %4842 = vmatmul.mubr.bf16.gmra.mrb[0].mxu0 %v4576
        %v4843 = vpop.f32.mrb[0].mxu0
        %v4844 = vadd.f32 %v4592, %v4843
        %v4845 = vpop.f32.mrb[0].mxu0
        %v4846 = vadd.f32 %v4596, %v4845
        %v4847 = vpop.f32.mrb[0].mxu0
        %v4848 = vadd.f32 %v4592, %v4847
        %v4849 = vpop.f32.mrb[0].mxu0
        %v4850 = vadd.f32 %v4596, %v4849
        %4851 = vmatprep.mubr.bf16.mxu0 0
        %4852 = vmatmul.mubr.bf16.gmra.mrb[0].mxu0 %v4577
        %v4853 = vpop.f32.mrb[0].mxu0
        %v4854 = vadd.f32 %v4592, %v4853
        %v4855 = vpop.f32.mrb[0].mxu0
        %v4856 = vadd.f32 %v4596, %v4855
        %v4857 = vpop.f32.mrb[0].mxu0
        %v4858 = vadd.f32 %v4592, %v4857
        %v4859 = vpop.f32.mrb[0].mxu0
        %v4860 = vadd.f32 %v4596, %v4859
        %4861 = vmatprep.mubr.bf16.mxu0 0
        %4862 = vmatmul.mubr.bf16.gmra.mrb[0].mxu0 %v4578
        %v4863 = vpop.f32.mrb[0].mxu0
        %v4864 = vadd.f32 %v4592, %v4863
        %v4865 = vpop.f32.mrb[0].mxu0
        %v4866 = vadd.f32 %v4596, %v4865
        %v4867 = vpop.f32.mrb[0].mxu0
        %v4868 = vadd.f32 %v4592, %v4867
        %v4869 = vpop.f32.mrb[0].mxu0
        %v4870 = vadd.f32 %v4596, %v4869
        %4871 = vmatprep.mubr.bf16.mxu0 0
        %4872 = vmatmul.mubr.bf16.gmra.mrb[0].mxu0 %v4579
        %v4873 = vpop.f32.mrb[0].mxu0
        %v4874 = vadd.f32 %v4592, %v4873
        %v4875 = vpop.f32.mrb[0].mxu0
        %v4876 = vadd.f32 %v4596, %v4875
        %v4877 = vpop.f32.mrb[0].mxu0
        %v4878 = vadd.f32 %v4592, %v4877
        %v4879 = vpop.f32.mrb[0].mxu0
        %v4880 = vadd.f32 %v4596, %v4879
        %4881 = vmatprep.mubr.bf16.mxu0 0
        %4882 = vmatmul.mubr.bf16.gmra.mrb[0].mxu0 %v4580
        %v4883 = vpop.f32.mrb[0].mxu0
        %v4884 = vadd.f32 %v4592, %v4883
        %v4885 = vpop.f32.mrb[0].mxu0
        %v4886 = vadd.f32 %v4596, %v4885
        %v4887 = vpop.f32.mrb[0].mxu0
        %v4888 = vadd.f32 %v4592, %v4887
        %v4889 = vpop.f32.mrb[0].mxu0
        %v4890 = vadd.f32 %v4596, %v4889
        %4891 = vmatprep.mubr.bf16.mxu0 0
        %4892 = vmatmul.mubr.bf16.gmra.mrb[0].mxu0 %v4581
        %v4893 = vpop.f32.mrb[0].mxu0
        %v4894 = vadd.f32 %v4592, %v4893
        %v4895 = vpop.f32.mrb[0].mxu0
        %v4896 = vadd.f32 %v4596, %v4895
        %v4897 = vpop.f32.mrb[0].mxu0
        %v4898 = vadd.f32 %v4592, %v4897
        %v4899 = vpop.f32.mrb[0].mxu0
        %v4900 = vadd.f32 %v4596, %v4899
        %4901 = vmatprep.mubr.bf16.mxu0 0
        %4902 = vmatmul.mubr.bf16.gmra.mrb[0].mxu0 %v4582
        %v4903 = vpop.f32.mrb[0].mxu0
        %v4904 = vadd.f32 %v4592, %v4903
        %v4905 = vpop.f32.mrb[0].mxu0
        %v4906 = vadd.f32 %v4596, %v4905
        %v4907 = vpop.f32.mrb[0].mxu0
        %v4908 = vadd.f32 %v4592, %v4907
        %v4909 = vpop.f32.mrb[0].mxu0
        %v4910 = vadd.f32 %v4596, %v4909
        %4911 = vmatprep.mubr.bf16.mxu0 0
        %4912 = vmatmul.mubr.bf16.gmra.mrb[0].mxu0 %v4583
        %v4913 = vpop.f32.mrb[0].mxu0
        %v4914 = vadd.f32 %v4592, %v4913
        %v4915 = vpop.f32.mrb[0].mxu0
        %v4916 = vadd.f32 %v4596, %v4915
        %v4917 = vpop.f32.mrb[0].mxu0
        %v4918 = vadd.f32 %v4592, %v4917
        %v4919 = vpop.f32.mrb[0].mxu0
        %v4920 = vadd.f32 %v4596, %v4919
        %4921 = vmatprep.mubr.bf16.mxu0 0
        %4922 = vmatmul.mubr.bf16.gmra.mrb[0].mxu0 %v4584
        %v4923 = vpop.f32.mrb[0].mxu0
        %v4924 = vadd.f32 %v4592, %v4923
        %v4925 = vpop.f32.mrb[0].mxu0
        %v4926 = vadd.f32 %v4596, %v4925
        %v4927 = vpop.f32.mrb[0].mxu0
        %v4928 = vadd.f32 %v4592, %v4927
        %v4929 = vpop.f32.mrb[0].mxu0
        %v4930 = vadd.f32 %v4596, %v4929
        %4931 = vmatprep.mubr.bf16.mxu0 0
        %4932 = vmatmul.mubr.bf16.gmra.mrb[0].mxu0 %v4585
        %v4933 = vpop.f32.mrb[0].mxu0
        %v4934 = vadd.f32 %v4592, %v4933
        %v4935 = vpop.f32.mrb[0].mxu0
        %v4936 = vadd.f32 %v4596, %v4935
        %v4937 = vpop.f32.mrb[0].mxu0
        %v4938 = vadd.f32 %v4592, %v4937
        %v4939 = vpop.f32.mrb[0].mxu0
        %v4940 = vadd.f32 %v4596, %v4939
        %4941 = vmatprep.mubr.bf16.mxu0 0
        %4942 = vmatmul.mubr.bf16.gmra.mrb[0].mxu0 %v4586
        %v4943 = vpop.f32.mrb[0].mxu0
        %v4944 = vadd.f32 %v4592, %v4943
        %v4945 = vpop.f32.mrb[0].mxu0
        %v4946 = vadd.f32 %v4596, %v4945
        %v4947 = vpop.f32.mrb[0].mxu0
        %v4948 = vadd.f32 %v4592, %v4947
        %v4949 = vpop.f32.mrb[0].mxu0
        %v4950 = vadd.f32 %v4596, %v4949
        %4951 = vmatprep.mubr.bf16.mxu0 0
        %4952 = vmatmul.mubr.bf16.gmra.mrb[0].mxu0 %v4587
        %v4953 = vpop.f32.mrb[0].mxu0
        %v4954 = vadd.f32 %v4592, %v4953
        %v4955 = vpop.f32.mrb[0].mxu0
        %v4956 = vadd.f32 %v4596, %v4955
        %v4957 = vpop.f32.mrb[0].mxu0
        %v4958 = vadd.f32 %v4592, %v4957
        %v4959 = vpop.f32.mrb[0].mxu0
        %v4960 = vadd.f32 %v4596, %v4959
        %4961 = vdwg.mxu0
        %4962 = vmatprep.subr.bf16.mxu0 %v4708
        %4963 = vmatpush1.bf16.msra.mxu0 %v4707
        %4964 = vmatprep.subr.bf16.mxu0 %v4712
        %4965 = vmatpush1.bf16.msra.mxu0 %v4711
        %4966 = vmatprep.subr.bf16.mxu0 %v4716
        %4967 = vmatpush1.bf16.msra.mxu0 %v4715
        %4968 = vmatprep.subr.bf16.mxu0 %v4720
        %4969 = vmatpush1.bf16.msra.mxu0 %v4719
        %4970 = vmatprep.subr.bf16.mxu0 %v4724
        %4971 = vmatpush1.bf16.msra.mxu0 %v4723
        %4972 = vmatprep.subr.bf16.mxu0 %v4728
        %4973 = vmatpush1.bf16.msra.mxu0 %v4727
        %4974 = vmatprep.subr.bf16.mxu0 %v4732
        %4975 = vmatpush1.bf16.msra.mxu0 %v4731
        %4976 = vmatprep.subr.bf16.mxu0 %v4736
        %4977 = vmatpush1.bf16.msra.mxu0 %v4735
        %4978 = vmatprep.subr.bf16.mxu0 0
        %4979 = vmatpush1.bf16.msra.mxu0 0
        %4980 = vmatprep.subr.bf16.mxu0 0
        %4981 = vmatpush1.bf16.msra.mxu0 0
        %4982 = vmatprep.subr.bf16.mxu0 0
        %4983 = vmatpush1.bf16.msra.mxu0 0
        %4984 = vmatprep.subr.bf16.mxu0 0
        %4985 = vmatpush1.bf16.msra.mxu0 0
        %4986 = vmatprep.subr.bf16.mxu0 0
        %4987 = vmatpush1.bf16.msra.mxu0 0
        %4988 = vmatprep.subr.bf16.mxu0 0
        %4989 = vmatpush1.bf16.msra.mxu0 0
        %4990 = vmatprep.subr.bf16.mxu0 0
        %4991 = vmatpush1.bf16.msra.mxu0 0
        %4992 = vmatprep.subr.bf16.mxu0 0
        %4993 = vmatpush1.bf16.msra.mxu0 0
        %4994 = vmatprep.mubr.bf16.mxu0 0
        %4995 = vmatmul.mubr.bf16.gmra.mrb[0].mxu0 %v4572
        %v4996 = vpop.f32.mrb[0].mxu0
        %v4997 = vadd.f32 %v4600, %v4996
        %v4998 = vpop.f32.mrb[0].mxu0
        %v4999 = vadd.f32 %v4604, %v4998
        %v5000 = vpop.f32.mrb[0].mxu0
        %v5001 = vadd.f32 %v4600, %v5000
        %v5002 = vpop.f32.mrb[0].mxu0
        %v5003 = vadd.f32 %v4604, %v5002
        %5004 = vmatprep.mubr.bf16.mxu0 0
        %5005 = vmatmul.mubr.bf16.gmra.mrb[0].mxu0 %v4573
        %v5006 = vpop.f32.mrb[0].mxu0
        %v5007 = vadd.f32 %v4600, %v5006
        %v5008 = vpop.f32.mrb[0].mxu0
        %v5009 = vadd.f32 %v4604, %v5008
        %v5010 = vpop.f32.mrb[0].mxu0
        %v5011 = vadd.f32 %v4600, %v5010
        %v5012 = vpop.f32.mrb[0].mxu0
        %v5013 = vadd.f32 %v4604, %v5012
        %5014 = vmatprep.mubr.bf16.mxu0 0
        %5015 = vmatmul.mubr.bf16.gmra.mrb[0].mxu0 %v4574
        %v5016 = vpop.f32.mrb[0].mxu0
        %v5017 = vadd.f32 %v4600, %v5016
        %v5018 = vpop.f32.mrb[0].mxu0
        %v5019 = vadd.f32 %v4604, %v5018
        %v5020 = vpop.f32.mrb[0].mxu0
        %v5021 = vadd.f32 %v4600, %v5020
        %v5022 = vpop.f32.mrb[0].mxu0
        %v5023 = vadd.f32 %v4604, %v5022
        %5024 = vmatprep.mubr.bf16.mxu0 0
        %5025 = vmatmul.mubr.bf16.gmra.mrb[0].mxu0 %v4575
        %v5026 = vpop.f32.mrb[0].mxu0
        %v5027 = vadd.f32 %v4600, %v5026
        %v5028 = vpop.f32.mrb[0].mxu0
        %v5029 = vadd.f32 %v4604, %v5028
        %v5030 = vpop.f32.mrb[0].mxu0
        %v5031 = vadd.f32 %v4600, %v5030
        %v5032 = vpop.f32.mrb[0].mxu0
        %v5033 = vadd.f32 %v4604, %v5032
        %5034 = vmatprep.mubr.bf16.mxu0 0
        %5035 = vmatmul.mubr.bf16.gmra.mrb[0].mxu0 %v4576
        %v5036 = vpop.f32.mrb[0].mxu0
        %v5037 = vadd.f32 %v4600, %v5036
        %v5038 = vpop.f32.mrb[0].mxu0
        %v5039 = vadd.f32 %v4604, %v5038
        %v5040 = vpop.f32.mrb[0].mxu0
        %v5041 = vadd.f32 %v4600, %v5040
        %v5042 = vpop.f32.mrb[0].mxu0
        %v5043 = vadd.f32 %v4604, %v5042
        %5044 = vmatprep.mubr.bf16.mxu0 0
        %5045 = vmatmul.mubr.bf16.gmra.mrb[0].mxu0 %v4577
        %v5046 = vpop.f32.mrb[0].mxu0
        %v5047 = vadd.f32 %v4600, %v5046
        %v5048 = vpop.f32.mrb[0].mxu0
        %v5049 = vadd.f32 %v4604, %v5048
        %v5050 = vpop.f32.mrb[0].mxu0
        %v5051 = vadd.f32 %v4600, %v5050
        %v5052 = vpop.f32.mrb[0].mxu0
        %v5053 = vadd.f32 %v4604, %v5052
        %5054 = vmatprep.mubr.bf16.mxu0 0
        %5055 = vmatmul.mubr.bf16.gmra.mrb[0].mxu0 %v4578
        %v5056 = vpop.f32.mrb[0].mxu0
        %v5057 = vadd.f32 %v4600, %v5056
        %v5058 = vpop.f32.mrb[0].mxu0
        %v5059 = vadd.f32 %v4604, %v5058
        %v5060 = vpop.f32.mrb[0].mxu0
        %v5061 = vadd.f32 %v4600, %v5060
        %v5062 = vpop.f32.mrb[0].mxu0
        %v5063 = vadd.f32 %v4604, %v5062
        %5064 = vmatprep.mubr.bf16.mxu0 0
        %5065 = vmatmul.mubr.bf16.gmra.mrb[0].mxu0 %v4579
        %v5066 = vpop.f32.mrb[0].mxu0
        %v5067 = vadd.f32 %v4600, %v5066
        %v5068 = vpop.f32.mrb[0].mxu0
        %v5069 = vadd.f32 %v4604, %v5068
        %v5070 = vpop.f32.mrb[0].mxu0
        %v5071 = vadd.f32 %v4600, %v5070
        %v5072 = vpop.f32.mrb[0].mxu0
        %v5073 = vadd.f32 %v4604, %v5072
        %5074 = vmatprep.mubr.bf16.mxu0 0
        %5075 = vmatmul.mubr.bf16.gmra.mrb[0].mxu0 %v4580
        %v5076 = vpop.f32.mrb[0].mxu0
        %v5077 = vadd.f32 %v4600, %v5076
        %v5078 = vpop.f32.mrb[0].mxu0
        %v5079 = vadd.f32 %v4604, %v5078
        %v5080 = vpop.f32.mrb[0].mxu0
        %v5081 = vadd.f32 %v4600, %v5080
        %v5082 = vpop.f32.mrb[0].mxu0
        %v5083 = vadd.f32 %v4604, %v5082
        %5084 = vmatprep.mubr.bf16.mxu0 0
        %5085 = vmatmul.mubr.bf16.gmra.mrb[0].mxu0 %v4581
        %v5086 = vpop.f32.mrb[0].mxu0
        %v5087 = vadd.f32 %v4600, %v5086
        %v5088 = vpop.f32.mrb[0].mxu0
        %v5089 = vadd.f32 %v4604, %v5088
        %v5090 = vpop.f32.mrb[0].mxu0
        %v5091 = vadd.f32 %v4600, %v5090
        %v5092 = vpop.f32.mrb[0].mxu0
        %v5093 = vadd.f32 %v4604, %v5092
        %5094 = vmatprep.mubr.bf16.mxu0 0
        %5095 = vmatmul.mubr.bf16.gmra.mrb[0].mxu0 %v4582
        %v5096 = vpop.f32.mrb[0].mxu0
        %v5097 = vadd.f32 %v4600, %v5096
        %v5098 = vpop.f32.mrb[0].mxu0
        %v5099 = vadd.f32 %v4604, %v5098
        %v5100 = vpop.f32.mrb[0].mxu0
        %v5101 = vadd.f32 %v4600, %v5100
        %v5102 = vpop.f32.mrb[0].mxu0
        %v5103 = vadd.f32 %v4604, %v5102
        %5104 = vmatprep.mubr.bf16.mxu0 0
        %5105 = vmatmul.mubr.bf16.gmra.mrb[0].mxu0 %v4583
        %v5106 = vpop.f32.mrb[0].mxu0
        %v5107 = vadd.f32 %v4600, %v5106
        %v5108 = vpop.f32.mrb[0].mxu0
        %v5109 = vadd.f32 %v4604, %v5108
        %v5110 = vpop.f32.mrb[0].mxu0
        %v5111 = vadd.f32 %v4600, %v5110
        %v5112 = vpop.f32.mrb[0].mxu0
        %v5113 = vadd.f32 %v4604, %v5112
        %5114 = vmatprep.mubr.bf16.mxu0 0
        %5115 = vmatmul.mubr.bf16.gmra.mrb[0].mxu0 %v4584
        %v5116 = vpop.f32.mrb[0].mxu0
        %v5117 = vadd.f32 %v4600, %v5116
        %v5118 = vpop.f32.mrb[0].mxu0
        %v5119 = vadd.f32 %v4604, %v5118
        %v5120 = vpop.f32.mrb[0].mxu0
        %v5121 = vadd.f32 %v4600, %v5120
        %v5122 = vpop.f32.mrb[0].mxu0
        %v5123 = vadd.f32 %v4604, %v5122
        %5124 = vmatprep.mubr.bf16.mxu0 0
        %5125 = vmatmul.mubr.bf16.gmra.mrb[0].mxu0 %v4585
        %v5126 = vpop.f32.mrb[0].mxu0
        %v5127 = vadd.f32 %v4600, %v5126
        %v5128 = vpop.f32.mrb[0].mxu0
        %v5129 = vadd.f32 %v4604, %v5128
        %v5130 = vpop.f32.mrb[0].mxu0
        %v5131 = vadd.f32 %v4600, %v5130
        %v5132 = vpop.f32.mrb[0].mxu0
        %v5133 = vadd.f32 %v4604, %v5132
        %5134 = vmatprep.mubr.bf16.mxu0 0
        %5135 = vmatmul.mubr.bf16.gmra.mrb[0].mxu0 %v4586
        %v5136 = vpop.f32.mrb[0].mxu0
        %v5137 = vadd.f32 %v4600, %v5136
        %v5138 = vpop.f32.mrb[0].mxu0
        %v5139 = vadd.f32 %v4604, %v5138
        %v5140 = vpop.f32.mrb[0].mxu0
        %v5141 = vadd.f32 %v4600, %v5140
        %v5142 = vpop.f32.mrb[0].mxu0
        %v5143 = vadd.f32 %v4604, %v5142
        %5144 = vmatprep.mubr.bf16.mxu0 0
        %5145 = vmatmul.mubr.bf16.gmra.mrb[0].mxu0 %v4587
        %v5146 = vpop.f32.mrb[0].mxu0
        %v5147 = vadd.f32 %v4600, %v5146
        %v5148 = vpop.f32.mrb[0].mxu0
        %v5149 = vadd.f32 %v4604, %v5148
        %v5150 = vpop.f32.mrb[0].mxu0
        %v5151 = vadd.f32 %v4600, %v5150
        %v5152 = vpop.f32.mrb[0].mxu0
        %v5153 = vadd.f32 %v4604, %v5152
        %5154 = vdwg.mxu0
        %v5155 = vpack.c.bf16 %v4808, %v4804
        %v5156 = vpack.c.bf16 %v4810, %v4806
        %v5157 = vpack.c.bf16 %v5001, %v4997
        %v5158 = vpack.c.bf16 %v5003, %v4999
        %v5159 = vpack.c.bf16 %v4818, %v4814
        %v5160 = vpack.c.bf16 %v4820, %v4816
        %v5161 = vpack.c.bf16 %v5011, %v5007
        %v5162 = vpack.c.bf16 %v5013, %v5009
        %v5163 = vpack.c.bf16 %v4828, %v4824
        %v5164 = vpack.c.bf16 %v4830, %v4826
        %v5165 = vpack.c.bf16 %v5021, %v5017
        %v5166 = vpack.c.bf16 %v5023, %v5019
        %v5167 = vpack.c.bf16 %v4838, %v4834
        %v5168 = vpack.c.bf16 %v4840, %v4836
        %v5169 = vpack.c.bf16 %v5031, %v5027
        %v5170 = vpack.c.bf16 %v5033, %v5029
        %v5171 = vpack.c.bf16 %v4848, %v4844
        %v5172 = vpack.c.bf16 %v4850, %v4846
        %v5173 = vpack.c.bf16 %v5041, %v5037
        %v5174 = vpack.c.bf16 %v5043, %v5039
        %v5175 = vpack.c.bf16 %v4858, %v4854
        %v5176 = vpack.c.bf16 %v4860, %v4856
        %v5177 = vpack.c.bf16 %v5051, %v5047
        %v5178 = vpack.c.bf16 %v5053, %v5049
        %v5179 = vpack.c.bf16 %v4868, %v4864
        %v5180 = vpack.c.bf16 %v4870, %v4866
        %v5181 = vpack.c.bf16 %v5061, %v5057
        %v5182 = vpack.c.bf16 %v5063, %v5059
        %v5183 = vpack.c.bf16 %v4878, %v4874
        %v5184 = vpack.c.bf16 %v4880, %v4876
        %v5185 = vpack.c.bf16 %v5071, %v5067
        %v5186 = vpack.c.bf16 %v5073, %v5069
        %v5187 = vpack.c.bf16 %v4888, %v4884
        %v5188 = vpack.c.bf16 %v4890, %v4886
        %v5189 = vpack.c.bf16 %v5081, %v5077
        %v5190 = vpack.c.bf16 %v5083, %v5079
        %v5191 = vpack.c.bf16 %v4898, %v4894
        %v5192 = vpack.c.bf16 %v4900, %v4896
        %v5193 = vpack.c.bf16 %v5091, %v5087
        %v5194 = vpack.c.bf16 %v5093, %v5089
        %v5195 = vpack.c.bf16 %v4908, %v4904
        %v5196 = vpack.c.bf16 %v4910, %v4906
        %v5197 = vpack.c.bf16 %v5101, %v5097
        %v5198 = vpack.c.bf16 %v5103, %v5099
        %v5199 = vpack.c.bf16 %v4918, %v4914
        %v5200 = vpack.c.bf16 %v4920, %v4916
        %v5201 = vpack.c.bf16 %v5111, %v5107
        %v5202 = vpack.c.bf16 %v5113, %v5109
        %v5203 = vpack.c.bf16 %v4928, %v4924
        %v5204 = vpack.c.bf16 %v4930, %v4926
        %v5205 = vpack.c.bf16 %v5121, %v5117
        %v5206 = vpack.c.bf16 %v5123, %v5119
        %v5207 = vpack.c.bf16 %v4938, %v4934
        %v5208 = vpack.c.bf16 %v4940, %v4936
        %v5209 = vpack.c.bf16 %v5131, %v5127
        %v5210 = vpack.c.bf16 %v5133, %v5129
        %v5211 = vpack.c.bf16 %v4948, %v4944
        %v5212 = vpack.c.bf16 %v4950, %v4946
        %v5213 = vpack.c.bf16 %v5141, %v5137
        %v5214 = vpack.c.bf16 %v5143, %v5139
        %v5215 = vpack.c.bf16 %v4958, %v4954
        %v5216 = vpack.c.bf16 %v4960, %v4956
        %v5217 = vpack.c.bf16 %v5151, %v5147
        %v5218 = vpack.c.bf16 %v5153, %v5149
        %v5283 = vunpack.c.l.b16 %v5155
        %v5284 = vunpack.c.l.b16 %v5156
        %v5285 = vunpack.c.l.b16 %v5157
        %v5286 = vunpack.c.l.b16 %v5158
        %v5287 = vunpack.c.h.b16 %v5155
        %v5288 = vunpack.c.h.b16 %v5156
        %v5289 = vunpack.c.h.b16 %v5157
        %v5290 = vunpack.c.h.b16 %v5158
        %v5291 = vunpack.c.l.b16 %v5159
        %v5292 = vunpack.c.l.b16 %v5160
        %v5293 = vunpack.c.l.b16 %v5161
        %v5294 = vunpack.c.l.b16 %v5162
        %v5295 = vunpack.c.h.b16 %v5159
        %v5296 = vunpack.c.h.b16 %v5160
        %v5297 = vunpack.c.h.b16 %v5161
        %v5298 = vunpack.c.h.b16 %v5162
        %v5299 = vunpack.c.l.b16 %v5163
        %v5300 = vunpack.c.l.b16 %v5164
        %v5301 = vunpack.c.l.b16 %v5165
        %v5302 = vunpack.c.l.b16 %v5166
        %v5303 = vunpack.c.h.b16 %v5163
        %v5304 = vunpack.c.h.b16 %v5164
        %v5305 = vunpack.c.h.b16 %v5165
        %v5306 = vunpack.c.h.b16 %v5166
        %v5307 = vunpack.c.l.b16 %v5167
        %v5308 = vunpack.c.l.b16 %v5168
        %v5309 = vunpack.c.l.b16 %v5169
        %v5310 = vunpack.c.l.b16 %v5170
        %v5311 = vunpack.c.h.b16 %v5167
        %v5312 = vunpack.c.h.b16 %v5168
        %v5313 = vunpack.c.h.b16 %v5169
        %v5314 = vunpack.c.h.b16 %v5170
        %v5315 = vunpack.c.l.b16 %v5171
        %v5316 = vunpack.c.l.b16 %v5172
        %v5317 = vunpack.c.l.b16 %v5173
        %v5318 = vunpack.c.l.b16 %v5174
        %v5319 = vunpack.c.h.b16 %v5171
        %v5320 = vunpack.c.h.b16 %v5172
        %v5321 = vunpack.c.h.b16 %v5173
        %v5322 = vunpack.c.h.b16 %v5174
        %v5323 = vunpack.c.l.b16 %v5175
        %v5324 = vunpack.c.l.b16 %v5176
        %v5325 = vunpack.c.l.b16 %v5177
        %v5326 = vunpack.c.l.b16 %v5178
        %v5327 = vunpack.c.h.b16 %v5175
        %v5328 = vunpack.c.h.b16 %v5176
        %v5329 = vunpack.c.h.b16 %v5177
        %v5330 = vunpack.c.h.b16 %v5178
        %v5331 = vunpack.c.l.b16 %v5179
        %v5332 = vunpack.c.l.b16 %v5180
        %v5333 = vunpack.c.l.b16 %v5181
        %v5334 = vunpack.c.l.b16 %v5182
        %v5335 = vunpack.c.h.b16 %v5179
        %v5336 = vunpack.c.h.b16 %v5180
        %v5337 = vunpack.c.h.b16 %v5181
        %v5338 = vunpack.c.h.b16 %v5182
        %v5339 = vunpack.c.l.b16 %v5183
        %v5340 = vunpack.c.l.b16 %v5184
        %v5341 = vunpack.c.l.b16 %v5185
        %v5342 = vunpack.c.l.b16 %v5186
        %v5343 = vunpack.c.h.b16 %v5183
        %v5344 = vunpack.c.h.b16 %v5184
        %v5345 = vunpack.c.h.b16 %v5185
        %v5346 = vunpack.c.h.b16 %v5186
        %v5347 = vunpack.c.l.b16 %v5187
        %v5348 = vunpack.c.l.b16 %v5188
        %v5349 = vunpack.c.l.b16 %v5189
        %v5350 = vunpack.c.l.b16 %v5190
        %v5351 = vunpack.c.h.b16 %v5187
        %v5352 = vunpack.c.h.b16 %v5188
        %v5353 = vunpack.c.h.b16 %v5189
        %v5354 = vunpack.c.h.b16 %v5190
        %v5355 = vunpack.c.l.b16 %v5191
        %v5356 = vunpack.c.l.b16 %v5192
        %v5357 = vunpack.c.l.b16 %v5193
        %v5358 = vunpack.c.l.b16 %v5194
        %v5359 = vunpack.c.h.b16 %v5191
        %v5360 = vunpack.c.h.b16 %v5192
        %v5361 = vunpack.c.h.b16 %v5193
        %v5362 = vunpack.c.h.b16 %v5194
        %v5363 = vunpack.c.l.b16 %v5195
        %v5364 = vunpack.c.l.b16 %v5196
        %v5365 = vunpack.c.l.b16 %v5197
        %v5366 = vunpack.c.l.b16 %v5198
        %v5367 = vunpack.c.h.b16 %v5195
        %v5368 = vunpack.c.h.b16 %v5196
        %v5369 = vunpack.c.h.b16 %v5197
        %v5370 = vunpack.c.h.b16 %v5198
        %v5371 = vunpack.c.l.b16 %v5199
        %v5372 = vunpack.c.l.b16 %v5200
        %v5373 = vunpack.c.l.b16 %v5201
        %v5374 = vunpack.c.l.b16 %v5202
        %v5375 = vunpack.c.h.b16 %v5199
        %v5376 = vunpack.c.h.b16 %v5200
        %v5377 = vunpack.c.h.b16 %v5201
        %v5378 = vunpack.c.h.b16 %v5202
        %v5379 = vunpack.c.l.b16 %v5203
        %v5380 = vunpack.c.l.b16 %v5204
        %v5381 = vunpack.c.l.b16 %v5205
        %v5382 = vunpack.c.l.b16 %v5206
        %v5383 = vunpack.c.h.b16 %v5203
        %v5384 = vunpack.c.h.b16 %v5204
        %v5385 = vunpack.c.h.b16 %v5205
        %v5386 = vunpack.c.h.b16 %v5206
        %v5387 = vunpack.c.l.b16 %v5207
        %v5388 = vunpack.c.l.b16 %v5208
        %v5389 = vunpack.c.l.b16 %v5209
        %v5390 = vunpack.c.l.b16 %v5210
        %v5391 = vunpack.c.h.b16 %v5207
        %v5392 = vunpack.c.h.b16 %v5208
        %v5393 = vunpack.c.h.b16 %v5209
        %v5394 = vunpack.c.h.b16 %v5210
        %v5395 = vunpack.c.l.b16 %v5211
        %v5396 = vunpack.c.l.b16 %v5212
        %v5397 = vunpack.c.l.b16 %v5213
        %v5398 = vunpack.c.l.b16 %v5214
        %v5399 = vunpack.c.h.b16 %v5211
        %v5400 = vunpack.c.h.b16 %v5212
        %v5401 = vunpack.c.h.b16 %v5213
        %v5402 = vunpack.c.h.b16 %v5214
        %v5403 = vunpack.c.l.b16 %v5215
        %v5404 = vunpack.c.l.b16 %v5216
        %v5405 = vunpack.c.l.b16 %v5217
        %v5406 = vunpack.c.l.b16 %v5218
        %v5407 = vunpack.c.h.b16 %v5215
        %v5408 = vunpack.c.h.b16 %v5216
        %v5409 = vunpack.c.h.b16 %v5217
        %v5410 = vunpack.c.h.b16 %v5218
        %v5411 = vpack.c.b16 %v5284, %v5283
        %v5412 = vpack.c.b16 %v5286, %v5285
        %v5413 = vpack.c.b16 %v5288, %v5287
        %v5414 = vpack.c.b16 %v5290, %v5289
        %v5415 = vpack.c.b16 %v5292, %v5291
        %v5416 = vpack.c.b16 %v5294, %v5293
        %v5417 = vpack.c.b16 %v5296, %v5295
        %v5418 = vpack.c.b16 %v5298, %v5297
        %v5419 = vpack.c.b16 %v5300, %v5299
        %v5420 = vpack.c.b16 %v5302, %v5301
        %v5421 = vpack.c.b16 %v5304, %v5303
        %v5422 = vpack.c.b16 %v5306, %v5305
        %v5423 = vpack.c.b16 %v5308, %v5307
        %v5424 = vpack.c.b16 %v5310, %v5309
        %v5425 = vpack.c.b16 %v5312, %v5311
        %v5426 = vpack.c.b16 %v5314, %v5313
        %v5427 = vpack.c.b16 %v5316, %v5315
        %v5428 = vpack.c.b16 %v5318, %v5317
        %v5429 = vpack.c.b16 %v5320, %v5319
        %v5430 = vpack.c.b16 %v5322, %v5321
        %v5431 = vpack.c.b16 %v5324, %v5323
        %v5432 = vpack.c.b16 %v5326, %v5325
        %v5433 = vpack.c.b16 %v5328, %v5327
        %v5434 = vpack.c.b16 %v5330, %v5329
        %v5435 = vpack.c.b16 %v5332, %v5331
        %v5436 = vpack.c.b16 %v5334, %v5333
        %v5437 = vpack.c.b16 %v5336, %v5335
        %v5438 = vpack.c.b16 %v5338, %v5337
        %v5439 = vpack.c.b16 %v5340, %v5339
        %v5440 = vpack.c.b16 %v5342, %v5341
        %v5441 = vpack.c.b16 %v5344, %v5343
        %v5442 = vpack.c.b16 %v5346, %v5345
        %v5443 = vpack.c.b16 %v5348, %v5347
        %v5444 = vpack.c.b16 %v5350, %v5349
        %v5445 = vpack.c.b16 %v5352, %v5351
        %v5446 = vpack.c.b16 %v5354, %v5353
        %v5447 = vpack.c.b16 %v5356, %v5355
        %v5448 = vpack.c.b16 %v5358, %v5357
        %v5449 = vpack.c.b16 %v5360, %v5359
        %v5450 = vpack.c.b16 %v5362, %v5361
        %v5451 = vpack.c.b16 %v5364, %v5363
        %v5452 = vpack.c.b16 %v5366, %v5365
        %v5453 = vpack.c.b16 %v5368, %v5367
        %v5454 = vpack.c.b16 %v5370, %v5369
        %v5455 = vpack.c.b16 %v5372, %v5371
        %v5456 = vpack.c.b16 %v5374, %v5373
        %v5457 = vpack.c.b16 %v5376, %v5375
        %v5458 = vpack.c.b16 %v5378, %v5377
        %v5459 = vpack.c.b16 %v5380, %v5379
        %v5460 = vpack.c.b16 %v5382, %v5381
        %v5461 = vpack.c.b16 %v5384, %v5383
        %v5462 = vpack.c.b16 %v5386, %v5385
        %v5463 = vpack.c.b16 %v5388, %v5387
        %v5464 = vpack.c.b16 %v5390, %v5389
        %v5465 = vpack.c.b16 %v5392, %v5391
        %v5466 = vpack.c.b16 %v5394, %v5393
        %v5467 = vpack.c.b16 %v5396, %v5395
        %v5468 = vpack.c.b16 %v5398, %v5397
        %v5469 = vpack.c.b16 %v5400, %v5399
        %v5470 = vpack.c.b16 %v5402, %v5401
        %v5471 = vpack.c.b16 %v5404, %v5403
        %v5472 = vpack.c.b16 %v5406, %v5405
        %v5473 = vpack.c.b16 %v5408, %v5407
        %v5474 = vpack.c.b16 %v5410, %v5409
        %5539 = vst [vmem:[%s286] sm:$0xff] %v5411
        %5540 = vst [vmem:[%s286 + $0x8] sm:$0xff] %v5412
        %5541 = vst [vmem:[%s286 + $0x10] sm:$0xff] %v5413
        %5542 = vst [vmem:[%s286 + $0x18] sm:$0xff] %v5414
        %5543 = vst [vmem:[%s286 + $0x20] sm:$0xff] %v5415
        %5544 = vst [vmem:[%s286 + $0x28] sm:$0xff] %v5416
        %5545 = vst [vmem:[%s286 + $0x30] sm:$0xff] %v5417
        %5546 = vst [vmem:[%s286 + $0x38] sm:$0xff] %v5418
        %5547 = vst [vmem:[%s286 + $0x40] sm:$0xff] %v5419
        %5548 = vst [vmem:[%s286 + $0x48] sm:$0xff] %v5420
        %5549 = vst [vmem:[%s286 + $0x50] sm:$0xff] %v5421
        %5550 = vst [vmem:[%s286 + $0x58] sm:$0xff] %v5422
        %5551 = vst [vmem:[%s286 + $0x60] sm:$0xff] %v5423
        %5552 = vst [vmem:[%s286 + $0x68] sm:$0xff] %v5424
        %5553 = vst [vmem:[%s286 + $0x70] sm:$0xff] %v5425
        %5554 = vst [vmem:[%s286 + $0x78] sm:$0xff] %v5426
        %5555 = vst [vmem:[%s286 + $0x80] sm:$0xff] %v5427
        %5556 = vst [vmem:[%s286 + $0x88] sm:$0xff] %v5428
        %5557 = vst [vmem:[%s286 + $0x90] sm:$0xff] %v5429
        %5558 = vst [vmem:[%s286 + $0x98] sm:$0xff] %v5430
        %5559 = vst [vmem:[%s286 + $0xa0] sm:$0xff] %v5431
        %5560 = vst [vmem:[%s286 + $0xa8] sm:$0xff] %v5432
        %5561 = vst [vmem:[%s286 + $0xb0] sm:$0xff] %v5433
        %5562 = vst [vmem:[%s286 + $0xb8] sm:$0xff] %v5434
        %5563 = vst [vmem:[%s286 + $0xc0] sm:$0xff] %v5435
        %5564 = vst [vmem:[%s286 + $0xc8] sm:$0xff] %v5436
        %5565 = vst [vmem:[%s286 + $0xd0] sm:$0xff] %v5437
        %5566 = vst [vmem:[%s286 + $0xd8] sm:$0xff] %v5438
        %5567 = vst [vmem:[%s286 + $0xe0] sm:$0xff] %v5439
        %5568 = vst [vmem:[%s286 + $0xe8] sm:$0xff] %v5440
        %5569 = vst [vmem:[%s286 + $0xf0] sm:$0xff] %v5441
        %5570 = vst [vmem:[%s286 + $0xf8] sm:$0xff] %v5442
        %5571 = vst [vmem:[%s286 + $0x100] sm:$0xff] %v5443
        %5572 = vst [vmem:[%s286 + $0x108] sm:$0xff] %v5444
        %5573 = vst [vmem:[%s286 + $0x110] sm:$0xff] %v5445
        %5574 = vst [vmem:[%s286 + $0x118] sm:$0xff] %v5446
        %5575 = vst [vmem:[%s286 + $0x120] sm:$0xff] %v5447
        %5576 = vst [vmem:[%s286 + $0x128] sm:$0xff] %v5448
        %5577 = vst [vmem:[%s286 + $0x130] sm:$0xff] %v5449
        %5578 = vst [vmem:[%s286 + $0x138] sm:$0xff] %v5450
        %5579 = vst [vmem:[%s286 + $0x140] sm:$0xff] %v5451
        %5580 = vst [vmem:[%s286 + $0x148] sm:$0xff] %v5452
        %5581 = vst [vmem:[%s286 + $0x150] sm:$0xff] %v5453
        %5582 = vst [vmem:[%s286 + $0x158] sm:$0xff] %v5454
        %5583 = vst [vmem:[%s286 + $0x160] sm:$0xff] %v5455
        %5584 = vst [vmem:[%s286 + $0x168] sm:$0xff] %v5456
        %5585 = vst [vmem:[%s286 + $0x170] sm:$0xff] %v5457
        %5586 = vst [vmem:[%s286 + $0x178] sm:$0xff] %v5458
        %5587 = vst [vmem:[%s286 + $0x180] sm:$0xff] %v5459
        %5588 = vst [vmem:[%s286 + $0x188] sm:$0xff] %v5460
        %5589 = vst [vmem:[%s286 + $0x190] sm:$0xff] %v5461
        %5590 = vst [vmem:[%s286 + $0x198] sm:$0xff] %v5462
        %5591 = vst [vmem:[%s286 + $0x1a0] sm:$0xff] %v5463
        %5592 = vst [vmem:[%s286 + $0x1a8] sm:$0xff] %v5464
        %5593 = vst [vmem:[%s286 + $0x1b0] sm:$0xff] %v5465
        %5594 = vst [vmem:[%s286 + $0x1b8] sm:$0xff] %v5466
        %5595 = vst [vmem:[%s286 + $0x1c0] sm:$0xff] %v5467
        %5596 = vst [vmem:[%s286 + $0x1c8] sm:$0xff] %v5468
        %5597 = vst [vmem:[%s286 + $0x1d0] sm:$0xff] %v5469
        %5598 = vst [vmem:[%s286 + $0x1d8] sm:$0xff] %v5470
        %5599 = vst [vmem:[%s286 + $0x1e0] sm:$0xff] %v5471
        %5600 = vst [vmem:[%s286 + $0x1e8] sm:$0xff] %v5472
        %5601 = vst [vmem:[%s286 + $0x1f0] sm:$0xff] %v5473
        %5602 = vst [vmem:[%s286 + $0x1f8] sm:$0xff] %v5474
        %s5603 = sand.u32 %s144, 1
        %s5604 = scalar_lea.sflag [#allocation4], %s5603
        %s5605 = sand.u32 %s144, 1
        %s5606 = smul.addr %s5605, 512
        %s5607 = scalar_lea.vmem [#allocation7], %s5606
        %s5608 = sand.u32 %s170, 1
        %s5609 = scalar_lea.sflag [#allocation9], %s5608
        %s5610 = sand.u32 %s170, 1
        %s5611 = smul.addr %s5610, 512
        %s5612 = scalar_lea.vmem [#allocation8], %s5611
        // Predicated region
        $region49: #{tpu_custom_call.1} parent=39 // pred_check
          %p5613 = pneg %p154
        $region50: #{tpu_custom_call.1} parent=39 // pred_check_branch
          %5615 = sbr.rel (%p5613) target = $region52
        $region51: #{tpu_custom_call.1} parent=39 // pred_region
          %s5616 = smul.u32 32, %s26
          %s5618 = ssub.s32 8192, 8192
          %5619 = vsyncadd %s5604, %s5618
          %s5620 = smul.addr %s5616, 4
          %s5621 = smul.addr %s5620, 64
          %s5622 = scalar_lea.hbm %s5, %s5621
          %s5623 = sshll.u32 %s5607, 4
          %s5624 = int_to_ptr.vmem [resolvable:$true] %s5623
          %5629 = dma.vmem_to_hbm [thread:$0]  %s5624, 8192, %s5622, %s5604, 256, 256, 16
        $region52: #{tpu_custom_call.1} parent=39 // pred_fallthru
          _
        // Predicated region
        $region53: #{tpu_custom_call.1} parent=39 // pred_check
          %p5630 = pneg %p180
        $region54: #{tpu_custom_call.1} parent=39 // pred_check_branch
          %5632 = sbr.rel (%p5630) target = $region56
        $region55: #{tpu_custom_call.1} parent=39 // pred_region
          %s5633 = smul.u32 32, %s26
          %s5635 = ssub.s32 8192, 8192
          %5636 = vsyncadd %s5609, %s5635
          %s5637 = smul.addr %s5633, 4
          %s5638 = smul.addr %s5637, 64
          %s5639 = scalar_lea.hbm %s6, %s5638
          %s5640 = sshll.u32 %s5612, 4
          %s5641 = int_to_ptr.vmem [resolvable:$true] %s5640
          %5646 = dma.vmem_to_hbm [thread:$0]  %s5641, 8192, %s5639, %s5609, 256, 256, 16
        $region56: #{tpu_custom_call.1} parent=39 // pred_fallthru
          _
      $region40: #{tpu_custom_call.1} parent=5 // pred_fallthru
        _
      %p5647 = scmp.le.s32.totalorder 2, %s21
      // Predicated region
      $region57: #{tpu_custom_call.1} parent=5 // pred_check
        %p5648 = pneg %p5647
      $region58: #{tpu_custom_call.1} parent=5 // pred_check_branch
        %5650 = sbr.rel (%p5648) target = $region60
      $region59: #{tpu_custom_call.1} parent=5 // pred_region
        %s5651 = ssub.s32 %s21, 2
        // Predicated region
        $region61: #{tpu_custom_call.1} parent=59 // pred_check
          %p5652 = pneg %p160
        $region62: #{tpu_custom_call.1} parent=59 // pred_check_branch
          %5654 = sbr.rel (%p5652) target = $region64
        $region63: #{tpu_custom_call.1} parent=59 // pred_region
          %s5655 = sand.u32 %s145, 1
          %s5656 = scalar_lea.sflag [#allocation4], %s5655
          %s5657 = sand.u32 %s145, 1
          %s5658 = smul.addr %s5657, 512
          %s5659 = scalar_lea.vmem [#allocation7], %s5658
          %5660 = dma.done %s5656, 8192
        $region64: #{tpu_custom_call.1} parent=59 // pred_fallthru
          _
        // Predicated region
        $region65: #{tpu_custom_call.1} parent=59 // pred_check
          %p5661 = pneg %p186
        $region66: #{tpu_custom_call.1} parent=59 // pred_check_branch
          %5663 = sbr.rel (%p5661) target = $region68
        $region67: #{tpu_custom_call.1} parent=59 // pred_region
          %s5664 = sand.u32 %s171, 1
          %s5665 = scalar_lea.sflag [#allocation9], %s5664
          %s5666 = sand.u32 %s171, 1
          %s5667 = smul.addr %s5666, 512
          %s5668 = scalar_lea.vmem [#allocation8], %s5667
          %5669 = dma.done %s5665, 8192
        $region68: #{tpu_custom_call.1} parent=59 // pred_fallthru
          _
      $region60: #{tpu_custom_call.1} parent=5 // pred_fallthru
        _
    $region6: #{tpu_custom_call.1} parent=1 // loop_footer
      %s25 = sadd.s32 1, %s21
    $region7: #{tpu_custom_call.1} parent=1 // loop_footer_branch
      %20 = sbr.rel target = $region3
    $region8: #{tpu_custom_call.1} parent=1 // loop_exit
      _
    %5670 = vsyncpa [#allocation3], 1
    %s5671 = scalar_lea.sflag [#allocation3], 1
    %5672 = vsyncpa %s5671, 1
    %5673 = vsyncpa [#allocation6], 1
    %5674 = vsyncpa [#allocation4], 1
    %s5675 = scalar_lea.sflag [#allocation4], 1
    %5676 = vsyncpa %s5675, 1
    %5677 = vsyncpa [#allocation9], 1
    %s5678 = scalar_lea.sflag [#allocation9], 1
    %5679 = vsyncpa %s5678, 1

// kernel: tpu_custom_call.1
$region0: #{tpu_custom_call.1}
  #allocation0 [shape = 'u32[]', space=smem, size = 0x4, offset = 0x4, fixed_abs, tag = 'smem constant byte address 0x4 - core index']
  #allocation1 [shape = 'u32[144,128]{1,0:T(1,128)}', space=vmem, size = 0x12000, scoped, tag = 'internal scratch']
  %s0 = inlined_call_operand.vmem [shape: s32[512,1], index: 0, kind: input, shape index: {}]
  %s1 = inlined_call_operand.hbm [shape: bf16[256,640], index: 1, kind: input, shape index: {}]
  %s2 = inlined_call_operand.hbm [shape: bf16[512,128], index: 2, kind: input, shape index: {}]
  %s3 = inlined_call_operand.vmem [shape: bf16[128,768], index: 3, kind: input, shape index: {}]
  %s4 = inlined_call_operand.vmem [shape: f32[8,512], index: 4, kind: input, shape index: {}]
  %s5 = inlined_call_operand.hbm [shape: bf16[512,512], index: 5, kind: output, shape index: {0}]
  %s6 = inlined_call_operand.hbm [shape: bf16[512,512], index: 6, kind: output, shape index: {1}]
  %7 = xla_tuple %s5, %s6
  %s8 = sld [smem:[#allocation0]]
  $region69: #{tpu_custom_call.1} parent=0
    _
  %s10 = ssub.s32 1, %s8
  %s11 = scalar_select 0, %s10, %s8
  $region1: #{tpu_custom_call.1} parent=0
    #allocation2 [shape = 'u8[327680]{0}', space=vmem, size = 0x50000, scoped, tag = 'input window, operand 1, single buffered']
    #allocation3 [shape = 's32[2]{0}', space=sflag, size = 0x8, scoped, tag = 'scoped memory for tpu_custom_call.1']
    #allocation4 [shape = 's32[2]{0}', space=sflag, size = 0x8, scoped, tag = 'scoped memory for tpu_custom_call.1']
    #allocation5 [shape = 'u8[131072]{0}', space=vmem, size = 0x20000, scoped, tag = 'input window, operand 2, single buffered']
    #allocation6 [shape = 's32[1]{0}', space=sflag, size = 0x4, scoped, tag = 'scoped memory for tpu_custom_call.1']
    #allocation7 [shape = 'u8[524288]{0}', space=vmem, size = 0x80000, scoped, tag = 'output window, operand 0']
    #allocation8 [shape = 'u8[524288]{0}', space=vmem, size = 0x80000, scoped, tag = 'output window, operand 1']
    #allocation9 [shape = 's32[2]{0}', space=sflag, size = 0x8, scoped, tag = 'scoped memory for tpu_custom_call.1']
    %12 = vsyncpa [#allocation3], 0
    %13 = vsyncpa [#allocation6], 0
    %14 = vsyncpa [#allocation4], 0
    %s15 = scalar_lea.sflag [#allocation4], 1
    %16 = vsyncpa %s15, 0
    %17 = vsyncpa [#allocation9], 0
    %s18 = scalar_lea.sflag [#allocation9], 1
    %19 = vsyncpa %s18, 0
    loop: start=0, step=1, limit=4
    $region2: #{tpu_custom_call.1} parent=1 // loop_pre_header
      _
    $region3: #{tpu_custom_call.1} parent=1 // loop_header
      %s21 = sphi 0, %s25
      %p22 = scmp.ge.s32.totalorder %s21, 4
      %s31 = sphi 0, %s33
      %s34 = sphi 0, %s31
      %s35 = sphi 0, %s34
      %s51 = sphi 0, %s35
      %s55 = sphi 0, %s55
      %s57 = sphi 0, %s55
      %s58 = sphi 0, %s57
      %s72 = sphi 0, %s58
      %s76 = sphi 0, %s76
      %s78 = sphi 0, %s76
      %s79 = sphi 0, %s78
      %s93 = sphi 0, %s79
      %s97 = sphi 0, %s97
      %s99 = sphi 0, %s97
      %s100 = sphi 0, %s99
      %s114 = sphi 0, %s100
      %s118 = sphi 0, %s118
      %s120 = sphi 0, %s118
      %s121 = sphi 0, %s120
      %s135 = sphi 0, %s121
      %s141 = sphi 0, %s143
      %s144 = sphi 0, %s141
      %s145 = sphi 0, %s144
      %s161 = sphi 0, %s145
      %s167 = sphi 0, %s169
      %s170 = sphi 0, %s167
      %s171 = sphi 0, %s170
      %s187 = sphi 0, %s171
    $region4: #{tpu_custom_call.1} parent=1 // loop_header_branch
      %24 = sbr.rel (%p22) target = $region8
    $region5: #{tpu_custom_call.1} parent=1 // loop_body
      %s26 = ssub.s32 %s21, 1
      %s27 = ssub.s32 %s21, 2
      %s28 = sadd.s32 %s21, 1
      %s29 = ssub.s32 %s21, %s28
      %p30 = scmp.eq.s32.totalorder %s29, 0
      %s32 = sadd.s32 %s31, 1
      %s33 = scalar_select %p30, %s31, %s32
      %p36 = pneg %p30
      %p37 = scmp.eq.s32.totalorder %s21, 1
      %p38 = por %p36, %p37
      %p39 = scmp.ne.s32.totalorder %s31, %s34
      %p40 = scmp.eq.s32.totalorder %s21, 0
      %p41 = por %p39, %p40
      %p42 = scmp.ne.s32.totalorder %s31, %s34
      %p43 = scmp.eq.s32.totalorder %s26, 1
      %p44 = por %p42, %p43
      %p45 = scmp.ne.s32.totalorder %s34, %s35
      %p46 = scmp.eq.s32.totalorder %s26, 0
      %p47 = por %p45, %p46
      %p48 = scmp.ne.s32.totalorder %s34, %s35
      %p49 = scmp.eq.s32.totalorder %s27, 1
      %p50 = por %p48, %p49
      %p52 = scmp.ne.s32.totalorder %s35, %s51
      %p53 = scmp.eq.s32.totalorder %s27, 0
      %p54 = por %p52, %p53
      %s56 = sadd.s32 %s55, 1
      %p59 = scmp.eq.s32.totalorder %s21, 1
      %p60 = scmp.ne.s32.totalorder %s55, %s57
      %p61 = scmp.eq.s32.totalorder %s21, 0
      %p62 = por %p60, %p61
      %p63 = scmp.ne.s32.totalorder %s55, %s57
      %p64 = scmp.eq.s32.totalorder %s26, 1
      %p65 = por %p63, %p64
      %p66 = scmp.ne.s32.totalorder %s57, %s58
      %p67 = scmp.eq.s32.totalorder %s26, 0
      %p68 = por %p66, %p67
      %p69 = scmp.ne.s32.totalorder %s57, %s58
      %p70 = scmp.eq.s32.totalorder %s27, 1
      %p71 = por %p69, %p70
      %p73 = scmp.ne.s32.totalorder %s58, %s72
      %p74 = scmp.eq.s32.totalorder %s27, 0
      %p75 = por %p73, %p74
      %s77 = sadd.s32 %s76, 1
      %p80 = scmp.eq.s32.totalorder %s21, 1
      %p81 = scmp.ne.s32.totalorder %s76, %s78
      %p82 = scmp.eq.s32.totalorder %s21, 0
      %p83 = por %p81, %p82
      %p84 = scmp.ne.s32.totalorder %s76, %s78
      %p85 = scmp.eq.s32.totalorder %s26, 1
      %p86 = por %p84, %p85
      %p87 = scmp.ne.s32.totalorder %s78, %s79
      %p88 = scmp.eq.s32.totalorder %s26, 0
      %p89 = por %p87, %p88
      %p90 = scmp.ne.s32.totalorder %s78, %s79
      %p91 = scmp.eq.s32.totalorder %s27, 1
      %p92 = por %p90, %p91
      %p94 = scmp.ne.s32.totalorder %s79, %s93
      %p95 = scmp.eq.s32.totalorder %s27, 0
      %p96 = por %p94, %p95
      %s98 = sadd.s32 %s97, 1
      %p101 = scmp.eq.s32.totalorder %s21, 1
      %p102 = scmp.ne.s32.totalorder %s97, %s99
      %p103 = scmp.eq.s32.totalorder %s21, 0
      %p104 = por %p102, %p103
      %p105 = scmp.ne.s32.totalorder %s97, %s99
      %p106 = scmp.eq.s32.totalorder %s26, 1
      %p107 = por %p105, %p106
      %p108 = scmp.ne.s32.totalorder %s99, %s100
      %p109 = scmp.eq.s32.totalorder %s26, 0
      %p110 = por %p108, %p109
      %p111 = scmp.ne.s32.totalorder %s99, %s100
      %p112 = scmp.eq.s32.totalorder %s27, 1
      %p113 = por %p111, %p112
      %p115 = scmp.ne.s32.totalorder %s100, %s114
      %p116 = scmp.eq.s32.totalorder %s27, 0
      %p117 = por %p115, %p116
      %s119 = sadd.s32 %s118, 1
      %p122 = scmp.eq.s32.totalorder %s21, 1
      %p123 = scmp.ne.s32.totalorder %s118, %s120
      %p124 = scmp.eq.s32.totalorder %s21, 0
      %p125 = por %p123, %p124
      %p126 = scmp.ne.s32.totalorder %s118, %s120
      %p127 = scmp.eq.s32.totalorder %s26, 1
      %p128 = por %p126, %p127
      %p129 = scmp.ne.s32.totalorder %s120, %s121
      %p130 = scmp.eq.s32.totalorder %s26, 0
      %p131 = por %p129, %p130
      %p132 = scmp.ne.s32.totalorder %s120, %s121
      %p133 = scmp.eq.s32.totalorder %s27, 1
      %p134 = por %p132, %p133
      %p136 = scmp.ne.s32.totalorder %s121, %s135
      %p137 = scmp.eq.s32.totalorder %s27, 0
      %p138 = por %p136, %p137
      %s139 = ssub.s32 %s21, %s28
      %p140 = scmp.eq.s32.totalorder %s139, 0
      %s142 = sadd.s32 %s141, 1
      %s143 = scalar_select %p140, %s141, %s142
      %p146 = pneg %p140
      %p147 = scmp.eq.s32.totalorder %s21, 1
      %p148 = por %p146, %p147
      %p149 = scmp.ne.s32.totalorder %s141, %s144
      %p150 = scmp.eq.s32.totalorder %s21, 0
      %p151 = por %p149, %p150
      %p152 = scmp.ne.s32.totalorder %s141, %s144
      %p153 = scmp.eq.s32.totalorder %s26, 1
      %p154 = por %p152, %p153
      %p155 = scmp.ne.s32.totalorder %s144, %s145
      %p156 = scmp.eq.s32.totalorder %s26, 0
      %p157 = por %p155, %p156
      %p158 = scmp.ne.s32.totalorder %s144, %s145
      %p159 = scmp.eq.s32.totalorder %s27, 1
      %p160 = por %p158, %p159
      %p162 = scmp.ne.s32.totalorder %s145, %s161
      %p163 = scmp.eq.s32.totalorder %s27, 0
      %p164 = por %p162, %p163
      %s165 = ssub.s32 %s21, %s28
      %p166 = scmp.eq.s32.totalorder %s165, 0
      %s168 = sadd.s32 %s167, 1
      %s169 = scalar_select %p166, %s167, %s168
      %p172 = pneg %p166
      %p173 = scmp.eq.s32.totalorder %s21, 1
      %p174 = por %p172, %p173
      %p175 = scmp.ne.s32.totalorder %s167, %s170
      %p176 = scmp.eq.s32.totalorder %s21, 0
      %p177 = por %p175, %p176
      %p178 = scmp.ne.s32.totalorder %s167, %s170
      %p179 = scmp.eq.s32.totalorder %s26, 1
      %p180 = por %p178, %p179
      %p181 = scmp.ne.s32.totalorder %s170, %s171
      %p182 = scmp.eq.s32.totalorder %s26, 0
      %p183 = por %p181, %p182
      %p184 = scmp.ne.s32.totalorder %s170, %s171
      %p185 = scmp.eq.s32.totalorder %s27, 1
      %p186 = por %p184, %p185
      %p188 = scmp.ne.s32.totalorder %s171, %s187
      %p189 = scmp.eq.s32.totalorder %s27, 0
      %p190 = por %p188, %p189
      %p191 = scmp.le.s32.totalorder 1, %s21
      %p192 = scmp.lt.s32.totalorder %s21, 3
      %p193 = pnand %p191, %p192
      %p194 = pneg %p193
      // Predicated region
      $region9: #{tpu_custom_call.1} parent=5 // pred_check
        _
      $region10: #{tpu_custom_call.1} parent=5 // pred_check_branch
        %196 = sbr.rel (%p193) target = $region12
      $region11: #{tpu_custom_call.1} parent=5 // pred_region
        %s197 = ssub.s32 %s21, 1
        // Predicated region
        $region13: #{tpu_custom_call.1} parent=11 // pred_check
          %p198 = pneg %p68
        $region14: #{tpu_custom_call.1} parent=11 // pred_check_branch
          %200 = sbr.rel (%p198) target = $region16
        $region15: #{tpu_custom_call.1} parent=11 // pred_region
          %s202 = ssub.s32 10240, 10240
          %203 = vsyncadd [#allocation3], %s202
          %s204 = sshll.u32 [#allocation2], 4
          %s205 = int_to_ptr.vmem [resolvable:$true] %s204
          %210 = dma.hbm_to_vmem [thread:$0]  %s1, 10240, %s205, [#allocation3], 320, 320, 20
        $region16: #{tpu_custom_call.1} parent=11 // pred_fallthru
          _
        // Predicated region
        $region17: #{tpu_custom_call.1} parent=11 // pred_check
          %p211 = pneg %p89
        $region18: #{tpu_custom_call.1} parent=11 // pred_check_branch
          %213 = sbr.rel (%p211) target = $region20
        $region19: #{tpu_custom_call.1} parent=11 // pred_region
          %s215 = ssub.s32 4096, 4096
          %216 = vsyncadd [#allocation6], %s215
          %s217 = sshll.u32 [#allocation5], 4
          %s218 = int_to_ptr.vmem [resolvable:$true] %s217
          %223 = dma.hbm_to_vmem [thread:$0]  %s2, 4096, %s218, [#allocation6], 64, 64, 4
        $region20: #{tpu_custom_call.1} parent=11 // pred_fallthru
          _
        // Predicated region
        $region21: #{tpu_custom_call.1} parent=11 // pred_check
          %p224 = pneg %p110
        $region22: #{tpu_custom_call.1} parent=11 // pred_check_branch
          %226 = sbr.rel (%p224) target = $region24
        $region23: #{tpu_custom_call.1} parent=11 // pred_region
          _
        $region24: #{tpu_custom_call.1} parent=11 // pred_fallthru
          _
        // Predicated region
        $region25: #{tpu_custom_call.1} parent=11 // pred_check
          %p227 = pneg %p131
        $region26: #{tpu_custom_call.1} parent=11 // pred_check_branch
          %229 = sbr.rel (%p227) target = $region28
        $region27: #{tpu_custom_call.1} parent=11 // pred_region
          _
        $region28: #{tpu_custom_call.1} parent=11 // pred_fallthru
          _
      $region12: #{tpu_custom_call.1} parent=5 // pred_fallthru
        _
      %p230 = scmp.lt.s32.totalorder %s21, 2
      // Predicated region
      $region29: #{tpu_custom_call.1} parent=5 // pred_check
        %p231 = pneg %p230
      $region30: #{tpu_custom_call.1} parent=5 // pred_check_branch
        %233 = sbr.rel (%p231) target = $region32
      $region31: #{tpu_custom_call.1} parent=5 // pred_region
        // Predicated region
        $region33: #{tpu_custom_call.1} parent=31 // pred_check
          %p234 = pneg %p41
        $region34: #{tpu_custom_call.1} parent=31 // pred_check_branch
          %236 = sbr.rel (%p234) target = $region36
        $region35: #{tpu_custom_call.1} parent=31 // pred_region
          %s237 = smul.u32 32, %s21
          %p238 = scmp.lt.s32.totalorder %s237, 63
          %s239 = scalar_select %p238, %s237, 63
          %s240 = smul.addr %s239, 8
          %s241 = scalar_lea.vmem %s0, %s240
          %s242 = smul.u32 32, %s21
        $region36: #{tpu_custom_call.1} parent=31 // pred_fallthru
          _
      $region32: #{tpu_custom_call.1} parent=5 // pred_fallthru
        _
      %p243 = scmp.le.s32.totalorder 1, %s21
      %p244 = scmp.lt.s32.totalorder %s21, 3
      %p245 = pnand %p243, %p244
      %p246 = pneg %p245
      // Predicated region
      $region37: #{tpu_custom_call.1} parent=5 // pred_check
        _
      $region38: #{tpu_custom_call.1} parent=5 // pred_check_branch
        %248 = sbr.rel (%p245) target = $region40
      $region39: #{tpu_custom_call.1} parent=5 // pred_region
        %s249 = ssub.s32 %s21, 1
        // Predicated region
        $region41: #{tpu_custom_call.1} parent=39 // pred_check
          %p250 = pneg %p68
        $region42: #{tpu_custom_call.1} parent=39 // pred_check_branch
          %252 = sbr.rel (%p250) target = $region44
        $region43: #{tpu_custom_call.1} parent=39 // pred_region
          %253 = dma.done [#allocation3], 10240
        $region44: #{tpu_custom_call.1} parent=39 // pred_fallthru
          _
        // Predicated region
        $region45: #{tpu_custom_call.1} parent=39 // pred_check
          %p254 = pneg %p89
        $region46: #{tpu_custom_call.1} parent=39 // pred_check_branch
          %256 = sbr.rel (%p254) target = $region48
        $region47: #{tpu_custom_call.1} parent=39 // pred_region
          %257 = dma.done [#allocation6], 4096
        $region48: #{tpu_custom_call.1} parent=39 // pred_fallthru
          _
        %s258 = smul.u32 32, %s26
        %p259 = scmp.lt.s32.totalorder %s258, 63
        %s260 = scalar_select %p259, %s258, 63
        %s261 = smul.addr %s260, 8
        %s262 = scalar_lea.vmem %s0, %s261
        %p263 = pneg %p47
        %p264 = pneg %p44
        %p265 = pneg %p68
        %p266 = pneg %p65
        %p267 = pneg %p89
        %p268 = pneg %p86
        %p269 = pneg %p110
        %p270 = pneg %p107
        %p271 = pneg %p131
        %p272 = pneg %p128
        %p273 = pneg %p157
        %p274 = pneg %p154
        %s275 = sand.u32 %s144, 1
        %s276 = scalar_lea.sflag [#allocation4], %s275
        %s277 = sand.u32 %s144, 1
        %s278 = smul.addr %s277, 512
        %s279 = scalar_lea.vmem [#allocation7], %s278
        %p280 = pneg %p183
        %p281 = pneg %p180
        %s282 = sand.u32 %s170, 1
        %s283 = scalar_lea.sflag [#allocation9], %s282
        %s284 = sand.u32 %s170, 1
        %s285 = smul.addr %s284, 512
        %s286 = scalar_lea.vmem [#allocation8], %s285
        %s287 = smul.u32 32, %s26
        %p288 = scmp.lt.s32.totalorder %s287, 63
        %s289 = scalar_select %p288, %s287, 63
        %s290 = smul.addr %s289, 8
        %s291 = scalar_lea.vmem %s0, %s290
        %s292 = smul.u32 32, %s26
        %s293 = smul.u32 32, %s26
        %s294 = smul.u32 32, %s26
        %v296 = vld [vmem:[%s291] sm:$0xff]
        %v297 = vld [vmem:[%s291 + $0x8] sm:$0xff]
        %v298 = vld [vmem:[%s291 + $0x10] sm:$0xff]
        %v299 = vld [vmem:[%s291 + $0x18] sm:$0xff]
        %v300 = vld [vmem:[%s291 + $0x20] sm:$0xff]
        %v301 = vld [vmem:[%s291 + $0x28] sm:$0xff]
        %v302 = vld [vmem:[%s291 + $0x30] sm:$0xff]
        %v303 = vld [vmem:[%s291 + $0x38] sm:$0xff]
        %v304 = vld [vmem:[%s291 + $0x40] sm:$0xff]
        %v305 = vld [vmem:[%s291 + $0x48] sm:$0xff]
        %v306 = vld [vmem:[%s291 + $0x50] sm:$0xff]
        %v307 = vld [vmem:[%s291 + $0x58] sm:$0xff]
        %v308 = vld [vmem:[%s291 + $0x60] sm:$0xff]
        %v309 = vld [vmem:[%s291 + $0x68] sm:$0xff]
        %v310 = vld [vmem:[%s291 + $0x70] sm:$0xff]
        %v311 = vld [vmem:[%s291 + $0x78] sm:$0xff]
        %v312 = vld [vmem:[%s291 + $0x80] sm:$0xff]
        %v313 = vld [vmem:[%s291 + $0x88] sm:$0xff]
        %v314 = vld [vmem:[%s291 + $0x90] sm:$0xff]
        %v315 = vld [vmem:[%s291 + $0x98] sm:$0xff]
        %v316 = vld [vmem:[%s291 + $0xa0] sm:$0xff]
        %v317 = vld [vmem:[%s291 + $0xa8] sm:$0xff]
        %v318 = vld [vmem:[%s291 + $0xb0] sm:$0xff]
        %v319 = vld [vmem:[%s291 + $0xb8] sm:$0xff]
        %v320 = vld [vmem:[%s291 + $0xc0] sm:$0xff]
        %v321 = vld [vmem:[%s291 + $0xc8] sm:$0xff]
        %v322 = vld [vmem:[%s291 + $0xd0] sm:$0xff]
        %v323 = vld [vmem:[%s291 + $0xd8] sm:$0xff]
        %v324 = vld [vmem:[%s291 + $0xe0] sm:$0xff]
        %v325 = vld [vmem:[%s291 + $0xe8] sm:$0xff]
        %v326 = vld [vmem:[%s291 + $0xf0] sm:$0xff]
        %v327 = vld [vmem:[%s291 + $0xf8] sm:$0xff]
        %v328 = vshra.s32 %v296, 9
        %v329 = vshra.s32 %v297, 9
        %v330 = vshra.s32 %v298, 9
        %v331 = vshra.s32 %v299, 9
        %v332 = vshra.s32 %v300, 9
        %v333 = vshra.s32 %v301, 9
        %v334 = vshra.s32 %v302, 9
        %v335 = vshra.s32 %v303, 9
        %v336 = vshra.s32 %v304, 9
        %v337 = vshra.s32 %v305, 9
        %v338 = vshra.s32 %v306, 9
        %v339 = vshra.s32 %v307, 9
        %v340 = vshra.s32 %v308, 9
        %v341 = vshra.s32 %v309, 9
        %v342 = vshra.s32 %v310, 9
        %v343 = vshra.s32 %v311, 9
        %v344 = vshra.s32 %v312, 9
        %v345 = vshra.s32 %v313, 9
        %v346 = vshra.s32 %v314, 9
        %v347 = vshra.s32 %v315, 9
        %v348 = vshra.s32 %v316, 9
        %v349 = vshra.s32 %v317, 9
        %v350 = vshra.s32 %v318, 9
        %v351 = vshra.s32 %v319, 9
        %v352 = vshra.s32 %v320, 9
        %v353 = vshra.s32 %v321, 9
        %v354 = vshra.s32 %v322, 9
        %v355 = vshra.s32 %v323, 9
        %v356 = vshra.s32 %v324, 9
        %v357 = vshra.s32 %v325, 9
        %v358 = vshra.s32 %v326, 9
        %v359 = vshra.s32 %v327, 9
        %v360 = vand.u32 %v296, 511
        %v361 = vand.u32 %v297, 511
        %v362 = vand.u32 %v298, 511
        %v363 = vand.u32 %v299, 511
        %v364 = vand.u32 %v300, 511
        %v365 = vand.u32 %v301, 511
        %v366 = vand.u32 %v302, 511
        %v367 = vand.u32 %v303, 511
        %v368 = vand.u32 %v304, 511
        %v369 = vand.u32 %v305, 511
        %v370 = vand.u32 %v306, 511
        %v371 = vand.u32 %v307, 511
        %v372 = vand.u32 %v308, 511
        %v373 = vand.u32 %v309, 511
        %v374 = vand.u32 %v310, 511
        %v375 = vand.u32 %v311, 511
        %v376 = vand.u32 %v312, 511
        %v377 = vand.u32 %v313, 511
        %v378 = vand.u32 %v314, 511
        %v379 = vand.u32 %v315, 511
        %v380 = vand.u32 %v316, 511
        %v381 = vand.u32 %v317, 511
        %v382 = vand.u32 %v318, 511
        %v383 = vand.u32 %v319, 511
        %v384 = vand.u32 %v320, 511
        %v385 = vand.u32 %v321, 511
        %v386 = vand.u32 %v322, 511
        %v387 = vand.u32 %v323, 511
        %v388 = vand.u32 %v324, 511
        %v389 = vand.u32 %v325, 511
        %v390 = vand.u32 %v326, 511
        %v391 = vand.u32 %v327, 511
        %v392 = vlaneseq
        %v393 = vand.u32 %v392, 127
        %v394 = vadd.s32 %v393, 128
        %395 = vset.pattern.permute.xlu0 0
        %396 = vperm.xlu0 %395, %v328
        %v397 = vpop.permute.xlu0 %396
        %398 = vset.pattern.permute.xlu0 0
        %399 = vperm.xlu0 %398, %v329
        %v400 = vpop.permute.xlu0 %399
        %401 = vset.pattern.permute.xlu0 0
        %402 = vperm.xlu0 %401, %v330
        %v403 = vpop.permute.xlu0 %402
        %404 = vset.pattern.permute.xlu0 0
        %405 = vperm.xlu0 %404, %v331
        %v406 = vpop.permute.xlu0 %405
        %407 = vset.pattern.permute.xlu0 0
        %408 = vperm.xlu0 %407, %v332
        %v409 = vpop.permute.xlu0 %408
        %410 = vset.pattern.permute.xlu0 0
        %411 = vperm.xlu0 %410, %v333
        %v412 = vpop.permute.xlu0 %411
        %413 = vset.pattern.permute.xlu0 0
        %414 = vperm.xlu0 %413, %v334
        %v415 = vpop.permute.xlu0 %414
        %416 = vset.pattern.permute.xlu0 0
        %417 = vperm.xlu0 %416, %v335
        %v418 = vpop.permute.xlu0 %417
        %419 = vset.pattern.permute.xlu0 0
        %420 = vperm.xlu0 %419, %v336
        %v421 = vpop.permute.xlu0 %420
        %422 = vset.pattern.permute.xlu0 0
        %423 = vperm.xlu0 %422, %v337
        %v424 = vpop.permute.xlu0 %423
        %425 = vset.pattern.permute.xlu0 0
        %426 = vperm.xlu0 %425, %v338
        %v427 = vpop.permute.xlu0 %426
        %428 = vset.pattern.permute.xlu0 0
        %429 = vperm.xlu0 %428, %v339
        %v430 = vpop.permute.xlu0 %429
        %431 = vset.pattern.permute.xlu0 0
        %432 = vperm.xlu0 %431, %v340
        %v433 = vpop.permute.xlu0 %432
        %434 = vset.pattern.permute.xlu0 0
        %435 = vperm.xlu0 %434, %v341
        %v436 = vpop.permute.xlu0 %435
        %437 = vset.pattern.permute.xlu0 0
        %438 = vperm.xlu0 %437, %v342
        %v439 = vpop.permute.xlu0 %438
        %440 = vset.pattern.permute.xlu0 0
        %441 = vperm.xlu0 %440, %v343
        %v442 = vpop.permute.xlu0 %441
        %443 = vset.pattern.permute.xlu0 0
        %444 = vperm.xlu0 %443, %v344
        %v445 = vpop.permute.xlu0 %444
        %446 = vset.pattern.permute.xlu0 0
        %447 = vperm.xlu0 %446, %v345
        %v448 = vpop.permute.xlu0 %447
        %449 = vset.pattern.permute.xlu0 0
        %450 = vperm.xlu0 %449, %v346
        %v451 = vpop.permute.xlu0 %450
        %452 = vset.pattern.permute.xlu0 0
        %453 = vperm.xlu0 %452, %v347
        %v454 = vpop.permute.xlu0 %453
        %455 = vset.pattern.permute.xlu0 0
        %456 = vperm.xlu0 %455, %v348
        %v457 = vpop.permute.xlu0 %456
        %458 = vset.pattern.permute.xlu0 0
        %459 = vperm.xlu0 %458, %v349
        %v460 = vpop.permute.xlu0 %459
        %461 = vset.pattern.permute.xlu0 0
        %462 = vperm.xlu0 %461, %v350
        %v463 = vpop.permute.xlu0 %462
        %464 = vset.pattern.permute.xlu0 0
        %465 = vperm.xlu0 %464, %v351
        %v466 = vpop.permute.xlu0 %465
        %467 = vset.pattern.permute.xlu0 0
        %468 = vperm.xlu0 %467, %v352
        %v469 = vpop.permute.xlu0 %468
        %470 = vset.pattern.permute.xlu0 0
        %471 = vperm.xlu0 %470, %v353
        %v472 = vpop.permute.xlu0 %471
        %473 = vset.pattern.permute.xlu0 0
        %474 = vperm.xlu0 %473, %v354
        %v475 = vpop.permute.xlu0 %474
        %476 = vset.pattern.permute.xlu0 0
        %477 = vperm.xlu0 %476, %v355
        %v478 = vpop.permute.xlu0 %477
        %479 = vset.pattern.permute.xlu0 0
        %480 = vperm.xlu0 %479, %v356
        %v481 = vpop.permute.xlu0 %480
        %482 = vset.pattern.permute.xlu0 0
        %483 = vperm.xlu0 %482, %v357
        %v484 = vpop.permute.xlu0 %483
        %485 = vset.pattern.permute.xlu0 0
        %486 = vperm.xlu0 %485, %v358
        %v487 = vpop.permute.xlu0 %486
        %488 = vset.pattern.permute.xlu0 0
        %489 = vperm.xlu0 %488, %v359
        %v490 = vpop.permute.xlu0 %489
        %vm491 = vcmp.eq.s32.totalorder %v397, %v393
        %vm492 = vcmp.eq.s32.totalorder %v397, %v394
        %vm493 = vcmp.eq.s32.totalorder %v400, %v393
        %vm494 = vcmp.eq.s32.totalorder %v400, %v394
        %vm495 = vcmp.eq.s32.totalorder %v403, %v393
        %vm496 = vcmp.eq.s32.totalorder %v403, %v394
        %vm497 = vcmp.eq.s32.totalorder %v406, %v393
        %vm498 = vcmp.eq.s32.totalorder %v406, %v394
        %vm499 = vcmp.eq.s32.totalorder %v409, %v393
        %vm500 = vcmp.eq.s32.totalorder %v409, %v394
        %vm501 = vcmp.eq.s32.totalorder %v412, %v393
        %vm502 = vcmp.eq.s32.totalorder %v412, %v394
        %vm503 = vcmp.eq.s32.totalorder %v415, %v393
        %vm504 = vcmp.eq.s32.totalorder %v415, %v394
        %vm505 = vcmp.eq.s32.totalorder %v418, %v393
        %vm506 = vcmp.eq.s32.totalorder %v418, %v394
        %vm507 = vcmp.eq.s32.totalorder %v421, %v393
        %vm508 = vcmp.eq.s32.totalorder %v421, %v394
        %vm509 = vcmp.eq.s32.totalorder %v424, %v393
        %vm510 = vcmp.eq.s32.totalorder %v424, %v394
        %vm511 = vcmp.eq.s32.totalorder %v427, %v393
        %vm512 = vcmp.eq.s32.totalorder %v427, %v394
        %vm513 = vcmp.eq.s32.totalorder %v430, %v393
        %vm514 = vcmp.eq.s32.totalorder %v430, %v394
        %vm515 = vcmp.eq.s32.totalorder %v433, %v393
        %vm516 = vcmp.eq.s32.totalorder %v433, %v394
        %vm517 = vcmp.eq.s32.totalorder %v436, %v393
        %vm518 = vcmp.eq.s32.totalorder %v436, %v394
        %vm519 = vcmp.eq.s32.totalorder %v439, %v393
        %vm520 = vcmp.eq.s32.totalorder %v439, %v394
        %vm521 = vcmp.eq.s32.totalorder %v442, %v393
        %vm522 = vcmp.eq.s32.totalorder %v442, %v394
        %vm523 = vcmp.eq.s32.totalorder %v445, %v393
        %vm524 = vcmp.eq.s32.totalorder %v445, %v394
        %vm525 = vcmp.eq.s32.totalorder %v448, %v393
        %vm526 = vcmp.eq.s32.totalorder %v448, %v394
        %vm527 = vcmp.eq.s32.totalorder %v451, %v393
        %vm528 = vcmp.eq.s32.totalorder %v451, %v394
        %vm529 = vcmp.eq.s32.totalorder %v454, %v393
        %vm530 = vcmp.eq.s32.totalorder %v454, %v394
        %vm531 = vcmp.eq.s32.totalorder %v457, %v393
        %vm532 = vcmp.eq.s32.totalorder %v457, %v394
        %vm533 = vcmp.eq.s32.totalorder %v460, %v393
        %vm534 = vcmp.eq.s32.totalorder %v460, %v394
        %vm535 = vcmp.eq.s32.totalorder %v463, %v393
        %vm536 = vcmp.eq.s32.totalorder %v463, %v394
        %vm537 = vcmp.eq.s32.totalorder %v466, %v393
        %vm538 = vcmp.eq.s32.totalorder %v466, %v394
        %vm539 = vcmp.eq.s32.totalorder %v469, %v393
        %vm540 = vcmp.eq.s32.totalorder %v469, %v394
        %vm541 = vcmp.eq.s32.totalorder %v472, %v393
        %vm542 = vcmp.eq.s32.totalorder %v472, %v394
        %vm543 = vcmp.eq.s32.totalorder %v475, %v393
        %vm544 = vcmp.eq.s32.totalorder %v475, %v394
        %vm545 = vcmp.eq.s32.totalorder %v478, %v393
        %vm546 = vcmp.eq.s32.totalorder %v478, %v394
        %vm547 = vcmp.eq.s32.totalorder %v481, %v393
        %vm548 = vcmp.eq.s32.totalorder %v481, %v394
        %vm549 = vcmp.eq.s32.totalorder %v484, %v393
        %vm550 = vcmp.eq.s32.totalorder %v484, %v394
        %vm551 = vcmp.eq.s32.totalorder %v487, %v393
        %vm552 = vcmp.eq.s32.totalorder %v487, %v394
        %vm553 = vcmp.eq.s32.totalorder %v490, %v393
        %vm554 = vcmp.eq.s32.totalorder %v490, %v394
        %v555 = vsel %vm491, 1, 0
        %v556 = vsel %vm492, 1, 0
        %v557 = vsel %vm493, 1, 0
        %v558 = vsel %vm494, 1, 0
        %v559 = vsel %vm495, 1, 0
        %v560 = vsel %vm496, 1, 0
        %v561 = vsel %vm497, 1, 0
        %v562 = vsel %vm498, 1, 0
        %v563 = vsel %vm499, 1, 0
        %v564 = vsel %vm500, 1, 0
        %v565 = vsel %vm501, 1, 0
        %v566 = vsel %vm502, 1, 0
        %v567 = vsel %vm503, 1, 0
        %v568 = vsel %vm504, 1, 0
        %v569 = vsel %vm505, 1, 0
        %v570 = vsel %vm506, 1, 0
        %v571 = vsel %vm507, 1, 0
        %v572 = vsel %vm508, 1, 0
        %v573 = vsel %vm509, 1, 0
        %v574 = vsel %vm510, 1, 0
        %v575 = vsel %vm511, 1, 0
        %v576 = vsel %vm512, 1, 0
        %v577 = vsel %vm513, 1, 0
        %v578 = vsel %vm514, 1, 0
        %v579 = vsel %vm515, 1, 0
        %v580 = vsel %vm516, 1, 0
        %v581 = vsel %vm517, 1, 0
        %v582 = vsel %vm518, 1, 0
        %v583 = vsel %vm519, 1, 0
        %v584 = vsel %vm520, 1, 0
        %v585 = vsel %vm521, 1, 0
        %v586 = vsel %vm522, 1, 0
        %v587 = vsel %vm523, 1, 0
        %v588 = vsel %vm524, 1, 0
        %v589 = vsel %vm525, 1, 0
        %v590 = vsel %vm526, 1, 0
        %v591 = vsel %vm527, 1, 0
        %v592 = vsel %vm528, 1, 0
        %v593 = vsel %vm529, 1, 0
        %v594 = vsel %vm530, 1, 0
        %v595 = vsel %vm531, 1, 0
        %v596 = vsel %vm532, 1, 0
        %v597 = vsel %vm533, 1, 0
        %v598 = vsel %vm534, 1, 0
        %v599 = vsel %vm535, 1, 0
        %v600 = vsel %vm536, 1, 0
        %v601 = vsel %vm537, 1, 0
        %v602 = vsel %vm538, 1, 0
        %v603 = vsel %vm539, 1, 0
        %v604 = vsel %vm540, 1, 0
        %v605 = vsel %vm541, 1, 0
        %v606 = vsel %vm542, 1, 0
        %v607 = vsel %vm543, 1, 0
        %v608 = vsel %vm544, 1, 0
        %v609 = vsel %vm545, 1, 0
        %v610 = vsel %vm546, 1, 0
        %v611 = vsel %vm547, 1, 0
        %v612 = vsel %vm548, 1, 0
        %v613 = vsel %vm549, 1, 0
        %v614 = vsel %vm550, 1, 0
        %v615 = vsel %vm551, 1, 0
        %v616 = vsel %vm552, 1, 0
        %v617 = vsel %vm553, 1, 0
        %v618 = vsel %vm554, 1, 0
        %v619 = vcvt.s32.f32 %v555
        %v620 = vcvt.s32.f32 %v556
        %v621 = vcvt.s32.f32 %v557
        %v622 = vcvt.s32.f32 %v558
        %v623 = vcvt.s32.f32 %v559
        %v624 = vcvt.s32.f32 %v560
        %v625 = vcvt.s32.f32 %v561
        %v626 = vcvt.s32.f32 %v562
        %v627 = vcvt.s32.f32 %v563
        %v628 = vcvt.s32.f32 %v564
        %v629 = vcvt.s32.f32 %v565
        %v630 = vcvt.s32.f32 %v566
        %v631 = vcvt.s32.f32 %v567
        %v632 = vcvt.s32.f32 %v568
        %v633 = vcvt.s32.f32 %v569
        %v634 = vcvt.s32.f32 %v570
        %v635 = vcvt.s32.f32 %v571
        %v636 = vcvt.s32.f32 %v572
        %v637 = vcvt.s32.f32 %v573
        %v638 = vcvt.s32.f32 %v574
        %v639 = vcvt.s32.f32 %v575
        %v640 = vcvt.s32.f32 %v576
        %v641 = vcvt.s32.f32 %v577
        %v642 = vcvt.s32.f32 %v578
        %v643 = vcvt.s32.f32 %v579
        %v644 = vcvt.s32.f32 %v580
        %v645 = vcvt.s32.f32 %v581
        %v646 = vcvt.s32.f32 %v582
        %v647 = vcvt.s32.f32 %v583
        %v648 = vcvt.s32.f32 %v584
        %v649 = vcvt.s32.f32 %v585
        %v650 = vcvt.s32.f32 %v586
        %v651 = vcvt.s32.f32 %v587
        %v652 = vcvt.s32.f32 %v588
        %v653 = vcvt.s32.f32 %v589
        %v654 = vcvt.s32.f32 %v590
        %v655 = vcvt.s32.f32 %v591
        %v656 = vcvt.s32.f32 %v592
        %v657 = vcvt.s32.f32 %v593
        %v658 = vcvt.s32.f32 %v594
        %v659 = vcvt.s32.f32 %v595
        %v660 = vcvt.s32.f32 %v596
        %v661 = vcvt.s32.f32 %v597
        %v662 = vcvt.s32.f32 %v598
        %v663 = vcvt.s32.f32 %v599
        %v664 = vcvt.s32.f32 %v600
        %v665 = vcvt.s32.f32 %v601
        %v666 = vcvt.s32.f32 %v602
        %v667 = vcvt.s32.f32 %v603
        %v668 = vcvt.s32.f32 %v604
        %v669 = vcvt.s32.f32 %v605
        %v670 = vcvt.s32.f32 %v606
        %v671 = vcvt.s32.f32 %v607
        %v672 = vcvt.s32.f32 %v608
        %v673 = vcvt.s32.f32 %v609
        %v674 = vcvt.s32.f32 %v610
        %v675 = vcvt.s32.f32 %v611
        %v676 = vcvt.s32.f32 %v612
        %v677 = vcvt.s32.f32 %v613
        %v678 = vcvt.s32.f32 %v614
        %v679 = vcvt.s32.f32 %v615
        %v680 = vcvt.s32.f32 %v616
        %v681 = vcvt.s32.f32 %v617
        %v682 = vcvt.s32.f32 %v618
        %v683 = vpack.c.bf16 %v621, %v619
        %v684 = vpack.c.bf16 %v622, %v620
        %v685 = vpack.c.bf16 %v625, %v623
        %v686 = vpack.c.bf16 %v626, %v624
        %v687 = vpack.c.bf16 %v629, %v627
        %v688 = vpack.c.bf16 %v630, %v628
        %v689 = vpack.c.bf16 %v633, %v631
        %v690 = vpack.c.bf16 %v634, %v632
        %v691 = vpack.c.bf16 %v637, %v635
        %v692 = vpack.c.bf16 %v638, %v636
        %v693 = vpack.c.bf16 %v641, %v639
        %v694 = vpack.c.bf16 %v642, %v640
        %v695 = vpack.c.bf16 %v645, %v643
        %v696 = vpack.c.bf16 %v646, %v644
        %v697 = vpack.c.bf16 %v649, %v647
        %v698 = vpack.c.bf16 %v650, %v648
        %v699 = vpack.c.bf16 %v653, %v651
        %v700 = vpack.c.bf16 %v654, %v652
        %v701 = vpack.c.bf16 %v657, %v655
        %v702 = vpack.c.bf16 %v658, %v656
        %v703 = vpack.c.bf16 %v661, %v659
        %v704 = vpack.c.bf16 %v662, %v660
        %v705 = vpack.c.bf16 %v665, %v663
        %v706 = vpack.c.bf16 %v666, %v664
        %v707 = vpack.c.bf16 %v669, %v667
        %v708 = vpack.c.bf16 %v670, %v668
        %v709 = vpack.c.bf16 %v673, %v671
        %v710 = vpack.c.bf16 %v674, %v672
        %v711 = vpack.c.bf16 %v677, %v675
        %v712 = vpack.c.bf16 %v678, %v676
        %v713 = vpack.c.bf16 %v681, %v679
        %v714 = vpack.c.bf16 %v682, %v680
        %v715 = vld [vmem:[#allocation2] sm:$0xff]
        %v716 = vld [vmem:[#allocation2 + $0x8] sm:$0xff]
        %v717 = vld [vmem:[#allocation2 + $0x10] sm:$0xf]
        %v718 = vld [vmem:[#allocation2 + $0x14] sm:$0xff]
        %v719 = vld [vmem:[#allocation2 + $0x1c] sm:$0xff]
        %v720 = vld [vmem:[#allocation2 + $0x24] sm:$0xf]
        %v721 = vld [vmem:[#allocation2 + $0x28] sm:$0xff]
        %v722 = vld [vmem:[#allocation2 + $0x30] sm:$0xff]
        %v723 = vld [vmem:[#allocation2 + $0x38] sm:$0xf]
        %v724 = vld [vmem:[#allocation2 + $0x3c] sm:$0xff]
        %v725 = vld [vmem:[#allocation2 + $0x44] sm:$0xff]
        %v726 = vld [vmem:[#allocation2 + $0x4c] sm:$0xf]
        %v727 = vld [vmem:[#allocation2 + $0x50] sm:$0xff]
        %v728 = vld [vmem:[#allocation2 + $0x58] sm:$0xff]
        %v729 = vld [vmem:[#allocation2 + $0x60] sm:$0xf]
        %v730 = vld [vmem:[#allocation2 + $0x64] sm:$0xff]
        %v731 = vld [vmem:[#allocation2 + $0x6c] sm:$0xff]
        %v732 = vld [vmem:[#allocation2 + $0x74] sm:$0xf]
        %v733 = vld [vmem:[#allocation2 + $0x78] sm:$0xff]
        %v734 = vld [vmem:[#allocation2 + $0x80] sm:$0xff]
        %v735 = vld [vmem:[#allocation2 + $0x88] sm:$0xf]
        %v736 = vld [vmem:[#allocation2 + $0x8c] sm:$0xff]
        %v737 = vld [vmem:[#allocation2 + $0x94] sm:$0xff]
        %v738 = vld [vmem:[#allocation2 + $0x9c] sm:$0xf]
        %v739 = vld [vmem:[#allocation2 + $0xa0] sm:$0xff]
        %v740 = vld [vmem:[#allocation2 + $0xa8] sm:$0xff]
        %v741 = vld [vmem:[#allocation2 + $0xb0] sm:$0xf]
        %v742 = vld [vmem:[#allocation2 + $0xb4] sm:$0xff]
        %v743 = vld [vmem:[#allocation2 + $0xbc] sm:$0xff]
        %v744 = vld [vmem:[#allocation2 + $0xc4] sm:$0xf]
        %v745 = vld [vmem:[#allocation2 + $0xc8] sm:$0xff]
        %v746 = vld [vmem:[#allocation2 + $0xd0] sm:$0xff]
        %v747 = vld [vmem:[#allocation2 + $0xd8] sm:$0xf]
        %v748 = vld [vmem:[#allocation2 + $0xdc] sm:$0xff]
        %v749 = vld [vmem:[#allocation2 + $0xe4] sm:$0xff]
        %v750 = vld [vmem:[#allocation2 + $0xec] sm:$0xf]
        %v751 = vld [vmem:[#allocation2 + $0xf0] sm:$0xff]
        %v752 = vld [vmem:[#allocation2 + $0xf8] sm:$0xff]
        %v753 = vld [vmem:[#allocation2 + $0x100] sm:$0xf]
        %v754 = vld [vmem:[#allocation2 + $0x104] sm:$0xff]
        %v755 = vld [vmem:[#allocation2 + $0x10c] sm:$0xff]
        %v756 = vld [vmem:[#allocation2 + $0x114] sm:$0xf]
        %v757 = vld [vmem:[#allocation2 + $0x118] sm:$0xff]
        %v758 = vld [vmem:[#allocation2 + $0x120] sm:$0xff]
        %v759 = vld [vmem:[#allocation2 + $0x128] sm:$0xf]
        %v760 = vld [vmem:[#allocation2 + $0x12c] sm:$0xff]
        %v761 = vld [vmem:[#allocation2 + $0x134] sm:$0xff]
        %v762 = vld [vmem:[#allocation2 + $0x13c] sm:$0xf]
        %v763 = vld [vmem:[#allocation2 + $0x140] sm:$0xff]
        %v764 = vld [vmem:[#allocation2 + $0x148] sm:$0xff]
        %v765 = vld [vmem:[#allocation2 + $0x150] sm:$0xf]
        %v766 = vld [vmem:[#allocation2 + $0x154] sm:$0xff]
        %v767 = vld [vmem:[#allocation2 + $0x15c] sm:$0xff]
        %v768 = vld [vmem:[#allocation2 + $0x164] sm:$0xf]
        %v769 = vld [vmem:[#allocation2 + $0x168] sm:$0xff]
        %v770 = vld [vmem:[#allocation2 + $0x170] sm:$0xff]
        %v771 = vld [vmem:[#allocation2 + $0x178] sm:$0xf]
        %v772 = vld [vmem:[#allocation2 + $0x17c] sm:$0xff]
        %v773 = vld [vmem:[#allocation2 + $0x184] sm:$0xff]
        %v774 = vld [vmem:[#allocation2 + $0x18c] sm:$0xf]
        %v775 = vld [vmem:[#allocation2 + $0x190] sm:$0xff]
        %v776 = vld [vmem:[#allocation2 + $0x198] sm:$0xff]
        %v777 = vld [vmem:[#allocation2 + $0x1a0] sm:$0xf]
        %v778 = vld [vmem:[#allocation2 + $0x1a4] sm:$0xff]
        %v779 = vld [vmem:[#allocation2 + $0x1ac] sm:$0xff]
        %v780 = vld [vmem:[#allocation2 + $0x1b4] sm:$0xf]
        %v781 = vld [vmem:[#allocation2 + $0x1b8] sm:$0xff]
        %v782 = vld [vmem:[#allocation2 + $0x1c0] sm:$0xff]
        %v783 = vld [vmem:[#allocation2 + $0x1c8] sm:$0xf]
        %v784 = vld [vmem:[#allocation2 + $0x1cc] sm:$0xff]
        %v785 = vld [vmem:[#allocation2 + $0x1d4] sm:$0xff]
        %v786 = vld [vmem:[#allocation2 + $0x1dc] sm:$0xf]
        %v787 = vld [vmem:[#allocation2 + $0x1e0] sm:$0xff]
        %v788 = vld [vmem:[#allocation2 + $0x1e8] sm:$0xff]
        %v789 = vld [vmem:[#allocation2 + $0x1f0] sm:$0xf]
        %v790 = vld [vmem:[#allocation2 + $0x1f4] sm:$0xff]
        %v791 = vld [vmem:[#allocation2 + $0x1fc] sm:$0xff]
        %v792 = vld [vmem:[#allocation2 + $0x204] sm:$0xf]
        %v793 = vld [vmem:[#allocation2 + $0x208] sm:$0xff]
        %v794 = vld [vmem:[#allocation2 + $0x210] sm:$0xff]
        %v795 = vld [vmem:[#allocation2 + $0x218] sm:$0xf]
        %v796 = vld [vmem:[#allocation2 + $0x21c] sm:$0xff]
        %v797 = vld [vmem:[#allocation2 + $0x224] sm:$0xff]
        %v798 = vld [vmem:[#allocation2 + $0x22c] sm:$0xf]
        %v799 = vld [vmem:[#allocation2 + $0x230] sm:$0xff]
        %v800 = vld [vmem:[#allocation2 + $0x238] sm:$0xff]
        %v801 = vld [vmem:[#allocation2 + $0x240] sm:$0xf]
        %v802 = vld [vmem:[#allocation2 + $0x244] sm:$0xff]
        %v803 = vld [vmem:[#allocation2 + $0x24c] sm:$0xff]
        %v804 = vld [vmem:[#allocation2 + $0x254] sm:$0xf]
        %v805 = vld [vmem:[#allocation2 + $0x258] sm:$0xff]
        %v806 = vld [vmem:[#allocation2 + $0x260] sm:$0xff]
        %v807 = vld [vmem:[#allocation2 + $0x268] sm:$0xf]
        %v808 = vld [vmem:[#allocation2 + $0x26c] sm:$0xff]
        %v809 = vld [vmem:[#allocation2 + $0x274] sm:$0xff]
        %v810 = vld [vmem:[#allocation2 + $0x27c] sm:$0xf]
        %v907 = vunpack.c.l.b16 %v715
        %v908 = vunpack.c.h.b16 %v715
        %v909 = vunpack.c.l.b16 %v716
        %v910 = vunpack.c.h.b16 %v716
        %v911 = vunpack.c.l.b16 %v717
        %v912 = vunpack.c.l.b16 %v718
        %v913 = vunpack.c.h.b16 %v718
        %v914 = vunpack.c.l.b16 %v719
        %v915 = vunpack.c.h.b16 %v719
        %v916 = vunpack.c.l.b16 %v720
        %v917 = vunpack.c.l.b16 %v721
        %v918 = vunpack.c.h.b16 %v721
        %v919 = vunpack.c.l.b16 %v722
        %v920 = vunpack.c.h.b16 %v722
        %v921 = vunpack.c.l.b16 %v723
        %v922 = vunpack.c.l.b16 %v724
        %v923 = vunpack.c.h.b16 %v724
        %v924 = vunpack.c.l.b16 %v725
        %v925 = vunpack.c.h.b16 %v725
        %v926 = vunpack.c.l.b16 %v726
        %v927 = vunpack.c.l.b16 %v727
        %v928 = vunpack.c.h.b16 %v727
        %v929 = vunpack.c.l.b16 %v728
        %v930 = vunpack.c.h.b16 %v728
        %v931 = vunpack.c.l.b16 %v729
        %v932 = vunpack.c.l.b16 %v730
        %v933 = vunpack.c.h.b16 %v730
        %v934 = vunpack.c.l.b16 %v731
        %v935 = vunpack.c.h.b16 %v731
        %v936 = vunpack.c.l.b16 %v732
        %v937 = vunpack.c.l.b16 %v733
        %v938 = vunpack.c.h.b16 %v733
        %v939 = vunpack.c.l.b16 %v734
        %v940 = vunpack.c.h.b16 %v734
        %v941 = vunpack.c.l.b16 %v735
        %v942 = vunpack.c.l.b16 %v736
        %v943 = vunpack.c.h.b16 %v736
        %v944 = vunpack.c.l.b16 %v737
        %v945 = vunpack.c.h.b16 %v737
        %v946 = vunpack.c.l.b16 %v738
        %v947 = vunpack.c.l.b16 %v739
        %v948 = vunpack.c.h.b16 %v739
        %v949 = vunpack.c.l.b16 %v740
        %v950 = vunpack.c.h.b16 %v740
        %v951 = vunpack.c.l.b16 %v741
        %v952 = vunpack.c.l.b16 %v742
        %v953 = vunpack.c.h.b16 %v742
        %v954 = vunpack.c.l.b16 %v743
        %v955 = vunpack.c.h.b16 %v743
        %v956 = vunpack.c.l.b16 %v744
        %v957 = vunpack.c.l.b16 %v745
        %v958 = vunpack.c.h.b16 %v745
        %v959 = vunpack.c.l.b16 %v746
        %v960 = vunpack.c.h.b16 %v746
        %v961 = vunpack.c.l.b16 %v747
        %v962 = vunpack.c.l.b16 %v748
        %v963 = vunpack.c.h.b16 %v748
        %v964 = vunpack.c.l.b16 %v749
        %v965 = vunpack.c.h.b16 %v749
        %v966 = vunpack.c.l.b16 %v750
        %v967 = vunpack.c.l.b16 %v751
        %v968 = vunpack.c.h.b16 %v751
        %v969 = vunpack.c.l.b16 %v752
        %v970 = vunpack.c.h.b16 %v752
        %v971 = vunpack.c.l.b16 %v753
        %v972 = vunpack.c.l.b16 %v754
        %v973 = vunpack.c.h.b16 %v754
        %v974 = vunpack.c.l.b16 %v755
        %v975 = vunpack.c.h.b16 %v755
        %v976 = vunpack.c.l.b16 %v756
        %v977 = vunpack.c.l.b16 %v757
        %v978 = vunpack.c.h.b16 %v757
        %v979 = vunpack.c.l.b16 %v758
        %v980 = vunpack.c.h.b16 %v758
        %v981 = vunpack.c.l.b16 %v759
        %v982 = vunpack.c.l.b16 %v760
        %v983 = vunpack.c.h.b16 %v760
        %v984 = vunpack.c.l.b16 %v761
        %v985 = vunpack.c.h.b16 %v761
        %v986 = vunpack.c.l.b16 %v762
        %v987 = vunpack.c.l.b16 %v763
        %v988 = vunpack.c.h.b16 %v763
        %v989 = vunpack.c.l.b16 %v764
        %v990 = vunpack.c.h.b16 %v764
        %v991 = vunpack.c.l.b16 %v765
        %v992 = vunpack.c.l.b16 %v766
        %v993 = vunpack.c.h.b16 %v766
        %v994 = vunpack.c.l.b16 %v767
        %v995 = vunpack.c.h.b16 %v767
        %v996 = vunpack.c.l.b16 %v768
        %v997 = vunpack.c.l.b16 %v769
        %v998 = vunpack.c.h.b16 %v769
        %v999 = vunpack.c.l.b16 %v770
        %v1000 = vunpack.c.h.b16 %v770
        %v1001 = vunpack.c.l.b16 %v771
        %v1002 = vunpack.c.l.b16 %v772
        %v1003 = vunpack.c.h.b16 %v772
        %v1004 = vunpack.c.l.b16 %v773
        %v1005 = vunpack.c.h.b16 %v773
        %v1006 = vunpack.c.l.b16 %v774
        %v1007 = vunpack.c.l.b16 %v775
        %v1008 = vunpack.c.h.b16 %v775
        %v1009 = vunpack.c.l.b16 %v776
        %v1010 = vunpack.c.h.b16 %v776
        %v1011 = vunpack.c.l.b16 %v777
        %v1012 = vunpack.c.l.b16 %v778
        %v1013 = vunpack.c.h.b16 %v778
        %v1014 = vunpack.c.l.b16 %v779
        %v1015 = vunpack.c.h.b16 %v779
        %v1016 = vunpack.c.l.b16 %v780
        %v1017 = vunpack.c.l.b16 %v781
        %v1018 = vunpack.c.h.b16 %v781
        %v1019 = vunpack.c.l.b16 %v782
        %v1020 = vunpack.c.h.b16 %v782
        %v1021 = vunpack.c.l.b16 %v783
        %v1022 = vunpack.c.l.b16 %v784
        %v1023 = vunpack.c.h.b16 %v784
        %v1024 = vunpack.c.l.b16 %v785
        %v1025 = vunpack.c.h.b16 %v785
        %v1026 = vunpack.c.l.b16 %v786
        %v1027 = vunpack.c.l.b16 %v787
        %v1028 = vunpack.c.h.b16 %v787
        %v1029 = vunpack.c.l.b16 %v788
        %v1030 = vunpack.c.h.b16 %v788
        %v1031 = vunpack.c.l.b16 %v789
        %v1032 = vunpack.c.l.b16 %v790
        %v1033 = vunpack.c.h.b16 %v790
        %v1034 = vunpack.c.l.b16 %v791
        %v1035 = vunpack.c.h.b16 %v791
        %v1036 = vunpack.c.l.b16 %v792
        %v1037 = vunpack.c.l.b16 %v793
        %v1038 = vunpack.c.h.b16 %v793
        %v1039 = vunpack.c.l.b16 %v794
        %v1040 = vunpack.c.h.b16 %v794
        %v1041 = vunpack.c.l.b16 %v795
        %v1042 = vunpack.c.l.b16 %v796
        %v1043 = vunpack.c.h.b16 %v796
        %v1044 = vunpack.c.l.b16 %v797
        %v1045 = vunpack.c.h.b16 %v797
        %v1046 = vunpack.c.l.b16 %v798
        %v1047 = vunpack.c.l.b16 %v799
        %v1048 = vunpack.c.h.b16 %v799
        %v1049 = vunpack.c.l.b16 %v800
        %v1050 = vunpack.c.h.b16 %v800
        %v1051 = vunpack.c.l.b16 %v801
        %v1052 = vunpack.c.l.b16 %v802
        %v1053 = vunpack.c.h.b16 %v802
        %v1054 = vunpack.c.l.b16 %v803
        %v1055 = vunpack.c.h.b16 %v803
        %v1056 = vunpack.c.l.b16 %v804
        %v1057 = vunpack.c.l.b16 %v805
        %v1058 = vunpack.c.h.b16 %v805
        %v1059 = vunpack.c.l.b16 %v806
        %v1060 = vunpack.c.h.b16 %v806
        %v1061 = vunpack.c.l.b16 %v807
        %v1062 = vunpack.c.l.b16 %v808
        %v1063 = vunpack.c.h.b16 %v808
        %v1064 = vunpack.c.l.b16 %v809
        %v1065 = vunpack.c.h.b16 %v809
        %v1066 = vunpack.c.l.b16 %v810
        %v1067 = vpack.c.b16 %v912, %v907
        %v1068 = vpack.c.b16 %v913, %v908
        %v1069 = vpack.c.b16 %v914, %v909
        %v1070 = vpack.c.b16 %v915, %v910
        %v1071 = vpack.c.b16 %v916, %v911
        %v1072 = vpack.c.b16 %v922, %v917
        %v1073 = vpack.c.b16 %v923, %v918
        %v1074 = vpack.c.b16 %v924, %v919
        %v1075 = vpack.c.b16 %v925, %v920
        %v1076 = vpack.c.b16 %v926, %v921
        %v1077 = vpack.c.b16 %v932, %v927
        %v1078 = vpack.c.b16 %v933, %v928
        %v1079 = vpack.c.b16 %v934, %v929
        %v1080 = vpack.c.b16 %v935, %v930
        %v1081 = vpack.c.b16 %v936, %v931
        %v1082 = vpack.c.b16 %v942, %v937
        %v1083 = vpack.c.b16 %v943, %v938
        %v1084 = vpack.c.b16 %v944, %v939
        %v1085 = vpack.c.b16 %v945, %v940
        %v1086 = vpack.c.b16 %v946, %v941
        %v1087 = vpack.c.b16 %v952, %v947
        %v1088 = vpack.c.b16 %v953, %v948
        %v1089 = vpack.c.b16 %v954, %v949
        %v1090 = vpack.c.b16 %v955, %v950
        %v1091 = vpack.c.b16 %v956, %v951
        %v1092 = vpack.c.b16 %v962, %v957
        %v1093 = vpack.c.b16 %v963, %v958
        %v1094 = vpack.c.b16 %v964, %v959
        %v1095 = vpack.c.b16 %v965, %v960
        %v1096 = vpack.c.b16 %v966, %v961
        %v1097 = vpack.c.b16 %v972, %v967
        %v1098 = vpack.c.b16 %v973, %v968
        %v1099 = vpack.c.b16 %v974, %v969
        %v1100 = vpack.c.b16 %v975, %v970
        %v1101 = vpack.c.b16 %v976, %v971
        %v1102 = vpack.c.b16 %v982, %v977
        %v1103 = vpack.c.b16 %v983, %v978
        %v1104 = vpack.c.b16 %v984, %v979
        %v1105 = vpack.c.b16 %v985, %v980
        %v1106 = vpack.c.b16 %v986, %v981
        %v1107 = vpack.c.b16 %v992, %v987
        %v1108 = vpack.c.b16 %v993, %v988
        %v1109 = vpack.c.b16 %v994, %v989
        %v1110 = vpack.c.b16 %v995, %v990
        %v1111 = vpack.c.b16 %v996, %v991
        %v1112 = vpack.c.b16 %v1002, %v997
        %v1113 = vpack.c.b16 %v1003, %v998
        %v1114 = vpack.c.b16 %v1004, %v999
        %v1115 = vpack.c.b16 %v1005, %v1000
        %v1116 = vpack.c.b16 %v1006, %v1001
        %v1117 = vpack.c.b16 %v1012, %v1007
        %v1118 = vpack.c.b16 %v1013, %v1008
        %v1119 = vpack.c.b16 %v1014, %v1009
        %v1120 = vpack.c.b16 %v1015, %v1010
        %v1121 = vpack.c.b16 %v1016, %v1011
        %v1122 = vpack.c.b16 %v1022, %v1017
        %v1123 = vpack.c.b16 %v1023, %v1018
        %v1124 = vpack.c.b16 %v1024, %v1019
        %v1125 = vpack.c.b16 %v1025, %v1020
        %v1126 = vpack.c.b16 %v1026, %v1021
        %v1127 = vpack.c.b16 %v1032, %v1027
        %v1128 = vpack.c.b16 %v1033, %v1028
        %v1129 = vpack.c.b16 %v1034, %v1029
        %v1130 = vpack.c.b16 %v1035, %v1030
        %v1131 = vpack.c.b16 %v1036, %v1031
        %v1132 = vpack.c.b16 %v1042, %v1037
        %v1133 = vpack.c.b16 %v1043, %v1038
        %v1134 = vpack.c.b16 %v1044, %v1039
        %v1135 = vpack.c.b16 %v1045, %v1040
        %v1136 = vpack.c.b16 %v1046, %v1041
        %v1137 = vpack.c.b16 %v1052, %v1047
        %v1138 = vpack.c.b16 %v1053, %v1048
        %v1139 = vpack.c.b16 %v1054, %v1049
        %v1140 = vpack.c.b16 %v1055, %v1050
        %v1141 = vpack.c.b16 %v1056, %v1051
        %v1142 = vpack.c.b16 %v1062, %v1057
        %v1143 = vpack.c.b16 %v1063, %v1058
        %v1144 = vpack.c.b16 %v1064, %v1059
        %v1145 = vpack.c.b16 %v1065, %v1060
        %v1146 = vpack.c.b16 %v1066, %v1061
        %1227 = vmatprep.subr.bf16.mxu0 %v1068
        %1228 = vmatpush1.bf16.msra.mxu0 %v1067
        %1229 = vmatprep.subr.bf16.mxu0 %v1073
        %1230 = vmatpush1.bf16.msra.mxu0 %v1072
        %1231 = vmatprep.subr.bf16.mxu0 %v1078
        %1232 = vmatpush1.bf16.msra.mxu0 %v1077
        %1233 = vmatprep.subr.bf16.mxu0 %v1083
        %1234 = vmatpush1.bf16.msra.mxu0 %v1082
        %1235 = vmatprep.subr.bf16.mxu0 %v1088
        %1236 = vmatpush1.bf16.msra.mxu0 %v1087
        %1237 = vmatprep.subr.bf16.mxu0 %v1093
        %1238 = vmatpush1.bf16.msra.mxu0 %v1092
        %1239 = vmatprep.subr.bf16.mxu0 %v1098
        %1240 = vmatpush1.bf16.msra.mxu0 %v1097
        %1241 = vmatprep.subr.bf16.mxu0 %v1103
        %1242 = vmatpush1.bf16.msra.mxu0 %v1102
        %1243 = vmatprep.subr.bf16.mxu0 %v1108
        %1244 = vmatpush1.bf16.msra.mxu0 %v1107
        %1245 = vmatprep.subr.bf16.mxu0 %v1113
        %1246 = vmatpush1.bf16.msra.mxu0 %v1112
        %1247 = vmatprep.subr.bf16.mxu0 %v1118
        %1248 = vmatpush1.bf16.msra.mxu0 %v1117
        %1249 = vmatprep.subr.bf16.mxu0 %v1123
        %1250 = vmatpush1.bf16.msra.mxu0 %v1122
        %1251 = vmatprep.subr.bf16.mxu0 %v1128
        %1252 = vmatpush1.bf16.msra.mxu0 %v1127
        %1253 = vmatprep.subr.bf16.mxu0 %v1133
        %1254 = vmatpush1.bf16.msra.mxu0 %v1132
        %1255 = vmatprep.subr.bf16.mxu0 %v1138
        %1256 = vmatpush1.bf16.msra.mxu0 %v1137
        %1257 = vmatprep.subr.bf16.mxu0 %v1143
        %1258 = vmatpush1.bf16.msra.mxu0 %v1142
        %1259 = vmatprep.mubr.bf16.mxu0 %v684
        %1260 = vmatmul.mubr.bf16.gmra.mrb[0].mxu0 %v683
        %v1261 = vpop.f32.mrb[0].mxu0
        %v1262 = vadd.f32 0.0, %v1261
        %v1263 = vpop.f32.mrb[0].mxu0
        %v1264 = vadd.f32 0.0, %v1263
        %v1265 = vpop.f32.mrb[0].mxu0
        %v1266 = vadd.f32 0.0, %v1265
        %v1267 = vpop.f32.mrb[0].mxu0
        %v1268 = vadd.f32 0.0, %v1267
        %1269 = vmatprep.mubr.bf16.mxu0 %v686
        %1270 = vmatmul.mubr.bf16.gmra.mrb[0].mxu0 %v685
        %v1271 = vpop.f32.mrb[0].mxu0
        %v1272 = vadd.f32 0.0, %v1271
        %v1273 = vpop.f32.mrb[0].mxu0
        %v1274 = vadd.f32 0.0, %v1273
        %v1275 = vpop.f32.mrb[0].mxu0
        %v1276 = vadd.f32 0.0, %v1275
        %v1277 = vpop.f32.mrb[0].mxu0
        %v1278 = vadd.f32 0.0, %v1277
        %1279 = vmatprep.mubr.bf16.mxu0 %v688
        %1280 = vmatmul.mubr.bf16.gmra.mrb[0].mxu0 %v687
        %v1281 = vpop.f32.mrb[0].mxu0
        %v1282 = vadd.f32 0.0, %v1281
        %v1283 = vpop.f32.mrb[0].mxu0
        %v1284 = vadd.f32 0.0, %v1283
        %v1285 = vpop.f32.mrb[0].mxu0
        %v1286 = vadd.f32 0.0, %v1285
        %v1287 = vpop.f32.mrb[0].mxu0
        %v1288 = vadd.f32 0.0, %v1287
        %1289 = vmatprep.mubr.bf16.mxu0 %v690
        %1290 = vmatmul.mubr.bf16.gmra.mrb[0].mxu0 %v689
        %v1291 = vpop.f32.mrb[0].mxu0
        %v1292 = vadd.f32 0.0, %v1291
        %v1293 = vpop.f32.mrb[0].mxu0
        %v1294 = vadd.f32 0.0, %v1293
        %v1295 = vpop.f32.mrb[0].mxu0
        %v1296 = vadd.f32 0.0, %v1295
        %v1297 = vpop.f32.mrb[0].mxu0
        %v1298 = vadd.f32 0.0, %v1297
        %1299 = vmatprep.mubr.bf16.mxu0 %v692
        %1300 = vmatmul.mubr.bf16.gmra.mrb[0].mxu0 %v691
        %v1301 = vpop.f32.mrb[0].mxu0
        %v1302 = vadd.f32 0.0, %v1301
        %v1303 = vpop.f32.mrb[0].mxu0
        %v1304 = vadd.f32 0.0, %v1303
        %v1305 = vpop.f32.mrb[0].mxu0
        %v1306 = vadd.f32 0.0, %v1305
        %v1307 = vpop.f32.mrb[0].mxu0
        %v1308 = vadd.f32 0.0, %v1307
        %1309 = vmatprep.mubr.bf16.mxu0 %v694
        %1310 = vmatmul.mubr.bf16.gmra.mrb[0].mxu0 %v693
        %v1311 = vpop.f32.mrb[0].mxu0
        %v1312 = vadd.f32 0.0, %v1311
        %v1313 = vpop.f32.mrb[0].mxu0
        %v1314 = vadd.f32 0.0, %v1313
        %v1315 = vpop.f32.mrb[0].mxu0
        %v1316 = vadd.f32 0.0, %v1315
        %v1317 = vpop.f32.mrb[0].mxu0
        %v1318 = vadd.f32 0.0, %v1317
        %1319 = vmatprep.mubr.bf16.mxu0 %v696
        %1320 = vmatmul.mubr.bf16.gmra.mrb[0].mxu0 %v695
        %v1321 = vpop.f32.mrb[0].mxu0
        %v1322 = vadd.f32 0.0, %v1321
        %v1323 = vpop.f32.mrb[0].mxu0
        %v1324 = vadd.f32 0.0, %v1323
        %v1325 = vpop.f32.mrb[0].mxu0
        %v1326 = vadd.f32 0.0, %v1325
        %v1327 = vpop.f32.mrb[0].mxu0
        %v1328 = vadd.f32 0.0, %v1327
        %1329 = vmatprep.mubr.bf16.mxu0 %v698
        %1330 = vmatmul.mubr.bf16.gmra.mrb[0].mxu0 %v697
        %v1331 = vpop.f32.mrb[0].mxu0
        %v1332 = vadd.f32 0.0, %v1331
        %v1333 = vpop.f32.mrb[0].mxu0
        %v1334 = vadd.f32 0.0, %v1333
        %v1335 = vpop.f32.mrb[0].mxu0
        %v1336 = vadd.f32 0.0, %v1335
        %v1337 = vpop.f32.mrb[0].mxu0
        %v1338 = vadd.f32 0.0, %v1337
        %1339 = vmatprep.mubr.bf16.mxu0 %v700
        %1340 = vmatmul.mubr.bf16.gmra.mrb[0].mxu0 %v699
        %v1341 = vpop.f32.mrb[0].mxu0
        %v1342 = vadd.f32 0.0, %v1341
        %v1343 = vpop.f32.mrb[0].mxu0
        %v1344 = vadd.f32 0.0, %v1343
        %v1345 = vpop.f32.mrb[0].mxu0
        %v1346 = vadd.f32 0.0, %v1345
        %v1347 = vpop.f32.mrb[0].mxu0
        %v1348 = vadd.f32 0.0, %v1347
        %1349 = vmatprep.mubr.bf16.mxu0 %v702
        %1350 = vmatmul.mubr.bf16.gmra.mrb[0].mxu0 %v701
        %v1351 = vpop.f32.mrb[0].mxu0
        %v1352 = vadd.f32 0.0, %v1351
        %v1353 = vpop.f32.mrb[0].mxu0
        %v1354 = vadd.f32 0.0, %v1353
        %v1355 = vpop.f32.mrb[0].mxu0
        %v1356 = vadd.f32 0.0, %v1355
        %v1357 = vpop.f32.mrb[0].mxu0
        %v1358 = vadd.f32 0.0, %v1357
        %1359 = vmatprep.mubr.bf16.mxu0 %v704
        %1360 = vmatmul.mubr.bf16.gmra.mrb[0].mxu0 %v703
        %v1361 = vpop.f32.mrb[0].mxu0
        %v1362 = vadd.f32 0.0, %v1361
        %v1363 = vpop.f32.mrb[0].mxu0
        %v1364 = vadd.f32 0.0, %v1363
        %v1365 = vpop.f32.mrb[0].mxu0
        %v1366 = vadd.f32 0.0, %v1365
        %v1367 = vpop.f32.mrb[0].mxu0
        %v1368 = vadd.f32 0.0, %v1367
        %1369 = vmatprep.mubr.bf16.mxu0 %v706
        %1370 = vmatmul.mubr.bf16.gmra.mrb[0].mxu0 %v705
        %v1371 = vpop.f32.mrb[0].mxu0
        %v1372 = vadd.f32 0.0, %v1371
        %v1373 = vpop.f32.mrb[0].mxu0
        %v1374 = vadd.f32 0.0, %v1373
        %v1375 = vpop.f32.mrb[0].mxu0
        %v1376 = vadd.f32 0.0, %v1375
        %v1377 = vpop.f32.mrb[0].mxu0
        %v1378 = vadd.f32 0.0, %v1377
        %1379 = vmatprep.mubr.bf16.mxu0 %v708
        %1380 = vmatmul.mubr.bf16.gmra.mrb[0].mxu0 %v707
        %v1381 = vpop.f32.mrb[0].mxu0
        %v1382 = vadd.f32 0.0, %v1381
        %v1383 = vpop.f32.mrb[0].mxu0
        %v1384 = vadd.f32 0.0, %v1383
        %v1385 = vpop.f32.mrb[0].mxu0
        %v1386 = vadd.f32 0.0, %v1385
        %v1387 = vpop.f32.mrb[0].mxu0
        %v1388 = vadd.f32 0.0, %v1387
        %1389 = vmatprep.mubr.bf16.mxu0 %v710
        %1390 = vmatmul.mubr.bf16.gmra.mrb[0].mxu0 %v709
        %v1391 = vpop.f32.mrb[0].mxu0
        %v1392 = vadd.f32 0.0, %v1391
        %v1393 = vpop.f32.mrb[0].mxu0
        %v1394 = vadd.f32 0.0, %v1393
        %v1395 = vpop.f32.mrb[0].mxu0
        %v1396 = vadd.f32 0.0, %v1395
        %v1397 = vpop.f32.mrb[0].mxu0
        %v1398 = vadd.f32 0.0, %v1397
        %1399 = vmatprep.mubr.bf16.mxu0 %v712
        %1400 = vmatmul.mubr.bf16.gmra.mrb[0].mxu0 %v711
        %v1401 = vpop.f32.mrb[0].mxu0
        %v1402 = vadd.f32 0.0, %v1401
        %v1403 = vpop.f32.mrb[0].mxu0
        %v1404 = vadd.f32 0.0, %v1403
        %v1405 = vpop.f32.mrb[0].mxu0
        %v1406 = vadd.f32 0.0, %v1405
        %v1407 = vpop.f32.mrb[0].mxu0
        %v1408 = vadd.f32 0.0, %v1407
        %1409 = vmatprep.mubr.bf16.mxu0 %v714
        %1410 = vmatmul.mubr.bf16.gmra.mrb[0].mxu0 %v713
        %v1411 = vpop.f32.mrb[0].mxu0
        %v1412 = vadd.f32 0.0, %v1411
        %v1413 = vpop.f32.mrb[0].mxu0
        %v1414 = vadd.f32 0.0, %v1413
        %v1415 = vpop.f32.mrb[0].mxu0
        %v1416 = vadd.f32 0.0, %v1415
        %v1417 = vpop.f32.mrb[0].mxu0
        %v1418 = vadd.f32 0.0, %v1417
        %1419 = vdwg.mxu0
        %1420 = vmatprep.subr.bf16.mxu0 %v1070
        %1421 = vmatpush1.bf16.msra.mxu0 %v1069
        %1422 = vmatprep.subr.bf16.mxu0 %v1075
        %1423 = vmatpush1.bf16.msra.mxu0 %v1074
        %1424 = vmatprep.subr.bf16.mxu0 %v1080
        %1425 = vmatpush1.bf16.msra.mxu0 %v1079
        %1426 = vmatprep.subr.bf16.mxu0 %v1085
        %1427 = vmatpush1.bf16.msra.mxu0 %v1084
        %1428 = vmatprep.subr.bf16.mxu0 %v1090
        %1429 = vmatpush1.bf16.msra.mxu0 %v1089
        %1430 = vmatprep.subr.bf16.mxu0 %v1095
        %1431 = vmatpush1.bf16.msra.mxu0 %v1094
        %1432 = vmatprep.subr.bf16.mxu0 %v1100
        %1433 = vmatpush1.bf16.msra.mxu0 %v1099
        %1434 = vmatprep.subr.bf16.mxu0 %v1105
        %1435 = vmatpush1.bf16.msra.mxu0 %v1104
        %1436 = vmatprep.subr.bf16.mxu0 %v1110
        %1437 = vmatpush1.bf16.msra.mxu0 %v1109
        %1438 = vmatprep.subr.bf16.mxu0 %v1115
        %1439 = vmatpush1.bf16.msra.mxu0 %v1114
        %1440 = vmatprep.subr.bf16.mxu0 %v1120
        %1441 = vmatpush1.bf16.msra.mxu0 %v1119
        %1442 = vmatprep.subr.bf16.mxu0 %v1125
        %1443 = vmatpush1.bf16.msra.mxu0 %v1124
        %1444 = vmatprep.subr.bf16.mxu0 %v1130
        %1445 = vmatpush1.bf16.msra.mxu0 %v1129
        %1446 = vmatprep.subr.bf16.mxu0 %v1135
        %1447 = vmatpush1.bf16.msra.mxu0 %v1134
        %1448 = vmatprep.subr.bf16.mxu0 %v1140
        %1449 = vmatpush1.bf16.msra.mxu0 %v1139
        %1450 = vmatprep.subr.bf16.mxu0 %v1145
        %1451 = vmatpush1.bf16.msra.mxu0 %v1144
        %1452 = vmatprep.mubr.bf16.mxu0 %v684
        %1453 = vmatmul.mubr.bf16.gmra.mrb[0].mxu0 %v683
        %v1454 = vpop.f32.mrb[0].mxu0
        %v1455 = vadd.f32 0.0, %v1454
        %v1456 = vpop.f32.mrb[0].mxu0
        %v1457 = vadd.f32 0.0, %v1456
        %v1458 = vpop.f32.mrb[0].mxu0
        %v1459 = vadd.f32 0.0, %v1458
        %v1460 = vpop.f32.mrb[0].mxu0
        %v1461 = vadd.f32 0.0, %v1460
        %1462 = vmatprep.mubr.bf16.mxu0 %v686
        %1463 = vmatmul.mubr.bf16.gmra.mrb[0].mxu0 %v685
        %v1464 = vpop.f32.mrb[0].mxu0
        %v1465 = vadd.f32 0.0, %v1464
        %v1466 = vpop.f32.mrb[0].mxu0
        %v1467 = vadd.f32 0.0, %v1466
        %v1468 = vpop.f32.mrb[0].mxu0
        %v1469 = vadd.f32 0.0, %v1468
        %v1470 = vpop.f32.mrb[0].mxu0
        %v1471 = vadd.f32 0.0, %v1470
        %1472 = vmatprep.mubr.bf16.mxu0 %v688
        %1473 = vmatmul.mubr.bf16.gmra.mrb[0].mxu0 %v687
        %v1474 = vpop.f32.mrb[0].mxu0
        %v1475 = vadd.f32 0.0, %v1474
        %v1476 = vpop.f32.mrb[0].mxu0
        %v1477 = vadd.f32 0.0, %v1476
        %v1478 = vpop.f32.mrb[0].mxu0
        %v1479 = vadd.f32 0.0, %v1478
        %v1480 = vpop.f32.mrb[0].mxu0
        %v1481 = vadd.f32 0.0, %v1480
        %1482 = vmatprep.mubr.bf16.mxu0 %v690
        %1483 = vmatmul.mubr.bf16.gmra.mrb[0].mxu0 %v689
        %v1484 = vpop.f32.mrb[0].mxu0
        %v1485 = vadd.f32 0.0, %v1484
        %v1486 = vpop.f32.mrb[0].mxu0
        %v1487 = vadd.f32 0.0, %v1486
        %v1488 = vpop.f32.mrb[0].mxu0
        %v1489 = vadd.f32 0.0, %v1488
        %v1490 = vpop.f32.mrb[0].mxu0
        %v1491 = vadd.f32 0.0, %v1490
        %1492 = vmatprep.mubr.bf16.mxu0 %v692
        %1493 = vmatmul.mubr.bf16.gmra.mrb[0].mxu0 %v691
        %v1494 = vpop.f32.mrb[0].mxu0
        %v1495 = vadd.f32 0.0, %v1494
        %v1496 = vpop.f32.mrb[0].mxu0
        %v1497 = vadd.f32 0.0, %v1496
        %v1498 = vpop.f32.mrb[0].mxu0
        %v1499 = vadd.f32 0.0, %v1498
        %v1500 = vpop.f32.mrb[0].mxu0
        %v1501 = vadd.f32 0.0, %v1500
        %1502 = vmatprep.mubr.bf16.mxu0 %v694
        %1503 = vmatmul.mubr.bf16.gmra.mrb[0].mxu0 %v693
        %v1504 = vpop.f32.mrb[0].mxu0
        %v1505 = vadd.f32 0.0, %v1504
        %v1506 = vpop.f32.mrb[0].mxu0
        %v1507 = vadd.f32 0.0, %v1506
        %v1508 = vpop.f32.mrb[0].mxu0
        %v1509 = vadd.f32 0.0, %v1508
        %v1510 = vpop.f32.mrb[0].mxu0
        %v1511 = vadd.f32 0.0, %v1510
        %1512 = vmatprep.mubr.bf16.mxu0 %v696
        %1513 = vmatmul.mubr.bf16.gmra.mrb[0].mxu0 %v695
        %v1514 = vpop.f32.mrb[0].mxu0
        %v1515 = vadd.f32 0.0, %v1514
        %v1516 = vpop.f32.mrb[0].mxu0
        %v1517 = vadd.f32 0.0, %v1516
        %v1518 = vpop.f32.mrb[0].mxu0
        %v1519 = vadd.f32 0.0, %v1518
        %v1520 = vpop.f32.mrb[0].mxu0
        %v1521 = vadd.f32 0.0, %v1520
        %1522 = vmatprep.mubr.bf16.mxu0 %v698
        %1523 = vmatmul.mubr.bf16.gmra.mrb[0].mxu0 %v697
        %v1524 = vpop.f32.mrb[0].mxu0
        %v1525 = vadd.f32 0.0, %v1524
        %v1526 = vpop.f32.mrb[0].mxu0
        %v1527 = vadd.f32 0.0, %v1526
        %v1528 = vpop.f32.mrb[0].mxu0
        %v1529 = vadd.f32 0.0, %v1528
        %v1530 = vpop.f32.mrb[0].mxu0
        %v1531 = vadd.f32 0.0, %v1530
        %1532 = vmatprep.mubr.bf16.mxu0 %v700
        %1533 = vmatmul.mubr.bf16.gmra.mrb[0].mxu0 %v699
        %v1534 = vpop.f32.mrb[0].mxu0
        %v1535 = vadd.f32 0.0, %v1534
        %v1536 = vpop.f32.mrb[0].mxu0
        %v1537 = vadd.f32 0.0, %v1536
        %v1538 = vpop.f32.mrb[0].mxu0
        %v1539 = vadd.f32 0.0, %v1538
        %v1540 = vpop.f32.mrb[0].mxu0
        %v1541 = vadd.f32 0.0, %v1540
        %1542 = vmatprep.mubr.bf16.mxu0 %v702
        %1543 = vmatmul.mubr.bf16.gmra.mrb[0].mxu0 %v701
        %v1544 = vpop.f32.mrb[0].mxu0
        %v1545 = vadd.f32 0.0, %v1544
        %v1546 = vpop.f32.mrb[0].mxu0
        %v1547 = vadd.f32 0.0, %v1546
        %v1548 = vpop.f32.mrb[0].mxu0
        %v1549 = vadd.f32 0.0, %v1548
        %v1550 = vpop.f32.mrb[0].mxu0
        %v1551 = vadd.f32 0.0, %v1550
        %1552 = vmatprep.mubr.bf16.mxu0 %v704
        %1553 = vmatmul.mubr.bf16.gmra.mrb[0].mxu0 %v703
        %v1554 = vpop.f32.mrb[0].mxu0
        %v1555 = vadd.f32 0.0, %v1554
        %v1556 = vpop.f32.mrb[0].mxu0
        %v1557 = vadd.f32 0.0, %v1556
        %v1558 = vpop.f32.mrb[0].mxu0
        %v1559 = vadd.f32 0.0, %v1558
        %v1560 = vpop.f32.mrb[0].mxu0
        %v1561 = vadd.f32 0.0, %v1560
        %1562 = vmatprep.mubr.bf16.mxu0 %v706
        %1563 = vmatmul.mubr.bf16.gmra.mrb[0].mxu0 %v705
        %v1564 = vpop.f32.mrb[0].mxu0
        %v1565 = vadd.f32 0.0, %v1564
        %v1566 = vpop.f32.mrb[0].mxu0
        %v1567 = vadd.f32 0.0, %v1566
        %v1568 = vpop.f32.mrb[0].mxu0
        %v1569 = vadd.f32 0.0, %v1568
        %v1570 = vpop.f32.mrb[0].mxu0
        %v1571 = vadd.f32 0.0, %v1570
        %1572 = vmatprep.mubr.bf16.mxu0 %v708
        %1573 = vmatmul.mubr.bf16.gmra.mrb[0].mxu0 %v707
        %v1574 = vpop.f32.mrb[0].mxu0
        %v1575 = vadd.f32 0.0, %v1574
        %v1576 = vpop.f32.mrb[0].mxu0
        %v1577 = vadd.f32 0.0, %v1576
        %v1578 = vpop.f32.mrb[0].mxu0
        %v1579 = vadd.f32 0.0, %v1578
        %v1580 = vpop.f32.mrb[0].mxu0
        %v1581 = vadd.f32 0.0, %v1580
        %1582 = vmatprep.mubr.bf16.mxu0 %v710
        %1583 = vmatmul.mubr.bf16.gmra.mrb[0].mxu0 %v709
        %v1584 = vpop.f32.mrb[0].mxu0
        %v1585 = vadd.f32 0.0, %v1584
        %v1586 = vpop.f32.mrb[0].mxu0
        %v1587 = vadd.f32 0.0, %v1586
        %v1588 = vpop.f32.mrb[0].mxu0
        %v1589 = vadd.f32 0.0, %v1588
        %v1590 = vpop.f32.mrb[0].mxu0
        %v1591 = vadd.f32 0.0, %v1590
        %1592 = vmatprep.mubr.bf16.mxu0 %v712
        %1593 = vmatmul.mubr.bf16.gmra.mrb[0].mxu0 %v711
        %v1594 = vpop.f32.mrb[0].mxu0
        %v1595 = vadd.f32 0.0, %v1594
        %v1596 = vpop.f32.mrb[0].mxu0
        %v1597 = vadd.f32 0.0, %v1596
        %v1598 = vpop.f32.mrb[0].mxu0
        %v1599 = vadd.f32 0.0, %v1598
        %v1600 = vpop.f32.mrb[0].mxu0
        %v1601 = vadd.f32 0.0, %v1600
        %1602 = vmatprep.mubr.bf16.mxu0 %v714
        %1603 = vmatmul.mubr.bf16.gmra.mrb[0].mxu0 %v713
        %v1604 = vpop.f32.mrb[0].mxu0
        %v1605 = vadd.f32 0.0, %v1604
        %v1606 = vpop.f32.mrb[0].mxu0
        %v1607 = vadd.f32 0.0, %v1606
        %v1608 = vpop.f32.mrb[0].mxu0
        %v1609 = vadd.f32 0.0, %v1608
        %v1610 = vpop.f32.mrb[0].mxu0
        %v1611 = vadd.f32 0.0, %v1610
        %1612 = vdwg.mxu0
        %1613 = vmatprep.subr.bf16.mxu0 0
        %1614 = vmatpush1.bf16.msra.mxu0 %v1071
        %1615 = vmatprep.subr.bf16.mxu0 0
        %1616 = vmatpush1.bf16.msra.mxu0 %v1076
        %1617 = vmatprep.subr.bf16.mxu0 0
        %1618 = vmatpush1.bf16.msra.mxu0 %v1081
        %1619 = vmatprep.subr.bf16.mxu0 0
        %1620 = vmatpush1.bf16.msra.mxu0 %v1086
        %1621 = vmatprep.subr.bf16.mxu0 0
        %1622 = vmatpush1.bf16.msra.mxu0 %v1091
        %1623 = vmatprep.subr.bf16.mxu0 0
        %1624 = vmatpush1.bf16.msra.mxu0 %v1096
        %1625 = vmatprep.subr.bf16.mxu0 0
        %1626 = vmatpush1.bf16.msra.mxu0 %v1101
        %1627 = vmatprep.subr.bf16.mxu0 0
        %1628 = vmatpush1.bf16.msra.mxu0 %v1106
        %1629 = vmatprep.subr.bf16.mxu0 0
        %1630 = vmatpush1.bf16.msra.mxu0 %v1111
        %1631 = vmatprep.subr.bf16.mxu0 0
        %1632 = vmatpush1.bf16.msra.mxu0 %v1116
        %1633 = vmatprep.subr.bf16.mxu0 0
        %1634 = vmatpush1.bf16.msra.mxu0 %v1121
        %1635 = vmatprep.subr.bf16.mxu0 0
        %1636 = vmatpush1.bf16.msra.mxu0 %v1126
        %1637 = vmatprep.subr.bf16.mxu0 0
        %1638 = vmatpush1.bf16.msra.mxu0 %v1131
        %1639 = vmatprep.subr.bf16.mxu0 0
        %1640 = vmatpush1.bf16.msra.mxu0 %v1136
        %1641 = vmatprep.subr.bf16.mxu0 0
        %1642 = vmatpush1.bf16.msra.mxu0 %v1141
        %1643 = vmatprep.subr.bf16.mxu0 0
        %1644 = vmatpush1.bf16.msra.mxu0 %v1146
        %1645 = vmatprep.mubr.bf16.mxu0 %v684
        %1646 = vmatmul.mubr.bf16.gmra.mrb[0].mxu0 %v683
        %v1647 = vpop.f32.mrb[0].mxu0
        %v1648 = vadd.f32 0.0, %v1647
        %v1649 = vpop.f32.mrb[0].mxu0
        %v1650 = vpop.f32.mrb[0].mxu0
        %v1651 = vadd.f32 0.0, %v1650
        %v1652 = vpop.f32.mrb[0].mxu0
        %1653 = vmatprep.mubr.bf16.mxu0 %v686
        %1654 = vmatmul.mubr.bf16.gmra.mrb[0].mxu0 %v685
        %v1655 = vpop.f32.mrb[0].mxu0
        %v1656 = vadd.f32 0.0, %v1655
        %v1657 = vpop.f32.mrb[0].mxu0
        %v1658 = vpop.f32.mrb[0].mxu0
        %v1659 = vadd.f32 0.0, %v1658
        %v1660 = vpop.f32.mrb[0].mxu0
        %1661 = vmatprep.mubr.bf16.mxu0 %v688
        %1662 = vmatmul.mubr.bf16.gmra.mrb[0].mxu0 %v687
        %v1663 = vpop.f32.mrb[0].mxu0
        %v1664 = vadd.f32 0.0, %v1663
        %v1665 = vpop.f32.mrb[0].mxu0
        %v1666 = vpop.f32.mrb[0].mxu0
        %v1667 = vadd.f32 0.0, %v1666
        %v1668 = vpop.f32.mrb[0].mxu0
        %1669 = vmatprep.mubr.bf16.mxu0 %v690
        %1670 = vmatmul.mubr.bf16.gmra.mrb[0].mxu0 %v689
        %v1671 = vpop.f32.mrb[0].mxu0
        %v1672 = vadd.f32 0.0, %v1671
        %v1673 = vpop.f32.mrb[0].mxu0
        %v1674 = vpop.f32.mrb[0].mxu0
        %v1675 = vadd.f32 0.0, %v1674
        %v1676 = vpop.f32.mrb[0].mxu0
        %1677 = vmatprep.mubr.bf16.mxu0 %v692
        %1678 = vmatmul.mubr.bf16.gmra.mrb[0].mxu0 %v691
        %v1679 = vpop.f32.mrb[0].mxu0
        %v1680 = vadd.f32 0.0, %v1679
        %v1681 = vpop.f32.mrb[0].mxu0
        %v1682 = vpop.f32.mrb[0].mxu0
        %v1683 = vadd.f32 0.0, %v1682
        %v1684 = vpop.f32.mrb[0].mxu0
        %1685 = vmatprep.mubr.bf16.mxu0 %v694
        %1686 = vmatmul.mubr.bf16.gmra.mrb[0].mxu0 %v693
        %v1687 = vpop.f32.mrb[0].mxu0
        %v1688 = vadd.f32 0.0, %v1687
        %v1689 = vpop.f32.mrb[0].mxu0
        %v1690 = vpop.f32.mrb[0].mxu0
        %v1691 = vadd.f32 0.0, %v1690
        %v1692 = vpop.f32.mrb[0].mxu0
        %1693 = vmatprep.mubr.bf16.mxu0 %v696
        %1694 = vmatmul.mubr.bf16.gmra.mrb[0].mxu0 %v695
        %v1695 = vpop.f32.mrb[0].mxu0
        %v1696 = vadd.f32 0.0, %v1695
        %v1697 = vpop.f32.mrb[0].mxu0
        %v1698 = vpop.f32.mrb[0].mxu0
        %v1699 = vadd.f32 0.0, %v1698
        %v1700 = vpop.f32.mrb[0].mxu0
        %1701 = vmatprep.mubr.bf16.mxu0 %v698
        %1702 = vmatmul.mubr.bf16.gmra.mrb[0].mxu0 %v697
        %v1703 = vpop.f32.mrb[0].mxu0
        %v1704 = vadd.f32 0.0, %v1703
        %v1705 = vpop.f32.mrb[0].mxu0
        %v1706 = vpop.f32.mrb[0].mxu0
        %v1707 = vadd.f32 0.0, %v1706
        %v1708 = vpop.f32.mrb[0].mxu0
        %1709 = vmatprep.mubr.bf16.mxu0 %v700
        %1710 = vmatmul.mubr.bf16.gmra.mrb[0].mxu0 %v699
        %v1711 = vpop.f32.mrb[0].mxu0
        %v1712 = vadd.f32 0.0, %v1711
        %v1713 = vpop.f32.mrb[0].mxu0
        %v1714 = vpop.f32.mrb[0].mxu0
        %v1715 = vadd.f32 0.0, %v1714
        %v1716 = vpop.f32.mrb[0].mxu0
        %1717 = vmatprep.mubr.bf16.mxu0 %v702
        %1718 = vmatmul.mubr.bf16.gmra.mrb[0].mxu0 %v701
        %v1719 = vpop.f32.mrb[0].mxu0
        %v1720 = vadd.f32 0.0, %v1719
        %v1721 = vpop.f32.mrb[0].mxu0
        %v1722 = vpop.f32.mrb[0].mxu0
        %v1723 = vadd.f32 0.0, %v1722
        %v1724 = vpop.f32.mrb[0].mxu0
        %1725 = vmatprep.mubr.bf16.mxu0 %v704
        %1726 = vmatmul.mubr.bf16.gmra.mrb[0].mxu0 %v703
        %v1727 = vpop.f32.mrb[0].mxu0
        %v1728 = vadd.f32 0.0, %v1727
        %v1729 = vpop.f32.mrb[0].mxu0
        %v1730 = vpop.f32.mrb[0].mxu0
        %v1731 = vadd.f32 0.0, %v1730
        %v1732 = vpop.f32.mrb[0].mxu0
        %1733 = vmatprep.mubr.bf16.mxu0 %v706
        %1734 = vmatmul.mubr.bf16.gmra.mrb[0].mxu0 %v705
        %v1735 = vpop.f32.mrb[0].mxu0
        %v1736 = vadd.f32 0.0, %v1735
        %v1737 = vpop.f32.mrb[0].mxu0
        %v1738 = vpop.f32.mrb[0].mxu0
        %v1739 = vadd.f32 0.0, %v1738
        %v1740 = vpop.f32.mrb[0].mxu0
        %1741 = vmatprep.mubr.bf16.mxu0 %v708
        %1742 = vmatmul.mubr.bf16.gmra.mrb[0].mxu0 %v707
        %v1743 = vpop.f32.mrb[0].mxu0
        %v1744 = vadd.f32 0.0, %v1743
        %v1745 = vpop.f32.mrb[0].mxu0
        %v1746 = vpop.f32.mrb[0].mxu0
        %v1747 = vadd.f32 0.0, %v1746
        %v1748 = vpop.f32.mrb[0].mxu0
        %1749 = vmatprep.mubr.bf16.mxu0 %v710
        %1750 = vmatmul.mubr.bf16.gmra.mrb[0].mxu0 %v709
        %v1751 = vpop.f32.mrb[0].mxu0
        %v1752 = vadd.f32 0.0, %v1751
        %v1753 = vpop.f32.mrb[0].mxu0
        %v1754 = vpop.f32.mrb[0].mxu0
        %v1755 = vadd.f32 0.0, %v1754
        %v1756 = vpop.f32.mrb[0].mxu0
        %1757 = vmatprep.mubr.bf16.mxu0 %v712
        %1758 = vmatmul.mubr.bf16.gmra.mrb[0].mxu0 %v711
        %v1759 = vpop.f32.mrb[0].mxu0
        %v1760 = vadd.f32 0.0, %v1759
        %v1761 = vpop.f32.mrb[0].mxu0
        %v1762 = vpop.f32.mrb[0].mxu0
        %v1763 = vadd.f32 0.0, %v1762
        %v1764 = vpop.f32.mrb[0].mxu0
        %1765 = vmatprep.mubr.bf16.mxu0 %v714
        %1766 = vmatmul.mubr.bf16.gmra.mrb[0].mxu0 %v713
        %v1767 = vpop.f32.mrb[0].mxu0
        %v1768 = vadd.f32 0.0, %v1767
        %v1769 = vpop.f32.mrb[0].mxu0
        %v1770 = vpop.f32.mrb[0].mxu0
        %v1771 = vadd.f32 0.0, %v1770
        %v1772 = vpop.f32.mrb[0].mxu0
        %1773 = vdwg.mxu0
        %v1774 = vpack.c.bf16 %v1266, %v1262
        %v1775 = vpack.c.bf16 %v1268, %v1264
        %v1776 = vpack.c.bf16 %v1459, %v1455
        %v1777 = vpack.c.bf16 %v1461, %v1457
        %v1778 = vpack.c.bf16 %v1276, %v1272
        %v1779 = vpack.c.bf16 %v1278, %v1274
        %v1780 = vpack.c.bf16 %v1469, %v1465
        %v1781 = vpack.c.bf16 %v1471, %v1467
        %v1782 = vpack.c.bf16 %v1286, %v1282
        %v1783 = vpack.c.bf16 %v1288, %v1284
        %v1784 = vpack.c.bf16 %v1479, %v1475
        %v1785 = vpack.c.bf16 %v1481, %v1477
        %v1786 = vpack.c.bf16 %v1296, %v1292
        %v1787 = vpack.c.bf16 %v1298, %v1294
        %v1788 = vpack.c.bf16 %v1489, %v1485
        %v1789 = vpack.c.bf16 %v1491, %v1487
        %v1790 = vpack.c.bf16 %v1306, %v1302
        %v1791 = vpack.c.bf16 %v1308, %v1304
        %v1792 = vpack.c.bf16 %v1499, %v1495
        %v1793 = vpack.c.bf16 %v1501, %v1497
        %v1794 = vpack.c.bf16 %v1316, %v1312
        %v1795 = vpack.c.bf16 %v1318, %v1314
        %v1796 = vpack.c.bf16 %v1509, %v1505
        %v1797 = vpack.c.bf16 %v1511, %v1507
        %v1798 = vpack.c.bf16 %v1326, %v1322
        %v1799 = vpack.c.bf16 %v1328, %v1324
        %v1800 = vpack.c.bf16 %v1519, %v1515
        %v1801 = vpack.c.bf16 %v1521, %v1517
        %v1802 = vpack.c.bf16 %v1336, %v1332
        %v1803 = vpack.c.bf16 %v1338, %v1334
        %v1804 = vpack.c.bf16 %v1529, %v1525
        %v1805 = vpack.c.bf16 %v1531, %v1527
        %v1806 = vpack.c.bf16 %v1346, %v1342
        %v1807 = vpack.c.bf16 %v1348, %v1344
        %v1808 = vpack.c.bf16 %v1539, %v1535
        %v1809 = vpack.c.bf16 %v1541, %v1537
        %v1810 = vpack.c.bf16 %v1356, %v1352
        %v1811 = vpack.c.bf16 %v1358, %v1354
        %v1812 = vpack.c.bf16 %v1549, %v1545
        %v1813 = vpack.c.bf16 %v1551, %v1547
        %v1814 = vpack.c.bf16 %v1366, %v1362
        %v1815 = vpack.c.bf16 %v1368, %v1364
        %v1816 = vpack.c.bf16 %v1559, %v1555
        %v1817 = vpack.c.bf16 %v1561, %v1557
        %v1818 = vpack.c.bf16 %v1376, %v1372
        %v1819 = vpack.c.bf16 %v1378, %v1374
        %v1820 = vpack.c.bf16 %v1569, %v1565
        %v1821 = vpack.c.bf16 %v1571, %v1567
        %v1822 = vpack.c.bf16 %v1386, %v1382
        %v1823 = vpack.c.bf16 %v1388, %v1384
        %v1824 = vpack.c.bf16 %v1579, %v1575
        %v1825 = vpack.c.bf16 %v1581, %v1577
        %v1826 = vpack.c.bf16 %v1396, %v1392
        %v1827 = vpack.c.bf16 %v1398, %v1394
        %v1828 = vpack.c.bf16 %v1589, %v1585
        %v1829 = vpack.c.bf16 %v1591, %v1587
        %v1830 = vpack.c.bf16 %v1406, %v1402
        %v1831 = vpack.c.bf16 %v1408, %v1404
        %v1832 = vpack.c.bf16 %v1599, %v1595
        %v1833 = vpack.c.bf16 %v1601, %v1597
        %v1834 = vpack.c.bf16 %v1416, %v1412
        %v1835 = vpack.c.bf16 %v1418, %v1414
        %v1836 = vpack.c.bf16 %v1609, %v1605
        %v1837 = vpack.c.bf16 %v1611, %v1607
        %v1902 = vunpack.c.l.b16 %v1774
        %v1903 = vunpack.c.l.b16 %v1775
        %v1904 = vunpack.c.l.b16 %v1776
        %v1905 = vunpack.c.l.b16 %v1777
        %v1906 = vunpack.c.h.b16 %v1774
        %v1907 = vunpack.c.h.b16 %v1775
        %v1908 = vunpack.c.h.b16 %v1776
        %v1909 = vunpack.c.h.b16 %v1777
        %v1910 = vunpack.c.l.b16 %v1778
        %v1911 = vunpack.c.l.b16 %v1779
        %v1912 = vunpack.c.l.b16 %v1780
        %v1913 = vunpack.c.l.b16 %v1781
        %v1914 = vunpack.c.h.b16 %v1778
        %v1915 = vunpack.c.h.b16 %v1779
        %v1916 = vunpack.c.h.b16 %v1780
        %v1917 = vunpack.c.h.b16 %v1781
        %v1918 = vunpack.c.l.b16 %v1782
        %v1919 = vunpack.c.l.b16 %v1783
        %v1920 = vunpack.c.l.b16 %v1784
        %v1921 = vunpack.c.l.b16 %v1785
        %v1922 = vunpack.c.h.b16 %v1782
        %v1923 = vunpack.c.h.b16 %v1783
        %v1924 = vunpack.c.h.b16 %v1784
        %v1925 = vunpack.c.h.b16 %v1785
        %v1926 = vunpack.c.l.b16 %v1786
        %v1927 = vunpack.c.l.b16 %v1787
        %v1928 = vunpack.c.l.b16 %v1788
        %v1929 = vunpack.c.l.b16 %v1789
        %v1930 = vunpack.c.h.b16 %v1786
        %v1931 = vunpack.c.h.b16 %v1787
        %v1932 = vunpack.c.h.b16 %v1788
        %v1933 = vunpack.c.h.b16 %v1789
        %v1934 = vunpack.c.l.b16 %v1790
        %v1935 = vunpack.c.l.b16 %v1791
        %v1936 = vunpack.c.l.b16 %v1792
        %v1937 = vunpack.c.l.b16 %v1793
        %v1938 = vunpack.c.h.b16 %v1790
        %v1939 = vunpack.c.h.b16 %v1791
        %v1940 = vunpack.c.h.b16 %v1792
        %v1941 = vunpack.c.h.b16 %v1793
        %v1942 = vunpack.c.l.b16 %v1794
        %v1943 = vunpack.c.l.b16 %v1795
        %v1944 = vunpack.c.l.b16 %v1796
        %v1945 = vunpack.c.l.b16 %v1797
        %v1946 = vunpack.c.h.b16 %v1794
        %v1947 = vunpack.c.h.b16 %v1795
        %v1948 = vunpack.c.h.b16 %v1796
        %v1949 = vunpack.c.h.b16 %v1797
        %v1950 = vunpack.c.l.b16 %v1798
        %v1951 = vunpack.c.l.b16 %v1799
        %v1952 = vunpack.c.l.b16 %v1800
        %v1953 = vunpack.c.l.b16 %v1801
        %v1954 = vunpack.c.h.b16 %v1798
        %v1955 = vunpack.c.h.b16 %v1799
        %v1956 = vunpack.c.h.b16 %v1800
        %v1957 = vunpack.c.h.b16 %v1801
        %v1958 = vunpack.c.l.b16 %v1802
        %v1959 = vunpack.c.l.b16 %v1803
        %v1960 = vunpack.c.l.b16 %v1804
        %v1961 = vunpack.c.l.b16 %v1805
        %v1962 = vunpack.c.h.b16 %v1802
        %v1963 = vunpack.c.h.b16 %v1803
        %v1964 = vunpack.c.h.b16 %v1804
        %v1965 = vunpack.c.h.b16 %v1805
        %v1966 = vunpack.c.l.b16 %v1806
        %v1967 = vunpack.c.l.b16 %v1807
        %v1968 = vunpack.c.l.b16 %v1808
        %v1969 = vunpack.c.l.b16 %v1809
        %v1970 = vunpack.c.h.b16 %v1806
        %v1971 = vunpack.c.h.b16 %v1807
        %v1972 = vunpack.c.h.b16 %v1808
        %v1973 = vunpack.c.h.b16 %v1809
        %v1974 = vunpack.c.l.b16 %v1810
        %v1975 = vunpack.c.l.b16 %v1811
        %v1976 = vunpack.c.l.b16 %v1812
        %v1977 = vunpack.c.l.b16 %v1813
        %v1978 = vunpack.c.h.b16 %v1810
        %v1979 = vunpack.c.h.b16 %v1811
        %v1980 = vunpack.c.h.b16 %v1812
        %v1981 = vunpack.c.h.b16 %v1813
        %v1982 = vunpack.c.l.b16 %v1814
        %v1983 = vunpack.c.l.b16 %v1815
        %v1984 = vunpack.c.l.b16 %v1816
        %v1985 = vunpack.c.l.b16 %v1817
        %v1986 = vunpack.c.h.b16 %v1814
        %v1987 = vunpack.c.h.b16 %v1815
        %v1988 = vunpack.c.h.b16 %v1816
        %v1989 = vunpack.c.h.b16 %v1817
        %v1990 = vunpack.c.l.b16 %v1818
        %v1991 = vunpack.c.l.b16 %v1819
        %v1992 = vunpack.c.l.b16 %v1820
        %v1993 = vunpack.c.l.b16 %v1821
        %v1994 = vunpack.c.h.b16 %v1818
        %v1995 = vunpack.c.h.b16 %v1819
        %v1996 = vunpack.c.h.b16 %v1820
        %v1997 = vunpack.c.h.b16 %v1821
        %v1998 = vunpack.c.l.b16 %v1822
        %v1999 = vunpack.c.l.b16 %v1823
        %v2000 = vunpack.c.l.b16 %v1824
        %v2001 = vunpack.c.l.b16 %v1825
        %v2002 = vunpack.c.h.b16 %v1822
        %v2003 = vunpack.c.h.b16 %v1823
        %v2004 = vunpack.c.h.b16 %v1824
        %v2005 = vunpack.c.h.b16 %v1825
        %v2006 = vunpack.c.l.b16 %v1826
        %v2007 = vunpack.c.l.b16 %v1827
        %v2008 = vunpack.c.l.b16 %v1828
        %v2009 = vunpack.c.l.b16 %v1829
        %v2010 = vunpack.c.h.b16 %v1826
        %v2011 = vunpack.c.h.b16 %v1827
        %v2012 = vunpack.c.h.b16 %v1828
        %v2013 = vunpack.c.h.b16 %v1829
        %v2014 = vunpack.c.l.b16 %v1830
        %v2015 = vunpack.c.l.b16 %v1831
        %v2016 = vunpack.c.l.b16 %v1832
        %v2017 = vunpack.c.l.b16 %v1833
        %v2018 = vunpack.c.h.b16 %v1830
        %v2019 = vunpack.c.h.b16 %v1831
        %v2020 = vunpack.c.h.b16 %v1832
        %v2021 = vunpack.c.h.b16 %v1833
        %v2022 = vunpack.c.l.b16 %v1834
        %v2023 = vunpack.c.l.b16 %v1835
        %v2024 = vunpack.c.l.b16 %v1836
        %v2025 = vunpack.c.l.b16 %v1837
        %v2026 = vunpack.c.h.b16 %v1834
        %v2027 = vunpack.c.h.b16 %v1835
        %v2028 = vunpack.c.h.b16 %v1836
        %v2029 = vunpack.c.h.b16 %v1837
        %v2030 = vpack.c.b16 %v1903, %v1902
        %v2031 = vpack.c.b16 %v1905, %v1904
        %v2032 = vpack.c.b16 %v1907, %v1906
        %v2033 = vpack.c.b16 %v1909, %v1908
        %v2034 = vpack.c.b16 %v1911, %v1910
        %v2035 = vpack.c.b16 %v1913, %v1912
        %v2036 = vpack.c.b16 %v1915, %v1914
        %v2037 = vpack.c.b16 %v1917, %v1916
        %v2038 = vpack.c.b16 %v1919, %v1918
        %v2039 = vpack.c.b16 %v1921, %v1920
        %v2040 = vpack.c.b16 %v1923, %v1922
        %v2041 = vpack.c.b16 %v1925, %v1924
        %v2042 = vpack.c.b16 %v1927, %v1926
        %v2043 = vpack.c.b16 %v1929, %v1928
        %v2044 = vpack.c.b16 %v1931, %v1930
        %v2045 = vpack.c.b16 %v1933, %v1932
        %v2046 = vpack.c.b16 %v1935, %v1934
        %v2047 = vpack.c.b16 %v1937, %v1936
        %v2048 = vpack.c.b16 %v1939, %v1938
        %v2049 = vpack.c.b16 %v1941, %v1940
        %v2050 = vpack.c.b16 %v1943, %v1942
        %v2051 = vpack.c.b16 %v1945, %v1944
        %v2052 = vpack.c.b16 %v1947, %v1946
        %v2053 = vpack.c.b16 %v1949, %v1948
        %v2054 = vpack.c.b16 %v1951, %v1950
        %v2055 = vpack.c.b16 %v1953, %v1952
        %v2056 = vpack.c.b16 %v1955, %v1954
        %v2057 = vpack.c.b16 %v1957, %v1956
        %v2058 = vpack.c.b16 %v1959, %v1958
        %v2059 = vpack.c.b16 %v1961, %v1960
        %v2060 = vpack.c.b16 %v1963, %v1962
        %v2061 = vpack.c.b16 %v1965, %v1964
        %v2062 = vpack.c.b16 %v1967, %v1966
        %v2063 = vpack.c.b16 %v1969, %v1968
        %v2064 = vpack.c.b16 %v1971, %v1970
        %v2065 = vpack.c.b16 %v1973, %v1972
        %v2066 = vpack.c.b16 %v1975, %v1974
        %v2067 = vpack.c.b16 %v1977, %v1976
        %v2068 = vpack.c.b16 %v1979, %v1978
        %v2069 = vpack.c.b16 %v1981, %v1980
        %v2070 = vpack.c.b16 %v1983, %v1982
        %v2071 = vpack.c.b16 %v1985, %v1984
        %v2072 = vpack.c.b16 %v1987, %v1986
        %v2073 = vpack.c.b16 %v1989, %v1988
        %v2074 = vpack.c.b16 %v1991, %v1990
        %v2075 = vpack.c.b16 %v1993, %v1992
        %v2076 = vpack.c.b16 %v1995, %v1994
        %v2077 = vpack.c.b16 %v1997, %v1996
        %v2078 = vpack.c.b16 %v1999, %v1998
        %v2079 = vpack.c.b16 %v2001, %v2000
        %v2080 = vpack.c.b16 %v2003, %v2002
        %v2081 = vpack.c.b16 %v2005, %v2004
        %v2082 = vpack.c.b16 %v2007, %v2006
        %v2083 = vpack.c.b16 %v2009, %v2008
        %v2084 = vpack.c.b16 %v2011, %v2010
        %v2085 = vpack.c.b16 %v2013, %v2012
        %v2086 = vpack.c.b16 %v2015, %v2014
        %v2087 = vpack.c.b16 %v2017, %v2016
        %v2088 = vpack.c.b16 %v2019, %v2018
        %v2089 = vpack.c.b16 %v2021, %v2020
        %v2090 = vpack.c.b16 %v2023, %v2022
        %v2091 = vpack.c.b16 %v2025, %v2024
        %v2092 = vpack.c.b16 %v2027, %v2026
        %v2093 = vpack.c.b16 %v2029, %v2028
        %2158 = vst [vmem:[%s279] sm:$0xff] %v2030
        %2159 = vst [vmem:[%s279 + $0x8] sm:$0xff] %v2031
        %2160 = vst [vmem:[%s279 + $0x10] sm:$0xff] %v2032
        %2161 = vst [vmem:[%s279 + $0x18] sm:$0xff] %v2033
        %2162 = vst [vmem:[%s279 + $0x20] sm:$0xff] %v2034
        %2163 = vst [vmem:[%s279 + $0x28] sm:$0xff] %v2035
        %2164 = vst [vmem:[%s279 + $0x30] sm:$0xff] %v2036
        %2165 = vst [vmem:[%s279 + $0x38] sm:$0xff] %v2037
        %2166 = vst [vmem:[%s279 + $0x40] sm:$0xff] %v2038
        %2167 = vst [vmem:[%s279 + $0x48] sm:$0xff] %v2039
        %2168 = vst [vmem:[%s279 + $0x50] sm:$0xff] %v2040
        %2169 = vst [vmem:[%s279 + $0x58] sm:$0xff] %v2041
        %2170 = vst [vmem:[%s279 + $0x60] sm:$0xff] %v2042
        %2171 = vst [vmem:[%s279 + $0x68] sm:$0xff] %v2043
        %2172 = vst [vmem:[%s279 + $0x70] sm:$0xff] %v2044
        %2173 = vst [vmem:[%s279 + $0x78] sm:$0xff] %v2045
        %2174 = vst [vmem:[%s279 + $0x80] sm:$0xff] %v2046
        %2175 = vst [vmem:[%s279 + $0x88] sm:$0xff] %v2047
        %2176 = vst [vmem:[%s279 + $0x90] sm:$0xff] %v2048
        %2177 = vst [vmem:[%s279 + $0x98] sm:$0xff] %v2049
        %2178 = vst [vmem:[%s279 + $0xa0] sm:$0xff] %v2050
        %2179 = vst [vmem:[%s279 + $0xa8] sm:$0xff] %v2051
        %2180 = vst [vmem:[%s279 + $0xb0] sm:$0xff] %v2052
        %2181 = vst [vmem:[%s279 + $0xb8] sm:$0xff] %v2053
        %2182 = vst [vmem:[%s279 + $0xc0] sm:$0xff] %v2054
        %2183 = vst [vmem:[%s279 + $0xc8] sm:$0xff] %v2055
        %2184 = vst [vmem:[%s279 + $0xd0] sm:$0xff] %v2056
        %2185 = vst [vmem:[%s279 + $0xd8] sm:$0xff] %v2057
        %2186 = vst [vmem:[%s279 + $0xe0] sm:$0xff] %v2058
        %2187 = vst [vmem:[%s279 + $0xe8] sm:$0xff] %v2059
        %2188 = vst [vmem:[%s279 + $0xf0] sm:$0xff] %v2060
        %2189 = vst [vmem:[%s279 + $0xf8] sm:$0xff] %v2061
        %2190 = vst [vmem:[%s279 + $0x100] sm:$0xff] %v2062
        %2191 = vst [vmem:[%s279 + $0x108] sm:$0xff] %v2063
        %2192 = vst [vmem:[%s279 + $0x110] sm:$0xff] %v2064
        %2193 = vst [vmem:[%s279 + $0x118] sm:$0xff] %v2065
        %2194 = vst [vmem:[%s279 + $0x120] sm:$0xff] %v2066
        %2195 = vst [vmem:[%s279 + $0x128] sm:$0xff] %v2067
        %2196 = vst [vmem:[%s279 + $0x130] sm:$0xff] %v2068
        %2197 = vst [vmem:[%s279 + $0x138] sm:$0xff] %v2069
        %2198 = vst [vmem:[%s279 + $0x140] sm:$0xff] %v2070
        %2199 = vst [vmem:[%s279 + $0x148] sm:$0xff] %v2071
        %2200 = vst [vmem:[%s279 + $0x150] sm:$0xff] %v2072
        %2201 = vst [vmem:[%s279 + $0x158] sm:$0xff] %v2073
        %2202 = vst [vmem:[%s279 + $0x160] sm:$0xff] %v2074
        %2203 = vst [vmem:[%s279 + $0x168] sm:$0xff] %v2075
        %2204 = vst [vmem:[%s279 + $0x170] sm:$0xff] %v2076
        %2205 = vst [vmem:[%s279 + $0x178] sm:$0xff] %v2077
        %2206 = vst [vmem:[%s279 + $0x180] sm:$0xff] %v2078
        %2207 = vst [vmem:[%s279 + $0x188] sm:$0xff] %v2079
        %2208 = vst [vmem:[%s279 + $0x190] sm:$0xff] %v2080
        %2209 = vst [vmem:[%s279 + $0x198] sm:$0xff] %v2081
        %2210 = vst [vmem:[%s279 + $0x1a0] sm:$0xff] %v2082
        %2211 = vst [vmem:[%s279 + $0x1a8] sm:$0xff] %v2083
        %2212 = vst [vmem:[%s279 + $0x1b0] sm:$0xff] %v2084
        %2213 = vst [vmem:[%s279 + $0x1b8] sm:$0xff] %v2085
        %2214 = vst [vmem:[%s279 + $0x1c0] sm:$0xff] %v2086
        %2215 = vst [vmem:[%s279 + $0x1c8] sm:$0xff] %v2087
        %2216 = vst [vmem:[%s279 + $0x1d0] sm:$0xff] %v2088
        %2217 = vst [vmem:[%s279 + $0x1d8] sm:$0xff] %v2089
        %2218 = vst [vmem:[%s279 + $0x1e0] sm:$0xff] %v2090
        %2219 = vst [vmem:[%s279 + $0x1e8] sm:$0xff] %v2091
        %2220 = vst [vmem:[%s279 + $0x1f0] sm:$0xff] %v2092
        %2221 = vst [vmem:[%s279 + $0x1f8] sm:$0xff] %v2093
        %v2222 = vadd.s32 %v393, 256
        %v2223 = vadd.s32 %v393, 384
        %2224 = vset.pattern.permute.xlu0 0
        %2225 = vperm.xlu0 %2224, %v360
        %v2226 = vpop.permute.xlu0 %2225
        %2227 = vset.pattern.permute.xlu0 0
        %2228 = vperm.xlu0 %2227, %v361
        %v2229 = vpop.permute.xlu0 %2228
        %2230 = vset.pattern.permute.xlu0 0
        %2231 = vperm.xlu0 %2230, %v362
        %v2232 = vpop.permute.xlu0 %2231
        %2233 = vset.pattern.permute.xlu0 0
        %2234 = vperm.xlu0 %2233, %v363
        %v2235 = vpop.permute.xlu0 %2234
        %2236 = vset.pattern.permute.xlu0 0
        %2237 = vperm.xlu0 %2236, %v364
        %v2238 = vpop.permute.xlu0 %2237
        %2239 = vset.pattern.permute.xlu0 0
        %2240 = vperm.xlu0 %2239, %v365
        %v2241 = vpop.permute.xlu0 %2240
        %2242 = vset.pattern.permute.xlu0 0
        %2243 = vperm.xlu0 %2242, %v366
        %v2244 = vpop.permute.xlu0 %2243
        %2245 = vset.pattern.permute.xlu0 0
        %2246 = vperm.xlu0 %2245, %v367
        %v2247 = vpop.permute.xlu0 %2246
        %2248 = vset.pattern.permute.xlu0 0
        %2249 = vperm.xlu0 %2248, %v368
        %v2250 = vpop.permute.xlu0 %2249
        %2251 = vset.pattern.permute.xlu0 0
        %2252 = vperm.xlu0 %2251, %v369
        %v2253 = vpop.permute.xlu0 %2252
        %2254 = vset.pattern.permute.xlu0 0
        %2255 = vperm.xlu0 %2254, %v370
        %v2256 = vpop.permute.xlu0 %2255
        %2257 = vset.pattern.permute.xlu0 0
        %2258 = vperm.xlu0 %2257, %v371
        %v2259 = vpop.permute.xlu0 %2258
        %2260 = vset.pattern.permute.xlu0 0
        %2261 = vperm.xlu0 %2260, %v372
        %v2262 = vpop.permute.xlu0 %2261
        %2263 = vset.pattern.permute.xlu0 0
        %2264 = vperm.xlu0 %2263, %v373
        %v2265 = vpop.permute.xlu0 %2264
        %2266 = vset.pattern.permute.xlu0 0
        %2267 = vperm.xlu0 %2266, %v374
        %v2268 = vpop.permute.xlu0 %2267
        %2269 = vset.pattern.permute.xlu0 0
        %2270 = vperm.xlu0 %2269, %v375
        %v2271 = vpop.permute.xlu0 %2270
        %2272 = vset.pattern.permute.xlu0 0
        %2273 = vperm.xlu0 %2272, %v376
        %v2274 = vpop.permute.xlu0 %2273
        %2275 = vset.pattern.permute.xlu0 0
        %2276 = vperm.xlu0 %2275, %v377
        %v2277 = vpop.permute.xlu0 %2276
        %2278 = vset.pattern.permute.xlu0 0
        %2279 = vperm.xlu0 %2278, %v378
        %v2280 = vpop.permute.xlu0 %2279
        %2281 = vset.pattern.permute.xlu0 0
        %2282 = vperm.xlu0 %2281, %v379
        %v2283 = vpop.permute.xlu0 %2282
        %2284 = vset.pattern.permute.xlu0 0
        %2285 = vperm.xlu0 %2284, %v380
        %v2286 = vpop.permute.xlu0 %2285
        %2287 = vset.pattern.permute.xlu0 0
        %2288 = vperm.xlu0 %2287, %v381
        %v2289 = vpop.permute.xlu0 %2288
        %2290 = vset.pattern.permute.xlu0 0
        %2291 = vperm.xlu0 %2290, %v382
        %v2292 = vpop.permute.xlu0 %2291
        %2293 = vset.pattern.permute.xlu0 0
        %2294 = vperm.xlu0 %2293, %v383
        %v2295 = vpop.permute.xlu0 %2294
        %2296 = vset.pattern.permute.xlu0 0
        %2297 = vperm.xlu0 %2296, %v384
        %v2298 = vpop.permute.xlu0 %2297
        %2299 = vset.pattern.permute.xlu0 0
        %2300 = vperm.xlu0 %2299, %v385
        %v2301 = vpop.permute.xlu0 %2300
        %2302 = vset.pattern.permute.xlu0 0
        %2303 = vperm.xlu0 %2302, %v386
        %v2304 = vpop.permute.xlu0 %2303
        %2305 = vset.pattern.permute.xlu0 0
        %2306 = vperm.xlu0 %2305, %v387
        %v2307 = vpop.permute.xlu0 %2306
        %2308 = vset.pattern.permute.xlu0 0
        %2309 = vperm.xlu0 %2308, %v388
        %v2310 = vpop.permute.xlu0 %2309
        %2311 = vset.pattern.permute.xlu0 0
        %2312 = vperm.xlu0 %2311, %v389
        %v2313 = vpop.permute.xlu0 %2312
        %2314 = vset.pattern.permute.xlu0 0
        %2315 = vperm.xlu0 %2314, %v390
        %v2316 = vpop.permute.xlu0 %2315
        %2317 = vset.pattern.permute.xlu0 0
        %2318 = vperm.xlu0 %2317, %v391
        %v2319 = vpop.permute.xlu0 %2318
        %vm2320 = vcmp.eq.s32.totalorder %v2226, %v393
        %vm2321 = vcmp.eq.s32.totalorder %v2226, %v394
        %vm2322 = vcmp.eq.s32.totalorder %v2226, %v2222
        %vm2323 = vcmp.eq.s32.totalorder %v2226, %v2223
        %vm2324 = vcmp.eq.s32.totalorder %v2229, %v393
        %vm2325 = vcmp.eq.s32.totalorder %v2229, %v394
        %vm2326 = vcmp.eq.s32.totalorder %v2229, %v2222
        %vm2327 = vcmp.eq.s32.totalorder %v2229, %v2223
        %vm2328 = vcmp.eq.s32.totalorder %v2232, %v393
        %vm2329 = vcmp.eq.s32.totalorder %v2232, %v394
        %vm2330 = vcmp.eq.s32.totalorder %v2232, %v2222
        %vm2331 = vcmp.eq.s32.totalorder %v2232, %v2223
        %vm2332 = vcmp.eq.s32.totalorder %v2235, %v393
        %vm2333 = vcmp.eq.s32.totalorder %v2235, %v394
        %vm2334 = vcmp.eq.s32.totalorder %v2235, %v2222
        %vm2335 = vcmp.eq.s32.totalorder %v2235, %v2223
        %vm2336 = vcmp.eq.s32.totalorder %v2238, %v393
        %vm2337 = vcmp.eq.s32.totalorder %v2238, %v394
        %vm2338 = vcmp.eq.s32.totalorder %v2238, %v2222
        %vm2339 = vcmp.eq.s32.totalorder %v2238, %v2223
        %vm2340 = vcmp.eq.s32.totalorder %v2241, %v393
        %vm2341 = vcmp.eq.s32.totalorder %v2241, %v394
        %vm2342 = vcmp.eq.s32.totalorder %v2241, %v2222
        %vm2343 = vcmp.eq.s32.totalorder %v2241, %v2223
        %vm2344 = vcmp.eq.s32.totalorder %v2244, %v393
        %vm2345 = vcmp.eq.s32.totalorder %v2244, %v394
        %vm2346 = vcmp.eq.s32.totalorder %v2244, %v2222
        %vm2347 = vcmp.eq.s32.totalorder %v2244, %v2223
        %vm2348 = vcmp.eq.s32.totalorder %v2247, %v393
        %vm2349 = vcmp.eq.s32.totalorder %v2247, %v394
        %vm2350 = vcmp.eq.s32.totalorder %v2247, %v2222
        %vm2351 = vcmp.eq.s32.totalorder %v2247, %v2223
        %vm2352 = vcmp.eq.s32.totalorder %v2250, %v393
        %vm2353 = vcmp.eq.s32.totalorder %v2250, %v394
        %vm2354 = vcmp.eq.s32.totalorder %v2250, %v2222
        %vm2355 = vcmp.eq.s32.totalorder %v2250, %v2223
        %vm2356 = vcmp.eq.s32.totalorder %v2253, %v393
        %vm2357 = vcmp.eq.s32.totalorder %v2253, %v394
        %vm2358 = vcmp.eq.s32.totalorder %v2253, %v2222
        %vm2359 = vcmp.eq.s32.totalorder %v2253, %v2223
        %vm2360 = vcmp.eq.s32.totalorder %v2256, %v393
        %vm2361 = vcmp.eq.s32.totalorder %v2256, %v394
        %vm2362 = vcmp.eq.s32.totalorder %v2256, %v2222
        %vm2363 = vcmp.eq.s32.totalorder %v2256, %v2223
        %vm2364 = vcmp.eq.s32.totalorder %v2259, %v393
        %vm2365 = vcmp.eq.s32.totalorder %v2259, %v394
        %vm2366 = vcmp.eq.s32.totalorder %v2259, %v2222
        %vm2367 = vcmp.eq.s32.totalorder %v2259, %v2223
        %vm2368 = vcmp.eq.s32.totalorder %v2262, %v393
        %vm2369 = vcmp.eq.s32.totalorder %v2262, %v394
        %vm2370 = vcmp.eq.s32.totalorder %v2262, %v2222
        %vm2371 = vcmp.eq.s32.totalorder %v2262, %v2223
        %vm2372 = vcmp.eq.s32.totalorder %v2265, %v393
        %vm2373 = vcmp.eq.s32.totalorder %v2265, %v394
        %vm2374 = vcmp.eq.s32.totalorder %v2265, %v2222
        %vm2375 = vcmp.eq.s32.totalorder %v2265, %v2223
        %vm2376 = vcmp.eq.s32.totalorder %v2268, %v393
        %vm2377 = vcmp.eq.s32.totalorder %v2268, %v394
        %vm2378 = vcmp.eq.s32.totalorder %v2268, %v2222
        %vm2379 = vcmp.eq.s32.totalorder %v2268, %v2223
        %vm2380 = vcmp.eq.s32.totalorder %v2271, %v393
        %vm2381 = vcmp.eq.s32.totalorder %v2271, %v394
        %vm2382 = vcmp.eq.s32.totalorder %v2271, %v2222
        %vm2383 = vcmp.eq.s32.totalorder %v2271, %v2223
        %vm2384 = vcmp.eq.s32.totalorder %v2274, %v393
        %vm2385 = vcmp.eq.s32.totalorder %v2274, %v394
        %vm2386 = vcmp.eq.s32.totalorder %v2274, %v2222
        %vm2387 = vcmp.eq.s32.totalorder %v2274, %v2223
        %vm2388 = vcmp.eq.s32.totalorder %v2277, %v393
        %vm2389 = vcmp.eq.s32.totalorder %v2277, %v394
        %vm2390 = vcmp.eq.s32.totalorder %v2277, %v2222
        %vm2391 = vcmp.eq.s32.totalorder %v2277, %v2223
        %vm2392 = vcmp.eq.s32.totalorder %v2280, %v393
        %vm2393 = vcmp.eq.s32.totalorder %v2280, %v394
        %vm2394 = vcmp.eq.s32.totalorder %v2280, %v2222
        %vm2395 = vcmp.eq.s32.totalorder %v2280, %v2223
        %vm2396 = vcmp.eq.s32.totalorder %v2283, %v393
        %vm2397 = vcmp.eq.s32.totalorder %v2283, %v394
        %vm2398 = vcmp.eq.s32.totalorder %v2283, %v2222
        %vm2399 = vcmp.eq.s32.totalorder %v2283, %v2223
        %vm2400 = vcmp.eq.s32.totalorder %v2286, %v393
        %vm2401 = vcmp.eq.s32.totalorder %v2286, %v394
        %vm2402 = vcmp.eq.s32.totalorder %v2286, %v2222
        %vm2403 = vcmp.eq.s32.totalorder %v2286, %v2223
        %vm2404 = vcmp.eq.s32.totalorder %v2289, %v393
        %vm2405 = vcmp.eq.s32.totalorder %v2289, %v394
        %vm2406 = vcmp.eq.s32.totalorder %v2289, %v2222
        %vm2407 = vcmp.eq.s32.totalorder %v2289, %v2223
        %vm2408 = vcmp.eq.s32.totalorder %v2292, %v393
        %vm2409 = vcmp.eq.s32.totalorder %v2292, %v394
        %vm2410 = vcmp.eq.s32.totalorder %v2292, %v2222
        %vm2411 = vcmp.eq.s32.totalorder %v2292, %v2223
        %vm2412 = vcmp.eq.s32.totalorder %v2295, %v393
        %vm2413 = vcmp.eq.s32.totalorder %v2295, %v394
        %vm2414 = vcmp.eq.s32.totalorder %v2295, %v2222
        %vm2415 = vcmp.eq.s32.totalorder %v2295, %v2223
        %vm2416 = vcmp.eq.s32.totalorder %v2298, %v393
        %vm2417 = vcmp.eq.s32.totalorder %v2298, %v394
        %vm2418 = vcmp.eq.s32.totalorder %v2298, %v2222
        %vm2419 = vcmp.eq.s32.totalorder %v2298, %v2223
        %vm2420 = vcmp.eq.s32.totalorder %v2301, %v393
        %vm2421 = vcmp.eq.s32.totalorder %v2301, %v394
        %vm2422 = vcmp.eq.s32.totalorder %v2301, %v2222
        %vm2423 = vcmp.eq.s32.totalorder %v2301, %v2223
        %vm2424 = vcmp.eq.s32.totalorder %v2304, %v393
        %vm2425 = vcmp.eq.s32.totalorder %v2304, %v394
        %vm2426 = vcmp.eq.s32.totalorder %v2304, %v2222
        %vm2427 = vcmp.eq.s32.totalorder %v2304, %v2223
        %vm2428 = vcmp.eq.s32.totalorder %v2307, %v393
        %vm2429 = vcmp.eq.s32.totalorder %v2307, %v394
        %vm2430 = vcmp.eq.s32.totalorder %v2307, %v2222
        %vm2431 = vcmp.eq.s32.totalorder %v2307, %v2223
        %vm2432 = vcmp.eq.s32.totalorder %v2310, %v393
        %vm2433 = vcmp.eq.s32.totalorder %v2310, %v394
        %vm2434 = vcmp.eq.s32.totalorder %v2310, %v2222
        %vm2435 = vcmp.eq.s32.totalorder %v2310, %v2223
        %vm2436 = vcmp.eq.s32.totalorder %v2313, %v393
        %vm2437 = vcmp.eq.s32.totalorder %v2313, %v394
        %vm2438 = vcmp.eq.s32.totalorder %v2313, %v2222
        %vm2439 = vcmp.eq.s32.totalorder %v2313, %v2223
        %vm2440 = vcmp.eq.s32.totalorder %v2316, %v393
        %vm2441 = vcmp.eq.s32.totalorder %v2316, %v394
        %vm2442 = vcmp.eq.s32.totalorder %v2316, %v2222
        %vm2443 = vcmp.eq.s32.totalorder %v2316, %v2223
        %vm2444 = vcmp.eq.s32.totalorder %v2319, %v393
        %vm2445 = vcmp.eq.s32.totalorder %v2319, %v394
        %vm2446 = vcmp.eq.s32.totalorder %v2319, %v2222
        %vm2447 = vcmp.eq.s32.totalorder %v2319, %v2223
        %v2448 = vsel %vm2320, 1, 0
        %v2449 = vsel %vm2321, 1, 0
        %v2450 = vsel %vm2322, 1, 0
        %v2451 = vsel %vm2323, 1, 0
        %v2452 = vsel %vm2324, 1, 0
        %v2453 = vsel %vm2325, 1, 0
        %v2454 = vsel %vm2326, 1, 0
        %v2455 = vsel %vm2327, 1, 0
        %v2456 = vsel %vm2328, 1, 0
        %v2457 = vsel %vm2329, 1, 0
        %v2458 = vsel %vm2330, 1, 0
        %v2459 = vsel %vm2331, 1, 0
        %v2460 = vsel %vm2332, 1, 0
        %v2461 = vsel %vm2333, 1, 0
        %v2462 = vsel %vm2334, 1, 0
        %v2463 = vsel %vm2335, 1, 0
        %v2464 = vsel %vm2336, 1, 0
        %v2465 = vsel %vm2337, 1, 0
        %v2466 = vsel %vm2338, 1, 0
        %v2467 = vsel %vm2339, 1, 0
        %v2468 = vsel %vm2340, 1, 0
        %v2469 = vsel %vm2341, 1, 0
        %v2470 = vsel %vm2342, 1, 0
        %v2471 = vsel %vm2343, 1, 0
        %v2472 = vsel %vm2344, 1, 0
        %v2473 = vsel %vm2345, 1, 0
        %v2474 = vsel %vm2346, 1, 0
        %v2475 = vsel %vm2347, 1, 0
        %v2476 = vsel %vm2348, 1, 0
        %v2477 = vsel %vm2349, 1, 0
        %v2478 = vsel %vm2350, 1, 0
        %v2479 = vsel %vm2351, 1, 0
        %v2480 = vsel %vm2352, 1, 0
        %v2481 = vsel %vm2353, 1, 0
        %v2482 = vsel %vm2354, 1, 0
        %v2483 = vsel %vm2355, 1, 0
        %v2484 = vsel %vm2356, 1, 0
        %v2485 = vsel %vm2357, 1, 0
        %v2486 = vsel %vm2358, 1, 0
        %v2487 = vsel %vm2359, 1, 0
        %v2488 = vsel %vm2360, 1, 0
        %v2489 = vsel %vm2361, 1, 0
        %v2490 = vsel %vm2362, 1, 0
        %v2491 = vsel %vm2363, 1, 0
        %v2492 = vsel %vm2364, 1, 0
        %v2493 = vsel %vm2365, 1, 0
        %v2494 = vsel %vm2366, 1, 0
        %v2495 = vsel %vm2367, 1, 0
        %v2496 = vsel %vm2368, 1, 0
        %v2497 = vsel %vm2369, 1, 0
        %v2498 = vsel %vm2370, 1, 0
        %v2499 = vsel %vm2371, 1, 0
        %v2500 = vsel %vm2372, 1, 0
        %v2501 = vsel %vm2373, 1, 0
        %v2502 = vsel %vm2374, 1, 0
        %v2503 = vsel %vm2375, 1, 0
        %v2504 = vsel %vm2376, 1, 0
        %v2505 = vsel %vm2377, 1, 0
        %v2506 = vsel %vm2378, 1, 0
        %v2507 = vsel %vm2379, 1, 0
        %v2508 = vsel %vm2380, 1, 0
        %v2509 = vsel %vm2381, 1, 0
        %v2510 = vsel %vm2382, 1, 0
        %v2511 = vsel %vm2383, 1, 0
        %v2512 = vsel %vm2384, 1, 0
        %v2513 = vsel %vm2385, 1, 0
        %v2514 = vsel %vm2386, 1, 0
        %v2515 = vsel %vm2387, 1, 0
        %v2516 = vsel %vm2388, 1, 0
        %v2517 = vsel %vm2389, 1, 0
        %v2518 = vsel %vm2390, 1, 0
        %v2519 = vsel %vm2391, 1, 0
        %v2520 = vsel %vm2392, 1, 0
        %v2521 = vsel %vm2393, 1, 0
        %v2522 = vsel %vm2394, 1, 0
        %v2523 = vsel %vm2395, 1, 0
        %v2524 = vsel %vm2396, 1, 0
        %v2525 = vsel %vm2397, 1, 0
        %v2526 = vsel %vm2398, 1, 0
        %v2527 = vsel %vm2399, 1, 0
        %v2528 = vsel %vm2400, 1, 0
        %v2529 = vsel %vm2401, 1, 0
        %v2530 = vsel %vm2402, 1, 0
        %v2531 = vsel %vm2403, 1, 0
        %v2532 = vsel %vm2404, 1, 0
        %v2533 = vsel %vm2405, 1, 0
        %v2534 = vsel %vm2406, 1, 0
        %v2535 = vsel %vm2407, 1, 0
        %v2536 = vsel %vm2408, 1, 0
        %v2537 = vsel %vm2409, 1, 0
        %v2538 = vsel %vm2410, 1, 0
        %v2539 = vsel %vm2411, 1, 0
        %v2540 = vsel %vm2412, 1, 0
        %v2541 = vsel %vm2413, 1, 0
        %v2542 = vsel %vm2414, 1, 0
        %v2543 = vsel %vm2415, 1, 0
        %v2544 = vsel %vm2416, 1, 0
        %v2545 = vsel %vm2417, 1, 0
        %v2546 = vsel %vm2418, 1, 0
        %v2547 = vsel %vm2419, 1, 0
        %v2548 = vsel %vm2420, 1, 0
        %v2549 = vsel %vm2421, 1, 0
        %v2550 = vsel %vm2422, 1, 0
        %v2551 = vsel %vm2423, 1, 0
        %v2552 = vsel %vm2424, 1, 0
        %v2553 = vsel %vm2425, 1, 0
        %v2554 = vsel %vm2426, 1, 0
        %v2555 = vsel %vm2427, 1, 0
        %v2556 = vsel %vm2428, 1, 0
        %v2557 = vsel %vm2429, 1, 0
        %v2558 = vsel %vm2430, 1, 0
        %v2559 = vsel %vm2431, 1, 0
        %v2560 = vsel %vm2432, 1, 0
        %v2561 = vsel %vm2433, 1, 0
        %v2562 = vsel %vm2434, 1, 0
        %v2563 = vsel %vm2435, 1, 0
        %v2564 = vsel %vm2436, 1, 0
        %v2565 = vsel %vm2437, 1, 0
        %v2566 = vsel %vm2438, 1, 0
        %v2567 = vsel %vm2439, 1, 0
        %v2568 = vsel %vm2440, 1, 0
        %v2569 = vsel %vm2441, 1, 0
        %v2570 = vsel %vm2442, 1, 0
        %v2571 = vsel %vm2443, 1, 0
        %v2572 = vsel %vm2444, 1, 0
        %v2573 = vsel %vm2445, 1, 0
        %v2574 = vsel %vm2446, 1, 0
        %v2575 = vsel %vm2447, 1, 0
        %v2576 = vcvt.s32.f32 %v2448
        %v2577 = vcvt.s32.f32 %v2449
        %v2578 = vcvt.s32.f32 %v2450
        %v2579 = vcvt.s32.f32 %v2451
        %v2580 = vcvt.s32.f32 %v2452
        %v2581 = vcvt.s32.f32 %v2453
        %v2582 = vcvt.s32.f32 %v2454
        %v2583 = vcvt.s32.f32 %v2455
        %v2584 = vcvt.s32.f32 %v2456
        %v2585 = vcvt.s32.f32 %v2457
        %v2586 = vcvt.s32.f32 %v2458
        %v2587 = vcvt.s32.f32 %v2459
        %v2588 = vcvt.s32.f32 %v2460
        %v2589 = vcvt.s32.f32 %v2461
        %v2590 = vcvt.s32.f32 %v2462
        %v2591 = vcvt.s32.f32 %v2463
        %v2592 = vcvt.s32.f32 %v2464
        %v2593 = vcvt.s32.f32 %v2465
        %v2594 = vcvt.s32.f32 %v2466
        %v2595 = vcvt.s32.f32 %v2467
        %v2596 = vcvt.s32.f32 %v2468
        %v2597 = vcvt.s32.f32 %v2469
        %v2598 = vcvt.s32.f32 %v2470
        %v2599 = vcvt.s32.f32 %v2471
        %v2600 = vcvt.s32.f32 %v2472
        %v2601 = vcvt.s32.f32 %v2473
        %v2602 = vcvt.s32.f32 %v2474
        %v2603 = vcvt.s32.f32 %v2475
        %v2604 = vcvt.s32.f32 %v2476
        %v2605 = vcvt.s32.f32 %v2477
        %v2606 = vcvt.s32.f32 %v2478
        %v2607 = vcvt.s32.f32 %v2479
        %v2608 = vcvt.s32.f32 %v2480
        %v2609 = vcvt.s32.f32 %v2481
        %v2610 = vcvt.s32.f32 %v2482
        %v2611 = vcvt.s32.f32 %v2483
        %v2612 = vcvt.s32.f32 %v2484
        %v2613 = vcvt.s32.f32 %v2485
        %v2614 = vcvt.s32.f32 %v2486
        %v2615 = vcvt.s32.f32 %v2487
        %v2616 = vcvt.s32.f32 %v2488
        %v2617 = vcvt.s32.f32 %v2489
        %v2618 = vcvt.s32.f32 %v2490
        %v2619 = vcvt.s32.f32 %v2491
        %v2620 = vcvt.s32.f32 %v2492
        %v2621 = vcvt.s32.f32 %v2493
        %v2622 = vcvt.s32.f32 %v2494
        %v2623 = vcvt.s32.f32 %v2495
        %v2624 = vcvt.s32.f32 %v2496
        %v2625 = vcvt.s32.f32 %v2497
        %v2626 = vcvt.s32.f32 %v2498
        %v2627 = vcvt.s32.f32 %v2499
        %v2628 = vcvt.s32.f32 %v2500
        %v2629 = vcvt.s32.f32 %v2501
        %v2630 = vcvt.s32.f32 %v2502
        %v2631 = vcvt.s32.f32 %v2503
        %v2632 = vcvt.s32.f32 %v2504
        %v2633 = vcvt.s32.f32 %v2505
        %v2634 = vcvt.s32.f32 %v2506
        %v2635 = vcvt.s32.f32 %v2507
        %v2636 = vcvt.s32.f32 %v2508
        %v2637 = vcvt.s32.f32 %v2509
        %v2638 = vcvt.s32.f32 %v2510
        %v2639 = vcvt.s32.f32 %v2511
        %v2640 = vcvt.s32.f32 %v2512
        %v2641 = vcvt.s32.f32 %v2513
        %v2642 = vcvt.s32.f32 %v2514
        %v2643 = vcvt.s32.f32 %v2515
        %v2644 = vcvt.s32.f32 %v2516
        %v2645 = vcvt.s32.f32 %v2517
        %v2646 = vcvt.s32.f32 %v2518
        %v2647 = vcvt.s32.f32 %v2519
        %v2648 = vcvt.s32.f32 %v2520
        %v2649 = vcvt.s32.f32 %v2521
        %v2650 = vcvt.s32.f32 %v2522
        %v2651 = vcvt.s32.f32 %v2523
        %v2652 = vcvt.s32.f32 %v2524
        %v2653 = vcvt.s32.f32 %v2525
        %v2654 = vcvt.s32.f32 %v2526
        %v2655 = vcvt.s32.f32 %v2527
        %v2656 = vcvt.s32.f32 %v2528
        %v2657 = vcvt.s32.f32 %v2529
        %v2658 = vcvt.s32.f32 %v2530
        %v2659 = vcvt.s32.f32 %v2531
        %v2660 = vcvt.s32.f32 %v2532
        %v2661 = vcvt.s32.f32 %v2533
        %v2662 = vcvt.s32.f32 %v2534
        %v2663 = vcvt.s32.f32 %v2535
        %v2664 = vcvt.s32.f32 %v2536
        %v2665 = vcvt.s32.f32 %v2537
        %v2666 = vcvt.s32.f32 %v2538
        %v2667 = vcvt.s32.f32 %v2539
        %v2668 = vcvt.s32.f32 %v2540
        %v2669 = vcvt.s32.f32 %v2541
        %v2670 = vcvt.s32.f32 %v2542
        %v2671 = vcvt.s32.f32 %v2543
        %v2672 = vcvt.s32.f32 %v2544
        %v2673 = vcvt.s32.f32 %v2545
        %v2674 = vcvt.s32.f32 %v2546
        %v2675 = vcvt.s32.f32 %v2547
        %v2676 = vcvt.s32.f32 %v2548
        %v2677 = vcvt.s32.f32 %v2549
        %v2678 = vcvt.s32.f32 %v2550
        %v2679 = vcvt.s32.f32 %v2551
        %v2680 = vcvt.s32.f32 %v2552
        %v2681 = vcvt.s32.f32 %v2553
        %v2682 = vcvt.s32.f32 %v2554
        %v2683 = vcvt.s32.f32 %v2555
        %v2684 = vcvt.s32.f32 %v2556
        %v2685 = vcvt.s32.f32 %v2557
        %v2686 = vcvt.s32.f32 %v2558
        %v2687 = vcvt.s32.f32 %v2559
        %v2688 = vcvt.s32.f32 %v2560
        %v2689 = vcvt.s32.f32 %v2561
        %v2690 = vcvt.s32.f32 %v2562
        %v2691 = vcvt.s32.f32 %v2563
        %v2692 = vcvt.s32.f32 %v2564
        %v2693 = vcvt.s32.f32 %v2565
        %v2694 = vcvt.s32.f32 %v2566
        %v2695 = vcvt.s32.f32 %v2567
        %v2696 = vcvt.s32.f32 %v2568
        %v2697 = vcvt.s32.f32 %v2569
        %v2698 = vcvt.s32.f32 %v2570
        %v2699 = vcvt.s32.f32 %v2571
        %v2700 = vcvt.s32.f32 %v2572
        %v2701 = vcvt.s32.f32 %v2573
        %v2702 = vcvt.s32.f32 %v2574
        %v2703 = vcvt.s32.f32 %v2575
        %v2704 = vpack.c.bf16 %v2580, %v2576
        %v2705 = vpack.c.bf16 %v2581, %v2577
        %v2706 = vpack.c.bf16 %v2582, %v2578
        %v2707 = vpack.c.bf16 %v2583, %v2579
        %v2708 = vpack.c.bf16 %v2588, %v2584
        %v2709 = vpack.c.bf16 %v2589, %v2585
        %v2710 = vpack.c.bf16 %v2590, %v2586
        %v2711 = vpack.c.bf16 %v2591, %v2587
        %v2712 = vpack.c.bf16 %v2596, %v2592
        %v2713 = vpack.c.bf16 %v2597, %v2593
        %v2714 = vpack.c.bf16 %v2598, %v2594
        %v2715 = vpack.c.bf16 %v2599, %v2595
        %v2716 = vpack.c.bf16 %v2604, %v2600
        %v2717 = vpack.c.bf16 %v2605, %v2601
        %v2718 = vpack.c.bf16 %v2606, %v2602
        %v2719 = vpack.c.bf16 %v2607, %v2603
        %v2720 = vpack.c.bf16 %v2612, %v2608
        %v2721 = vpack.c.bf16 %v2613, %v2609
        %v2722 = vpack.c.bf16 %v2614, %v2610
        %v2723 = vpack.c.bf16 %v2615, %v2611
        %v2724 = vpack.c.bf16 %v2620, %v2616
        %v2725 = vpack.c.bf16 %v2621, %v2617
        %v2726 = vpack.c.bf16 %v2622, %v2618
        %v2727 = vpack.c.bf16 %v2623, %v2619
        %v2728 = vpack.c.bf16 %v2628, %v2624
        %v2729 = vpack.c.bf16 %v2629, %v2625
        %v2730 = vpack.c.bf16 %v2630, %v2626
        %v2731 = vpack.c.bf16 %v2631, %v2627
        %v2732 = vpack.c.bf16 %v2636, %v2632
        %v2733 = vpack.c.bf16 %v2637, %v2633
        %v2734 = vpack.c.bf16 %v2638, %v2634
        %v2735 = vpack.c.bf16 %v2639, %v2635
        %v2736 = vpack.c.bf16 %v2644, %v2640
        %v2737 = vpack.c.bf16 %v2645, %v2641
        %v2738 = vpack.c.bf16 %v2646, %v2642
        %v2739 = vpack.c.bf16 %v2647, %v2643
        %v2740 = vpack.c.bf16 %v2652, %v2648
        %v2741 = vpack.c.bf16 %v2653, %v2649
        %v2742 = vpack.c.bf16 %v2654, %v2650
        %v2743 = vpack.c.bf16 %v2655, %v2651
        %v2744 = vpack.c.bf16 %v2660, %v2656
        %v2745 = vpack.c.bf16 %v2661, %v2657
        %v2746 = vpack.c.bf16 %v2662, %v2658
        %v2747 = vpack.c.bf16 %v2663, %v2659
        %v2748 = vpack.c.bf16 %v2668, %v2664
        %v2749 = vpack.c.bf16 %v2669, %v2665
        %v2750 = vpack.c.bf16 %v2670, %v2666
        %v2751 = vpack.c.bf16 %v2671, %v2667
        %v2752 = vpack.c.bf16 %v2676, %v2672
        %v2753 = vpack.c.bf16 %v2677, %v2673
        %v2754 = vpack.c.bf16 %v2678, %v2674
        %v2755 = vpack.c.bf16 %v2679, %v2675
        %v2756 = vpack.c.bf16 %v2684, %v2680
        %v2757 = vpack.c.bf16 %v2685, %v2681
        %v2758 = vpack.c.bf16 %v2686, %v2682
        %v2759 = vpack.c.bf16 %v2687, %v2683
        %v2760 = vpack.c.bf16 %v2692, %v2688
        %v2761 = vpack.c.bf16 %v2693, %v2689
        %v2762 = vpack.c.bf16 %v2694, %v2690
        %v2763 = vpack.c.bf16 %v2695, %v2691
        %v2764 = vpack.c.bf16 %v2700, %v2696
        %v2765 = vpack.c.bf16 %v2701, %v2697
        %v2766 = vpack.c.bf16 %v2702, %v2698
        %v2767 = vpack.c.bf16 %v2703, %v2699
        %v2768 = vld [vmem:[#allocation5] sm:$0xf]
        %v2769 = vld [vmem:[#allocation5 + $0x4] sm:$0xf]
        %v2770 = vld [vmem:[#allocation5 + $0x8] sm:$0xf]
        %v2771 = vld [vmem:[#allocation5 + $0xc] sm:$0xf]
        %v2772 = vld [vmem:[#allocation5 + $0x10] sm:$0xf]
        %v2773 = vld [vmem:[#allocation5 + $0x14] sm:$0xf]
        %v2774 = vld [vmem:[#allocation5 + $0x18] sm:$0xf]
        %v2775 = vld [vmem:[#allocation5 + $0x1c] sm:$0xf]
        %v2776 = vld [vmem:[#allocation5 + $0x20] sm:$0xf]
        %v2777 = vld [vmem:[#allocation5 + $0x24] sm:$0xf]
        %v2778 = vld [vmem:[#allocation5 + $0x28] sm:$0xf]
        %v2779 = vld [vmem:[#allocation5 + $0x2c] sm:$0xf]
        %v2780 = vld [vmem:[#allocation5 + $0x30] sm:$0xf]
        %v2781 = vld [vmem:[#allocation5 + $0x34] sm:$0xf]
        %v2782 = vld [vmem:[#allocation5 + $0x38] sm:$0xf]
        %v2783 = vld [vmem:[#allocation5 + $0x3c] sm:$0xf]
        %v2784 = vld [vmem:[#allocation5 + $0x40] sm:$0xf]
        %v2785 = vld [vmem:[#allocation5 + $0x44] sm:$0xf]
        %v2786 = vld [vmem:[#allocation5 + $0x48] sm:$0xf]
        %v2787 = vld [vmem:[#allocation5 + $0x4c] sm:$0xf]
        %v2788 = vld [vmem:[#allocation5 + $0x50] sm:$0xf]
        %v2789 = vld [vmem:[#allocation5 + $0x54] sm:$0xf]
        %v2790 = vld [vmem:[#allocation5 + $0x58] sm:$0xf]
        %v2791 = vld [vmem:[#allocation5 + $0x5c] sm:$0xf]
        %v2792 = vld [vmem:[#allocation5 + $0x60] sm:$0xf]
        %v2793 = vld [vmem:[#allocation5 + $0x64] sm:$0xf]
        %v2794 = vld [vmem:[#allocation5 + $0x68] sm:$0xf]
        %v2795 = vld [vmem:[#allocation5 + $0x6c] sm:$0xf]
        %v2796 = vld [vmem:[#allocation5 + $0x70] sm:$0xf]
        %v2797 = vld [vmem:[#allocation5 + $0x74] sm:$0xf]
        %v2798 = vld [vmem:[#allocation5 + $0x78] sm:$0xf]
        %v2799 = vld [vmem:[#allocation5 + $0x7c] sm:$0xf]
        %v2800 = vld [vmem:[#allocation5 + $0x80] sm:$0xf]
        %v2801 = vld [vmem:[#allocation5 + $0x84] sm:$0xf]
        %v2802 = vld [vmem:[#allocation5 + $0x88] sm:$0xf]
        %v2803 = vld [vmem:[#allocation5 + $0x8c] sm:$0xf]
        %v2804 = vld [vmem:[#allocation5 + $0x90] sm:$0xf]
        %v2805 = vld [vmem:[#allocation5 + $0x94] sm:$0xf]
        %v2806 = vld [vmem:[#allocation5 + $0x98] sm:$0xf]
        %v2807 = vld [vmem:[#allocation5 + $0x9c] sm:$0xf]
        %v2808 = vld [vmem:[#allocation5 + $0xa0] sm:$0xf]
        %v2809 = vld [vmem:[#allocation5 + $0xa4] sm:$0xf]
        %v2810 = vld [vmem:[#allocation5 + $0xa8] sm:$0xf]
        %v2811 = vld [vmem:[#allocation5 + $0xac] sm:$0xf]
        %v2812 = vld [vmem:[#allocation5 + $0xb0] sm:$0xf]
        %v2813 = vld [vmem:[#allocation5 + $0xb4] sm:$0xf]
        %v2814 = vld [vmem:[#allocation5 + $0xb8] sm:$0xf]
        %v2815 = vld [vmem:[#allocation5 + $0xbc] sm:$0xf]
        %v2816 = vld [vmem:[#allocation5 + $0xc0] sm:$0xf]
        %v2817 = vld [vmem:[#allocation5 + $0xc4] sm:$0xf]
        %v2818 = vld [vmem:[#allocation5 + $0xc8] sm:$0xf]
        %v2819 = vld [vmem:[#allocation5 + $0xcc] sm:$0xf]
        %v2820 = vld [vmem:[#allocation5 + $0xd0] sm:$0xf]
        %v2821 = vld [vmem:[#allocation5 + $0xd4] sm:$0xf]
        %v2822 = vld [vmem:[#allocation5 + $0xd8] sm:$0xf]
        %v2823 = vld [vmem:[#allocation5 + $0xdc] sm:$0xf]
        %v2824 = vld [vmem:[#allocation5 + $0xe0] sm:$0xf]
        %v2825 = vld [vmem:[#allocation5 + $0xe4] sm:$0xf]
        %v2826 = vld [vmem:[#allocation5 + $0xe8] sm:$0xf]
        %v2827 = vld [vmem:[#allocation5 + $0xec] sm:$0xf]
        %v2828 = vld [vmem:[#allocation5 + $0xf0] sm:$0xf]
        %v2829 = vld [vmem:[#allocation5 + $0xf4] sm:$0xf]
        %v2830 = vld [vmem:[#allocation5 + $0xf8] sm:$0xf]
        %v2831 = vld [vmem:[#allocation5 + $0xfc] sm:$0xf]
        %v2896 = vunpack.c.l.b16 %v2768
        %v2897 = vunpack.c.l.b16 %v2769
        %v2898 = vunpack.c.l.b16 %v2770
        %v2899 = vunpack.c.l.b16 %v2771
        %v2900 = vunpack.c.l.b16 %v2772
        %v2901 = vunpack.c.l.b16 %v2773
        %v2902 = vunpack.c.l.b16 %v2774
        %v2903 = vunpack.c.l.b16 %v2775
        %v2904 = vunpack.c.l.b16 %v2776
        %v2905 = vunpack.c.l.b16 %v2777
        %v2906 = vunpack.c.l.b16 %v2778
        %v2907 = vunpack.c.l.b16 %v2779
        %v2908 = vunpack.c.l.b16 %v2780
        %v2909 = vunpack.c.l.b16 %v2781
        %v2910 = vunpack.c.l.b16 %v2782
        %v2911 = vunpack.c.l.b16 %v2783
        %v2912 = vunpack.c.l.b16 %v2784
        %v2913 = vunpack.c.l.b16 %v2785
        %v2914 = vunpack.c.l.b16 %v2786
        %v2915 = vunpack.c.l.b16 %v2787
        %v2916 = vunpack.c.l.b16 %v2788
        %v2917 = vunpack.c.l.b16 %v2789
        %v2918 = vunpack.c.l.b16 %v2790
        %v2919 = vunpack.c.l.b16 %v2791
        %v2920 = vunpack.c.l.b16 %v2792
        %v2921 = vunpack.c.l.b16 %v2793
        %v2922 = vunpack.c.l.b16 %v2794
        %v2923 = vunpack.c.l.b16 %v2795
        %v2924 = vunpack.c.l.b16 %v2796
        %v2925 = vunpack.c.l.b16 %v2797
        %v2926 = vunpack.c.l.b16 %v2798
        %v2927 = vunpack.c.l.b16 %v2799
        %v2928 = vunpack.c.l.b16 %v2800
        %v2929 = vunpack.c.l.b16 %v2801
        %v2930 = vunpack.c.l.b16 %v2802
        %v2931 = vunpack.c.l.b16 %v2803
        %v2932 = vunpack.c.l.b16 %v2804
        %v2933 = vunpack.c.l.b16 %v2805
        %v2934 = vunpack.c.l.b16 %v2806
        %v2935 = vunpack.c.l.b16 %v2807
        %v2936 = vunpack.c.l.b16 %v2808
        %v2937 = vunpack.c.l.b16 %v2809
        %v2938 = vunpack.c.l.b16 %v2810
        %v2939 = vunpack.c.l.b16 %v2811
        %v2940 = vunpack.c.l.b16 %v2812
        %v2941 = vunpack.c.l.b16 %v2813
        %v2942 = vunpack.c.l.b16 %v2814
        %v2943 = vunpack.c.l.b16 %v2815
        %v2944 = vunpack.c.l.b16 %v2816
        %v2945 = vunpack.c.l.b16 %v2817
        %v2946 = vunpack.c.l.b16 %v2818
        %v2947 = vunpack.c.l.b16 %v2819
        %v2948 = vunpack.c.l.b16 %v2820
        %v2949 = vunpack.c.l.b16 %v2821
        %v2950 = vunpack.c.l.b16 %v2822
        %v2951 = vunpack.c.l.b16 %v2823
        %v2952 = vunpack.c.l.b16 %v2824
        %v2953 = vunpack.c.l.b16 %v2825
        %v2954 = vunpack.c.l.b16 %v2826
        %v2955 = vunpack.c.l.b16 %v2827
        %v2956 = vunpack.c.l.b16 %v2828
        %v2957 = vunpack.c.l.b16 %v2829
        %v2958 = vunpack.c.l.b16 %v2830
        %v2959 = vunpack.c.l.b16 %v2831
        %v2960 = vpack.c.b16 %v2897, %v2896
        %v2961 = vpack.c.b16 %v2899, %v2898
        %v2962 = vpack.c.b16 %v2901, %v2900
        %v2963 = vpack.c.b16 %v2903, %v2902
        %v2964 = vpack.c.b16 %v2905, %v2904
        %v2965 = vpack.c.b16 %v2907, %v2906
        %v2966 = vpack.c.b16 %v2909, %v2908
        %v2967 = vpack.c.b16 %v2911, %v2910
        %v2968 = vpack.c.b16 %v2913, %v2912
        %v2969 = vpack.c.b16 %v2915, %v2914
        %v2970 = vpack.c.b16 %v2917, %v2916
        %v2971 = vpack.c.b16 %v2919, %v2918
        %v2972 = vpack.c.b16 %v2921, %v2920
        %v2973 = vpack.c.b16 %v2923, %v2922
        %v2974 = vpack.c.b16 %v2925, %v2924
        %v2975 = vpack.c.b16 %v2927, %v2926
        %v2976 = vpack.c.b16 %v2929, %v2928
        %v2977 = vpack.c.b16 %v2931, %v2930
        %v2978 = vpack.c.b16 %v2933, %v2932
        %v2979 = vpack.c.b16 %v2935, %v2934
        %v2980 = vpack.c.b16 %v2937, %v2936
        %v2981 = vpack.c.b16 %v2939, %v2938
        %v2982 = vpack.c.b16 %v2941, %v2940
        %v2983 = vpack.c.b16 %v2943, %v2942
        %v2984 = vpack.c.b16 %v2945, %v2944
        %v2985 = vpack.c.b16 %v2947, %v2946
        %v2986 = vpack.c.b16 %v2949, %v2948
        %v2987 = vpack.c.b16 %v2951, %v2950
        %v2988 = vpack.c.b16 %v2953, %v2952
        %v2989 = vpack.c.b16 %v2955, %v2954
        %v2990 = vpack.c.b16 %v2957, %v2956
        %v2991 = vpack.c.b16 %v2959, %v2958
        %3024 = vmatprep.subr.bf16.mxu0 0
        %3025 = vmatpush1.bf16.msra.mxu0 %v2960
        %3026 = vmatprep.subr.bf16.mxu0 0
        %3027 = vmatpush1.bf16.msra.mxu0 %v2961
        %3028 = vmatprep.subr.bf16.mxu0 0
        %3029 = vmatpush1.bf16.msra.mxu0 %v2962
        %3030 = vmatprep.subr.bf16.mxu0 0
        %3031 = vmatpush1.bf16.msra.mxu0 %v2963
        %3032 = vmatprep.subr.bf16.mxu0 0
        %3033 = vmatpush1.bf16.msra.mxu0 %v2964
        %3034 = vmatprep.subr.bf16.mxu0 0
        %3035 = vmatpush1.bf16.msra.mxu0 %v2965
        %3036 = vmatprep.subr.bf16.mxu0 0
        %3037 = vmatpush1.bf16.msra.mxu0 %v2966
        %3038 = vmatprep.subr.bf16.mxu0 0
        %3039 = vmatpush1.bf16.msra.mxu0 %v2967
        %3040 = vmatprep.subr.bf16.mxu0 0
        %3041 = vmatpush1.bf16.msra.mxu0 %v2968
        %3042 = vmatprep.subr.bf16.mxu0 0
        %3043 = vmatpush1.bf16.msra.mxu0 %v2969
        %3044 = vmatprep.subr.bf16.mxu0 0
        %3045 = vmatpush1.bf16.msra.mxu0 %v2970
        %3046 = vmatprep.subr.bf16.mxu0 0
        %3047 = vmatpush1.bf16.msra.mxu0 %v2971
        %3048 = vmatprep.subr.bf16.mxu0 0
        %3049 = vmatpush1.bf16.msra.mxu0 %v2972
        %3050 = vmatprep.subr.bf16.mxu0 0
        %3051 = vmatpush1.bf16.msra.mxu0 %v2973
        %3052 = vmatprep.subr.bf16.mxu0 0
        %3053 = vmatpush1.bf16.msra.mxu0 %v2974
        %3054 = vmatprep.subr.bf16.mxu0 0
        %3055 = vmatpush1.bf16.msra.mxu0 %v2975
        %3056 = vmatprep.mubr.bf16.mxu0 %v2705
        %3057 = vmatmul.mubr.bf16.gmra.mrb[0].mxu0 %v2704
        %v3058 = vpop.f32.mrb[0].mxu0
        %v3059 = vadd.f32 0.0, %v3058
        %v3060 = vpop.f32.mrb[0].mxu0
        %v3061 = vpop.f32.mrb[0].mxu0
        %v3062 = vadd.f32 0.0, %v3061
        %v3063 = vpop.f32.mrb[0].mxu0
        %3064 = vmatprep.mubr.bf16.mxu0 %v2709
        %3065 = vmatmul.mubr.bf16.gmra.mrb[0].mxu0 %v2708
        %v3066 = vpop.f32.mrb[0].mxu0
        %v3067 = vadd.f32 0.0, %v3066
        %v3068 = vpop.f32.mrb[0].mxu0
        %v3069 = vpop.f32.mrb[0].mxu0
        %v3070 = vadd.f32 0.0, %v3069
        %v3071 = vpop.f32.mrb[0].mxu0
        %3072 = vmatprep.mubr.bf16.mxu0 %v2713
        %3073 = vmatmul.mubr.bf16.gmra.mrb[0].mxu0 %v2712
        %v3074 = vpop.f32.mrb[0].mxu0
        %v3075 = vadd.f32 0.0, %v3074
        %v3076 = vpop.f32.mrb[0].mxu0
        %v3077 = vpop.f32.mrb[0].mxu0
        %v3078 = vadd.f32 0.0, %v3077
        %v3079 = vpop.f32.mrb[0].mxu0
        %3080 = vmatprep.mubr.bf16.mxu0 %v2717
        %3081 = vmatmul.mubr.bf16.gmra.mrb[0].mxu0 %v2716
        %v3082 = vpop.f32.mrb[0].mxu0
        %v3083 = vadd.f32 0.0, %v3082
        %v3084 = vpop.f32.mrb[0].mxu0
        %v3085 = vpop.f32.mrb[0].mxu0
        %v3086 = vadd.f32 0.0, %v3085
        %v3087 = vpop.f32.mrb[0].mxu0
        %3088 = vmatprep.mubr.bf16.mxu0 %v2721
        %3089 = vmatmul.mubr.bf16.gmra.mrb[0].mxu0 %v2720
        %v3090 = vpop.f32.mrb[0].mxu0
        %v3091 = vadd.f32 0.0, %v3090
        %v3092 = vpop.f32.mrb[0].mxu0
        %v3093 = vpop.f32.mrb[0].mxu0
        %v3094 = vadd.f32 0.0, %v3093
        %v3095 = vpop.f32.mrb[0].mxu0
        %3096 = vmatprep.mubr.bf16.mxu0 %v2725
        %3097 = vmatmul.mubr.bf16.gmra.mrb[0].mxu0 %v2724
        %v3098 = vpop.f32.mrb[0].mxu0
        %v3099 = vadd.f32 0.0, %v3098
        %v3100 = vpop.f32.mrb[0].mxu0
        %v3101 = vpop.f32.mrb[0].mxu0
        %v3102 = vadd.f32 0.0, %v3101
        %v3103 = vpop.f32.mrb[0].mxu0
        %3104 = vmatprep.mubr.bf16.mxu0 %v2729
        %3105 = vmatmul.mubr.bf16.gmra.mrb[0].mxu0 %v2728
        %v3106 = vpop.f32.mrb[0].mxu0
        %v3107 = vadd.f32 0.0, %v3106
        %v3108 = vpop.f32.mrb[0].mxu0
        %v3109 = vpop.f32.mrb[0].mxu0
        %v3110 = vadd.f32 0.0, %v3109
        %v3111 = vpop.f32.mrb[0].mxu0
        %3112 = vmatprep.mubr.bf16.mxu0 %v2733
        %3113 = vmatmul.mubr.bf16.gmra.mrb[0].mxu0 %v2732
        %v3114 = vpop.f32.mrb[0].mxu0
        %v3115 = vadd.f32 0.0, %v3114
        %v3116 = vpop.f32.mrb[0].mxu0
        %v3117 = vpop.f32.mrb[0].mxu0
        %v3118 = vadd.f32 0.0, %v3117
        %v3119 = vpop.f32.mrb[0].mxu0
        %3120 = vmatprep.mubr.bf16.mxu0 %v2737
        %3121 = vmatmul.mubr.bf16.gmra.mrb[0].mxu0 %v2736
        %v3122 = vpop.f32.mrb[0].mxu0
        %v3123 = vadd.f32 0.0, %v3122
        %v3124 = vpop.f32.mrb[0].mxu0
        %v3125 = vpop.f32.mrb[0].mxu0
        %v3126 = vadd.f32 0.0, %v3125
        %v3127 = vpop.f32.mrb[0].mxu0
        %3128 = vmatprep.mubr.bf16.mxu0 %v2741
        %3129 = vmatmul.mubr.bf16.gmra.mrb[0].mxu0 %v2740
        %v3130 = vpop.f32.mrb[0].mxu0
        %v3131 = vadd.f32 0.0, %v3130
        %v3132 = vpop.f32.mrb[0].mxu0
        %v3133 = vpop.f32.mrb[0].mxu0
        %v3134 = vadd.f32 0.0, %v3133
        %v3135 = vpop.f32.mrb[0].mxu0
        %3136 = vmatprep.mubr.bf16.mxu0 %v2745
        %3137 = vmatmul.mubr.bf16.gmra.mrb[0].mxu0 %v2744
        %v3138 = vpop.f32.mrb[0].mxu0
        %v3139 = vadd.f32 0.0, %v3138
        %v3140 = vpop.f32.mrb[0].mxu0
        %v3141 = vpop.f32.mrb[0].mxu0
        %v3142 = vadd.f32 0.0, %v3141
        %v3143 = vpop.f32.mrb[0].mxu0
        %3144 = vmatprep.mubr.bf16.mxu0 %v2749
        %3145 = vmatmul.mubr.bf16.gmra.mrb[0].mxu0 %v2748
        %v3146 = vpop.f32.mrb[0].mxu0
        %v3147 = vadd.f32 0.0, %v3146
        %v3148 = vpop.f32.mrb[0].mxu0
        %v3149 = vpop.f32.mrb[0].mxu0
        %v3150 = vadd.f32 0.0, %v3149
        %v3151 = vpop.f32.mrb[0].mxu0
        %3152 = vmatprep.mubr.bf16.mxu0 %v2753
        %3153 = vmatmul.mubr.bf16.gmra.mrb[0].mxu0 %v2752
        %v3154 = vpop.f32.mrb[0].mxu0
        %v3155 = vadd.f32 0.0, %v3154
        %v3156 = vpop.f32.mrb[0].mxu0
        %v3157 = vpop.f32.mrb[0].mxu0
        %v3158 = vadd.f32 0.0, %v3157
        %v3159 = vpop.f32.mrb[0].mxu0
        %3160 = vmatprep.mubr.bf16.mxu0 %v2757
        %3161 = vmatmul.mubr.bf16.gmra.mrb[0].mxu0 %v2756
        %v3162 = vpop.f32.mrb[0].mxu0
        %v3163 = vadd.f32 0.0, %v3162
        %v3164 = vpop.f32.mrb[0].mxu0
        %v3165 = vpop.f32.mrb[0].mxu0
        %v3166 = vadd.f32 0.0, %v3165
        %v3167 = vpop.f32.mrb[0].mxu0
        %3168 = vmatprep.mubr.bf16.mxu0 %v2761
        %3169 = vmatmul.mubr.bf16.gmra.mrb[0].mxu0 %v2760
        %v3170 = vpop.f32.mrb[0].mxu0
        %v3171 = vadd.f32 0.0, %v3170
        %v3172 = vpop.f32.mrb[0].mxu0
        %v3173 = vpop.f32.mrb[0].mxu0
        %v3174 = vadd.f32 0.0, %v3173
        %v3175 = vpop.f32.mrb[0].mxu0
        %3176 = vmatprep.mubr.bf16.mxu0 %v2765
        %3177 = vmatmul.mubr.bf16.gmra.mrb[0].mxu0 %v2764
        %v3178 = vpop.f32.mrb[0].mxu0
        %v3179 = vadd.f32 0.0, %v3178
        %v3180 = vpop.f32.mrb[0].mxu0
        %v3181 = vpop.f32.mrb[0].mxu0
        %v3182 = vadd.f32 0.0, %v3181
        %v3183 = vpop.f32.mrb[0].mxu0
        %3184 = vdwg.mxu0
        %3185 = vmatprep.subr.bf16.mxu0 0
        %3186 = vmatpush1.bf16.msra.mxu0 %v2976
        %3187 = vmatprep.subr.bf16.mxu0 0
        %3188 = vmatpush1.bf16.msra.mxu0 %v2977
        %3189 = vmatprep.subr.bf16.mxu0 0
        %3190 = vmatpush1.bf16.msra.mxu0 %v2978
        %3191 = vmatprep.subr.bf16.mxu0 0
        %3192 = vmatpush1.bf16.msra.mxu0 %v2979
        %3193 = vmatprep.subr.bf16.mxu0 0
        %3194 = vmatpush1.bf16.msra.mxu0 %v2980
        %3195 = vmatprep.subr.bf16.mxu0 0
        %3196 = vmatpush1.bf16.msra.mxu0 %v2981
        %3197 = vmatprep.subr.bf16.mxu0 0
        %3198 = vmatpush1.bf16.msra.mxu0 %v2982
        %3199 = vmatprep.subr.bf16.mxu0 0
        %3200 = vmatpush1.bf16.msra.mxu0 %v2983
        %3201 = vmatprep.subr.bf16.mxu0 0
        %3202 = vmatpush1.bf16.msra.mxu0 %v2984
        %3203 = vmatprep.subr.bf16.mxu0 0
        %3204 = vmatpush1.bf16.msra.mxu0 %v2985
        %3205 = vmatprep.subr.bf16.mxu0 0
        %3206 = vmatpush1.bf16.msra.mxu0 %v2986
        %3207 = vmatprep.subr.bf16.mxu0 0
        %3208 = vmatpush1.bf16.msra.mxu0 %v2987
        %3209 = vmatprep.subr.bf16.mxu0 0
        %3210 = vmatpush1.bf16.msra.mxu0 %v2988
        %3211 = vmatprep.subr.bf16.mxu0 0
        %3212 = vmatpush1.bf16.msra.mxu0 %v2989
        %3213 = vmatprep.subr.bf16.mxu0 0
        %3214 = vmatpush1.bf16.msra.mxu0 %v2990
        %3215 = vmatprep.subr.bf16.mxu0 0
        %3216 = vmatpush1.bf16.msra.mxu0 %v2991
        %3217 = vmatprep.mubr.bf16.mxu0 %v2707
        %3218 = vmatmul.mubr.bf16.gmra.mrb[0].mxu0 %v2706
        %v3219 = vpop.f32.mrb[0].mxu0
        %v3220 = vadd.f32 %v3059, %v3219
        %v3221 = vpop.f32.mrb[0].mxu0
        %v3222 = vpop.f32.mrb[0].mxu0
        %v3223 = vadd.f32 %v3062, %v3222
        %v3224 = vpop.f32.mrb[0].mxu0
        %3225 = vmatprep.mubr.bf16.mxu0 %v2711
        %3226 = vmatmul.mubr.bf16.gmra.mrb[0].mxu0 %v2710
        %v3227 = vpop.f32.mrb[0].mxu0
        %v3228 = vadd.f32 %v3067, %v3227
        %v3229 = vpop.f32.mrb[0].mxu0
        %v3230 = vpop.f32.mrb[0].mxu0
        %v3231 = vadd.f32 %v3070, %v3230
        %v3232 = vpop.f32.mrb[0].mxu0
        %3233 = vmatprep.mubr.bf16.mxu0 %v2715
        %3234 = vmatmul.mubr.bf16.gmra.mrb[0].mxu0 %v2714
        %v3235 = vpop.f32.mrb[0].mxu0
        %v3236 = vadd.f32 %v3075, %v3235
        %v3237 = vpop.f32.mrb[0].mxu0
        %v3238 = vpop.f32.mrb[0].mxu0
        %v3239 = vadd.f32 %v3078, %v3238
        %v3240 = vpop.f32.mrb[0].mxu0
        %3241 = vmatprep.mubr.bf16.mxu0 %v2719
        %3242 = vmatmul.mubr.bf16.gmra.mrb[0].mxu0 %v2718
        %v3243 = vpop.f32.mrb[0].mxu0
        %v3244 = vadd.f32 %v3083, %v3243
        %v3245 = vpop.f32.mrb[0].mxu0
        %v3246 = vpop.f32.mrb[0].mxu0
        %v3247 = vadd.f32 %v3086, %v3246
        %v3248 = vpop.f32.mrb[0].mxu0
        %3249 = vmatprep.mubr.bf16.mxu0 %v2723
        %3250 = vmatmul.mubr.bf16.gmra.mrb[0].mxu0 %v2722
        %v3251 = vpop.f32.mrb[0].mxu0
        %v3252 = vadd.f32 %v3091, %v3251
        %v3253 = vpop.f32.mrb[0].mxu0
        %v3254 = vpop.f32.mrb[0].mxu0
        %v3255 = vadd.f32 %v3094, %v3254
        %v3256 = vpop.f32.mrb[0].mxu0
        %3257 = vmatprep.mubr.bf16.mxu0 %v2727
        %3258 = vmatmul.mubr.bf16.gmra.mrb[0].mxu0 %v2726
        %v3259 = vpop.f32.mrb[0].mxu0
        %v3260 = vadd.f32 %v3099, %v3259
        %v3261 = vpop.f32.mrb[0].mxu0
        %v3262 = vpop.f32.mrb[0].mxu0
        %v3263 = vadd.f32 %v3102, %v3262
        %v3264 = vpop.f32.mrb[0].mxu0
        %3265 = vmatprep.mubr.bf16.mxu0 %v2731
        %3266 = vmatmul.mubr.bf16.gmra.mrb[0].mxu0 %v2730
        %v3267 = vpop.f32.mrb[0].mxu0
        %v3268 = vadd.f32 %v3107, %v3267
        %v3269 = vpop.f32.mrb[0].mxu0
        %v3270 = vpop.f32.mrb[0].mxu0
        %v3271 = vadd.f32 %v3110, %v3270
        %v3272 = vpop.f32.mrb[0].mxu0
        %3273 = vmatprep.mubr.bf16.mxu0 %v2735
        %3274 = vmatmul.mubr.bf16.gmra.mrb[0].mxu0 %v2734
        %v3275 = vpop.f32.mrb[0].mxu0
        %v3276 = vadd.f32 %v3115, %v3275
        %v3277 = vpop.f32.mrb[0].mxu0
        %v3278 = vpop.f32.mrb[0].mxu0
        %v3279 = vadd.f32 %v3118, %v3278
        %v3280 = vpop.f32.mrb[0].mxu0
        %3281 = vmatprep.mubr.bf16.mxu0 %v2739
        %3282 = vmatmul.mubr.bf16.gmra.mrb[0].mxu0 %v2738
        %v3283 = vpop.f32.mrb[0].mxu0
        %v3284 = vadd.f32 %v3123, %v3283
        %v3285 = vpop.f32.mrb[0].mxu0
        %v3286 = vpop.f32.mrb[0].mxu0
        %v3287 = vadd.f32 %v3126, %v3286
        %v3288 = vpop.f32.mrb[0].mxu0
        %3289 = vmatprep.mubr.bf16.mxu0 %v2743
        %3290 = vmatmul.mubr.bf16.gmra.mrb[0].mxu0 %v2742
        %v3291 = vpop.f32.mrb[0].mxu0
        %v3292 = vadd.f32 %v3131, %v3291
        %v3293 = vpop.f32.mrb[0].mxu0
        %v3294 = vpop.f32.mrb[0].mxu0
        %v3295 = vadd.f32 %v3134, %v3294
        %v3296 = vpop.f32.mrb[0].mxu0
        %3297 = vmatprep.mubr.bf16.mxu0 %v2747
        %3298 = vmatmul.mubr.bf16.gmra.mrb[0].mxu0 %v2746
        %v3299 = vpop.f32.mrb[0].mxu0
        %v3300 = vadd.f32 %v3139, %v3299
        %v3301 = vpop.f32.mrb[0].mxu0
        %v3302 = vpop.f32.mrb[0].mxu0
        %v3303 = vadd.f32 %v3142, %v3302
        %v3304 = vpop.f32.mrb[0].mxu0
        %3305 = vmatprep.mubr.bf16.mxu0 %v2751
        %3306 = vmatmul.mubr.bf16.gmra.mrb[0].mxu0 %v2750
        %v3307 = vpop.f32.mrb[0].mxu0
        %v3308 = vadd.f32 %v3147, %v3307
        %v3309 = vpop.f32.mrb[0].mxu0
        %v3310 = vpop.f32.mrb[0].mxu0
        %v3311 = vadd.f32 %v3150, %v3310
        %v3312 = vpop.f32.mrb[0].mxu0
        %3313 = vmatprep.mubr.bf16.mxu0 %v2755
        %3314 = vmatmul.mubr.bf16.gmra.mrb[0].mxu0 %v2754
        %v3315 = vpop.f32.mrb[0].mxu0
        %v3316 = vadd.f32 %v3155, %v3315
        %v3317 = vpop.f32.mrb[0].mxu0
        %v3318 = vpop.f32.mrb[0].mxu0
        %v3319 = vadd.f32 %v3158, %v3318
        %v3320 = vpop.f32.mrb[0].mxu0
        %3321 = vmatprep.mubr.bf16.mxu0 %v2759
        %3322 = vmatmul.mubr.bf16.gmra.mrb[0].mxu0 %v2758
        %v3323 = vpop.f32.mrb[0].mxu0
        %v3324 = vadd.f32 %v3163, %v3323
        %v3325 = vpop.f32.mrb[0].mxu0
        %v3326 = vpop.f32.mrb[0].mxu0
        %v3327 = vadd.f32 %v3166, %v3326
        %v3328 = vpop.f32.mrb[0].mxu0
        %3329 = vmatprep.mubr.bf16.mxu0 %v2763
        %3330 = vmatmul.mubr.bf16.gmra.mrb[0].mxu0 %v2762
        %v3331 = vpop.f32.mrb[0].mxu0
        %v3332 = vadd.f32 %v3171, %v3331
        %v3333 = vpop.f32.mrb[0].mxu0
        %v3334 = vpop.f32.mrb[0].mxu0
        %v3335 = vadd.f32 %v3174, %v3334
        %v3336 = vpop.f32.mrb[0].mxu0
        %3337 = vmatprep.mubr.bf16.mxu0 %v2767
        %3338 = vmatmul.mubr.bf16.gmra.mrb[0].mxu0 %v2766
        %v3339 = vpop.f32.mrb[0].mxu0
        %v3340 = vadd.f32 %v3179, %v3339
        %v3341 = vpop.f32.mrb[0].mxu0
        %v3342 = vpop.f32.mrb[0].mxu0
        %v3343 = vadd.f32 %v3182, %v3342
        %v3344 = vpop.f32.mrb[0].mxu0
        %3345 = vdwg.mxu0
        %v3346 = vld [vmem:[%s3] sm:$0xf]
        %v3347 = vld [vmem:[%s3 + $0x18] sm:$0xf]
        %v3348 = vld [vmem:[%s3 + $0x30] sm:$0xf]
        %v3349 = vld [vmem:[%s3 + $0x48] sm:$0xf]
        %v3350 = vld [vmem:[%s3 + $0x60] sm:$0xf]
        %v3351 = vld [vmem:[%s3 + $0x78] sm:$0xf]
        %v3352 = vld [vmem:[%s3 + $0x90] sm:$0xf]
        %v3353 = vld [vmem:[%s3 + $0xa8] sm:$0xf]
        %v3354 = vld [vmem:[%s3 + $0xc0] sm:$0xf]
        %v3355 = vld [vmem:[%s3 + $0xd8] sm:$0xf]
        %v3356 = vld [vmem:[%s3 + $0xf0] sm:$0xf]
        %v3357 = vld [vmem:[%s3 + $0x108] sm:$0xf]
        %v3358 = vld [vmem:[%s3 + $0x120] sm:$0xf]
        %v3359 = vld [vmem:[%s3 + $0x138] sm:$0xf]
        %v3360 = vld [vmem:[%s3 + $0x150] sm:$0xf]
        %v3361 = vld [vmem:[%s3 + $0x168] sm:$0xf]
        %v3362 = vld [vmem:[%s3 + $0x4] sm:$0xf]
        %v3363 = vld [vmem:[%s3 + $0x1c] sm:$0xf]
        %v3364 = vld [vmem:[%s3 + $0x34] sm:$0xf]
        %v3365 = vld [vmem:[%s3 + $0x4c] sm:$0xf]
        %v3366 = vld [vmem:[%s3 + $0x64] sm:$0xf]
        %v3367 = vld [vmem:[%s3 + $0x7c] sm:$0xf]
        %v3368 = vld [vmem:[%s3 + $0x94] sm:$0xf]
        %v3369 = vld [vmem:[%s3 + $0xac] sm:$0xf]
        %v3370 = vld [vmem:[%s3 + $0xc4] sm:$0xf]
        %v3371 = vld [vmem:[%s3 + $0xdc] sm:$0xf]
        %v3372 = vld [vmem:[%s3 + $0xf4] sm:$0xf]
        %v3373 = vld [vmem:[%s3 + $0x10c] sm:$0xf]
        %v3374 = vld [vmem:[%s3 + $0x124] sm:$0xf]
        %v3375 = vld [vmem:[%s3 + $0x13c] sm:$0xf]
        %v3376 = vld [vmem:[%s3 + $0x154] sm:$0xf]
        %v3377 = vld [vmem:[%s3 + $0x16c] sm:$0xf]
        %v3378 = vld [vmem:[%s3 + $0x8] sm:$0xff]
        %v3379 = vld [vmem:[%s3 + $0x10] sm:$0xff]
        %v3380 = vld [vmem:[%s3 + $0x20] sm:$0xff]
        %v3381 = vld [vmem:[%s3 + $0x28] sm:$0xff]
        %v3382 = vld [vmem:[%s3 + $0x38] sm:$0xff]
        %v3383 = vld [vmem:[%s3 + $0x40] sm:$0xff]
        %v3384 = vld [vmem:[%s3 + $0x50] sm:$0xff]
        %v3385 = vld [vmem:[%s3 + $0x58] sm:$0xff]
        %v3386 = vld [vmem:[%s3 + $0x68] sm:$0xff]
        %v3387 = vld [vmem:[%s3 + $0x70] sm:$0xff]
        %v3388 = vld [vmem:[%s3 + $0x80] sm:$0xff]
        %v3389 = vld [vmem:[%s3 + $0x88] sm:$0xff]
        %v3390 = vld [vmem:[%s3 + $0x98] sm:$0xff]
        %v3391 = vld [vmem:[%s3 + $0xa0] sm:$0xff]
        %v3392 = vld [vmem:[%s3 + $0xb0] sm:$0xff]
        %v3393 = vld [vmem:[%s3 + $0xb8] sm:$0xff]
        %v3394 = vld [vmem:[%s3 + $0xc8] sm:$0xff]
        %v3395 = vld [vmem:[%s3 + $0xd0] sm:$0xff]
        %v3396 = vld [vmem:[%s3 + $0xe0] sm:$0xff]
        %v3397 = vld [vmem:[%s3 + $0xe8] sm:$0xff]
        %v3398 = vld [vmem:[%s3 + $0xf8] sm:$0xff]
        %v3399 = vld [vmem:[%s3 + $0x100] sm:$0xff]
        %v3400 = vld [vmem:[%s3 + $0x110] sm:$0xff]
        %v3401 = vld [vmem:[%s3 + $0x118] sm:$0xff]
        %v3402 = vld [vmem:[%s3 + $0x128] sm:$0xff]
        %v3403 = vld [vmem:[%s3 + $0x130] sm:$0xff]
        %v3404 = vld [vmem:[%s3 + $0x140] sm:$0xff]
        %v3405 = vld [vmem:[%s3 + $0x148] sm:$0xff]
        %v3406 = vld [vmem:[%s3 + $0x158] sm:$0xff]
        %v3407 = vld [vmem:[%s3 + $0x160] sm:$0xff]
        %v3408 = vld [vmem:[%s3 + $0x170] sm:$0xff]
        %v3409 = vld [vmem:[%s3 + $0x178] sm:$0xff]
        %v3410 = vld [vmem:[%s4] ss:$8 sm:$0xf]
        %v3411 = vld [vmem:[%s4 + $0x1] ss:$0 sm:$0xff]
        %v3412 = vld [vmem:[%s4 + $0x2] ss:$0 sm:$0xff]
        %v3413 = vld [vmem:[%s4 + $0x3] ss:$0 sm:$0xff]
        %v3414 = vld [vmem:[%s4 + $0x4] ss:$0 sm:$0xff]
        %v3415 = vadd.f32 %v3220, %v1648
        %v3416 = vadd.f32 %v3223, %v1651
        %v3417 = vadd.f32 %v3228, %v1656
        %v3418 = vadd.f32 %v3231, %v1659
        %v3419 = vadd.f32 %v3236, %v1664
        %v3420 = vadd.f32 %v3239, %v1667
        %v3421 = vadd.f32 %v3244, %v1672
        %v3422 = vadd.f32 %v3247, %v1675
        %v3423 = vadd.f32 %v3252, %v1680
        %v3424 = vadd.f32 %v3255, %v1683
        %v3425 = vadd.f32 %v3260, %v1688
        %v3426 = vadd.f32 %v3263, %v1691
        %v3427 = vadd.f32 %v3268, %v1696
        %v3428 = vadd.f32 %v3271, %v1699
        %v3429 = vadd.f32 %v3276, %v1704
        %v3430 = vadd.f32 %v3279, %v1707
        %v3431 = vadd.f32 %v3284, %v1712
        %v3432 = vadd.f32 %v3287, %v1715
        %v3433 = vadd.f32 %v3292, %v1720
        %v3434 = vadd.f32 %v3295, %v1723
        %v3435 = vadd.f32 %v3300, %v1728
        %v3436 = vadd.f32 %v3303, %v1731
        %v3437 = vadd.f32 %v3308, %v1736
        %v3438 = vadd.f32 %v3311, %v1739
        %v3439 = vadd.f32 %v3316, %v1744
        %v3440 = vadd.f32 %v3319, %v1747
        %v3441 = vadd.f32 %v3324, %v1752
        %v3442 = vadd.f32 %v3327, %v1755
        %v3443 = vadd.f32 %v3332, %v1760
        %v3444 = vadd.f32 %v3335, %v1763
        %v3445 = vadd.f32 %v3340, %v1768
        %v3446 = vadd.f32 %v3343, %v1771
        %v3447 = vpack.c.bf16 %v3416, %v3415
        %v3448 = vpack.c.bf16 %v3418, %v3417
        %v3449 = vpack.c.bf16 %v3420, %v3419
        %v3450 = vpack.c.bf16 %v3422, %v3421
        %v3451 = vpack.c.bf16 %v3424, %v3423
        %v3452 = vpack.c.bf16 %v3426, %v3425
        %v3453 = vpack.c.bf16 %v3428, %v3427
        %v3454 = vpack.c.bf16 %v3430, %v3429
        %v3455 = vpack.c.bf16 %v3432, %v3431
        %v3456 = vpack.c.bf16 %v3434, %v3433
        %v3457 = vpack.c.bf16 %v3436, %v3435
        %v3458 = vpack.c.bf16 %v3438, %v3437
        %v3459 = vpack.c.bf16 %v3440, %v3439
        %v3460 = vpack.c.bf16 %v3442, %v3441
        %v3461 = vpack.c.bf16 %v3444, %v3443
        %v3462 = vpack.c.bf16 %v3446, %v3445
        %v3479 = vunpack.c.l.b16 %v3346
        %v3480 = vunpack.c.l.b16 %v3347
        %v3481 = vunpack.c.l.b16 %v3348
        %v3482 = vunpack.c.l.b16 %v3349
        %v3483 = vunpack.c.l.b16 %v3350
        %v3484 = vunpack.c.l.b16 %v3351
        %v3485 = vunpack.c.l.b16 %v3352
        %v3486 = vunpack.c.l.b16 %v3353
        %v3487 = vunpack.c.l.b16 %v3354
        %v3488 = vunpack.c.l.b16 %v3355
        %v3489 = vunpack.c.l.b16 %v3356
        %v3490 = vunpack.c.l.b16 %v3357
        %v3491 = vunpack.c.l.b16 %v3358
        %v3492 = vunpack.c.l.b16 %v3359
        %v3493 = vunpack.c.l.b16 %v3360
        %v3494 = vunpack.c.l.b16 %v3361
        %v3495 = vpack.c.b16 %v3480, %v3479
        %v3496 = vpack.c.b16 %v3482, %v3481
        %v3497 = vpack.c.b16 %v3484, %v3483
        %v3498 = vpack.c.b16 %v3486, %v3485
        %v3499 = vpack.c.b16 %v3488, %v3487
        %v3500 = vpack.c.b16 %v3490, %v3489
        %v3501 = vpack.c.b16 %v3492, %v3491
        %v3502 = vpack.c.b16 %v3494, %v3493
        %3511 = vmatprep.subr.bf16.mxu0 0
        %3512 = vmatpush1.bf16.msra.mxu0 %v3495
        %3513 = vmatprep.subr.bf16.mxu0 0
        %3514 = vmatpush1.bf16.msra.mxu0 %v3496
        %3515 = vmatprep.subr.bf16.mxu0 0
        %3516 = vmatpush1.bf16.msra.mxu0 %v3497
        %3517 = vmatprep.subr.bf16.mxu0 0
        %3518 = vmatpush1.bf16.msra.mxu0 %v3498
        %3519 = vmatprep.subr.bf16.mxu0 0
        %3520 = vmatpush1.bf16.msra.mxu0 %v3499
        %3521 = vmatprep.subr.bf16.mxu0 0
        %3522 = vmatpush1.bf16.msra.mxu0 %v3500
        %3523 = vmatprep.subr.bf16.mxu0 0
        %3524 = vmatpush1.bf16.msra.mxu0 %v3501
        %3525 = vmatprep.subr.bf16.mxu0 0
        %3526 = vmatpush1.bf16.msra.mxu0 %v3502
        %3527 = vmatprep.subr.bf16.mxu0 0
        %3528 = vmatpush1.bf16.msra.mxu0 0
        %3529 = vmatprep.subr.bf16.mxu0 0
        %3530 = vmatpush1.bf16.msra.mxu0 0
        %3531 = vmatprep.subr.bf16.mxu0 0
        %3532 = vmatpush1.bf16.msra.mxu0 0
        %3533 = vmatprep.subr.bf16.mxu0 0
        %3534 = vmatpush1.bf16.msra.mxu0 0
        %3535 = vmatprep.subr.bf16.mxu0 0
        %3536 = vmatpush1.bf16.msra.mxu0 0
        %3537 = vmatprep.subr.bf16.mxu0 0
        %3538 = vmatpush1.bf16.msra.mxu0 0
        %3539 = vmatprep.subr.bf16.mxu0 0
        %3540 = vmatpush1.bf16.msra.mxu0 0
        %3541 = vmatprep.subr.bf16.mxu0 0
        %3542 = vmatpush1.bf16.msra.mxu0 0
        %3543 = vmatprep.mubr.bf16.mxu0 0
        %3544 = vmatmul.mubr.bf16.gmra.mrb[0].mxu0 %v3447
        %v3545 = vpop.f32.mrb[0].mxu0
        %v3546 = vadd.f32 %v3411, %v3545
        %v3547 = vpop.f32.mrb[0].mxu0
        %v3548 = vpop.f32.mrb[0].mxu0
        %v3549 = vadd.f32 %v3411, %v3548
        %v3550 = vpop.f32.mrb[0].mxu0
        %3551 = vmatprep.mubr.bf16.mxu0 0
        %3552 = vmatmul.mubr.bf16.gmra.mrb[0].mxu0 %v3448
        %v3553 = vpop.f32.mrb[0].mxu0
        %v3554 = vadd.f32 %v3411, %v3553
        %v3555 = vpop.f32.mrb[0].mxu0
        %v3556 = vpop.f32.mrb[0].mxu0
        %v3557 = vadd.f32 %v3411, %v3556
        %v3558 = vpop.f32.mrb[0].mxu0
        %3559 = vmatprep.mubr.bf16.mxu0 0
        %3560 = vmatmul.mubr.bf16.gmra.mrb[0].mxu0 %v3449
        %v3561 = vpop.f32.mrb[0].mxu0
        %v3562 = vadd.f32 %v3411, %v3561
        %v3563 = vpop.f32.mrb[0].mxu0
        %v3564 = vpop.f32.mrb[0].mxu0
        %v3565 = vadd.f32 %v3411, %v3564
        %v3566 = vpop.f32.mrb[0].mxu0
        %3567 = vmatprep.mubr.bf16.mxu0 0
        %3568 = vmatmul.mubr.bf16.gmra.mrb[0].mxu0 %v3450
        %v3569 = vpop.f32.mrb[0].mxu0
        %v3570 = vadd.f32 %v3411, %v3569
        %v3571 = vpop.f32.mrb[0].mxu0
        %v3572 = vpop.f32.mrb[0].mxu0
        %v3573 = vadd.f32 %v3411, %v3572
        %v3574 = vpop.f32.mrb[0].mxu0
        %3575 = vmatprep.mubr.bf16.mxu0 0
        %3576 = vmatmul.mubr.bf16.gmra.mrb[0].mxu0 %v3451
        %v3577 = vpop.f32.mrb[0].mxu0
        %v3578 = vadd.f32 %v3411, %v3577
        %v3579 = vpop.f32.mrb[0].mxu0
        %v3580 = vpop.f32.mrb[0].mxu0
        %v3581 = vadd.f32 %v3411, %v3580
        %v3582 = vpop.f32.mrb[0].mxu0
        %3583 = vmatprep.mubr.bf16.mxu0 0
        %3584 = vmatmul.mubr.bf16.gmra.mrb[0].mxu0 %v3452
        %v3585 = vpop.f32.mrb[0].mxu0
        %v3586 = vadd.f32 %v3411, %v3585
        %v3587 = vpop.f32.mrb[0].mxu0
        %v3588 = vpop.f32.mrb[0].mxu0
        %v3589 = vadd.f32 %v3411, %v3588
        %v3590 = vpop.f32.mrb[0].mxu0
        %3591 = vmatprep.mubr.bf16.mxu0 0
        %3592 = vmatmul.mubr.bf16.gmra.mrb[0].mxu0 %v3453
        %v3593 = vpop.f32.mrb[0].mxu0
        %v3594 = vadd.f32 %v3411, %v3593
        %v3595 = vpop.f32.mrb[0].mxu0
        %v3596 = vpop.f32.mrb[0].mxu0
        %v3597 = vadd.f32 %v3411, %v3596
        %v3598 = vpop.f32.mrb[0].mxu0
        %3599 = vmatprep.mubr.bf16.mxu0 0
        %3600 = vmatmul.mubr.bf16.gmra.mrb[0].mxu0 %v3454
        %v3601 = vpop.f32.mrb[0].mxu0
        %v3602 = vadd.f32 %v3411, %v3601
        %v3603 = vpop.f32.mrb[0].mxu0
        %v3604 = vpop.f32.mrb[0].mxu0
        %v3605 = vadd.f32 %v3411, %v3604
        %v3606 = vpop.f32.mrb[0].mxu0
        %3607 = vmatprep.mubr.bf16.mxu0 0
        %3608 = vmatmul.mubr.bf16.gmra.mrb[0].mxu0 %v3455
        %v3609 = vpop.f32.mrb[0].mxu0
        %v3610 = vadd.f32 %v3411, %v3609
        %v3611 = vpop.f32.mrb[0].mxu0
        %v3612 = vpop.f32.mrb[0].mxu0
        %v3613 = vadd.f32 %v3411, %v3612
        %v3614 = vpop.f32.mrb[0].mxu0
        %3615 = vmatprep.mubr.bf16.mxu0 0
        %3616 = vmatmul.mubr.bf16.gmra.mrb[0].mxu0 %v3456
        %v3617 = vpop.f32.mrb[0].mxu0
        %v3618 = vadd.f32 %v3411, %v3617
        %v3619 = vpop.f32.mrb[0].mxu0
        %v3620 = vpop.f32.mrb[0].mxu0
        %v3621 = vadd.f32 %v3411, %v3620
        %v3622 = vpop.f32.mrb[0].mxu0
        %3623 = vmatprep.mubr.bf16.mxu0 0
        %3624 = vmatmul.mubr.bf16.gmra.mrb[0].mxu0 %v3457
        %v3625 = vpop.f32.mrb[0].mxu0
        %v3626 = vadd.f32 %v3411, %v3625
        %v3627 = vpop.f32.mrb[0].mxu0
        %v3628 = vpop.f32.mrb[0].mxu0
        %v3629 = vadd.f32 %v3411, %v3628
        %v3630 = vpop.f32.mrb[0].mxu0
        %3631 = vmatprep.mubr.bf16.mxu0 0
        %3632 = vmatmul.mubr.bf16.gmra.mrb[0].mxu0 %v3458
        %v3633 = vpop.f32.mrb[0].mxu0
        %v3634 = vadd.f32 %v3411, %v3633
        %v3635 = vpop.f32.mrb[0].mxu0
        %v3636 = vpop.f32.mrb[0].mxu0
        %v3637 = vadd.f32 %v3411, %v3636
        %v3638 = vpop.f32.mrb[0].mxu0
        %3639 = vmatprep.mubr.bf16.mxu0 0
        %3640 = vmatmul.mubr.bf16.gmra.mrb[0].mxu0 %v3459
        %v3641 = vpop.f32.mrb[0].mxu0
        %v3642 = vadd.f32 %v3411, %v3641
        %v3643 = vpop.f32.mrb[0].mxu0
        %v3644 = vpop.f32.mrb[0].mxu0
        %v3645 = vadd.f32 %v3411, %v3644
        %v3646 = vpop.f32.mrb[0].mxu0
        %3647 = vmatprep.mubr.bf16.mxu0 0
        %3648 = vmatmul.mubr.bf16.gmra.mrb[0].mxu0 %v3460
        %v3649 = vpop.f32.mrb[0].mxu0
        %v3650 = vadd.f32 %v3411, %v3649
        %v3651 = vpop.f32.mrb[0].mxu0
        %v3652 = vpop.f32.mrb[0].mxu0
        %v3653 = vadd.f32 %v3411, %v3652
        %v3654 = vpop.f32.mrb[0].mxu0
        %3655 = vmatprep.mubr.bf16.mxu0 0
        %3656 = vmatmul.mubr.bf16.gmra.mrb[0].mxu0 %v3461
        %v3657 = vpop.f32.mrb[0].mxu0
        %v3658 = vadd.f32 %v3411, %v3657
        %v3659 = vpop.f32.mrb[0].mxu0
        %v3660 = vpop.f32.mrb[0].mxu0
        %v3661 = vadd.f32 %v3411, %v3660
        %v3662 = vpop.f32.mrb[0].mxu0
        %3663 = vmatprep.mubr.bf16.mxu0 0
        %3664 = vmatmul.mubr.bf16.gmra.mrb[0].mxu0 %v3462
        %v3665 = vpop.f32.mrb[0].mxu0
        %v3666 = vadd.f32 %v3411, %v3665
        %v3667 = vpop.f32.mrb[0].mxu0
        %v3668 = vpop.f32.mrb[0].mxu0
        %v3669 = vadd.f32 %v3411, %v3668
        %v3670 = vpop.f32.mrb[0].mxu0
        %3671 = vdwg.mxu0
        %v3672 = vmax.f32 %v3546, 0.0
        %v3673 = vmax.f32 %v3549, 0.0
        %v3674 = vmax.f32 %v3554, 0.0
        %v3675 = vmax.f32 %v3557, 0.0
        %v3676 = vmax.f32 %v3562, 0.0
        %v3677 = vmax.f32 %v3565, 0.0
        %v3678 = vmax.f32 %v3570, 0.0
        %v3679 = vmax.f32 %v3573, 0.0
        %v3680 = vmax.f32 %v3578, 0.0
        %v3681 = vmax.f32 %v3581, 0.0
        %v3682 = vmax.f32 %v3586, 0.0
        %v3683 = vmax.f32 %v3589, 0.0
        %v3684 = vmax.f32 %v3594, 0.0
        %v3685 = vmax.f32 %v3597, 0.0
        %v3686 = vmax.f32 %v3602, 0.0
        %v3687 = vmax.f32 %v3605, 0.0
        %v3688 = vmax.f32 %v3610, 0.0
        %v3689 = vmax.f32 %v3613, 0.0
        %v3690 = vmax.f32 %v3618, 0.0
        %v3691 = vmax.f32 %v3621, 0.0
        %v3692 = vmax.f32 %v3626, 0.0
        %v3693 = vmax.f32 %v3629, 0.0
        %v3694 = vmax.f32 %v3634, 0.0
        %v3695 = vmax.f32 %v3637, 0.0
        %v3696 = vmax.f32 %v3642, 0.0
        %v3697 = vmax.f32 %v3645, 0.0
        %v3698 = vmax.f32 %v3650, 0.0
        %v3699 = vmax.f32 %v3653, 0.0
        %v3700 = vmax.f32 %v3658, 0.0
        %v3701 = vmax.f32 %v3661, 0.0
        %v3702 = vmax.f32 %v3666, 0.0
        %v3703 = vmax.f32 %v3669, 0.0
        %v3704 = vadd.f32 %v3415, %v3672
        %v3705 = vadd.f32 %v3416, %v3673
        %v3706 = vadd.f32 %v3417, %v3674
        %v3707 = vadd.f32 %v3418, %v3675
        %v3708 = vadd.f32 %v3419, %v3676
        %v3709 = vadd.f32 %v3420, %v3677
        %v3710 = vadd.f32 %v3421, %v3678
        %v3711 = vadd.f32 %v3422, %v3679
        %v3712 = vadd.f32 %v3423, %v3680
        %v3713 = vadd.f32 %v3424, %v3681
        %v3714 = vadd.f32 %v3425, %v3682
        %v3715 = vadd.f32 %v3426, %v3683
        %v3716 = vadd.f32 %v3427, %v3684
        %v3717 = vadd.f32 %v3428, %v3685
        %v3718 = vadd.f32 %v3429, %v3686
        %v3719 = vadd.f32 %v3430, %v3687
        %v3720 = vadd.f32 %v3431, %v3688
        %v3721 = vadd.f32 %v3432, %v3689
        %v3722 = vadd.f32 %v3433, %v3690
        %v3723 = vadd.f32 %v3434, %v3691
        %v3724 = vadd.f32 %v3435, %v3692
        %v3725 = vadd.f32 %v3436, %v3693
        %v3726 = vadd.f32 %v3437, %v3694
        %v3727 = vadd.f32 %v3438, %v3695
        %v3728 = vadd.f32 %v3439, %v3696
        %v3729 = vadd.f32 %v3440, %v3697
        %v3730 = vadd.f32 %v3441, %v3698
        %v3731 = vadd.f32 %v3442, %v3699
        %v3732 = vadd.f32 %v3443, %v3700
        %v3733 = vadd.f32 %v3444, %v3701
        %v3734 = vadd.f32 %v3445, %v3702
        %v3735 = vadd.f32 %v3446, %v3703
        %v3736 = vadd.f32 %v3220, %v3704
        %v3737 = vadd.f32 %v3223, %v3705
        %v3738 = vadd.f32 %v3228, %v3706
        %v3739 = vadd.f32 %v3231, %v3707
        %v3740 = vadd.f32 %v3236, %v3708
        %v3741 = vadd.f32 %v3239, %v3709
        %v3742 = vadd.f32 %v3244, %v3710
        %v3743 = vadd.f32 %v3247, %v3711
        %v3744 = vadd.f32 %v3252, %v3712
        %v3745 = vadd.f32 %v3255, %v3713
        %v3746 = vadd.f32 %v3260, %v3714
        %v3747 = vadd.f32 %v3263, %v3715
        %v3748 = vadd.f32 %v3268, %v3716
        %v3749 = vadd.f32 %v3271, %v3717
        %v3750 = vadd.f32 %v3276, %v3718
        %v3751 = vadd.f32 %v3279, %v3719
        %v3752 = vadd.f32 %v3284, %v3720
        %v3753 = vadd.f32 %v3287, %v3721
        %v3754 = vadd.f32 %v3292, %v3722
        %v3755 = vadd.f32 %v3295, %v3723
        %v3756 = vadd.f32 %v3300, %v3724
        %v3757 = vadd.f32 %v3303, %v3725
        %v3758 = vadd.f32 %v3308, %v3726
        %v3759 = vadd.f32 %v3311, %v3727
        %v3760 = vadd.f32 %v3316, %v3728
        %v3761 = vadd.f32 %v3319, %v3729
        %v3762 = vadd.f32 %v3324, %v3730
        %v3763 = vadd.f32 %v3327, %v3731
        %v3764 = vadd.f32 %v3332, %v3732
        %v3765 = vadd.f32 %v3335, %v3733
        %v3766 = vadd.f32 %v3340, %v3734
        %v3767 = vadd.f32 %v3343, %v3735
        %v3768 = vadd.f32 %v3736, %v1648
        %v3769 = vadd.f32 %v3737, %v1651
        %v3770 = vadd.f32 %v3738, %v1656
        %v3771 = vadd.f32 %v3739, %v1659
        %v3772 = vadd.f32 %v3740, %v1664
        %v3773 = vadd.f32 %v3741, %v1667
        %v3774 = vadd.f32 %v3742, %v1672
        %v3775 = vadd.f32 %v3743, %v1675
        %v3776 = vadd.f32 %v3744, %v1680
        %v3777 = vadd.f32 %v3745, %v1683
        %v3778 = vadd.f32 %v3746, %v1688
        %v3779 = vadd.f32 %v3747, %v1691
        %v3780 = vadd.f32 %v3748, %v1696
        %v3781 = vadd.f32 %v3749, %v1699
        %v3782 = vadd.f32 %v3750, %v1704
        %v3783 = vadd.f32 %v3751, %v1707
        %v3784 = vadd.f32 %v3752, %v1712
        %v3785 = vadd.f32 %v3753, %v1715
        %v3786 = vadd.f32 %v3754, %v1720
        %v3787 = vadd.f32 %v3755, %v1723
        %v3788 = vadd.f32 %v3756, %v1728
        %v3789 = vadd.f32 %v3757, %v1731
        %v3790 = vadd.f32 %v3758, %v1736
        %v3791 = vadd.f32 %v3759, %v1739
        %v3792 = vadd.f32 %v3760, %v1744
        %v3793 = vadd.f32 %v3761, %v1747
        %v3794 = vadd.f32 %v3762, %v1752
        %v3795 = vadd.f32 %v3763, %v1755
        %v3796 = vadd.f32 %v3764, %v1760
        %v3797 = vadd.f32 %v3765, %v1763
        %v3798 = vadd.f32 %v3766, %v1768
        %v3799 = vadd.f32 %v3767, %v1771
        %v3800 = vpack.c.bf16 %v3769, %v3768
        %v3801 = vpack.c.bf16 %v3771, %v3770
        %v3802 = vpack.c.bf16 %v3773, %v3772
        %v3803 = vpack.c.bf16 %v3775, %v3774
        %v3804 = vpack.c.bf16 %v3777, %v3776
        %v3805 = vpack.c.bf16 %v3779, %v3778
        %v3806 = vpack.c.bf16 %v3781, %v3780
        %v3807 = vpack.c.bf16 %v3783, %v3782
        %v3808 = vpack.c.bf16 %v3785, %v3784
        %v3809 = vpack.c.bf16 %v3787, %v3786
        %v3810 = vpack.c.bf16 %v3789, %v3788
        %v3811 = vpack.c.bf16 %v3791, %v3790
        %v3812 = vpack.c.bf16 %v3793, %v3792
        %v3813 = vpack.c.bf16 %v3795, %v3794
        %v3814 = vpack.c.bf16 %v3797, %v3796
        %v3815 = vpack.c.bf16 %v3799, %v3798
        %v3832 = vunpack.c.l.b16 %v3362
        %v3833 = vunpack.c.l.b16 %v3363
        %v3834 = vunpack.c.l.b16 %v3364
        %v3835 = vunpack.c.l.b16 %v3365
        %v3836 = vunpack.c.l.b16 %v3366
        %v3837 = vunpack.c.l.b16 %v3367
        %v3838 = vunpack.c.l.b16 %v3368
        %v3839 = vunpack.c.l.b16 %v3369
        %v3840 = vunpack.c.l.b16 %v3370
        %v3841 = vunpack.c.l.b16 %v3371
        %v3842 = vunpack.c.l.b16 %v3372
        %v3843 = vunpack.c.l.b16 %v3373
        %v3844 = vunpack.c.l.b16 %v3374
        %v3845 = vunpack.c.l.b16 %v3375
        %v3846 = vunpack.c.l.b16 %v3376
        %v3847 = vunpack.c.l.b16 %v3377
        %v3848 = vpack.c.b16 %v3833, %v3832
        %v3849 = vpack.c.b16 %v3835, %v3834
        %v3850 = vpack.c.b16 %v3837, %v3836
        %v3851 = vpack.c.b16 %v3839, %v3838
        %v3852 = vpack.c.b16 %v3841, %v3840
        %v3853 = vpack.c.b16 %v3843, %v3842
        %v3854 = vpack.c.b16 %v3845, %v3844
        %v3855 = vpack.c.b16 %v3847, %v3846
        %3864 = vmatprep.subr.bf16.mxu0 0
        %3865 = vmatpush1.bf16.msra.mxu0 %v3848
        %3866 = vmatprep.subr.bf16.mxu0 0
        %3867 = vmatpush1.bf16.msra.mxu0 %v3849
        %3868 = vmatprep.subr.bf16.mxu0 0
        %3869 = vmatpush1.bf16.msra.mxu0 %v3850
        %3870 = vmatprep.subr.bf16.mxu0 0
        %3871 = vmatpush1.bf16.msra.mxu0 %v3851
        %3872 = vmatprep.subr.bf16.mxu0 0
        %3873 = vmatpush1.bf16.msra.mxu0 %v3852
        %3874 = vmatprep.subr.bf16.mxu0 0
        %3875 = vmatpush1.bf16.msra.mxu0 %v3853
        %3876 = vmatprep.subr.bf16.mxu0 0
        %3877 = vmatpush1.bf16.msra.mxu0 %v3854
        %3878 = vmatprep.subr.bf16.mxu0 0
        %3879 = vmatpush1.bf16.msra.mxu0 %v3855
        %3880 = vmatprep.subr.bf16.mxu0 0
        %3881 = vmatpush1.bf16.msra.mxu0 0
        %3882 = vmatprep.subr.bf16.mxu0 0
        %3883 = vmatpush1.bf16.msra.mxu0 0
        %3884 = vmatprep.subr.bf16.mxu0 0
        %3885 = vmatpush1.bf16.msra.mxu0 0
        %3886 = vmatprep.subr.bf16.mxu0 0
        %3887 = vmatpush1.bf16.msra.mxu0 0
        %3888 = vmatprep.subr.bf16.mxu0 0
        %3889 = vmatpush1.bf16.msra.mxu0 0
        %3890 = vmatprep.subr.bf16.mxu0 0
        %3891 = vmatpush1.bf16.msra.mxu0 0
        %3892 = vmatprep.subr.bf16.mxu0 0
        %3893 = vmatpush1.bf16.msra.mxu0 0
        %3894 = vmatprep.subr.bf16.mxu0 0
        %3895 = vmatpush1.bf16.msra.mxu0 0
        %3896 = vmatprep.mubr.bf16.mxu0 0
        %3897 = vmatmul.mubr.bf16.gmra.mrb[0].mxu0 %v3800
        %v3898 = vpop.f32.mrb[0].mxu0
        %v3899 = vadd.f32 %v3412, %v3898
        %v3900 = vpop.f32.mrb[0].mxu0
        %v3901 = vpop.f32.mrb[0].mxu0
        %v3902 = vadd.f32 %v3412, %v3901
        %v3903 = vpop.f32.mrb[0].mxu0
        %3904 = vmatprep.mubr.bf16.mxu0 0
        %3905 = vmatmul.mubr.bf16.gmra.mrb[0].mxu0 %v3801
        %v3906 = vpop.f32.mrb[0].mxu0
        %v3907 = vadd.f32 %v3412, %v3906
        %v3908 = vpop.f32.mrb[0].mxu0
        %v3909 = vpop.f32.mrb[0].mxu0
        %v3910 = vadd.f32 %v3412, %v3909
        %v3911 = vpop.f32.mrb[0].mxu0
        %3912 = vmatprep.mubr.bf16.mxu0 0
        %3913 = vmatmul.mubr.bf16.gmra.mrb[0].mxu0 %v3802
        %v3914 = vpop.f32.mrb[0].mxu0
        %v3915 = vadd.f32 %v3412, %v3914
        %v3916 = vpop.f32.mrb[0].mxu0
        %v3917 = vpop.f32.mrb[0].mxu0
        %v3918 = vadd.f32 %v3412, %v3917
        %v3919 = vpop.f32.mrb[0].mxu0
        %3920 = vmatprep.mubr.bf16.mxu0 0
        %3921 = vmatmul.mubr.bf16.gmra.mrb[0].mxu0 %v3803
        %v3922 = vpop.f32.mrb[0].mxu0
        %v3923 = vadd.f32 %v3412, %v3922
        %v3924 = vpop.f32.mrb[0].mxu0
        %v3925 = vpop.f32.mrb[0].mxu0
        %v3926 = vadd.f32 %v3412, %v3925
        %v3927 = vpop.f32.mrb[0].mxu0
        %3928 = vmatprep.mubr.bf16.mxu0 0
        %3929 = vmatmul.mubr.bf16.gmra.mrb[0].mxu0 %v3804
        %v3930 = vpop.f32.mrb[0].mxu0
        %v3931 = vadd.f32 %v3412, %v3930
        %v3932 = vpop.f32.mrb[0].mxu0
        %v3933 = vpop.f32.mrb[0].mxu0
        %v3934 = vadd.f32 %v3412, %v3933
        %v3935 = vpop.f32.mrb[0].mxu0
        %3936 = vmatprep.mubr.bf16.mxu0 0
        %3937 = vmatmul.mubr.bf16.gmra.mrb[0].mxu0 %v3805
        %v3938 = vpop.f32.mrb[0].mxu0
        %v3939 = vadd.f32 %v3412, %v3938
        %v3940 = vpop.f32.mrb[0].mxu0
        %v3941 = vpop.f32.mrb[0].mxu0
        %v3942 = vadd.f32 %v3412, %v3941
        %v3943 = vpop.f32.mrb[0].mxu0
        %3944 = vmatprep.mubr.bf16.mxu0 0
        %3945 = vmatmul.mubr.bf16.gmra.mrb[0].mxu0 %v3806
        %v3946 = vpop.f32.mrb[0].mxu0
        %v3947 = vadd.f32 %v3412, %v3946
        %v3948 = vpop.f32.mrb[0].mxu0
        %v3949 = vpop.f32.mrb[0].mxu0
        %v3950 = vadd.f32 %v3412, %v3949
        %v3951 = vpop.f32.mrb[0].mxu0
        %3952 = vmatprep.mubr.bf16.mxu0 0
        %3953 = vmatmul.mubr.bf16.gmra.mrb[0].mxu0 %v3807
        %v3954 = vpop.f32.mrb[0].mxu0
        %v3955 = vadd.f32 %v3412, %v3954
        %v3956 = vpop.f32.mrb[0].mxu0
        %v3957 = vpop.f32.mrb[0].mxu0
        %v3958 = vadd.f32 %v3412, %v3957
        %v3959 = vpop.f32.mrb[0].mxu0
        %3960 = vmatprep.mubr.bf16.mxu0 0
        %3961 = vmatmul.mubr.bf16.gmra.mrb[0].mxu0 %v3808
        %v3962 = vpop.f32.mrb[0].mxu0
        %v3963 = vadd.f32 %v3412, %v3962
        %v3964 = vpop.f32.mrb[0].mxu0
        %v3965 = vpop.f32.mrb[0].mxu0
        %v3966 = vadd.f32 %v3412, %v3965
        %v3967 = vpop.f32.mrb[0].mxu0
        %3968 = vmatprep.mubr.bf16.mxu0 0
        %3969 = vmatmul.mubr.bf16.gmra.mrb[0].mxu0 %v3809
        %v3970 = vpop.f32.mrb[0].mxu0
        %v3971 = vadd.f32 %v3412, %v3970
        %v3972 = vpop.f32.mrb[0].mxu0
        %v3973 = vpop.f32.mrb[0].mxu0
        %v3974 = vadd.f32 %v3412, %v3973
        %v3975 = vpop.f32.mrb[0].mxu0
        %3976 = vmatprep.mubr.bf16.mxu0 0
        %3977 = vmatmul.mubr.bf16.gmra.mrb[0].mxu0 %v3810
        %v3978 = vpop.f32.mrb[0].mxu0
        %v3979 = vadd.f32 %v3412, %v3978
        %v3980 = vpop.f32.mrb[0].mxu0
        %v3981 = vpop.f32.mrb[0].mxu0
        %v3982 = vadd.f32 %v3412, %v3981
        %v3983 = vpop.f32.mrb[0].mxu0
        %3984 = vmatprep.mubr.bf16.mxu0 0
        %3985 = vmatmul.mubr.bf16.gmra.mrb[0].mxu0 %v3811
        %v3986 = vpop.f32.mrb[0].mxu0
        %v3987 = vadd.f32 %v3412, %v3986
        %v3988 = vpop.f32.mrb[0].mxu0
        %v3989 = vpop.f32.mrb[0].mxu0
        %v3990 = vadd.f32 %v3412, %v3989
        %v3991 = vpop.f32.mrb[0].mxu0
        %3992 = vmatprep.mubr.bf16.mxu0 0
        %3993 = vmatmul.mubr.bf16.gmra.mrb[0].mxu0 %v3812
        %v3994 = vpop.f32.mrb[0].mxu0
        %v3995 = vadd.f32 %v3412, %v3994
        %v3996 = vpop.f32.mrb[0].mxu0
        %v3997 = vpop.f32.mrb[0].mxu0
        %v3998 = vadd.f32 %v3412, %v3997
        %v3999 = vpop.f32.mrb[0].mxu0
        %4000 = vmatprep.mubr.bf16.mxu0 0
        %4001 = vmatmul.mubr.bf16.gmra.mrb[0].mxu0 %v3813
        %v4002 = vpop.f32.mrb[0].mxu0
        %v4003 = vadd.f32 %v3412, %v4002
        %v4004 = vpop.f32.mrb[0].mxu0
        %v4005 = vpop.f32.mrb[0].mxu0
        %v4006 = vadd.f32 %v3412, %v4005
        %v4007 = vpop.f32.mrb[0].mxu0
        %4008 = vmatprep.mubr.bf16.mxu0 0
        %4009 = vmatmul.mubr.bf16.gmra.mrb[0].mxu0 %v3814
        %v4010 = vpop.f32.mrb[0].mxu0
        %v4011 = vadd.f32 %v3412, %v4010
        %v4012 = vpop.f32.mrb[0].mxu0
        %v4013 = vpop.f32.mrb[0].mxu0
        %v4014 = vadd.f32 %v3412, %v4013
        %v4015 = vpop.f32.mrb[0].mxu0
        %4016 = vmatprep.mubr.bf16.mxu0 0
        %4017 = vmatmul.mubr.bf16.gmra.mrb[0].mxu0 %v3815
        %v4018 = vpop.f32.mrb[0].mxu0
        %v4019 = vadd.f32 %v3412, %v4018
        %v4020 = vpop.f32.mrb[0].mxu0
        %v4021 = vpop.f32.mrb[0].mxu0
        %v4022 = vadd.f32 %v3412, %v4021
        %v4023 = vpop.f32.mrb[0].mxu0
        %4024 = vdwg.mxu0
        %v4025 = vmax.f32 %v3899, 0.0
        %v4026 = vmax.f32 %v3902, 0.0
        %v4027 = vmax.f32 %v3907, 0.0
        %v4028 = vmax.f32 %v3910, 0.0
        %v4029 = vmax.f32 %v3915, 0.0
        %v4030 = vmax.f32 %v3918, 0.0
        %v4031 = vmax.f32 %v3923, 0.0
        %v4032 = vmax.f32 %v3926, 0.0
        %v4033 = vmax.f32 %v3931, 0.0
        %v4034 = vmax.f32 %v3934, 0.0
        %v4035 = vmax.f32 %v3939, 0.0
        %v4036 = vmax.f32 %v3942, 0.0
        %v4037 = vmax.f32 %v3947, 0.0
        %v4038 = vmax.f32 %v3950, 0.0
        %v4039 = vmax.f32 %v3955, 0.0
        %v4040 = vmax.f32 %v3958, 0.0
        %v4041 = vmax.f32 %v3963, 0.0
        %v4042 = vmax.f32 %v3966, 0.0
        %v4043 = vmax.f32 %v3971, 0.0
        %v4044 = vmax.f32 %v3974, 0.0
        %v4045 = vmax.f32 %v3979, 0.0
        %v4046 = vmax.f32 %v3982, 0.0
        %v4047 = vmax.f32 %v3987, 0.0
        %v4048 = vmax.f32 %v3990, 0.0
        %v4049 = vmax.f32 %v3995, 0.0
        %v4050 = vmax.f32 %v3998, 0.0
        %v4051 = vmax.f32 %v4003, 0.0
        %v4052 = vmax.f32 %v4006, 0.0
        %v4053 = vmax.f32 %v4011, 0.0
        %v4054 = vmax.f32 %v4014, 0.0
        %v4055 = vmax.f32 %v4019, 0.0
        %v4056 = vmax.f32 %v4022, 0.0
        %v4057 = vadd.f32 %v3768, %v4025
        %v4058 = vadd.f32 %v3769, %v4026
        %v4059 = vadd.f32 %v3770, %v4027
        %v4060 = vadd.f32 %v3771, %v4028
        %v4061 = vadd.f32 %v3772, %v4029
        %v4062 = vadd.f32 %v3773, %v4030
        %v4063 = vadd.f32 %v3774, %v4031
        %v4064 = vadd.f32 %v3775, %v4032
        %v4065 = vadd.f32 %v3776, %v4033
        %v4066 = vadd.f32 %v3777, %v4034
        %v4067 = vadd.f32 %v3778, %v4035
        %v4068 = vadd.f32 %v3779, %v4036
        %v4069 = vadd.f32 %v3780, %v4037
        %v4070 = vadd.f32 %v3781, %v4038
        %v4071 = vadd.f32 %v3782, %v4039
        %v4072 = vadd.f32 %v3783, %v4040
        %v4073 = vadd.f32 %v3784, %v4041
        %v4074 = vadd.f32 %v3785, %v4042
        %v4075 = vadd.f32 %v3786, %v4043
        %v4076 = vadd.f32 %v3787, %v4044
        %v4077 = vadd.f32 %v3788, %v4045
        %v4078 = vadd.f32 %v3789, %v4046
        %v4079 = vadd.f32 %v3790, %v4047
        %v4080 = vadd.f32 %v3791, %v4048
        %v4081 = vadd.f32 %v3792, %v4049
        %v4082 = vadd.f32 %v3793, %v4050
        %v4083 = vadd.f32 %v3794, %v4051
        %v4084 = vadd.f32 %v3795, %v4052
        %v4085 = vadd.f32 %v3796, %v4053
        %v4086 = vadd.f32 %v3797, %v4054
        %v4087 = vadd.f32 %v3798, %v4055
        %v4088 = vadd.f32 %v3799, %v4056
        %vm4089 = vcmp.lt.s32.totalorder %v393, 32
        %v4090 = vsel %vm4089, 1, 0
        %v4091 = vcvt.s32.f32 %v4090
        %v4092 = vmul.f32 %v4057, %v4091
        %v4093 = vmul.f32 %v4058, %v4091
        %v4094 = vmul.f32 %v4059, %v4091
        %v4095 = vmul.f32 %v4060, %v4091
        %v4096 = vmul.f32 %v4061, %v4091
        %v4097 = vmul.f32 %v4062, %v4091
        %v4098 = vmul.f32 %v4063, %v4091
        %v4099 = vmul.f32 %v4064, %v4091
        %v4100 = vmul.f32 %v4065, %v4091
        %v4101 = vmul.f32 %v4066, %v4091
        %v4102 = vmul.f32 %v4067, %v4091
        %v4103 = vmul.f32 %v4068, %v4091
        %v4104 = vmul.f32 %v4069, %v4091
        %v4105 = vmul.f32 %v4070, %v4091
        %v4106 = vmul.f32 %v4071, %v4091
        %v4107 = vmul.f32 %v4072, %v4091
        %v4108 = vmul.f32 %v4073, %v4091
        %v4109 = vmul.f32 %v4074, %v4091
        %v4110 = vmul.f32 %v4075, %v4091
        %v4111 = vmul.f32 %v4076, %v4091
        %v4112 = vmul.f32 %v4077, %v4091
        %v4113 = vmul.f32 %v4078, %v4091
        %v4114 = vmul.f32 %v4079, %v4091
        %v4115 = vmul.f32 %v4080, %v4091
        %v4116 = vmul.f32 %v4081, %v4091
        %v4117 = vmul.f32 %v4082, %v4091
        %v4118 = vmul.f32 %v4083, %v4091
        %v4119 = vmul.f32 %v4084, %v4091
        %v4120 = vmul.f32 %v4085, %v4091
        %v4121 = vmul.f32 %v4086, %v4091
        %v4122 = vmul.f32 %v4087, %v4091
        %v4123 = vmul.f32 %v4088, %v4091
        %4124 = vadd.xlane.f32.xlu0 %v4092
        %v4125 = vpop.xlane.xlu0 %4124
        %4126 = vadd.xlane.f32.xlu0 %v4093
        %v4127 = vpop.xlane.xlu0 %4126
        %4128 = vadd.xlane.f32.xlu0 %v4094
        %v4129 = vpop.xlane.xlu0 %4128
        %4130 = vadd.xlane.f32.xlu0 %v4095
        %v4131 = vpop.xlane.xlu0 %4130
        %4132 = vadd.xlane.f32.xlu0 %v4096
        %v4133 = vpop.xlane.xlu0 %4132
        %4134 = vadd.xlane.f32.xlu0 %v4097
        %v4135 = vpop.xlane.xlu0 %4134
        %4136 = vadd.xlane.f32.xlu0 %v4098
        %v4137 = vpop.xlane.xlu0 %4136
        %4138 = vadd.xlane.f32.xlu0 %v4099
        %v4139 = vpop.xlane.xlu0 %4138
        %4140 = vadd.xlane.f32.xlu0 %v4100
        %v4141 = vpop.xlane.xlu0 %4140
        %4142 = vadd.xlane.f32.xlu0 %v4101
        %v4143 = vpop.xlane.xlu0 %4142
        %4144 = vadd.xlane.f32.xlu0 %v4102
        %v4145 = vpop.xlane.xlu0 %4144
        %4146 = vadd.xlane.f32.xlu0 %v4103
        %v4147 = vpop.xlane.xlu0 %4146
        %4148 = vadd.xlane.f32.xlu0 %v4104
        %v4149 = vpop.xlane.xlu0 %4148
        %4150 = vadd.xlane.f32.xlu0 %v4105
        %v4151 = vpop.xlane.xlu0 %4150
        %4152 = vadd.xlane.f32.xlu0 %v4106
        %v4153 = vpop.xlane.xlu0 %4152
        %4154 = vadd.xlane.f32.xlu0 %v4107
        %v4155 = vpop.xlane.xlu0 %4154
        %4156 = vadd.xlane.f32.xlu0 %v4108
        %v4157 = vpop.xlane.xlu0 %4156
        %4158 = vadd.xlane.f32.xlu0 %v4109
        %v4159 = vpop.xlane.xlu0 %4158
        %4160 = vadd.xlane.f32.xlu0 %v4110
        %v4161 = vpop.xlane.xlu0 %4160
        %4162 = vadd.xlane.f32.xlu0 %v4111
        %v4163 = vpop.xlane.xlu0 %4162
        %4164 = vadd.xlane.f32.xlu0 %v4112
        %v4165 = vpop.xlane.xlu0 %4164
        %4166 = vadd.xlane.f32.xlu0 %v4113
        %v4167 = vpop.xlane.xlu0 %4166
        %4168 = vadd.xlane.f32.xlu0 %v4114
        %v4169 = vpop.xlane.xlu0 %4168
        %4170 = vadd.xlane.f32.xlu0 %v4115
        %v4171 = vpop.xlane.xlu0 %4170
        %4172 = vadd.xlane.f32.xlu0 %v4116
        %v4173 = vpop.xlane.xlu0 %4172
        %4174 = vadd.xlane.f32.xlu0 %v4117
        %v4175 = vpop.xlane.xlu0 %4174
        %4176 = vadd.xlane.f32.xlu0 %v4118
        %v4177 = vpop.xlane.xlu0 %4176
        %4178 = vadd.xlane.f32.xlu0 %v4119
        %v4179 = vpop.xlane.xlu0 %4178
        %4180 = vadd.xlane.f32.xlu0 %v4120
        %v4181 = vpop.xlane.xlu0 %4180
        %4182 = vadd.xlane.f32.xlu0 %v4121
        %v4183 = vpop.xlane.xlu0 %4182
        %4184 = vadd.xlane.f32.xlu0 %v4122
        %v4185 = vpop.xlane.xlu0 %4184
        %4186 = vadd.xlane.f32.xlu0 %v4123
        %v4187 = vpop.xlane.xlu0 %4186
        %v4188 = vmul.f32 %v4125, 0.03125
        %v4189 = vmul.f32 %v4127, 0.03125
        %v4190 = vmul.f32 %v4129, 0.03125
        %v4191 = vmul.f32 %v4131, 0.03125
        %v4192 = vmul.f32 %v4133, 0.03125
        %v4193 = vmul.f32 %v4135, 0.03125
        %v4194 = vmul.f32 %v4137, 0.03125
        %v4195 = vmul.f32 %v4139, 0.03125
        %v4196 = vmul.f32 %v4141, 0.03125
        %v4197 = vmul.f32 %v4143, 0.03125
        %v4198 = vmul.f32 %v4145, 0.03125
        %v4199 = vmul.f32 %v4147, 0.03125
        %v4200 = vmul.f32 %v4149, 0.03125
        %v4201 = vmul.f32 %v4151, 0.03125
        %v4202 = vmul.f32 %v4153, 0.03125
        %v4203 = vmul.f32 %v4155, 0.03125
        %v4204 = vmul.f32 %v4157, 0.03125
        %v4205 = vmul.f32 %v4159, 0.03125
        %v4206 = vmul.f32 %v4161, 0.03125
        %v4207 = vmul.f32 %v4163, 0.03125
        %v4208 = vmul.f32 %v4165, 0.03125
        %v4209 = vmul.f32 %v4167, 0.03125
        %v4210 = vmul.f32 %v4169, 0.03125
        %v4211 = vmul.f32 %v4171, 0.03125
        %v4212 = vmul.f32 %v4173, 0.03125
        %v4213 = vmul.f32 %v4175, 0.03125
        %v4214 = vmul.f32 %v4177, 0.03125
        %v4215 = vmul.f32 %v4179, 0.03125
        %v4216 = vmul.f32 %v4181, 0.03125
        %v4217 = vmul.f32 %v4183, 0.03125
        %v4218 = vmul.f32 %v4185, 0.03125
        %v4219 = vmul.f32 %v4187, 0.03125
        %v4220 = vsub.f32 %v4057, %v4188
        %v4221 = vsub.f32 %v4058, %v4189
        %v4222 = vsub.f32 %v4059, %v4190
        %v4223 = vsub.f32 %v4060, %v4191
        %v4224 = vsub.f32 %v4061, %v4192
        %v4225 = vsub.f32 %v4062, %v4193
        %v4226 = vsub.f32 %v4063, %v4194
        %v4227 = vsub.f32 %v4064, %v4195
        %v4228 = vsub.f32 %v4065, %v4196
        %v4229 = vsub.f32 %v4066, %v4197
        %v4230 = vsub.f32 %v4067, %v4198
        %v4231 = vsub.f32 %v4068, %v4199
        %v4232 = vsub.f32 %v4069, %v4200
        %v4233 = vsub.f32 %v4070, %v4201
        %v4234 = vsub.f32 %v4071, %v4202
        %v4235 = vsub.f32 %v4072, %v4203
        %v4236 = vsub.f32 %v4073, %v4204
        %v4237 = vsub.f32 %v4074, %v4205
        %v4238 = vsub.f32 %v4075, %v4206
        %v4239 = vsub.f32 %v4076, %v4207
        %v4240 = vsub.f32 %v4077, %v4208
        %v4241 = vsub.f32 %v4078, %v4209
        %v4242 = vsub.f32 %v4079, %v4210
        %v4243 = vsub.f32 %v4080, %v4211
        %v4244 = vsub.f32 %v4081, %v4212
        %v4245 = vsub.f32 %v4082, %v4213
        %v4246 = vsub.f32 %v4083, %v4214
        %v4247 = vsub.f32 %v4084, %v4215
        %v4248 = vsub.f32 %v4085, %v4216
        %v4249 = vsub.f32 %v4086, %v4217
        %v4250 = vsub.f32 %v4087, %v4218
        %v4251 = vsub.f32 %v4088, %v4219
        %v4252 = vmul.f32 %v4220, %v4091
        %v4253 = vmul.f32 %v4221, %v4091
        %v4254 = vmul.f32 %v4222, %v4091
        %v4255 = vmul.f32 %v4223, %v4091
        %v4256 = vmul.f32 %v4224, %v4091
        %v4257 = vmul.f32 %v4225, %v4091
        %v4258 = vmul.f32 %v4226, %v4091
        %v4259 = vmul.f32 %v4227, %v4091
        %v4260 = vmul.f32 %v4228, %v4091
        %v4261 = vmul.f32 %v4229, %v4091
        %v4262 = vmul.f32 %v4230, %v4091
        %v4263 = vmul.f32 %v4231, %v4091
        %v4264 = vmul.f32 %v4232, %v4091
        %v4265 = vmul.f32 %v4233, %v4091
        %v4266 = vmul.f32 %v4234, %v4091
        %v4267 = vmul.f32 %v4235, %v4091
        %v4268 = vmul.f32 %v4236, %v4091
        %v4269 = vmul.f32 %v4237, %v4091
        %v4270 = vmul.f32 %v4238, %v4091
        %v4271 = vmul.f32 %v4239, %v4091
        %v4272 = vmul.f32 %v4240, %v4091
        %v4273 = vmul.f32 %v4241, %v4091
        %v4274 = vmul.f32 %v4242, %v4091
        %v4275 = vmul.f32 %v4243, %v4091
        %v4276 = vmul.f32 %v4244, %v4091
        %v4277 = vmul.f32 %v4245, %v4091
        %v4278 = vmul.f32 %v4246, %v4091
        %v4279 = vmul.f32 %v4247, %v4091
        %v4280 = vmul.f32 %v4248, %v4091
        %v4281 = vmul.f32 %v4249, %v4091
        %v4282 = vmul.f32 %v4250, %v4091
        %v4283 = vmul.f32 %v4251, %v4091
        %v4284 = vmul.f32 %v4252, %v4252
        %v4285 = vmul.f32 %v4253, %v4253
        %v4286 = vmul.f32 %v4254, %v4254
        %v4287 = vmul.f32 %v4255, %v4255
        %v4288 = vmul.f32 %v4256, %v4256
        %v4289 = vmul.f32 %v4257, %v4257
        %v4290 = vmul.f32 %v4258, %v4258
        %v4291 = vmul.f32 %v4259, %v4259
        %v4292 = vmul.f32 %v4260, %v4260
        %v4293 = vmul.f32 %v4261, %v4261
        %v4294 = vmul.f32 %v4262, %v4262
        %v4295 = vmul.f32 %v4263, %v4263
        %v4296 = vmul.f32 %v4264, %v4264
        %v4297 = vmul.f32 %v4265, %v4265
        %v4298 = vmul.f32 %v4266, %v4266
        %v4299 = vmul.f32 %v4267, %v4267
        %v4300 = vmul.f32 %v4268, %v4268
        %v4301 = vmul.f32 %v4269, %v4269
        %v4302 = vmul.f32 %v4270, %v4270
        %v4303 = vmul.f32 %v4271, %v4271
        %v4304 = vmul.f32 %v4272, %v4272
        %v4305 = vmul.f32 %v4273, %v4273
        %v4306 = vmul.f32 %v4274, %v4274
        %v4307 = vmul.f32 %v4275, %v4275
        %v4308 = vmul.f32 %v4276, %v4276
        %v4309 = vmul.f32 %v4277, %v4277
        %v4310 = vmul.f32 %v4278, %v4278
        %v4311 = vmul.f32 %v4279, %v4279
        %v4312 = vmul.f32 %v4280, %v4280
        %v4313 = vmul.f32 %v4281, %v4281
        %v4314 = vmul.f32 %v4282, %v4282
        %v4315 = vmul.f32 %v4283, %v4283
        %4316 = vadd.xlane.f32.xlu0 %v4284
        %v4317 = vpop.xlane.xlu0 %4316
        %4318 = vadd.xlane.f32.xlu0 %v4285
        %v4319 = vpop.xlane.xlu0 %4318
        %4320 = vadd.xlane.f32.xlu0 %v4286
        %v4321 = vpop.xlane.xlu0 %4320
        %4322 = vadd.xlane.f32.xlu0 %v4287
        %v4323 = vpop.xlane.xlu0 %4322
        %4324 = vadd.xlane.f32.xlu0 %v4288
        %v4325 = vpop.xlane.xlu0 %4324
        %4326 = vadd.xlane.f32.xlu0 %v4289
        %v4327 = vpop.xlane.xlu0 %4326
        %4328 = vadd.xlane.f32.xlu0 %v4290
        %v4329 = vpop.xlane.xlu0 %4328
        %4330 = vadd.xlane.f32.xlu0 %v4291
        %v4331 = vpop.xlane.xlu0 %4330
        %4332 = vadd.xlane.f32.xlu0 %v4292
        %v4333 = vpop.xlane.xlu0 %4332
        %4334 = vadd.xlane.f32.xlu0 %v4293
        %v4335 = vpop.xlane.xlu0 %4334
        %4336 = vadd.xlane.f32.xlu0 %v4294
        %v4337 = vpop.xlane.xlu0 %4336
        %4338 = vadd.xlane.f32.xlu0 %v4295
        %v4339 = vpop.xlane.xlu0 %4338
        %4340 = vadd.xlane.f32.xlu0 %v4296
        %v4341 = vpop.xlane.xlu0 %4340
        %4342 = vadd.xlane.f32.xlu0 %v4297
        %v4343 = vpop.xlane.xlu0 %4342
        %4344 = vadd.xlane.f32.xlu0 %v4298
        %v4345 = vpop.xlane.xlu0 %4344
        %4346 = vadd.xlane.f32.xlu0 %v4299
        %v4347 = vpop.xlane.xlu0 %4346
        %4348 = vadd.xlane.f32.xlu0 %v4300
        %v4349 = vpop.xlane.xlu0 %4348
        %4350 = vadd.xlane.f32.xlu0 %v4301
        %v4351 = vpop.xlane.xlu0 %4350
        %4352 = vadd.xlane.f32.xlu0 %v4302
        %v4353 = vpop.xlane.xlu0 %4352
        %4354 = vadd.xlane.f32.xlu0 %v4303
        %v4355 = vpop.xlane.xlu0 %4354
        %4356 = vadd.xlane.f32.xlu0 %v4304
        %v4357 = vpop.xlane.xlu0 %4356
        %4358 = vadd.xlane.f32.xlu0 %v4305
        %v4359 = vpop.xlane.xlu0 %4358
        %4360 = vadd.xlane.f32.xlu0 %v4306
        %v4361 = vpop.xlane.xlu0 %4360
        %4362 = vadd.xlane.f32.xlu0 %v4307
        %v4363 = vpop.xlane.xlu0 %4362
        %4364 = vadd.xlane.f32.xlu0 %v4308
        %v4365 = vpop.xlane.xlu0 %4364
        %4366 = vadd.xlane.f32.xlu0 %v4309
        %v4367 = vpop.xlane.xlu0 %4366
        %4368 = vadd.xlane.f32.xlu0 %v4310
        %v4369 = vpop.xlane.xlu0 %4368
        %4370 = vadd.xlane.f32.xlu0 %v4311
        %v4371 = vpop.xlane.xlu0 %4370
        %4372 = vadd.xlane.f32.xlu0 %v4312
        %v4373 = vpop.xlane.xlu0 %4372
        %4374 = vadd.xlane.f32.xlu0 %v4313
        %v4375 = vpop.xlane.xlu0 %4374
        %4376 = vadd.xlane.f32.xlu0 %v4314
        %v4377 = vpop.xlane.xlu0 %4376
        %4378 = vadd.xlane.f32.xlu0 %v4315
        %v4379 = vpop.xlane.xlu0 %4378
        %v4380 = vmul.f32 %v4317, 0.03125
        %v4381 = vmul.f32 %v4319, 0.03125
        %v4382 = vmul.f32 %v4321, 0.03125
        %v4383 = vmul.f32 %v4323, 0.03125
        %v4384 = vmul.f32 %v4325, 0.03125
        %v4385 = vmul.f32 %v4327, 0.03125
        %v4386 = vmul.f32 %v4329, 0.03125
        %v4387 = vmul.f32 %v4331, 0.03125
        %v4388 = vmul.f32 %v4333, 0.03125
        %v4389 = vmul.f32 %v4335, 0.03125
        %v4390 = vmul.f32 %v4337, 0.03125
        %v4391 = vmul.f32 %v4339, 0.03125
        %v4392 = vmul.f32 %v4341, 0.03125
        %v4393 = vmul.f32 %v4343, 0.03125
        %v4394 = vmul.f32 %v4345, 0.03125
        %v4395 = vmul.f32 %v4347, 0.03125
        %v4396 = vmul.f32 %v4349, 0.03125
        %v4397 = vmul.f32 %v4351, 0.03125
        %v4398 = vmul.f32 %v4353, 0.03125
        %v4399 = vmul.f32 %v4355, 0.03125
        %v4400 = vmul.f32 %v4357, 0.03125
        %v4401 = vmul.f32 %v4359, 0.03125
        %v4402 = vmul.f32 %v4361, 0.03125
        %v4403 = vmul.f32 %v4363, 0.03125
        %v4404 = vmul.f32 %v4365, 0.03125
        %v4405 = vmul.f32 %v4367, 0.03125
        %v4406 = vmul.f32 %v4369, 0.03125
        %v4407 = vmul.f32 %v4371, 0.03125
        %v4408 = vmul.f32 %v4373, 0.03125
        %v4409 = vmul.f32 %v4375, 0.03125
        %v4410 = vmul.f32 %v4377, 0.03125
        %v4411 = vmul.f32 %v4379, 0.03125
        %v4412 = vadd.f32 %v4380, 1e-05
        %v4413 = vadd.f32 %v4381, 1e-05
        %v4414 = vadd.f32 %v4382, 1e-05
        %v4415 = vadd.f32 %v4383, 1e-05
        %v4416 = vadd.f32 %v4384, 1e-05
        %v4417 = vadd.f32 %v4385, 1e-05
        %v4418 = vadd.f32 %v4386, 1e-05
        %v4419 = vadd.f32 %v4387, 1e-05
        %v4420 = vadd.f32 %v4388, 1e-05
        %v4421 = vadd.f32 %v4389, 1e-05
        %v4422 = vadd.f32 %v4390, 1e-05
        %v4423 = vadd.f32 %v4391, 1e-05
        %v4424 = vadd.f32 %v4392, 1e-05
        %v4425 = vadd.f32 %v4393, 1e-05
        %v4426 = vadd.f32 %v4394, 1e-05
        %v4427 = vadd.f32 %v4395, 1e-05
        %v4428 = vadd.f32 %v4396, 1e-05
        %v4429 = vadd.f32 %v4397, 1e-05
        %v4430 = vadd.f32 %v4398, 1e-05
        %v4431 = vadd.f32 %v4399, 1e-05
        %v4432 = vadd.f32 %v4400, 1e-05
        %v4433 = vadd.f32 %v4401, 1e-05
        %v4434 = vadd.f32 %v4402, 1e-05
        %v4435 = vadd.f32 %v4403, 1e-05
        %v4436 = vadd.f32 %v4404, 1e-05
        %v4437 = vadd.f32 %v4405, 1e-05
        %v4438 = vadd.f32 %v4406, 1e-05
        %v4439 = vadd.f32 %v4407, 1e-05
        %v4440 = vadd.f32 %v4408, 1e-05
        %v4441 = vadd.f32 %v4409, 1e-05
        %v4442 = vadd.f32 %v4410, 1e-05
        %v4443 = vadd.f32 %v4411, 1e-05
        %v4444 = vrsqrt.pop %v4412
        %v4445 = vrsqrt.pop %v4413
        %v4446 = vrsqrt.pop %v4414
        %v4447 = vrsqrt.pop %v4415
        %v4448 = vrsqrt.pop %v4416
        %v4449 = vrsqrt.pop %v4417
        %v4450 = vrsqrt.pop %v4418
        %v4451 = vrsqrt.pop %v4419
        %v4452 = vrsqrt.pop %v4420
        %v4453 = vrsqrt.pop %v4421
        %v4454 = vrsqrt.pop %v4422
        %v4455 = vrsqrt.pop %v4423
        %v4456 = vrsqrt.pop %v4424
        %v4457 = vrsqrt.pop %v4425
        %v4458 = vrsqrt.pop %v4426
        %v4459 = vrsqrt.pop %v4427
        %v4460 = vrsqrt.pop %v4428
        %v4461 = vrsqrt.pop %v4429
        %v4462 = vrsqrt.pop %v4430
        %v4463 = vrsqrt.pop %v4431
        %v4464 = vrsqrt.pop %v4432
        %v4465 = vrsqrt.pop %v4433
        %v4466 = vrsqrt.pop %v4434
        %v4467 = vrsqrt.pop %v4435
        %v4468 = vrsqrt.pop %v4436
        %v4469 = vrsqrt.pop %v4437
        %v4470 = vrsqrt.pop %v4438
        %v4471 = vrsqrt.pop %v4439
        %v4472 = vrsqrt.pop %v4440
        %v4473 = vrsqrt.pop %v4441
        %v4474 = vrsqrt.pop %v4442
        %v4475 = vrsqrt.pop %v4443
        %v4476 = vmul.f32 %v4252, %v4444
        %v4477 = vmul.f32 %v4253, %v4445
        %v4478 = vmul.f32 %v4254, %v4446
        %v4479 = vmul.f32 %v4255, %v4447
        %v4480 = vmul.f32 %v4256, %v4448
        %v4481 = vmul.f32 %v4257, %v4449
        %v4482 = vmul.f32 %v4258, %v4450
        %v4483 = vmul.f32 %v4259, %v4451
        %v4484 = vmul.f32 %v4260, %v4452
        %v4485 = vmul.f32 %v4261, %v4453
        %v4486 = vmul.f32 %v4262, %v4454
        %v4487 = vmul.f32 %v4263, %v4455
        %v4488 = vmul.f32 %v4264, %v4456
        %v4489 = vmul.f32 %v4265, %v4457
        %v4490 = vmul.f32 %v4266, %v4458
        %v4491 = vmul.f32 %v4267, %v4459
        %v4492 = vmul.f32 %v4268, %v4460
        %v4493 = vmul.f32 %v4269, %v4461
        %v4494 = vmul.f32 %v4270, %v4462
        %v4495 = vmul.f32 %v4271, %v4463
        %v4496 = vmul.f32 %v4272, %v4464
        %v4497 = vmul.f32 %v4273, %v4465
        %v4498 = vmul.f32 %v4274, %v4466
        %v4499 = vmul.f32 %v4275, %v4467
        %v4500 = vmul.f32 %v4276, %v4468
        %v4501 = vmul.f32 %v4277, %v4469
        %v4502 = vmul.f32 %v4278, %v4470
        %v4503 = vmul.f32 %v4279, %v4471
        %v4504 = vmul.f32 %v4280, %v4472
        %v4505 = vmul.f32 %v4281, %v4473
        %v4506 = vmul.f32 %v4282, %v4474
        %v4507 = vmul.f32 %v4283, %v4475
        %v4508 = vmul.f32 %v4476, %v3413
        %v4509 = vmul.f32 %v4477, %v3413
        %v4510 = vmul.f32 %v4478, %v3413
        %v4511 = vmul.f32 %v4479, %v3413
        %v4512 = vmul.f32 %v4480, %v3413
        %v4513 = vmul.f32 %v4481, %v3413
        %v4514 = vmul.f32 %v4482, %v3413
        %v4515 = vmul.f32 %v4483, %v3413
        %v4516 = vmul.f32 %v4484, %v3413
        %v4517 = vmul.f32 %v4485, %v3413
        %v4518 = vmul.f32 %v4486, %v3413
        %v4519 = vmul.f32 %v4487, %v3413
        %v4520 = vmul.f32 %v4488, %v3413
        %v4521 = vmul.f32 %v4489, %v3413
        %v4522 = vmul.f32 %v4490, %v3413
        %v4523 = vmul.f32 %v4491, %v3413
        %v4524 = vmul.f32 %v4492, %v3413
        %v4525 = vmul.f32 %v4493, %v3413
        %v4526 = vmul.f32 %v4494, %v3413
        %v4527 = vmul.f32 %v4495, %v3413
        %v4528 = vmul.f32 %v4496, %v3413
        %v4529 = vmul.f32 %v4497, %v3413
        %v4530 = vmul.f32 %v4498, %v3413
        %v4531 = vmul.f32 %v4499, %v3413
        %v4532 = vmul.f32 %v4500, %v3413
        %v4533 = vmul.f32 %v4501, %v3413
        %v4534 = vmul.f32 %v4502, %v3413
        %v4535 = vmul.f32 %v4503, %v3413
        %v4536 = vmul.f32 %v4504, %v3413
        %v4537 = vmul.f32 %v4505, %v3413
        %v4538 = vmul.f32 %v4506, %v3413
        %v4539 = vmul.f32 %v4507, %v3413
        %v4540 = vadd.f32 %v4508, %v3414
        %v4541 = vadd.f32 %v4509, %v3414
        %v4542 = vadd.f32 %v4510, %v3414
        %v4543 = vadd.f32 %v4511, %v3414
        %v4544 = vadd.f32 %v4512, %v3414
        %v4545 = vadd.f32 %v4513, %v3414
        %v4546 = vadd.f32 %v4514, %v3414
        %v4547 = vadd.f32 %v4515, %v3414
        %v4548 = vadd.f32 %v4516, %v3414
        %v4549 = vadd.f32 %v4517, %v3414
        %v4550 = vadd.f32 %v4518, %v3414
        %v4551 = vadd.f32 %v4519, %v3414
        %v4552 = vadd.f32 %v4520, %v3414
        %v4553 = vadd.f32 %v4521, %v3414
        %v4554 = vadd.f32 %v4522, %v3414
        %v4555 = vadd.f32 %v4523, %v3414
        %v4556 = vadd.f32 %v4524, %v3414
        %v4557 = vadd.f32 %v4525, %v3414
        %v4558 = vadd.f32 %v4526, %v3414
        %v4559 = vadd.f32 %v4527, %v3414
        %v4560 = vadd.f32 %v4528, %v3414
        %v4561 = vadd.f32 %v4529, %v3414
        %v4562 = vadd.f32 %v4530, %v3414
        %v4563 = vadd.f32 %v4531, %v3414
        %v4564 = vadd.f32 %v4532, %v3414
        %v4565 = vadd.f32 %v4533, %v3414
        %v4566 = vadd.f32 %v4534, %v3414
        %v4567 = vadd.f32 %v4535, %v3414
        %v4568 = vadd.f32 %v4536, %v3414
        %v4569 = vadd.f32 %v4537, %v3414
        %v4570 = vadd.f32 %v4538, %v3414
        %v4571 = vadd.f32 %v4539, %v3414
        %v4572 = vpack.c.bf16 %v4541, %v4540
        %v4573 = vpack.c.bf16 %v4543, %v4542
        %v4574 = vpack.c.bf16 %v4545, %v4544
        %v4575 = vpack.c.bf16 %v4547, %v4546
        %v4576 = vpack.c.bf16 %v4549, %v4548
        %v4577 = vpack.c.bf16 %v4551, %v4550
        %v4578 = vpack.c.bf16 %v4553, %v4552
        %v4579 = vpack.c.bf16 %v4555, %v4554
        %v4580 = vpack.c.bf16 %v4557, %v4556
        %v4581 = vpack.c.bf16 %v4559, %v4558
        %v4582 = vpack.c.bf16 %v4561, %v4560
        %v4583 = vpack.c.bf16 %v4563, %v4562
        %v4584 = vpack.c.bf16 %v4565, %v4564
        %v4585 = vpack.c.bf16 %v4567, %v4566
        %v4586 = vpack.c.bf16 %v4569, %v4568
        %v4587 = vpack.c.bf16 %v4571, %v4570
        %v4589 = vlaneseq
        %v4590 = vshrl.u32 %v4589, 7
        %v4591 = vsub.s32 0, %v4590
        %v4592 = vrot.slane %v3410, %v4591
        %v4593 = vlaneseq
        %v4594 = vshrl.u32 %v4593, 7
        %v4595 = vsub.s32 1, %v4594
        %v4596 = vrot.slane %v3410, %v4595
        %v4597 = vlaneseq
        %v4598 = vshrl.u32 %v4597, 7
        %v4599 = vsub.s32 2, %v4598
        %v4600 = vrot.slane %v3410, %v4599
        %v4601 = vlaneseq
        %v4602 = vshrl.u32 %v4601, 7
        %v4603 = vsub.s32 3, %v4602
        %v4604 = vrot.slane %v3410, %v4603
        %v4641 = vunpack.c.l.b16 %v3378
        %v4642 = vunpack.c.h.b16 %v3378
        %v4643 = vunpack.c.l.b16 %v3379
        %v4644 = vunpack.c.h.b16 %v3379
        %v4645 = vunpack.c.l.b16 %v3380
        %v4646 = vunpack.c.h.b16 %v3380
        %v4647 = vunpack.c.l.b16 %v3381
        %v4648 = vunpack.c.h.b16 %v3381
        %v4649 = vunpack.c.l.b16 %v3382
        %v4650 = vunpack.c.h.b16 %v3382
        %v4651 = vunpack.c.l.b16 %v3383
        %v4652 = vunpack.c.h.b16 %v3383
        %v4653 = vunpack.c.l.b16 %v3384
        %v4654 = vunpack.c.h.b16 %v3384
        %v4655 = vunpack.c.l.b16 %v3385
        %v4656 = vunpack.c.h.b16 %v3385
        %v4657 = vunpack.c.l.b16 %v3386
        %v4658 = vunpack.c.h.b16 %v3386
        %v4659 = vunpack.c.l.b16 %v3387
        %v4660 = vunpack.c.h.b16 %v3387
        %v4661 = vunpack.c.l.b16 %v3388
        %v4662 = vunpack.c.h.b16 %v3388
        %v4663 = vunpack.c.l.b16 %v3389
        %v4664 = vunpack.c.h.b16 %v3389
        %v4665 = vunpack.c.l.b16 %v3390
        %v4666 = vunpack.c.h.b16 %v3390
        %v4667 = vunpack.c.l.b16 %v3391
        %v4668 = vunpack.c.h.b16 %v3391
        %v4669 = vunpack.c.l.b16 %v3392
        %v4670 = vunpack.c.h.b16 %v3392
        %v4671 = vunpack.c.l.b16 %v3393
        %v4672 = vunpack.c.h.b16 %v3393
        %v4673 = vunpack.c.l.b16 %v3394
        %v4674 = vunpack.c.h.b16 %v3394
        %v4675 = vunpack.c.l.b16 %v3395
        %v4676 = vunpack.c.h.b16 %v3395
        %v4677 = vunpack.c.l.b16 %v3396
        %v4678 = vunpack.c.h.b16 %v3396
        %v4679 = vunpack.c.l.b16 %v3397
        %v4680 = vunpack.c.h.b16 %v3397
        %v4681 = vunpack.c.l.b16 %v3398
        %v4682 = vunpack.c.h.b16 %v3398
        %v4683 = vunpack.c.l.b16 %v3399
        %v4684 = vunpack.c.h.b16 %v3399
        %v4685 = vunpack.c.l.b16 %v3400
        %v4686 = vunpack.c.h.b16 %v3400
        %v4687 = vunpack.c.l.b16 %v3401
        %v4688 = vunpack.c.h.b16 %v3401
        %v4689 = vunpack.c.l.b16 %v3402
        %v4690 = vunpack.c.h.b16 %v3402
        %v4691 = vunpack.c.l.b16 %v3403
        %v4692 = vunpack.c.h.b16 %v3403
        %v4693 = vunpack.c.l.b16 %v3404
        %v4694 = vunpack.c.h.b16 %v3404
        %v4695 = vunpack.c.l.b16 %v3405
        %v4696 = vunpack.c.h.b16 %v3405
        %v4697 = vunpack.c.l.b16 %v3406
        %v4698 = vunpack.c.h.b16 %v3406
        %v4699 = vunpack.c.l.b16 %v3407
        %v4700 = vunpack.c.h.b16 %v3407
        %v4701 = vunpack.c.l.b16 %v3408
        %v4702 = vunpack.c.h.b16 %v3408
        %v4703 = vunpack.c.l.b16 %v3409
        %v4704 = vunpack.c.h.b16 %v3409
        %v4705 = vpack.c.b16 %v4645, %v4641
        %v4706 = vpack.c.b16 %v4646, %v4642
        %v4707 = vpack.c.b16 %v4647, %v4643
        %v4708 = vpack.c.b16 %v4648, %v4644
        %v4709 = vpack.c.b16 %v4653, %v4649
        %v4710 = vpack.c.b16 %v4654, %v4650
        %v4711 = vpack.c.b16 %v4655, %v4651
        %v4712 = vpack.c.b16 %v4656, %v4652
        %v4713 = vpack.c.b16 %v4661, %v4657
        %v4714 = vpack.c.b16 %v4662, %v4658
        %v4715 = vpack.c.b16 %v4663, %v4659
        %v4716 = vpack.c.b16 %v4664, %v4660
        %v4717 = vpack.c.b16 %v4669, %v4665
        %v4718 = vpack.c.b16 %v4670, %v4666
        %v4719 = vpack.c.b16 %v4671, %v4667
        %v4720 = vpack.c.b16 %v4672, %v4668
        %v4721 = vpack.c.b16 %v4677, %v4673
        %v4722 = vpack.c.b16 %v4678, %v4674
        %v4723 = vpack.c.b16 %v4679, %v4675
        %v4724 = vpack.c.b16 %v4680, %v4676
        %v4725 = vpack.c.b16 %v4685, %v4681
        %v4726 = vpack.c.b16 %v4686, %v4682
        %v4727 = vpack.c.b16 %v4687, %v4683
        %v4728 = vpack.c.b16 %v4688, %v4684
        %v4729 = vpack.c.b16 %v4693, %v4689
        %v4730 = vpack.c.b16 %v4694, %v4690
        %v4731 = vpack.c.b16 %v4695, %v4691
        %v4732 = vpack.c.b16 %v4696, %v4692
        %v4733 = vpack.c.b16 %v4701, %v4697
        %v4734 = vpack.c.b16 %v4702, %v4698
        %v4735 = vpack.c.b16 %v4703, %v4699
        %v4736 = vpack.c.b16 %v4704, %v4700
        %4769 = vmatprep.subr.bf16.mxu0 %v4706
        %4770 = vmatpush1.bf16.msra.mxu0 %v4705
        %4771 = vmatprep.subr.bf16.mxu0 %v4710
        %4772 = vmatpush1.bf16.msra.mxu0 %v4709
        %4773 = vmatprep.subr.bf16.mxu0 %v4714
        %4774 = vmatpush1.bf16.msra.mxu0 %v4713
        %4775 = vmatprep.subr.bf16.mxu0 %v4718
        %4776 = vmatpush1.bf16.msra.mxu0 %v4717
        %4777 = vmatprep.subr.bf16.mxu0 %v4722
        %4778 = vmatpush1.bf16.msra.mxu0 %v4721
        %4779 = vmatprep.subr.bf16.mxu0 %v4726
        %4780 = vmatpush1.bf16.msra.mxu0 %v4725
        %4781 = vmatprep.subr.bf16.mxu0 %v4730
        %4782 = vmatpush1.bf16.msra.mxu0 %v4729
        %4783 = vmatprep.subr.bf16.mxu0 %v4734
        %4784 = vmatpush1.bf16.msra.mxu0 %v4733
        %4785 = vmatprep.subr.bf16.mxu0 0
        %4786 = vmatpush1.bf16.msra.mxu0 0
        %4787 = vmatprep.subr.bf16.mxu0 0
        %4788 = vmatpush1.bf16.msra.mxu0 0
        %4789 = vmatprep.subr.bf16.mxu0 0
        %4790 = vmatpush1.bf16.msra.mxu0 0
        %4791 = vmatprep.subr.bf16.mxu0 0
        %4792 = vmatpush1.bf16.msra.mxu0 0
        %4793 = vmatprep.subr.bf16.mxu0 0
        %4794 = vmatpush1.bf16.msra.mxu0 0
        %4795 = vmatprep.subr.bf16.mxu0 0
        %4796 = vmatpush1.bf16.msra.mxu0 0
        %4797 = vmatprep.subr.bf16.mxu0 0
        %4798 = vmatpush1.bf16.msra.mxu0 0
        %4799 = vmatprep.subr.bf16.mxu0 0
        %4800 = vmatpush1.bf16.msra.mxu0 0
        %4801 = vmatprep.mubr.bf16.mxu0 0
        %4802 = vmatmul.mubr.bf16.gmra.mrb[0].mxu0 %v4572
        %v4803 = vpop.f32.mrb[0].mxu0
        %v4804 = vadd.f32 %v4592, %v4803
        %v4805 = vpop.f32.mrb[0].mxu0
        %v4806 = vadd.f32 %v4596, %v4805
        %v4807 = vpop.f32.mrb[0].mxu0
        %v4808 = vadd.f32 %v4592, %v4807
        %v4809 = vpop.f32.mrb[0].mxu0
        %v4810 = vadd.f32 %v4596, %v4809
        %4811 = vmatprep.mubr.bf16.mxu0 0
        %4812 = vmatmul.mubr.bf16.gmra.mrb[0].mxu0 %v4573
        %v4813 = vpop.f32.mrb[0].mxu0
        %v4814 = vadd.f32 %v4592, %v4813
        %v4815 = vpop.f32.mrb[0].mxu0
        %v4816 = vadd.f32 %v4596, %v4815
        %v4817 = vpop.f32.mrb[0].mxu0
        %v4818 = vadd.f32 %v4592, %v4817
        %v4819 = vpop.f32.mrb[0].mxu0
        %v4820 = vadd.f32 %v4596, %v4819
        %4821 = vmatprep.mubr.bf16.mxu0 0
        %4822 = vmatmul.mubr.bf16.gmra.mrb[0].mxu0 %v4574
        %v4823 = vpop.f32.mrb[0].mxu0
        %v4824 = vadd.f32 %v4592, %v4823
        %v4825 = vpop.f32.mrb[0].mxu0
        %v4826 = vadd.f32 %v4596, %v4825
        %v4827 = vpop.f32.mrb[0].mxu0
        %v4828 = vadd.f32 %v4592, %v4827
        %v4829 = vpop.f32.mrb[0].mxu0
        %v4830 = vadd.f32 %v4596, %v4829
        %4831 = vmatprep.mubr.bf16.mxu0 0
        %4832 = vmatmul.mubr.bf16.gmra.mrb[0].mxu0 %v4575
        %v4833 = vpop.f32.mrb[0].mxu0
        %v4834 = vadd.f32 %v4592, %v4833
        %v4835 = vpop.f32.mrb[0].mxu0
        %v4836 = vadd.f32 %v4596, %v4835
        %v4837 = vpop.f32.mrb[0].mxu0
        %v4838 = vadd.f32 %v4592, %v4837
        %v4839 = vpop.f32.mrb[0].mxu0
        %v4840 = vadd.f32 %v4596, %v4839
        %4841 = vmatprep.mubr.bf16.mxu0 0
        %4842 = vmatmul.mubr.bf16.gmra.mrb[0].mxu0 %v4576
        %v4843 = vpop.f32.mrb[0].mxu0
        %v4844 = vadd.f32 %v4592, %v4843
        %v4845 = vpop.f32.mrb[0].mxu0
        %v4846 = vadd.f32 %v4596, %v4845
        %v4847 = vpop.f32.mrb[0].mxu0
        %v4848 = vadd.f32 %v4592, %v4847
        %v4849 = vpop.f32.mrb[0].mxu0
        %v4850 = vadd.f32 %v4596, %v4849
        %4851 = vmatprep.mubr.bf16.mxu0 0
        %4852 = vmatmul.mubr.bf16.gmra.mrb[0].mxu0 %v4577
        %v4853 = vpop.f32.mrb[0].mxu0
        %v4854 = vadd.f32 %v4592, %v4853
        %v4855 = vpop.f32.mrb[0].mxu0
        %v4856 = vadd.f32 %v4596, %v4855
        %v4857 = vpop.f32.mrb[0].mxu0
        %v4858 = vadd.f32 %v4592, %v4857
        %v4859 = vpop.f32.mrb[0].mxu0
        %v4860 = vadd.f32 %v4596, %v4859
        %4861 = vmatprep.mubr.bf16.mxu0 0
        %4862 = vmatmul.mubr.bf16.gmra.mrb[0].mxu0 %v4578
        %v4863 = vpop.f32.mrb[0].mxu0
        %v4864 = vadd.f32 %v4592, %v4863
        %v4865 = vpop.f32.mrb[0].mxu0
        %v4866 = vadd.f32 %v4596, %v4865
        %v4867 = vpop.f32.mrb[0].mxu0
        %v4868 = vadd.f32 %v4592, %v4867
        %v4869 = vpop.f32.mrb[0].mxu0
        %v4870 = vadd.f32 %v4596, %v4869
        %4871 = vmatprep.mubr.bf16.mxu0 0
        %4872 = vmatmul.mubr.bf16.gmra.mrb[0].mxu0 %v4579
        %v4873 = vpop.f32.mrb[0].mxu0
        %v4874 = vadd.f32 %v4592, %v4873
        %v4875 = vpop.f32.mrb[0].mxu0
        %v4876 = vadd.f32 %v4596, %v4875
        %v4877 = vpop.f32.mrb[0].mxu0
        %v4878 = vadd.f32 %v4592, %v4877
        %v4879 = vpop.f32.mrb[0].mxu0
        %v4880 = vadd.f32 %v4596, %v4879
        %4881 = vmatprep.mubr.bf16.mxu0 0
        %4882 = vmatmul.mubr.bf16.gmra.mrb[0].mxu0 %v4580
        %v4883 = vpop.f32.mrb[0].mxu0
        %v4884 = vadd.f32 %v4592, %v4883
        %v4885 = vpop.f32.mrb[0].mxu0
        %v4886 = vadd.f32 %v4596, %v4885
        %v4887 = vpop.f32.mrb[0].mxu0
        %v4888 = vadd.f32 %v4592, %v4887
        %v4889 = vpop.f32.mrb[0].mxu0
        %v4890 = vadd.f32 %v4596, %v4889
        %4891 = vmatprep.mubr.bf16.mxu0 0
        %4892 = vmatmul.mubr.bf16.gmra.mrb[0].mxu0 %v4581
        %v4893 = vpop.f32.mrb[0].mxu0
        %v4894 = vadd.f32 %v4592, %v4893
        %v4895 = vpop.f32.mrb[0].mxu0
        %v4896 = vadd.f32 %v4596, %v4895
        %v4897 = vpop.f32.mrb[0].mxu0
        %v4898 = vadd.f32 %v4592, %v4897
        %v4899 = vpop.f32.mrb[0].mxu0
        %v4900 = vadd.f32 %v4596, %v4899
        %4901 = vmatprep.mubr.bf16.mxu0 0
        %4902 = vmatmul.mubr.bf16.gmra.mrb[0].mxu0 %v4582
        %v4903 = vpop.f32.mrb[0].mxu0
        %v4904 = vadd.f32 %v4592, %v4903
        %v4905 = vpop.f32.mrb[0].mxu0
        %v4906 = vadd.f32 %v4596, %v4905
        %v4907 = vpop.f32.mrb[0].mxu0
        %v4908 = vadd.f32 %v4592, %v4907
        %v4909 = vpop.f32.mrb[0].mxu0
        %v4910 = vadd.f32 %v4596, %v4909
        %4911 = vmatprep.mubr.bf16.mxu0 0
        %4912 = vmatmul.mubr.bf16.gmra.mrb[0].mxu0 %v4583
        %v4913 = vpop.f32.mrb[0].mxu0
        %v4914 = vadd.f32 %v4592, %v4913
        %v4915 = vpop.f32.mrb[0].mxu0
        %v4916 = vadd.f32 %v4596, %v4915
        %v4917 = vpop.f32.mrb[0].mxu0
        %v4918 = vadd.f32 %v4592, %v4917
        %v4919 = vpop.f32.mrb[0].mxu0
        %v4920 = vadd.f32 %v4596, %v4919
        %4921 = vmatprep.mubr.bf16.mxu0 0
        %4922 = vmatmul.mubr.bf16.gmra.mrb[0].mxu0 %v4584
        %v4923 = vpop.f32.mrb[0].mxu0
        %v4924 = vadd.f32 %v4592, %v4923
        %v4925 = vpop.f32.mrb[0].mxu0
        %v4926 = vadd.f32 %v4596, %v4925
        %v4927 = vpop.f32.mrb[0].mxu0
        %v4928 = vadd.f32 %v4592, %v4927
        %v4929 = vpop.f32.mrb[0].mxu0
        %v4930 = vadd.f32 %v4596, %v4929
        %4931 = vmatprep.mubr.bf16.mxu0 0
        %4932 = vmatmul.mubr.bf16.gmra.mrb[0].mxu0 %v4585
        %v4933 = vpop.f32.mrb[0].mxu0
        %v4934 = vadd.f32 %v4592, %v4933
        %v4935 = vpop.f32.mrb[0].mxu0
        %v4936 = vadd.f32 %v4596, %v4935
        %v4937 = vpop.f32.mrb[0].mxu0
        %v4938 = vadd.f32 %v4592, %v4937
        %v4939 = vpop.f32.mrb[0].mxu0
        %v4940 = vadd.f32 %v4596, %v4939
        %4941 = vmatprep.mubr.bf16.mxu0 0
        %4942 = vmatmul.mubr.bf16.gmra.mrb[0].mxu0 %v4586
        %v4943 = vpop.f32.mrb[0].mxu0
        %v4944 = vadd.f32 %v4592, %v4943
        %v4945 = vpop.f32.mrb[0].mxu0
        %v4946 = vadd.f32 %v4596, %v4945
        %v4947 = vpop.f32.mrb[0].mxu0
        %v4948 = vadd.f32 %v4592, %v4947
        %v4949 = vpop.f32.mrb[0].mxu0
        %v4950 = vadd.f32 %v4596, %v4949
        %4951 = vmatprep.mubr.bf16.mxu0 0
        %4952 = vmatmul.mubr.bf16.gmra.mrb[0].mxu0 %v4587
        %v4953 = vpop.f32.mrb[0].mxu0
        %v4954 = vadd.f32 %v4592, %v4953
        %v4955 = vpop.f32.mrb[0].mxu0
        %v4956 = vadd.f32 %v4596, %v4955
        %v4957 = vpop.f32.mrb[0].mxu0
        %v4958 = vadd.f32 %v4592, %v4957
        %v4959 = vpop.f32.mrb[0].mxu0
        %v4960 = vadd.f32 %v4596, %v4959
        %4961 = vdwg.mxu0
        %4962 = vmatprep.subr.bf16.mxu0 %v4708
        %4963 = vmatpush1.bf16.msra.mxu0 %v4707
        %4964 = vmatprep.subr.bf16.mxu0 %v4712
        %4965 = vmatpush1.bf16.msra.mxu0 %v4711
        %4966 = vmatprep.subr.bf16.mxu0 %v4716
        %4967 = vmatpush1.bf16.msra.mxu0 %v4715
        %4968 = vmatprep.subr.bf16.mxu0 %v4720
        %4969 = vmatpush1.bf16.msra.mxu0 %v4719
        %4970 = vmatprep.subr.bf16.mxu0 %v4724
        %4971 = vmatpush1.bf16.msra.mxu0 %v4723
        %4972 = vmatprep.subr.bf16.mxu0 %v4728
        %4973 = vmatpush1.bf16.msra.mxu0 %v4727
        %4974 = vmatprep.subr.bf16.mxu0 %v4732
        %4975 = vmatpush1.bf16.msra.mxu0 %v4731
        %4976 = vmatprep.subr.bf16.mxu0 %v4736
        %4977 = vmatpush1.bf16.msra.mxu0 %v4735
        %4978 = vmatprep.subr.bf16.mxu0 0
        %4979 = vmatpush1.bf16.msra.mxu0 0
        %4980 = vmatprep.subr.bf16.mxu0 0
        %4981 = vmatpush1.bf16.msra.mxu0 0
        %4982 = vmatprep.subr.bf16.mxu0 0
        %4983 = vmatpush1.bf16.msra.mxu0 0
        %4984 = vmatprep.subr.bf16.mxu0 0
        %4985 = vmatpush1.bf16.msra.mxu0 0
        %4986 = vmatprep.subr.bf16.mxu0 0
        %4987 = vmatpush1.bf16.msra.mxu0 0
        %4988 = vmatprep.subr.bf16.mxu0 0
        %4989 = vmatpush1.bf16.msra.mxu0 0
        %4990 = vmatprep.subr.bf16.mxu0 0
        %4991 = vmatpush1.bf16.msra.mxu0 0
        %4992 = vmatprep.subr.bf16.mxu0 0
        %4993 = vmatpush1.bf16.msra.mxu0 0
        %4994 = vmatprep.mubr.bf16.mxu0 0
        %4995 = vmatmul.mubr.bf16.gmra.mrb[0].mxu0 %v4572
        %v4996 = vpop.f32.mrb[0].mxu0
        %v4997 = vadd.f32 %v4600, %v4996
        %v4998 = vpop.f32.mrb[0].mxu0
        %v4999 = vadd.f32 %v4604, %v4998
        %v5000 = vpop.f32.mrb[0].mxu0
        %v5001 = vadd.f32 %v4600, %v5000
        %v5002 = vpop.f32.mrb[0].mxu0
        %v5003 = vadd.f32 %v4604, %v5002
        %5004 = vmatprep.mubr.bf16.mxu0 0
        %5005 = vmatmul.mubr.bf16.gmra.mrb[0].mxu0 %v4573
        %v5006 = vpop.f32.mrb[0].mxu0
        %v5007 = vadd.f32 %v4600, %v5006
        %v5008 = vpop.f32.mrb[0].mxu0
        %v5009 = vadd.f32 %v4604, %v5008
        %v5010 = vpop.f32.mrb[0].mxu0
        %v5011 = vadd.f32 %v4600, %v5010
        %v5012 = vpop.f32.mrb[0].mxu0
        %v5013 = vadd.f32 %v4604, %v5012
        %5014 = vmatprep.mubr.bf16.mxu0 0
        %5015 = vmatmul.mubr.bf16.gmra.mrb[0].mxu0 %v4574
        %v5016 = vpop.f32.mrb[0].mxu0
        %v5017 = vadd.f32 %v4600, %v5016
        %v5018 = vpop.f32.mrb[0].mxu0
        %v5019 = vadd.f32 %v4604, %v5018
        %v5020 = vpop.f32.mrb[0].mxu0
        %v5021 = vadd.f32 %v4600, %v5020
        %v5022 = vpop.f32.mrb[0].mxu0
        %v5023 = vadd.f32 %v4604, %v5022
        %5024 = vmatprep.mubr.bf16.mxu0 0
        %5025 = vmatmul.mubr.bf16.gmra.mrb[0].mxu0 %v4575
        %v5026 = vpop.f32.mrb[0].mxu0
        %v5027 = vadd.f32 %v4600, %v5026
        %v5028 = vpop.f32.mrb[0].mxu0
        %v5029 = vadd.f32 %v4604, %v5028
        %v5030 = vpop.f32.mrb[0].mxu0
        %v5031 = vadd.f32 %v4600, %v5030
        %v5032 = vpop.f32.mrb[0].mxu0
        %v5033 = vadd.f32 %v4604, %v5032
        %5034 = vmatprep.mubr.bf16.mxu0 0
        %5035 = vmatmul.mubr.bf16.gmra.mrb[0].mxu0 %v4576
        %v5036 = vpop.f32.mrb[0].mxu0
        %v5037 = vadd.f32 %v4600, %v5036
        %v5038 = vpop.f32.mrb[0].mxu0
        %v5039 = vadd.f32 %v4604, %v5038
        %v5040 = vpop.f32.mrb[0].mxu0
        %v5041 = vadd.f32 %v4600, %v5040
        %v5042 = vpop.f32.mrb[0].mxu0
        %v5043 = vadd.f32 %v4604, %v5042
        %5044 = vmatprep.mubr.bf16.mxu0 0
        %5045 = vmatmul.mubr.bf16.gmra.mrb[0].mxu0 %v4577
        %v5046 = vpop.f32.mrb[0].mxu0
        %v5047 = vadd.f32 %v4600, %v5046
        %v5048 = vpop.f32.mrb[0].mxu0
        %v5049 = vadd.f32 %v4604, %v5048
        %v5050 = vpop.f32.mrb[0].mxu0
        %v5051 = vadd.f32 %v4600, %v5050
        %v5052 = vpop.f32.mrb[0].mxu0
        %v5053 = vadd.f32 %v4604, %v5052
        %5054 = vmatprep.mubr.bf16.mxu0 0
        %5055 = vmatmul.mubr.bf16.gmra.mrb[0].mxu0 %v4578
        %v5056 = vpop.f32.mrb[0].mxu0
        %v5057 = vadd.f32 %v4600, %v5056
        %v5058 = vpop.f32.mrb[0].mxu0
        %v5059 = vadd.f32 %v4604, %v5058
        %v5060 = vpop.f32.mrb[0].mxu0
        %v5061 = vadd.f32 %v4600, %v5060
        %v5062 = vpop.f32.mrb[0].mxu0
        %v5063 = vadd.f32 %v4604, %v5062
        %5064 = vmatprep.mubr.bf16.mxu0 0
        %5065 = vmatmul.mubr.bf16.gmra.mrb[0].mxu0 %v4579
        %v5066 = vpop.f32.mrb[0].mxu0
        %v5067 = vadd.f32 %v4600, %v5066
        %v5068 = vpop.f32.mrb[0].mxu0
        %v5069 = vadd.f32 %v4604, %v5068
        %v5070 = vpop.f32.mrb[0].mxu0
        %v5071 = vadd.f32 %v4600, %v5070
        %v5072 = vpop.f32.mrb[0].mxu0
        %v5073 = vadd.f32 %v4604, %v5072
        %5074 = vmatprep.mubr.bf16.mxu0 0
        %5075 = vmatmul.mubr.bf16.gmra.mrb[0].mxu0 %v4580
        %v5076 = vpop.f32.mrb[0].mxu0
        %v5077 = vadd.f32 %v4600, %v5076
        %v5078 = vpop.f32.mrb[0].mxu0
        %v5079 = vadd.f32 %v4604, %v5078
        %v5080 = vpop.f32.mrb[0].mxu0
        %v5081 = vadd.f32 %v4600, %v5080
        %v5082 = vpop.f32.mrb[0].mxu0
        %v5083 = vadd.f32 %v4604, %v5082
        %5084 = vmatprep.mubr.bf16.mxu0 0
        %5085 = vmatmul.mubr.bf16.gmra.mrb[0].mxu0 %v4581
        %v5086 = vpop.f32.mrb[0].mxu0
        %v5087 = vadd.f32 %v4600, %v5086
        %v5088 = vpop.f32.mrb[0].mxu0
        %v5089 = vadd.f32 %v4604, %v5088
        %v5090 = vpop.f32.mrb[0].mxu0
        %v5091 = vadd.f32 %v4600, %v5090
        %v5092 = vpop.f32.mrb[0].mxu0
        %v5093 = vadd.f32 %v4604, %v5092
        %5094 = vmatprep.mubr.bf16.mxu0 0
        %5095 = vmatmul.mubr.bf16.gmra.mrb[0].mxu0 %v4582
        %v5096 = vpop.f32.mrb[0].mxu0
        %v5097 = vadd.f32 %v4600, %v5096
        %v5098 = vpop.f32.mrb[0].mxu0
        %v5099 = vadd.f32 %v4604, %v5098
        %v5100 = vpop.f32.mrb[0].mxu0
        %v5101 = vadd.f32 %v4600, %v5100
        %v5102 = vpop.f32.mrb[0].mxu0
        %v5103 = vadd.f32 %v4604, %v5102
        %5104 = vmatprep.mubr.bf16.mxu0 0
        %5105 = vmatmul.mubr.bf16.gmra.mrb[0].mxu0 %v4583
        %v5106 = vpop.f32.mrb[0].mxu0
        %v5107 = vadd.f32 %v4600, %v5106
        %v5108 = vpop.f32.mrb[0].mxu0
        %v5109 = vadd.f32 %v4604, %v5108
        %v5110 = vpop.f32.mrb[0].mxu0
        %v5111 = vadd.f32 %v4600, %v5110
        %v5112 = vpop.f32.mrb[0].mxu0
        %v5113 = vadd.f32 %v4604, %v5112
        %5114 = vmatprep.mubr.bf16.mxu0 0
        %5115 = vmatmul.mubr.bf16.gmra.mrb[0].mxu0 %v4584
        %v5116 = vpop.f32.mrb[0].mxu0
        %v5117 = vadd.f32 %v4600, %v5116
        %v5118 = vpop.f32.mrb[0].mxu0
        %v5119 = vadd.f32 %v4604, %v5118
        %v5120 = vpop.f32.mrb[0].mxu0
        %v5121 = vadd.f32 %v4600, %v5120
        %v5122 = vpop.f32.mrb[0].mxu0
        %v5123 = vadd.f32 %v4604, %v5122
        %5124 = vmatprep.mubr.bf16.mxu0 0
        %5125 = vmatmul.mubr.bf16.gmra.mrb[0].mxu0 %v4585
        %v5126 = vpop.f32.mrb[0].mxu0
        %v5127 = vadd.f32 %v4600, %v5126
        %v5128 = vpop.f32.mrb[0].mxu0
        %v5129 = vadd.f32 %v4604, %v5128
        %v5130 = vpop.f32.mrb[0].mxu0
        %v5131 = vadd.f32 %v4600, %v5130
        %v5132 = vpop.f32.mrb[0].mxu0
        %v5133 = vadd.f32 %v4604, %v5132
        %5134 = vmatprep.mubr.bf16.mxu0 0
        %5135 = vmatmul.mubr.bf16.gmra.mrb[0].mxu0 %v4586
        %v5136 = vpop.f32.mrb[0].mxu0
        %v5137 = vadd.f32 %v4600, %v5136
        %v5138 = vpop.f32.mrb[0].mxu0
        %v5139 = vadd.f32 %v4604, %v5138
        %v5140 = vpop.f32.mrb[0].mxu0
        %v5141 = vadd.f32 %v4600, %v5140
        %v5142 = vpop.f32.mrb[0].mxu0
        %v5143 = vadd.f32 %v4604, %v5142
        %5144 = vmatprep.mubr.bf16.mxu0 0
        %5145 = vmatmul.mubr.bf16.gmra.mrb[0].mxu0 %v4587
        %v5146 = vpop.f32.mrb[0].mxu0
        %v5147 = vadd.f32 %v4600, %v5146
        %v5148 = vpop.f32.mrb[0].mxu0
        %v5149 = vadd.f32 %v4604, %v5148
        %v5150 = vpop.f32.mrb[0].mxu0
        %v5151 = vadd.f32 %v4600, %v5150
        %v5152 = vpop.f32.mrb[0].mxu0
        %v5153 = vadd.f32 %v4604, %v5152
        %5154 = vdwg.mxu0
        %v5155 = vpack.c.bf16 %v4808, %v4804
        %v5156 = vpack.c.bf16 %v4810, %v4806
        %v5157 = vpack.c.bf16 %v5001, %v4997
        %v5158 = vpack.c.bf16 %v5003, %v4999
        %v5159 = vpack.c.bf16 %v4818, %v4814
        %v5160 = vpack.c.bf16 %v4820, %v4816
        %v5161 = vpack.c.bf16 %v5011, %v5007
        %v5162 = vpack.c.bf16 %v5013, %v5009
        %v5163 = vpack.c.bf16 %v4828, %v4824
        %v5164 = vpack.c.bf16 %v4830, %v4826
        %v5165 = vpack.c.bf16 %v5021, %v5017
        %v5166 = vpack.c.bf16 %v5023, %v5019
        %v5167 = vpack.c.bf16 %v4838, %v4834
        %v5168 = vpack.c.bf16 %v4840, %v4836
        %v5169 = vpack.c.bf16 %v5031, %v5027
        %v5170 = vpack.c.bf16 %v5033, %v5029
        %v5171 = vpack.c.bf16 %v4848, %v4844
        %v5172 = vpack.c.bf16 %v4850, %v4846
        %v5173 = vpack.c.bf16 %v5041, %v5037
        %v5174 = vpack.c.bf16 %v5043, %v5039
        %v5175 = vpack.c.bf16 %v4858, %v4854
        %v5176 = vpack.c.bf16 %v4860, %v4856
        %v5177 = vpack.c.bf16 %v5051, %v5047
        %v5178 = vpack.c.bf16 %v5053, %v5049
        %v5179 = vpack.c.bf16 %v4868, %v4864
        %v5180 = vpack.c.bf16 %v4870, %v4866
        %v5181 = vpack.c.bf16 %v5061, %v5057
        %v5182 = vpack.c.bf16 %v5063, %v5059
        %v5183 = vpack.c.bf16 %v4878, %v4874
        %v5184 = vpack.c.bf16 %v4880, %v4876
        %v5185 = vpack.c.bf16 %v5071, %v5067
        %v5186 = vpack.c.bf16 %v5073, %v5069
        %v5187 = vpack.c.bf16 %v4888, %v4884
        %v5188 = vpack.c.bf16 %v4890, %v4886
        %v5189 = vpack.c.bf16 %v5081, %v5077
        %v5190 = vpack.c.bf16 %v5083, %v5079
        %v5191 = vpack.c.bf16 %v4898, %v4894
        %v5192 = vpack.c.bf16 %v4900, %v4896
        %v5193 = vpack.c.bf16 %v5091, %v5087
        %v5194 = vpack.c.bf16 %v5093, %v5089
        %v5195 = vpack.c.bf16 %v4908, %v4904
        %v5196 = vpack.c.bf16 %v4910, %v4906
        %v5197 = vpack.c.bf16 %v5101, %v5097
        %v5198 = vpack.c.bf16 %v5103, %v5099
        %v5199 = vpack.c.bf16 %v4918, %v4914
        %v5200 = vpack.c.bf16 %v4920, %v4916
        %v5201 = vpack.c.bf16 %v5111, %v5107
        %v5202 = vpack.c.bf16 %v5113, %v5109
        %v5203 = vpack.c.bf16 %v4928, %v4924
        %v5204 = vpack.c.bf16 %v4930, %v4926
        %v5205 = vpack.c.bf16 %v5121, %v5117
        %v5206 = vpack.c.bf16 %v5123, %v5119
        %v5207 = vpack.c.bf16 %v4938, %v4934
        %v5208 = vpack.c.bf16 %v4940, %v4936
        %v5209 = vpack.c.bf16 %v5131, %v5127
        %v5210 = vpack.c.bf16 %v5133, %v5129
        %v5211 = vpack.c.bf16 %v4948, %v4944
        %v5212 = vpack.c.bf16 %v4950, %v4946
        %v5213 = vpack.c.bf16 %v5141, %v5137
        %v5214 = vpack.c.bf16 %v5143, %v5139
        %v5215 = vpack.c.bf16 %v4958, %v4954
        %v5216 = vpack.c.bf16 %v4960, %v4956
        %v5217 = vpack.c.bf16 %v5151, %v5147
        %v5218 = vpack.c.bf16 %v5153, %v5149
        %v5283 = vunpack.c.l.b16 %v5155
        %v5284 = vunpack.c.l.b16 %v5156
        %v5285 = vunpack.c.l.b16 %v5157
        %v5286 = vunpack.c.l.b16 %v5158
        %v5287 = vunpack.c.h.b16 %v5155
        %v5288 = vunpack.c.h.b16 %v5156
        %v5289 = vunpack.c.h.b16 %v5157
        %v5290 = vunpack.c.h.b16 %v5158
        %v5291 = vunpack.c.l.b16 %v5159
        %v5292 = vunpack.c.l.b16 %v5160
        %v5293 = vunpack.c.l.b16 %v5161
        %v5294 = vunpack.c.l.b16 %v5162
        %v5295 = vunpack.c.h.b16 %v5159
        %v5296 = vunpack.c.h.b16 %v5160
        %v5297 = vunpack.c.h.b16 %v5161
        %v5298 = vunpack.c.h.b16 %v5162
        %v5299 = vunpack.c.l.b16 %v5163
        %v5300 = vunpack.c.l.b16 %v5164
        %v5301 = vunpack.c.l.b16 %v5165
        %v5302 = vunpack.c.l.b16 %v5166
        %v5303 = vunpack.c.h.b16 %v5163
        %v5304 = vunpack.c.h.b16 %v5164
        %v5305 = vunpack.c.h.b16 %v5165
        %v5306 = vunpack.c.h.b16 %v5166
        %v5307 = vunpack.c.l.b16 %v5167
        %v5308 = vunpack.c.l.b16 %v5168
        %v5309 = vunpack.c.l.b16 %v5169
        %v5310 = vunpack.c.l.b16 %v5170
        %v5311 = vunpack.c.h.b16 %v5167
        %v5312 = vunpack.c.h.b16 %v5168
        %v5313 = vunpack.c.h.b16 %v5169
        %v5314 = vunpack.c.h.b16 %v5170
        %v5315 = vunpack.c.l.b16 %v5171
        %v5316 = vunpack.c.l.b16 %v5172
        %v5317 = vunpack.c.l.b16 %v5173
        %v5318 = vunpack.c.l.b16 %v5174
        %v5319 = vunpack.c.h.b16 %v5171
        %v5320 = vunpack.c.h.b16 %v5172
        %v5321 = vunpack.c.h.b16 %v5173
        %v5322 = vunpack.c.h.b16 %v5174
        %v5323 = vunpack.c.l.b16 %v5175
        %v5324 = vunpack.c.l.b16 %v5176
        %v5325 = vunpack.c.l.b16 %v5177
        %v5326 = vunpack.c.l.b16 %v5178
        %v5327 = vunpack.c.h.b16 %v5175
        %v5328 = vunpack.c.h.b16 %v5176
        %v5329 = vunpack.c.h.b16 %v5177
        %v5330 = vunpack.c.h.b16 %v5178
        %v5331 = vunpack.c.l.b16 %v5179
        %v5332 = vunpack.c.l.b16 %v5180
        %v5333 = vunpack.c.l.b16 %v5181
        %v5334 = vunpack.c.l.b16 %v5182
        %v5335 = vunpack.c.h.b16 %v5179
        %v5336 = vunpack.c.h.b16 %v5180
        %v5337 = vunpack.c.h.b16 %v5181
        %v5338 = vunpack.c.h.b16 %v5182
        %v5339 = vunpack.c.l.b16 %v5183
        %v5340 = vunpack.c.l.b16 %v5184
        %v5341 = vunpack.c.l.b16 %v5185
        %v5342 = vunpack.c.l.b16 %v5186
        %v5343 = vunpack.c.h.b16 %v5183
        %v5344 = vunpack.c.h.b16 %v5184
        %v5345 = vunpack.c.h.b16 %v5185
        %v5346 = vunpack.c.h.b16 %v5186
        %v5347 = vunpack.c.l.b16 %v5187
        %v5348 = vunpack.c.l.b16 %v5188
        %v5349 = vunpack.c.l.b16 %v5189
        %v5350 = vunpack.c.l.b16 %v5190
        %v5351 = vunpack.c.h.b16 %v5187
        %v5352 = vunpack.c.h.b16 %v5188
        %v5353 = vunpack.c.h.b16 %v5189
        %v5354 = vunpack.c.h.b16 %v5190
        %v5355 = vunpack.c.l.b16 %v5191
        %v5356 = vunpack.c.l.b16 %v5192
        %v5357 = vunpack.c.l.b16 %v5193
        %v5358 = vunpack.c.l.b16 %v5194
        %v5359 = vunpack.c.h.b16 %v5191
        %v5360 = vunpack.c.h.b16 %v5192
        %v5361 = vunpack.c.h.b16 %v5193
        %v5362 = vunpack.c.h.b16 %v5194
        %v5363 = vunpack.c.l.b16 %v5195
        %v5364 = vunpack.c.l.b16 %v5196
        %v5365 = vunpack.c.l.b16 %v5197
        %v5366 = vunpack.c.l.b16 %v5198
        %v5367 = vunpack.c.h.b16 %v5195
        %v5368 = vunpack.c.h.b16 %v5196
        %v5369 = vunpack.c.h.b16 %v5197
        %v5370 = vunpack.c.h.b16 %v5198
        %v5371 = vunpack.c.l.b16 %v5199
        %v5372 = vunpack.c.l.b16 %v5200
        %v5373 = vunpack.c.l.b16 %v5201
        %v5374 = vunpack.c.l.b16 %v5202
        %v5375 = vunpack.c.h.b16 %v5199
        %v5376 = vunpack.c.h.b16 %v5200
        %v5377 = vunpack.c.h.b16 %v5201
        %v5378 = vunpack.c.h.b16 %v5202
        %v5379 = vunpack.c.l.b16 %v5203
        %v5380 = vunpack.c.l.b16 %v5204
        %v5381 = vunpack.c.l.b16 %v5205
        %v5382 = vunpack.c.l.b16 %v5206
        %v5383 = vunpack.c.h.b16 %v5203
        %v5384 = vunpack.c.h.b16 %v5204
        %v5385 = vunpack.c.h.b16 %v5205
        %v5386 = vunpack.c.h.b16 %v5206
        %v5387 = vunpack.c.l.b16 %v5207
        %v5388 = vunpack.c.l.b16 %v5208
        %v5389 = vunpack.c.l.b16 %v5209
        %v5390 = vunpack.c.l.b16 %v5210
        %v5391 = vunpack.c.h.b16 %v5207
        %v5392 = vunpack.c.h.b16 %v5208
        %v5393 = vunpack.c.h.b16 %v5209
        %v5394 = vunpack.c.h.b16 %v5210
        %v5395 = vunpack.c.l.b16 %v5211
        %v5396 = vunpack.c.l.b16 %v5212
        %v5397 = vunpack.c.l.b16 %v5213
        %v5398 = vunpack.c.l.b16 %v5214
        %v5399 = vunpack.c.h.b16 %v5211
        %v5400 = vunpack.c.h.b16 %v5212
        %v5401 = vunpack.c.h.b16 %v5213
        %v5402 = vunpack.c.h.b16 %v5214
        %v5403 = vunpack.c.l.b16 %v5215
        %v5404 = vunpack.c.l.b16 %v5216
        %v5405 = vunpack.c.l.b16 %v5217
        %v5406 = vunpack.c.l.b16 %v5218
        %v5407 = vunpack.c.h.b16 %v5215
        %v5408 = vunpack.c.h.b16 %v5216
        %v5409 = vunpack.c.h.b16 %v5217
        %v5410 = vunpack.c.h.b16 %v5218
        %v5411 = vpack.c.b16 %v5284, %v5283
        %v5412 = vpack.c.b16 %v5286, %v5285
        %v5413 = vpack.c.b16 %v5288, %v5287
        %v5414 = vpack.c.b16 %v5290, %v5289
        %v5415 = vpack.c.b16 %v5292, %v5291
        %v5416 = vpack.c.b16 %v5294, %v5293
        %v5417 = vpack.c.b16 %v5296, %v5295
        %v5418 = vpack.c.b16 %v5298, %v5297
        %v5419 = vpack.c.b16 %v5300, %v5299
        %v5420 = vpack.c.b16 %v5302, %v5301
        %v5421 = vpack.c.b16 %v5304, %v5303
        %v5422 = vpack.c.b16 %v5306, %v5305
        %v5423 = vpack.c.b16 %v5308, %v5307
        %v5424 = vpack.c.b16 %v5310, %v5309
        %v5425 = vpack.c.b16 %v5312, %v5311
        %v5426 = vpack.c.b16 %v5314, %v5313
        %v5427 = vpack.c.b16 %v5316, %v5315
        %v5428 = vpack.c.b16 %v5318, %v5317
        %v5429 = vpack.c.b16 %v5320, %v5319
        %v5430 = vpack.c.b16 %v5322, %v5321
        %v5431 = vpack.c.b16 %v5324, %v5323
        %v5432 = vpack.c.b16 %v5326, %v5325
        %v5433 = vpack.c.b16 %v5328, %v5327
        %v5434 = vpack.c.b16 %v5330, %v5329
        %v5435 = vpack.c.b16 %v5332, %v5331
        %v5436 = vpack.c.b16 %v5334, %v5333
        %v5437 = vpack.c.b16 %v5336, %v5335
        %v5438 = vpack.c.b16 %v5338, %v5337
        %v5439 = vpack.c.b16 %v5340, %v5339
        %v5440 = vpack.c.b16 %v5342, %v5341
        %v5441 = vpack.c.b16 %v5344, %v5343
        %v5442 = vpack.c.b16 %v5346, %v5345
        %v5443 = vpack.c.b16 %v5348, %v5347
        %v5444 = vpack.c.b16 %v5350, %v5349
        %v5445 = vpack.c.b16 %v5352, %v5351
        %v5446 = vpack.c.b16 %v5354, %v5353
        %v5447 = vpack.c.b16 %v5356, %v5355
        %v5448 = vpack.c.b16 %v5358, %v5357
        %v5449 = vpack.c.b16 %v5360, %v5359
        %v5450 = vpack.c.b16 %v5362, %v5361
        %v5451 = vpack.c.b16 %v5364, %v5363
        %v5452 = vpack.c.b16 %v5366, %v5365
        %v5453 = vpack.c.b16 %v5368, %v5367
        %v5454 = vpack.c.b16 %v5370, %v5369
        %v5455 = vpack.c.b16 %v5372, %v5371
        %v5456 = vpack.c.b16 %v5374, %v5373
        %v5457 = vpack.c.b16 %v5376, %v5375
        %v5458 = vpack.c.b16 %v5378, %v5377
        %v5459 = vpack.c.b16 %v5380, %v5379
        %v5460 = vpack.c.b16 %v5382, %v5381
        %v5461 = vpack.c.b16 %v5384, %v5383
        %v5462 = vpack.c.b16 %v5386, %v5385
        %v5463 = vpack.c.b16 %v5388, %v5387
        %v5464 = vpack.c.b16 %v5390, %v5389
        %v5465 = vpack.c.b16 %v5392, %v5391
        %v5466 = vpack.c.b16 %v5394, %v5393
        %v5467 = vpack.c.b16 %v5396, %v5395
        %v5468 = vpack.c.b16 %v5398, %v5397
        %v5469 = vpack.c.b16 %v5400, %v5399
        %v5470 = vpack.c.b16 %v5402, %v5401
        %v5471 = vpack.c.b16 %v5404, %v5403
        %v5472 = vpack.c.b16 %v5406, %v5405
        %v5473 = vpack.c.b16 %v5408, %v5407
        %v5474 = vpack.c.b16 %v5410, %v5409
        %5539 = vst [vmem:[%s286] sm:$0xff] %v5411
        %5540 = vst [vmem:[%s286 + $0x8] sm:$0xff] %v5412
        %5541 = vst [vmem:[%s286 + $0x10] sm:$0xff] %v5413
        %5542 = vst [vmem:[%s286 + $0x18] sm:$0xff] %v5414
        %5543 = vst [vmem:[%s286 + $0x20] sm:$0xff] %v5415
        %5544 = vst [vmem:[%s286 + $0x28] sm:$0xff] %v5416
        %5545 = vst [vmem:[%s286 + $0x30] sm:$0xff] %v5417
        %5546 = vst [vmem:[%s286 + $0x38] sm:$0xff] %v5418
        %5547 = vst [vmem:[%s286 + $0x40] sm:$0xff] %v5419
        %5548 = vst [vmem:[%s286 + $0x48] sm:$0xff] %v5420
        %5549 = vst [vmem:[%s286 + $0x50] sm:$0xff] %v5421
        %5550 = vst [vmem:[%s286 + $0x58] sm:$0xff] %v5422
        %5551 = vst [vmem:[%s286 + $0x60] sm:$0xff] %v5423
        %5552 = vst [vmem:[%s286 + $0x68] sm:$0xff] %v5424
        %5553 = vst [vmem:[%s286 + $0x70] sm:$0xff] %v5425
        %5554 = vst [vmem:[%s286 + $0x78] sm:$0xff] %v5426
        %5555 = vst [vmem:[%s286 + $0x80] sm:$0xff] %v5427
        %5556 = vst [vmem:[%s286 + $0x88] sm:$0xff] %v5428
        %5557 = vst [vmem:[%s286 + $0x90] sm:$0xff] %v5429
        %5558 = vst [vmem:[%s286 + $0x98] sm:$0xff] %v5430
        %5559 = vst [vmem:[%s286 + $0xa0] sm:$0xff] %v5431
        %5560 = vst [vmem:[%s286 + $0xa8] sm:$0xff] %v5432
        %5561 = vst [vmem:[%s286 + $0xb0] sm:$0xff] %v5433
        %5562 = vst [vmem:[%s286 + $0xb8] sm:$0xff] %v5434
        %5563 = vst [vmem:[%s286 + $0xc0] sm:$0xff] %v5435
        %5564 = vst [vmem:[%s286 + $0xc8] sm:$0xff] %v5436
        %5565 = vst [vmem:[%s286 + $0xd0] sm:$0xff] %v5437
        %5566 = vst [vmem:[%s286 + $0xd8] sm:$0xff] %v5438
        %5567 = vst [vmem:[%s286 + $0xe0] sm:$0xff] %v5439
        %5568 = vst [vmem:[%s286 + $0xe8] sm:$0xff] %v5440
        %5569 = vst [vmem:[%s286 + $0xf0] sm:$0xff] %v5441
        %5570 = vst [vmem:[%s286 + $0xf8] sm:$0xff] %v5442
        %5571 = vst [vmem:[%s286 + $0x100] sm:$0xff] %v5443
        %5572 = vst [vmem:[%s286 + $0x108] sm:$0xff] %v5444
        %5573 = vst [vmem:[%s286 + $0x110] sm:$0xff] %v5445
        %5574 = vst [vmem:[%s286 + $0x118] sm:$0xff] %v5446
        %5575 = vst [vmem:[%s286 + $0x120] sm:$0xff] %v5447
        %5576 = vst [vmem:[%s286 + $0x128] sm:$0xff] %v5448
        %5577 = vst [vmem:[%s286 + $0x130] sm:$0xff] %v5449
        %5578 = vst [vmem:[%s286 + $0x138] sm:$0xff] %v5450
        %5579 = vst [vmem:[%s286 + $0x140] sm:$0xff] %v5451
        %5580 = vst [vmem:[%s286 + $0x148] sm:$0xff] %v5452
        %5581 = vst [vmem:[%s286 + $0x150] sm:$0xff] %v5453
        %5582 = vst [vmem:[%s286 + $0x158] sm:$0xff] %v5454
        %5583 = vst [vmem:[%s286 + $0x160] sm:$0xff] %v5455
        %5584 = vst [vmem:[%s286 + $0x168] sm:$0xff] %v5456
        %5585 = vst [vmem:[%s286 + $0x170] sm:$0xff] %v5457
        %5586 = vst [vmem:[%s286 + $0x178] sm:$0xff] %v5458
        %5587 = vst [vmem:[%s286 + $0x180] sm:$0xff] %v5459
        %5588 = vst [vmem:[%s286 + $0x188] sm:$0xff] %v5460
        %5589 = vst [vmem:[%s286 + $0x190] sm:$0xff] %v5461
        %5590 = vst [vmem:[%s286 + $0x198] sm:$0xff] %v5462
        %5591 = vst [vmem:[%s286 + $0x1a0] sm:$0xff] %v5463
        %5592 = vst [vmem:[%s286 + $0x1a8] sm:$0xff] %v5464
        %5593 = vst [vmem:[%s286 + $0x1b0] sm:$0xff] %v5465
        %5594 = vst [vmem:[%s286 + $0x1b8] sm:$0xff] %v5466
        %5595 = vst [vmem:[%s286 + $0x1c0] sm:$0xff] %v5467
        %5596 = vst [vmem:[%s286 + $0x1c8] sm:$0xff] %v5468
        %5597 = vst [vmem:[%s286 + $0x1d0] sm:$0xff] %v5469
        %5598 = vst [vmem:[%s286 + $0x1d8] sm:$0xff] %v5470
        %5599 = vst [vmem:[%s286 + $0x1e0] sm:$0xff] %v5471
        %5600 = vst [vmem:[%s286 + $0x1e8] sm:$0xff] %v5472
        %5601 = vst [vmem:[%s286 + $0x1f0] sm:$0xff] %v5473
        %5602 = vst [vmem:[%s286 + $0x1f8] sm:$0xff] %v5474
        %s5603 = sand.u32 %s144, 1
        %s5604 = scalar_lea.sflag [#allocation4], %s5603
        %s5605 = sand.u32 %s144, 1
        %s5606 = smul.addr %s5605, 512
        %s5607 = scalar_lea.vmem [#allocation7], %s5606
        %s5608 = sand.u32 %s170, 1
        %s5609 = scalar_lea.sflag [#allocation9], %s5608
        %s5610 = sand.u32 %s170, 1
        %s5611 = smul.addr %s5610, 512
        %s5612 = scalar_lea.vmem [#allocation8], %s5611
        // Predicated region
        $region49: #{tpu_custom_call.1} parent=39 // pred_check
          %p5613 = pneg %p154
        $region50: #{tpu_custom_call.1} parent=39 // pred_check_branch
          %5615 = sbr.rel (%p5613) target = $region52
        $region51: #{tpu_custom_call.1} parent=39 // pred_region
          %s5616 = smul.u32 32, %s26
          %s5618 = ssub.s32 8192, 8192
          %5619 = vsyncadd %s5604, %s5618
          %s5620 = smul.addr %s5616, 4
          %s5621 = smul.addr %s5620, 64
          %s5622 = scalar_lea.hbm %s5, %s5621
          %s5623 = sshll.u32 %s5607, 4
          %s5624 = int_to_ptr.vmem [resolvable:$true] %s5623
          %5629 = dma.vmem_to_hbm [thread:$0]  %s5624, 8192, %s5622, %s5604, 256, 256, 16
        $region52: #{tpu_custom_call.1} parent=39 // pred_fallthru
          _
        // Predicated region
        $region53: #{tpu_custom_call.1} parent=39 // pred_check
          %p5630 = pneg %p180
        $region54: #{tpu_custom_call.1} parent=39 // pred_check_branch
          %5632 = sbr.rel (%p5630) target = $region56
        $region55: #{tpu_custom_call.1} parent=39 // pred_region
          %s5633 = smul.u32 32, %s26
          %s5635 = ssub.s32 8192, 8192
          %5636 = vsyncadd %s5609, %s5635
          %s5637 = smul.addr %s5633, 4
          %s5638 = smul.addr %s5637, 64
          %s5639 = scalar_lea.hbm %s6, %s5638
          %s5640 = sshll.u32 %s5612, 4
          %s5641 = int_to_ptr.vmem [resolvable:$true] %s5640
          %5646 = dma.vmem_to_hbm [thread:$0]  %s5641, 8192, %s5639, %s5609, 256, 256, 16
        $region56: #{tpu_custom_call.1} parent=39 // pred_fallthru
          _
      $region40: #{tpu_custom_call.1} parent=5 // pred_fallthru
        _
      %p5647 = scmp.le.s32.totalorder 2, %s21
      // Predicated region
      $region57: #{tpu_custom_call.1} parent=5 // pred_check
        %p5648 = pneg %p5647
      $region58: #{tpu_custom_call.1} parent=5 // pred_check_branch
        %5650 = sbr.rel (%p5648) target = $region60
      $region59: #{tpu_custom_call.1} parent=5 // pred_region
        %s5651 = ssub.s32 %s21, 2
        // Predicated region
        $region61: #{tpu_custom_call.1} parent=59 // pred_check
          %p5652 = pneg %p160
        $region62: #{tpu_custom_call.1} parent=59 // pred_check_branch
          %5654 = sbr.rel (%p5652) target = $region64
        $region63: #{tpu_custom_call.1} parent=59 // pred_region
          %s5655 = sand.u32 %s145, 1
          %s5656 = scalar_lea.sflag [#allocation4], %s5655
          %s5657 = sand.u32 %s145, 1
          %s5658 = smul.addr %s5657, 512
          %s5659 = scalar_lea.vmem [#allocation7], %s5658
          %5660 = dma.done %s5656, 8192
        $region64: #{tpu_custom_call.1} parent=59 // pred_fallthru
          _
        // Predicated region
        $region65: #{tpu_custom_call.1} parent=59 // pred_check
          %p5661 = pneg %p186
        $region66: #{tpu_custom_call.1} parent=59 // pred_check_branch
          %5663 = sbr.rel (%p5661) target = $region68
        $region67: #{tpu_custom_call.1} parent=59 // pred_region
          %s5664 = sand.u32 %s171, 1
          %s5665 = scalar_lea.sflag [#allocation9], %s5664
          %s5666 = sand.u32 %s171, 1
          %s5667 = smul.addr %s5666, 512
          %s5668 = scalar_lea.vmem [#allocation8], %s5667
          %5669 = dma.done %s5665, 8192
        $region68: #{tpu_custom_call.1} parent=59 // pred_fallthru
          _
      $region60: #{tpu_custom_call.1} parent=5 // pred_fallthru
        _
    $region6: #{tpu_custom_call.1} parent=1 // loop_footer
      %s25 = sadd.s32 1, %s21
    $region7: #{tpu_custom_call.1} parent=1 // loop_footer_branch
      %20 = sbr.rel target = $region3
    $region8: #{tpu_custom_call.1} parent=1 // loop_exit
      _
    %5670 = vsyncpa [#allocation3], 1
    %s5671 = scalar_lea.sflag [#allocation3], 1
    %5672 = vsyncpa %s5671, 1
    %5673 = vsyncpa [#allocation6], 1
    %5674 = vsyncpa [#allocation4], 1
    %s5675 = scalar_lea.sflag [#allocation4], 1
    %5676 = vsyncpa %s5675, 1
    %5677 = vsyncpa [#allocation9], 1
    %s5678 = scalar_lea.sflag [#allocation9], 1
    %5679 = vsyncpa %s5678, 1

</llo_original>
